<compile_context>
chip_gen: v7x
topology: tpu7x:2x2x1
jax: 0.10.0
libtpu: 0.0.40
codegen_flags: <defaults>
</compile_context>

<pallas_src>
import functools
import math

import jax
import jax.numpy as jnp
from jax import lax
from jax.experimental import pallas as pl
from jax.experimental.pallas import tpu as pltpu


# ----------------------------------------------------------------------------
# marginal_prob_std (standard score-SDE choice; injected dependency of the
# original module)
# ----------------------------------------------------------------------------
def marginal_prob_std(t, sigma=25.0):
    return jnp.sqrt((sigma ** (2.0 * t) - 1.0) / (2.0 * jnp.log(sigma)))


def _layer_defs(hidden_dim, hidden_layers):
    # (in_dim, out_dim, relu_after) for alpha, hidden_0..n-1, omega.
    defs = [(1, hidden_dim, True)]
    defs += [(hidden_dim, hidden_dim, True) for _ in range(hidden_layers)]
    defs += [(hidden_dim, 1, False)]
    return defs


def _choose_tb(batch):
    # Batch block per grid step: sublane block dims must be a multiple of 8
    # or the full dim.
    return 8 if batch % 8 == 0 else batch


# ----------------------------------------------------------------------------
# Fully fused forward kernel (one batch block per grid step)
# ----------------------------------------------------------------------------
def _fused_forward_kernel(*refs, layer_defs, length, tb):
    """emb MLP -> (dense+ReLU -> kerneldense -> circular conv [-> ReLU]) * N
    -> final 1/std scaling, all in VMEM for a block of `tb` samples.

    refs layout:
      fourier [tb, E], x [tb, L], inv_std [tb, 1],
      w_emb1 [E, E], b_emb1 [1, E], w_emb2 [E, E], b_emb2 [1, E],
      per layer: wd [Kin, E], bd [1, Kin], wk_prep [F, Kin], bk_prep [1, F],
      out [tb, L]
    """
    n_layers = len(layer_defs)
    fourier_ref, x_ref, istd_ref, we1, be1, we2, be2 = refs[:7]
    layer_refs = refs[7:7 + 4 * n_layers]
    out_ref = refs[7 + 4 * n_layers]

    bf16, f32 = jnp.bfloat16, jnp.float32
    L = length
    pad = (L - 1) // 2

    def lin(a, w_ref, b_ref):
        # y = a @ W.T + b with W kept in PyTorch [out, in] layout.
        y = lax.dot_general(a.astype(bf16), w_ref[...].astype(bf16),
                            dimension_numbers=(((1,), (1,)), ((), ())),
                            preferred_element_type=f32)
        return y + b_ref[...]

    # (1) Time-embedding MLP: Linear -> ReLU -> Linear -> ReLU.
    emb = jnp.maximum(lin(fourier_ref[...], we1, be1), 0.0)        # [tb, E]
    emb = jnp.maximum(lin(emb, we2, be2), 0.0)                     # [tb, E]

    # (2) BatchConvolver1D layers.
    h = x_ref[...][:, None, :]                                     # [tb, 1, L]
    for li, (cin, cout, relu_after) in enumerate(layer_defs):
        wd, bd, wk, bk = layer_refs[4 * li:4 * li + 4]
        G = cin * L

        # Per-layer time-conditioning Linear + ReLU (whole block, one matmul).
        ht = jnp.maximum(lin(emb, wd, bd), 0.0)                    # [tb, Kin]

        # Kernel-producing Linear (FLOP-dominant matmul).  Output columns are
        # in (o, k, c) order thanks to the one-time weight permutation.
        kflat = lin(ht, wk, bk)                                    # [tb, cout*G]

        # Re-layout kflat -> [tb, cout, G] with static lane slices (no generic
        # reshape).
        kmat = jnp.concatenate(
            [kflat[:, None, o * G:(o + 1) * G] for o in range(cout)],
            axis=1)                                                # [tb, cout, G]

        # Circular pad + im2col built once per block from VMEM-resident
        # activations with static lane-window slices.
        hp = jnp.concatenate([h[..., L - pad:], h, h[..., :pad]],
                             axis=-1)                              # [tb, cin, 2L-1]
        pat = jnp.concatenate([hp[..., k:k + L] for k in range(L)],
                              axis=1)                              # [tb, G, L] (k, c)

        # Conv as one batched bf16 MXU matmul per block: [cout,G] x [G,L].
        acc = lax.dot_general(kmat.astype(bf16), pat.astype(bf16),
                              dimension_numbers=(((2,), (1,)), ((0,), (0,))),
                              preferred_element_type=f32)          # [tb, cout, L]
        h = jnp.maximum(acc, 0.0) if relu_after else acc

    # (3) Final per-sample scaling by 1 / marginal_prob_std(t).
    out_ref[...] = h[:, 0, :] * istd_ref[...]


# ----------------------------------------------------------------------------
# pallas_call wrapper
# ----------------------------------------------------------------------------
@functools.partial(jax.jit, static_argnames=("length", "hidden_dim",
                                             "hidden_layers"))
def convolutional_forward(params, x, t, *, length, hidden_dim, hidden_layers):
    """Pallas equivalent of Convolutional.forward(x, t)."""
    B = x.shape[0]
    E = params["w_emb1"].shape[0]
    Kin = hidden_dim * length
    defs = _layer_defs(hidden_dim, hidden_layers)

    # Gaussian Fourier features + marginal_prob_std: tiny [B]-sized
    # transcendental glue kept in plain JAX for lowering safety.
    # TODO(synk): sin/cos feature map left outside Pallas (negligible cost).
    x_proj = t[:, None] * params["W_fourier"][None, :] * (2.0 * jnp.pi)
    fourier = jnp.concatenate([jnp.sin(x_proj), jnp.cos(x_proj)], axis=-1)
    inv_std = (1.0 / marginal_prob_std(t)).reshape(B, 1)

    tb = _choose_tb(B)
    nb = B // tb

    in_arrays = [fourier, x, inv_std,
                 params["w_emb1"], params["b_emb1"],
                 params["w_emb2"], params["b_emb2"]]
    in_specs = [
        pl.BlockSpec((tb, E), lambda i: (i, 0)),           # fourier features
        pl.BlockSpec((tb, length), lambda i: (i, 0)),      # x
        pl.BlockSpec((tb, 1), lambda i: (i, 0)),           # 1/std
        pl.BlockSpec((E, E), lambda i: (0, 0)),            # emb_dense1 W (resident)
        pl.BlockSpec((1, E), lambda i: (0, 0)),            # emb_dense1 b
        pl.BlockSpec((E, E), lambda i: (0, 0)),            # emb_dense2 W (resident)
        pl.BlockSpec((1, E), lambda i: (0, 0)),            # emb_dense2 b
    ]
    for (cin, cout, _), lp in zip(defs, params["layers"]):
        F = cout * cin * length
        in_arrays += [lp["wd"], lp["bd"], lp["wk_prep"], lp["bk_prep"]]
        in_specs += [
            pl.BlockSpec((Kin, E), lambda i: (0, 0)),      # dense_* W (resident)
            pl.BlockSpec((1, Kin), lambda i: (0, 0)),      # dense_* b
            pl.BlockSpec((F, Kin), lambda i: (0, 0)),      # kerneldense W (resident)
            pl.BlockSpec((1, F), lambda i: (0, 0)),        # kerneldense b
        ]

    kernel = functools.partial(_fused_forward_kernel, layer_defs=tuple(defs),
                               length=length, tb=tb)
    return pl.pallas_call(
        kernel,
        grid=(nb,),
        out_shape=jax.ShapeDtypeStruct((B, length), jnp.float32),
        in_specs=in_specs,
        out_specs=pl.BlockSpec((tb, length), lambda i: (i, 0)),
        compiler_params=pltpu.CompilerParams(
            dimension_semantics=("parallel",),     # batch blocks shard across TCs
            vmem_limit_bytes=32 * 1024 * 1024),    # v7x-safe; raise on v5e/v6e
    )(*in_arrays)


# ----------------------------------------------------------------------------
# Parameter construction (PyTorch layout) and one-time layout preparation
# ----------------------------------------------------------------------------
def init_torch_params(key, *, length, hidden_dim, hidden_layers, embed_dim):
    E = embed_dim
    kin = hidden_dim * length
    n_layers = hidden_layers + 2
    keys = jax.random.split(key, 5 + 4 * n_layers)
    it = iter(keys)

    def unif(k, shape, fan_in):
        bound = 1.0 / math.sqrt(fan_in)
        return jax.random.uniform(k, shape, jnp.float32, -bound, bound)

    tp = {
        "W_fourier": jax.random.normal(next(it), (E // 2,), jnp.float32) * 30.0,
        "w_emb1": unif(next(it), (E, E), E), "b_emb1": unif(next(it), (E,), E),
        "w_emb2": unif(next(it), (E, E), E), "b_emb2": unif(next(it), (E,), E),
        "layers": [],
    }
    for (cin, cout, _) in _layer_defs(hidden_dim, hidden_layers):
        F = cout * cin * length
        tp["layers"].append({
            "wd": unif(next(it), (kin, E), E),
            "bd": unif(next(it), (kin,), E),
            "wk": unif(next(it), (F, kin), kin),
            "bk": unif(next(it), (F,), kin),
        })
    return tp


def prepare_params(tp, *, length, hidden_dim, hidden_layers):
    """One-time (load-time) layout preparation for the Pallas forward.

    The kerneldense rows are reordered from PyTorch's (o, c, k) order to the
    (o, k, c) order that the kernel's in-VMEM im2col produces, so no weight
    transpose or gather is ever materialised inside the forward pass.
    """
    prep = {
        "W_fourier": tp["W_fourier"],
        "w_emb1": tp["w_emb1"], "b_emb1": tp["b_emb1"].reshape(1, -1),
        "w_emb2": tp["w_emb2"], "b_emb2": tp["b_emb2"].reshape(1, -1),
        "layers": [],
    }
    for (cin, cout, _), lp in zip(_layer_defs(hidden_dim, hidden_layers),
                                  tp["layers"]):
        F = cout * cin * length
        kin = lp["wd"].shape[0]
        wk_prep = jnp.transpose(
            lp["wk"].reshape(cout, cin, length, kin), (0, 2, 1, 3)
        ).reshape(F, kin)
        bk_prep = jnp.transpose(
            lp["bk"].reshape(cout, cin, length), (0, 2, 1)
        ).reshape(1, F)
        prep["layers"].append({
            "wd": lp["wd"], "bd": lp["bd"].reshape(1, -1),
            "wk_prep": wk_prep, "bk_prep": bk_prep,
        })
    return prep


# ----------------------------------------------------------------------------
# Pure-JAX references
# ----------------------------------------------------------------------------
def reference_forward(tp, x, t, *, length, hidden_dim, hidden_layers, mode):
    """mode='bf16': mirrors the kernel's bf16-operand / f32-accumulate matmuls
    (tight structural check).  mode='f32': independent float32 HIGHEST
    reference using vmapped lax.conv_general_dilated (PyTorch semantics)."""
    assert mode in ("bf16", "f32")
    L = length
    pad = (L - 1) // 2
    B = x.shape[0]
    bf16 = jnp.bfloat16

    if mode == "bf16":
        def lin(a, w, b):
            return jnp.dot(a.astype(bf16), w.T.astype(bf16),
                           preferred_element_type=jnp.float32) + b
    else:
        def lin(a, w, b):
            return jnp.dot(a, w.T, precision=lax.Precision.HIGHEST) + b

    def conv(h, kernels4):
        hp = jnp.concatenate([h[..., L - pad:], h, h[..., :pad]], axis=-1)
        if mode == "bf16":
            idx = jnp.arange(L)[:, None] + jnp.arange(L)[None, :]   # [t, k]
            wnd = hp[:, :, idx]                                      # [B,cin,t,k]
            return jnp.einsum("bock,bctk->bot",
                              kernels4.astype(bf16), wnd.astype(bf16),
                              preferred_element_type=jnp.float32)
        return jax.vmap(
            lambda hpb, ker: lax.conv_general_dilated(
                hpb[None], ker, window_strides=(1,), padding="VALID",
                dimension_numbers=("NCH", "OIH", "NCH"),
                precision=lax.Precision.HIGHEST)[0]
        )(hp, kernels4)

    x_proj = t[:, None] * tp["W_fourier"][None, :] * (2.0 * jnp.pi)
    emb = jnp.concatenate([jnp.sin(x_proj), jnp.cos(x_proj)], axis=-1)
    emb = jnp.maximum(lin(emb, tp["w_emb1"], tp["b_emb1"]), 0.0)
    emb = jnp.maximum(lin(emb, tp["w_emb2"], tp["b_emb2"]), 0.0)
    h = x[:, None, :]
    for (cin, cout, relu_flag), lp in zip(
            _layer_defs(hidden_dim, hidden_layers), tp["layers"]):
        ht = jnp.maximum(lin(emb, lp["wd"], lp["bd"]), 0.0)
        kernels4 = lin(ht, lp["wk"], lp["bk"]).reshape(B, cout, cin, L)
        h = conv(h, kernels4)
        if relu_flag:
            h = jnp.maximum(h, 0.0)
    return h[:, 0, :] / marginal_prob_std(t)[:, None]


# ----------------------------------------------------------------------------
# Demo / self-check
# ----------------------------------------------------------------------------
if __name__ == "__main__":
    # Small shapes consistent with the module: odd length >= 3.
    length = 15
    hidden_dim = 8
    hidden_layers = 2
    embed_dim = 32
    B = 16          # two batch blocks of 8 -> >=2 parallel grid steps (v7x)

    key = jax.random.PRNGKey(0)
    kp, kx, kt = jax.random.split(key, 3)
    tp = init_torch_params(kp, length=length, hidden_dim=hidden_dim,
                           hidden_layers=hidden_layers, embed_dim=embed_dim)
    params = prepare_params(tp, length=length, hidden_dim=hidden_dim,
                            hidden_layers=hidden_layers)

    x = jax.random.normal(kx, (B, length), jnp.float32)
    t = jax.random.uniform(kt, (B,), jnp.float32, 0.05, 1.0)

    score = convolutional_forward(params, x, t, length=length,
                                  hidden_dim=hidden_dim,
                                  hidden_layers=hidden_layers)
    score = jax.block_until_ready(score)

    assert score.shape == (B, length), score.shape
    assert bool(jnp.all(jnp.isfinite(score)))

    # (1) Tight structural check vs. a pure-JAX reference mirroring the
    #     kernel's bf16-operand / f32-accumulate MXU matmuls.
    ref_bf16 = reference_forward(tp, x, t, length=length,
                                 hidden_dim=hidden_dim,
                                 hidden_layers=hidden_layers, mode="bf16")
    err = float(jnp.max(jnp.abs(score - ref_bf16)))
    peak = float(jnp.max(jnp.abs(ref_bf16)))
    assert err <= 1e-2 * (1.0 + peak), (err, peak)

    # (2) Sanity check vs. an independent float32 HIGHEST reference (vmapped
    #     lax.conv, PyTorch layout).  The gap is the intended bf16 MXU rounding.
    ref_f32 = reference_forward(tp, x, t, length=length,
                                hidden_dim=hidden_dim,
                                hidden_layers=hidden_layers, mode="f32")
    err32 = float(jnp.max(jnp.abs(score - ref_f32)))
    peak32 = float(jnp.max(jnp.abs(ref_f32)))
    assert err32 <= 1e-1 * (1.0 + peak32), (err32, peak32)

    print("KERNEL_OK")
</pallas_src>

<mosaic_0001>
module attributes {stable_mosaic.version = 11 : i64} {
  func.func @_fused_forward_kernel(%arg0: i32, %arg1: memref<8x32xf32, #tpu.memory_space<vmem>>, %arg2: memref<8x15xf32, #tpu.memory_space<vmem>>, %arg3: memref<8x1xf32, #tpu.memory_space<vmem>>, %arg4: memref<32x32xf32, #tpu.memory_space<vmem>>, %arg5: memref<1x32xf32, #tpu.memory_space<vmem>>, %arg6: memref<32x32xf32, #tpu.memory_space<vmem>>, %arg7: memref<1x32xf32, #tpu.memory_space<vmem>>, %arg8: memref<120x32xf32, #tpu.memory_space<vmem>>, %arg9: memref<1x120xf32, #tpu.memory_space<vmem>>, %arg10: memref<120x120xf32, #tpu.memory_space<vmem>>, %arg11: memref<1x120xf32, #tpu.memory_space<vmem>>, %arg12: memref<120x32xf32, #tpu.memory_space<vmem>>, %arg13: memref<1x120xf32, #tpu.memory_space<vmem>>, %arg14: memref<960x120xf32, #tpu.memory_space<vmem>>, %arg15: memref<1x960xf32, #tpu.memory_space<vmem>>, %arg16: memref<120x32xf32, #tpu.memory_space<vmem>>, %arg17: memref<1x120xf32, #tpu.memory_space<vmem>>, %arg18: memref<960x120xf32, #tpu.memory_space<vmem>>, %arg19: memref<1x960xf32, #tpu.memory_space<vmem>>, %arg20: memref<120x32xf32, #tpu.memory_space<vmem>>, %arg21: memref<1x120xf32, #tpu.memory_space<vmem>>, %arg22: memref<120x120xf32, #tpu.memory_space<vmem>>, %arg23: memref<1x120xf32, #tpu.memory_space<vmem>>, %arg24: memref<8x15xf32, #tpu.memory_space<vmem>>) attributes {dimension_semantics = [#tpu.dimension_semantics<parallel>], iteration_bounds = array<i64: 2>, scalar_prefetch = 0 : i64, scratch_operands = 0 : i64, tpu.core_type = #tpu.core_type<tc>, window_params = [{transform_indices = @transform_0, window_bounds = array<i64: 8, 32>}, {transform_indices = @transform_1, window_bounds = array<i64: 8, 15>}, {transform_indices = @transform_2, window_bounds = array<i64: 8, 1>}, {pipeline_mode = #tpu.pipeline_mode<synchronous>, transform_indices = @transform_3, window_bounds = array<i64: 32, 32>}, {pipeline_mode = #tpu.pipeline_mode<synchronous>, transform_indices = @transform_4, window_bounds = array<i64: 1, 32>}, {pipeline_mode = #tpu.pipeline_mode<synchronous>, transform_indices = @transform_5, window_bounds = array<i64: 32, 32>}, {pipeline_mode = #tpu.pipeline_mode<synchronous>, transform_indices = @transform_6, window_bounds = array<i64: 1, 32>}, {pipeline_mode = #tpu.pipeline_mode<synchronous>, transform_indices = @transform_7, window_bounds = array<i64: 120, 32>}, {pipeline_mode = #tpu.pipeline_mode<synchronous>, transform_indices = @transform_8, window_bounds = array<i64: 1, 120>}, {pipeline_mode = #tpu.pipeline_mode<synchronous>, transform_indices = @transform_9, window_bounds = array<i64: 120, 120>}, {pipeline_mode = #tpu.pipeline_mode<synchronous>, transform_indices = @transform_10, window_bounds = array<i64: 1, 120>}, {pipeline_mode = #tpu.pipeline_mode<synchronous>, transform_indices = @transform_11, window_bounds = array<i64: 120, 32>}, {pipeline_mode = #tpu.pipeline_mode<synchronous>, transform_indices = @transform_12, window_bounds = array<i64: 1, 120>}, {pipeline_mode = #tpu.pipeline_mode<synchronous>, transform_indices = @transform_13, window_bounds = array<i64: 960, 120>}, {pipeline_mode = #tpu.pipeline_mode<synchronous>, transform_indices = @transform_14, window_bounds = array<i64: 1, 960>}, {pipeline_mode = #tpu.pipeline_mode<synchronous>, transform_indices = @transform_15, window_bounds = array<i64: 120, 32>}, {pipeline_mode = #tpu.pipeline_mode<synchronous>, transform_indices = @transform_16, window_bounds = array<i64: 1, 120>}, {pipeline_mode = #tpu.pipeline_mode<synchronous>, transform_indices = @transform_17, window_bounds = array<i64: 960, 120>}, {pipeline_mode = #tpu.pipeline_mode<synchronous>, transform_indices = @transform_18, window_bounds = array<i64: 1, 960>}, {pipeline_mode = #tpu.pipeline_mode<synchronous>, transform_indices = @transform_19, window_bounds = array<i64: 120, 32>}, {pipeline_mode = #tpu.pipeline_mode<synchronous>, transform_indices = @transform_20, window_bounds = array<i64: 1, 120>}, {pipeline_mode = #tpu.pipeline_mode<synchronous>, transform_indices = @transform_21, window_bounds = array<i64: 120, 120>}, {pipeline_mode = #tpu.pipeline_mode<synchronous>, transform_indices = @transform_22, window_bounds = array<i64: 1, 120>}, {transform_indices = @transform_23, window_bounds = array<i64: 8, 15>}]} {
    %c0 = arith.constant 0 : index
    %c0_0 = arith.constant 0 : index
    %0 = vector.load %arg1[%c0, %c0_0] : memref<8x32xf32, #tpu.memory_space<vmem>>, vector<8x32xf32>
    %1 = arith.truncf %0 : vector<8x32xf32> to vector<8x32xbf16>
    %c0_1 = arith.constant 0 : index
    %c0_2 = arith.constant 0 : index
    %2 = vector.load %arg4[%c0_1, %c0_2] : memref<32x32xf32, #tpu.memory_space<vmem>>, vector<32x32xf32>
    %3 = arith.truncf %2 : vector<32x32xf32> to vector<32x32xbf16>
    %cst = arith.constant dense<0.000000e+00> : vector<8x32xf32>
    %4 = tpu.matmul %1, %3, %cst {dimension_numbers = #tpu.dot_dimension_numbers<[1], [1], [0], [0], [0, 0, 1, 0], [], []>} : vector<8x32xbf16>, vector<32x32xbf16>, vector<8x32xf32> -> vector<8x32xf32>
    %c0_3 = arith.constant 0 : index
    %c0_4 = arith.constant 0 : index
    %5 = vector.load %arg5[%c0_3, %c0_4] : memref<1x32xf32, #tpu.memory_space<vmem>>, vector<1x32xf32>
    %6 = vector.broadcast %5 : vector<1x32xf32> to vector<8x32xf32>
    %7 = arith.addf %4, %6 : vector<8x32xf32>
    %cst_5 = arith.constant 0.000000e+00 : f32
    %8 = vector.broadcast %cst_5 : f32 to vector<8x32xf32>
    %9 = arith.maximumf %7, %8 : vector<8x32xf32>
    %10 = arith.truncf %9 : vector<8x32xf32> to vector<8x32xbf16>
    %c0_6 = arith.constant 0 : index
    %c0_7 = arith.constant 0 : index
    %11 = vector.load %arg6[%c0_6, %c0_7] : memref<32x32xf32, #tpu.memory_space<vmem>>, vector<32x32xf32>
    %12 = arith.truncf %11 : vector<32x32xf32> to vector<32x32xbf16>
    %cst_8 = arith.constant dense<0.000000e+00> : vector<8x32xf32>
    %13 = tpu.matmul %10, %12, %cst_8 {dimension_numbers = #tpu.dot_dimension_numbers<[1], [1], [0], [0], [0, 0, 1, 0], [], []>} : vector<8x32xbf16>, vector<32x32xbf16>, vector<8x32xf32> -> vector<8x32xf32>
    %c0_9 = arith.constant 0 : index
    %c0_10 = arith.constant 0 : index
    %14 = vector.load %arg7[%c0_9, %c0_10] : memref<1x32xf32, #tpu.memory_space<vmem>>, vector<1x32xf32>
    %15 = vector.broadcast %14 : vector<1x32xf32> to vector<8x32xf32>
    %16 = arith.addf %13, %15 : vector<8x32xf32>
    %cst_11 = arith.constant 0.000000e+00 : f32
    %17 = vector.broadcast %cst_11 : f32 to vector<8x32xf32>
    %18 = arith.maximumf %16, %17 : vector<8x32xf32>
    %c0_12 = arith.constant 0 : index
    %c0_13 = arith.constant 0 : index
    %19 = vector.load %arg2[%c0_12, %c0_13] : memref<8x15xf32, #tpu.memory_space<vmem>>, vector<8x15xf32>
    %20 = vector.shape_cast %19 : vector<8x15xf32> to vector<8x1x15xf32>
    %21 = arith.truncf %18 : vector<8x32xf32> to vector<8x32xbf16>
    %c0_14 = arith.constant 0 : index
    %c0_15 = arith.constant 0 : index
    %22 = vector.load %arg8[%c0_14, %c0_15] : memref<120x32xf32, #tpu.memory_space<vmem>>, vector<120x32xf32>
    %23 = arith.truncf %22 : vector<120x32xf32> to vector<120x32xbf16>
    %cst_16 = arith.constant dense<0.000000e+00> : vector<8x120xf32>
    %24 = tpu.matmul %21, %23, %cst_16 {dimension_numbers = #tpu.dot_dimension_numbers<[1], [1], [0], [0], [0, 0, 1, 0], [], []>} : vector<8x32xbf16>, vector<120x32xbf16>, vector<8x120xf32> -> vector<8x120xf32>
    %c0_17 = arith.constant 0 : index
    %c0_18 = arith.constant 0 : index
    %25 = vector.load %arg9[%c0_17, %c0_18] : memref<1x120xf32, #tpu.memory_space<vmem>>, vector<1x120xf32>
    %26 = vector.broadcast %25 : vector<1x120xf32> to vector<8x120xf32>
    %27 = arith.addf %24, %26 : vector<8x120xf32>
    %cst_19 = arith.constant 0.000000e+00 : f32
    %28 = vector.broadcast %cst_19 : f32 to vector<8x120xf32>
    %29 = arith.maximumf %27, %28 : vector<8x120xf32>
    %30 = arith.truncf %29 : vector<8x120xf32> to vector<8x120xbf16>
    %c0_20 = arith.constant 0 : index
    %c0_21 = arith.constant 0 : index
    %31 = vector.load %arg10[%c0_20, %c0_21] : memref<120x120xf32, #tpu.memory_space<vmem>>, vector<120x120xf32>
    %32 = arith.truncf %31 : vector<120x120xf32> to vector<120x120xbf16>
    %cst_22 = arith.constant dense<0.000000e+00> : vector<8x120xf32>
    %33 = tpu.matmul %30, %32, %cst_22 {dimension_numbers = #tpu.dot_dimension_numbers<[1], [1], [0], [0], [0, 0, 1, 0], [], []>} : vector<8x120xbf16>, vector<120x120xbf16>, vector<8x120xf32> -> vector<8x120xf32>
    %c0_23 = arith.constant 0 : index
    %c0_24 = arith.constant 0 : index
    %34 = vector.load %arg11[%c0_23, %c0_24] : memref<1x120xf32, #tpu.memory_space<vmem>>, vector<1x120xf32>
    %35 = vector.broadcast %34 : vector<1x120xf32> to vector<8x120xf32>
    %36 = arith.addf %33, %35 : vector<8x120xf32>
    %37 = vector.extract_strided_slice %36 {offsets = [0, 0], sizes = [8, 15], strides = [1, 1]} : vector<8x120xf32> to vector<8x15xf32>
    %38 = vector.shape_cast %37 : vector<8x15xf32> to vector<8x1x15xf32>
    %39 = vector.extract_strided_slice %36 {offsets = [0, 15], sizes = [8, 15], strides = [1, 1]} : vector<8x120xf32> to vector<8x15xf32>
    %40 = vector.shape_cast %39 : vector<8x15xf32> to vector<8x1x15xf32>
    %41 = vector.extract_strided_slice %36 {offsets = [0, 30], sizes = [8, 15], strides = [1, 1]} : vector<8x120xf32> to vector<8x15xf32>
    %42 = vector.shape_cast %41 : vector<8x15xf32> to vector<8x1x15xf32>
    %43 = vector.extract_strided_slice %36 {offsets = [0, 45], sizes = [8, 15], strides = [1, 1]} : vector<8x120xf32> to vector<8x15xf32>
    %44 = vector.shape_cast %43 : vector<8x15xf32> to vector<8x1x15xf32>
    %45 = vector.extract_strided_slice %36 {offsets = [0, 60], sizes = [8, 15], strides = [1, 1]} : vector<8x120xf32> to vector<8x15xf32>
    %46 = vector.shape_cast %45 : vector<8x15xf32> to vector<8x1x15xf32>
    %47 = vector.extract_strided_slice %36 {offsets = [0, 75], sizes = [8, 15], strides = [1, 1]} : vector<8x120xf32> to vector<8x15xf32>
    %48 = vector.shape_cast %47 : vector<8x15xf32> to vector<8x1x15xf32>
    %49 = vector.extract_strided_slice %36 {offsets = [0, 90], sizes = [8, 15], strides = [1, 1]} : vector<8x120xf32> to vector<8x15xf32>
    %50 = vector.shape_cast %49 : vector<8x15xf32> to vector<8x1x15xf32>
    %51 = vector.extract_strided_slice %36 {offsets = [0, 105], sizes = [8, 15], strides = [1, 1]} : vector<8x120xf32> to vector<8x15xf32>
    %52 = vector.shape_cast %51 : vector<8x15xf32> to vector<8x1x15xf32>
    %53 = tpu.concatenate %38, %40, %42, %44, %46, %48, %50, %52 in 1 : vector<8x1x15xf32>, vector<8x1x15xf32>, vector<8x1x15xf32>, vector<8x1x15xf32>, vector<8x1x15xf32>, vector<8x1x15xf32>, vector<8x1x15xf32>, vector<8x1x15xf32> -> vector<8x8x15xf32>
    %54 = vector.extract_strided_slice %20 {offsets = [0, 0, 8], sizes = [8, 1, 7], strides = [1, 1, 1]} : vector<8x1x15xf32> to vector<8x1x7xf32>
    %55 = vector.extract_strided_slice %20 {offsets = [0, 0, 0], sizes = [8, 1, 7], strides = [1, 1, 1]} : vector<8x1x15xf32> to vector<8x1x7xf32>
    %56 = tpu.concatenate %54, %20, %55 in 2 : vector<8x1x7xf32>, vector<8x1x15xf32>, vector<8x1x7xf32> -> vector<8x1x29xf32>
    %57 = vector.extract_strided_slice %56 {offsets = [0, 0, 0], sizes = [8, 1, 15], strides = [1, 1, 1]} : vector<8x1x29xf32> to vector<8x1x15xf32>
    %58 = vector.extract_strided_slice %56 {offsets = [0, 0, 1], sizes = [8, 1, 15], strides = [1, 1, 1]} : vector<8x1x29xf32> to vector<8x1x15xf32>
    %59 = vector.extract_strided_slice %56 {offsets = [0, 0, 2], sizes = [8, 1, 15], strides = [1, 1, 1]} : vector<8x1x29xf32> to vector<8x1x15xf32>
    %60 = vector.extract_strided_slice %56 {offsets = [0, 0, 3], sizes = [8, 1, 15], strides = [1, 1, 1]} : vector<8x1x29xf32> to vector<8x1x15xf32>
    %61 = vector.extract_strided_slice %56 {offsets = [0, 0, 4], sizes = [8, 1, 15], strides = [1, 1, 1]} : vector<8x1x29xf32> to vector<8x1x15xf32>
    %62 = vector.extract_strided_slice %56 {offsets = [0, 0, 5], sizes = [8, 1, 15], strides = [1, 1, 1]} : vector<8x1x29xf32> to vector<8x1x15xf32>
    %63 = vector.extract_strided_slice %56 {offsets = [0, 0, 6], sizes = [8, 1, 15], strides = [1, 1, 1]} : vector<8x1x29xf32> to vector<8x1x15xf32>
    %64 = vector.extract_strided_slice %56 {offsets = [0, 0, 7], sizes = [8, 1, 15], strides = [1, 1, 1]} : vector<8x1x29xf32> to vector<8x1x15xf32>
    %65 = vector.extract_strided_slice %56 {offsets = [0, 0, 8], sizes = [8, 1, 15], strides = [1, 1, 1]} : vector<8x1x29xf32> to vector<8x1x15xf32>
    %66 = vector.extract_strided_slice %56 {offsets = [0, 0, 9], sizes = [8, 1, 15], strides = [1, 1, 1]} : vector<8x1x29xf32> to vector<8x1x15xf32>
    %67 = vector.extract_strided_slice %56 {offsets = [0, 0, 10], sizes = [8, 1, 15], strides = [1, 1, 1]} : vector<8x1x29xf32> to vector<8x1x15xf32>
    %68 = vector.extract_strided_slice %56 {offsets = [0, 0, 11], sizes = [8, 1, 15], strides = [1, 1, 1]} : vector<8x1x29xf32> to vector<8x1x15xf32>
    %69 = vector.extract_strided_slice %56 {offsets = [0, 0, 12], sizes = [8, 1, 15], strides = [1, 1, 1]} : vector<8x1x29xf32> to vector<8x1x15xf32>
    %70 = vector.extract_strided_slice %56 {offsets = [0, 0, 13], sizes = [8, 1, 15], strides = [1, 1, 1]} : vector<8x1x29xf32> to vector<8x1x15xf32>
    %71 = vector.extract_strided_slice %56 {offsets = [0, 0, 14], sizes = [8, 1, 15], strides = [1, 1, 1]} : vector<8x1x29xf32> to vector<8x1x15xf32>
    %72 = tpu.concatenate %57, %58, %59, %60, %61, %62, %63, %64, %65, %66, %67, %68, %69, %70, %71 in 1 : vector<8x1x15xf32>, vector<8x1x15xf32>, vector<8x1x15xf32>, vector<8x1x15xf32>, vector<8x1x15xf32>, vector<8x1x15xf32>, vector<8x1x15xf32>, vector<8x1x15xf32>, vector<8x1x15xf32>, vector<8x1x15xf32>, vector<8x1x15xf32>, vector<8x1x15xf32>, vector<8x1x15xf32>, vector<8x1x15xf32>, vector<8x1x15xf32> -> vector<8x15x15xf32>
    %73 = arith.truncf %53 : vector<8x8x15xf32> to vector<8x8x15xbf16>
    %74 = arith.truncf %72 : vector<8x15x15xf32> to vector<8x15x15xbf16>
    %cst_25 = arith.constant dense<0.000000e+00> : vector<8x8x15xf32>
    %75 = tpu.matmul %73, %74, %cst_25 {dimension_numbers = #tpu.dot_dimension_numbers<[2], [1], [1], [2], [0, 0, 0, 1, 1, 2], [0], [0]>} : vector<8x8x15xbf16>, vector<8x15x15xbf16>, vector<8x8x15xf32> -> vector<8x8x15xf32>
    %cst_26 = arith.constant 0.000000e+00 : f32
    %76 = vector.broadcast %cst_26 : f32 to vector<8x8x15xf32>
    %77 = arith.maximumf %75, %76 : vector<8x8x15xf32>
    %78 = arith.truncf %18 : vector<8x32xf32> to vector<8x32xbf16>
    %c0_27 = arith.constant 0 : index
    %c0_28 = arith.constant 0 : index
    %79 = vector.load %arg12[%c0_27, %c0_28] : memref<120x32xf32, #tpu.memory_space<vmem>>, vector<120x32xf32>
    %80 = arith.truncf %79 : vector<120x32xf32> to vector<120x32xbf16>
    %cst_29 = arith.constant dense<0.000000e+00> : vector<8x120xf32>
    %81 = tpu.matmul %78, %80, %cst_29 {dimension_numbers = #tpu.dot_dimension_numbers<[1], [1], [0], [0], [0, 0, 1, 0], [], []>} : vector<8x32xbf16>, vector<120x32xbf16>, vector<8x120xf32> -> vector<8x120xf32>
    %c0_30 = arith.constant 0 : index
    %c0_31 = arith.constant 0 : index
    %82 = vector.load %arg13[%c0_30, %c0_31] : memref<1x120xf32, #tpu.memory_space<vmem>>, vector<1x120xf32>
    %83 = vector.broadcast %82 : vector<1x120xf32> to vector<8x120xf32>
    %84 = arith.addf %81, %83 : vector<8x120xf32>
    %cst_32 = arith.constant 0.000000e+00 : f32
    %85 = vector.broadcast %cst_32 : f32 to vector<8x120xf32>
    %86 = arith.maximumf %84, %85 : vector<8x120xf32>
    %87 = arith.truncf %86 : vector<8x120xf32> to vector<8x120xbf16>
    %c0_33 = arith.constant 0 : index
    %c0_34 = arith.constant 0 : index
    %88 = vector.load %arg14[%c0_33, %c0_34] : memref<960x120xf32, #tpu.memory_space<vmem>>, vector<960x120xf32>
    %89 = arith.truncf %88 : vector<960x120xf32> to vector<960x120xbf16>
    %cst_35 = arith.constant dense<0.000000e+00> : vector<8x960xf32>
    %90 = tpu.matmul %87, %89, %cst_35 {dimension_numbers = #tpu.dot_dimension_numbers<[1], [1], [0], [0], [0, 0, 1, 0], [], []>} : vector<8x120xbf16>, vector<960x120xbf16>, vector<8x960xf32> -> vector<8x960xf32>
    %c0_36 = arith.constant 0 : index
    %c0_37 = arith.constant 0 : index
    %91 = vector.load %arg15[%c0_36, %c0_37] : memref<1x960xf32, #tpu.memory_space<vmem>>, vector<1x960xf32>
    %92 = vector.broadcast %91 : vector<1x960xf32> to vector<8x960xf32>
    %93 = arith.addf %90, %92 : vector<8x960xf32>
    %94 = vector.extract_strided_slice %93 {offsets = [0, 0], sizes = [8, 120], strides = [1, 1]} : vector<8x960xf32> to vector<8x120xf32>
    %95 = vector.shape_cast %94 : vector<8x120xf32> to vector<8x1x120xf32>
    %96 = vector.extract_strided_slice %93 {offsets = [0, 120], sizes = [8, 120], strides = [1, 1]} : vector<8x960xf32> to vector<8x120xf32>
    %97 = vector.shape_cast %96 : vector<8x120xf32> to vector<8x1x120xf32>
    %98 = vector.extract_strided_slice %93 {offsets = [0, 240], sizes = [8, 120], strides = [1, 1]} : vector<8x960xf32> to vector<8x120xf32>
    %99 = vector.shape_cast %98 : vector<8x120xf32> to vector<8x1x120xf32>
    %100 = vector.extract_strided_slice %93 {offsets = [0, 360], sizes = [8, 120], strides = [1, 1]} : vector<8x960xf32> to vector<8x120xf32>
    %101 = vector.shape_cast %100 : vector<8x120xf32> to vector<8x1x120xf32>
    %102 = vector.extract_strided_slice %93 {offsets = [0, 480], sizes = [8, 120], strides = [1, 1]} : vector<8x960xf32> to vector<8x120xf32>
    %103 = vector.shape_cast %102 : vector<8x120xf32> to vector<8x1x120xf32>
    %104 = vector.extract_strided_slice %93 {offsets = [0, 600], sizes = [8, 120], strides = [1, 1]} : vector<8x960xf32> to vector<8x120xf32>
    %105 = vector.shape_cast %104 : vector<8x120xf32> to vector<8x1x120xf32>
    %106 = vector.extract_strided_slice %93 {offsets = [0, 720], sizes = [8, 120], strides = [1, 1]} : vector<8x960xf32> to vector<8x120xf32>
    %107 = vector.shape_cast %106 : vector<8x120xf32> to vector<8x1x120xf32>
    %108 = vector.extract_strided_slice %93 {offsets = [0, 840], sizes = [8, 120], strides = [1, 1]} : vector<8x960xf32> to vector<8x120xf32>
    %109 = vector.shape_cast %108 : vector<8x120xf32> to vector<8x1x120xf32>
    %110 = tpu.concatenate %95, %97, %99, %101, %103, %105, %107, %109 in 1 : vector<8x1x120xf32>, vector<8x1x120xf32>, vector<8x1x120xf32>, vector<8x1x120xf32>, vector<8x1x120xf32>, vector<8x1x120xf32>, vector<8x1x120xf32>, vector<8x1x120xf32> -> vector<8x8x120xf32>
    %111 = vector.extract_strided_slice %77 {offsets = [0, 0, 8], sizes = [8, 8, 7], strides = [1, 1, 1]} : vector<8x8x15xf32> to vector<8x8x7xf32>
    %112 = vector.extract_strided_slice %77 {offsets = [0, 0, 0], sizes = [8, 8, 7], strides = [1, 1, 1]} : vector<8x8x15xf32> to vector<8x8x7xf32>
    %113 = tpu.concatenate %111, %77, %112 in 2 : vector<8x8x7xf32>, vector<8x8x15xf32>, vector<8x8x7xf32> -> vector<8x8x29xf32>
    %114 = vector.extract_strided_slice %113 {offsets = [0, 0, 0], sizes = [8, 8, 15], strides = [1, 1, 1]} : vector<8x8x29xf32> to vector<8x8x15xf32>
    %115 = vector.extract_strided_slice %113 {offsets = [0, 0, 1], sizes = [8, 8, 15], strides = [1, 1, 1]} : vector<8x8x29xf32> to vector<8x8x15xf32>
    %116 = vector.extract_strided_slice %113 {offsets = [0, 0, 2], sizes = [8, 8, 15], strides = [1, 1, 1]} : vector<8x8x29xf32> to vector<8x8x15xf32>
    %117 = vector.extract_strided_slice %113 {offsets = [0, 0, 3], sizes = [8, 8, 15], strides = [1, 1, 1]} : vector<8x8x29xf32> to vector<8x8x15xf32>
    %118 = vector.extract_strided_slice %113 {offsets = [0, 0, 4], sizes = [8, 8, 15], strides = [1, 1, 1]} : vector<8x8x29xf32> to vector<8x8x15xf32>
    %119 = vector.extract_strided_slice %113 {offsets = [0, 0, 5], sizes = [8, 8, 15], strides = [1, 1, 1]} : vector<8x8x29xf32> to vector<8x8x15xf32>
    %120 = vector.extract_strided_slice %113 {offsets = [0, 0, 6], sizes = [8, 8, 15], strides = [1, 1, 1]} : vector<8x8x29xf32> to vector<8x8x15xf32>
    %121 = vector.extract_strided_slice %113 {offsets = [0, 0, 7], sizes = [8, 8, 15], strides = [1, 1, 1]} : vector<8x8x29xf32> to vector<8x8x15xf32>
    %122 = vector.extract_strided_slice %113 {offsets = [0, 0, 8], sizes = [8, 8, 15], strides = [1, 1, 1]} : vector<8x8x29xf32> to vector<8x8x15xf32>
    %123 = vector.extract_strided_slice %113 {offsets = [0, 0, 9], sizes = [8, 8, 15], strides = [1, 1, 1]} : vector<8x8x29xf32> to vector<8x8x15xf32>
    %124 = vector.extract_strided_slice %113 {offsets = [0, 0, 10], sizes = [8, 8, 15], strides = [1, 1, 1]} : vector<8x8x29xf32> to vector<8x8x15xf32>
    %125 = vector.extract_strided_slice %113 {offsets = [0, 0, 11], sizes = [8, 8, 15], strides = [1, 1, 1]} : vector<8x8x29xf32> to vector<8x8x15xf32>
    %126 = vector.extract_strided_slice %113 {offsets = [0, 0, 12], sizes = [8, 8, 15], strides = [1, 1, 1]} : vector<8x8x29xf32> to vector<8x8x15xf32>
    %127 = vector.extract_strided_slice %113 {offsets = [0, 0, 13], sizes = [8, 8, 15], strides = [1, 1, 1]} : vector<8x8x29xf32> to vector<8x8x15xf32>
    %128 = vector.extract_strided_slice %113 {offsets = [0, 0, 14], sizes = [8, 8, 15], strides = [1, 1, 1]} : vector<8x8x29xf32> to vector<8x8x15xf32>
    %129 = tpu.concatenate %114, %115, %116, %117, %118, %119, %120, %121, %122, %123, %124, %125, %126, %127, %128 in 1 : vector<8x8x15xf32>, vector<8x8x15xf32>, vector<8x8x15xf32>, vector<8x8x15xf32>, vector<8x8x15xf32>, vector<8x8x15xf32>, vector<8x8x15xf32>, vector<8x8x15xf32>, vector<8x8x15xf32>, vector<8x8x15xf32>, vector<8x8x15xf32>, vector<8x8x15xf32>, vector<8x8x15xf32>, vector<8x8x15xf32>, vector<8x8x15xf32> -> vector<8x120x15xf32>
    %130 = arith.truncf %110 : vector<8x8x120xf32> to vector<8x8x120xbf16>
    %131 = arith.truncf %129 : vector<8x120x15xf32> to vector<8x120x15xbf16>
    %cst_38 = arith.constant dense<0.000000e+00> : vector<8x8x15xf32>
    %132 = tpu.matmul %130, %131, %cst_38 {dimension_numbers = #tpu.dot_dimension_numbers<[2], [1], [1], [2], [0, 0, 0, 1, 1, 2], [0], [0]>} : vector<8x8x120xbf16>, vector<8x120x15xbf16>, vector<8x8x15xf32> -> vector<8x8x15xf32>
    %cst_39 = arith.constant 0.000000e+00 : f32
    %133 = vector.broadcast %cst_39 : f32 to vector<8x8x15xf32>
    %134 = arith.maximumf %132, %133 : vector<8x8x15xf32>
    %135 = arith.truncf %18 : vector<8x32xf32> to vector<8x32xbf16>
    %c0_40 = arith.constant 0 : index
    %c0_41 = arith.constant 0 : index
    %136 = vector.load %arg16[%c0_40, %c0_41] : memref<120x32xf32, #tpu.memory_space<vmem>>, vector<120x32xf32>
    %137 = arith.truncf %136 : vector<120x32xf32> to vector<120x32xbf16>
    %cst_42 = arith.constant dense<0.000000e+00> : vector<8x120xf32>
    %138 = tpu.matmul %135, %137, %cst_42 {dimension_numbers = #tpu.dot_dimension_numbers<[1], [1], [0], [0], [0, 0, 1, 0], [], []>} : vector<8x32xbf16>, vector<120x32xbf16>, vector<8x120xf32> -> vector<8x120xf32>
    %c0_43 = arith.constant 0 : index
    %c0_44 = arith.constant 0 : index
    %139 = vector.load %arg17[%c0_43, %c0_44] : memref<1x120xf32, #tpu.memory_space<vmem>>, vector<1x120xf32>
    %140 = vector.broadcast %139 : vector<1x120xf32> to vector<8x120xf32>
    %141 = arith.addf %138, %140 : vector<8x120xf32>
    %cst_45 = arith.constant 0.000000e+00 : f32
    %142 = vector.broadcast %cst_45 : f32 to vector<8x120xf32>
    %143 = arith.maximumf %141, %142 : vector<8x120xf32>
    %144 = arith.truncf %143 : vector<8x120xf32> to vector<8x120xbf16>
    %c0_46 = arith.constant 0 : index
    %c0_47 = arith.constant 0 : index
    %145 = vector.load %arg18[%c0_46, %c0_47] : memref<960x120xf32, #tpu.memory_space<vmem>>, vector<960x120xf32>
    %146 = arith.truncf %145 : vector<960x120xf32> to vector<960x120xbf16>
    %cst_48 = arith.constant dense<0.000000e+00> : vector<8x960xf32>
    %147 = tpu.matmul %144, %146, %cst_48 {dimension_numbers = #tpu.dot_dimension_numbers<[1], [1], [0], [0], [0, 0, 1, 0], [], []>} : vector<8x120xbf16>, vector<960x120xbf16>, vector<8x960xf32> -> vector<8x960xf32>
    %c0_49 = arith.constant 0 : index
    %c0_50 = arith.constant 0 : index
    %148 = vector.load %arg19[%c0_49, %c0_50] : memref<1x960xf32, #tpu.memory_space<vmem>>, vector<1x960xf32>
    %149 = vector.broadcast %148 : vector<1x960xf32> to vector<8x960xf32>
    %150 = arith.addf %147, %149 : vector<8x960xf32>
    %151 = vector.extract_strided_slice %150 {offsets = [0, 0], sizes = [8, 120], strides = [1, 1]} : vector<8x960xf32> to vector<8x120xf32>
    %152 = vector.shape_cast %151 : vector<8x120xf32> to vector<8x1x120xf32>
    %153 = vector.extract_strided_slice %150 {offsets = [0, 120], sizes = [8, 120], strides = [1, 1]} : vector<8x960xf32> to vector<8x120xf32>
    %154 = vector.shape_cast %153 : vector<8x120xf32> to vector<8x1x120xf32>
    %155 = vector.extract_strided_slice %150 {offsets = [0, 240], sizes = [8, 120], strides = [1, 1]} : vector<8x960xf32> to vector<8x120xf32>
    %156 = vector.shape_cast %155 : vector<8x120xf32> to vector<8x1x120xf32>
    %157 = vector.extract_strided_slice %150 {offsets = [0, 360], sizes = [8, 120], strides = [1, 1]} : vector<8x960xf32> to vector<8x120xf32>
    %158 = vector.shape_cast %157 : vector<8x120xf32> to vector<8x1x120xf32>
    %159 = vector.extract_strided_slice %150 {offsets = [0, 480], sizes = [8, 120], strides = [1, 1]} : vector<8x960xf32> to vector<8x120xf32>
    %160 = vector.shape_cast %159 : vector<8x120xf32> to vector<8x1x120xf32>
    %161 = vector.extract_strided_slice %150 {offsets = [0, 600], sizes = [8, 120], strides = [1, 1]} : vector<8x960xf32> to vector<8x120xf32>
    %162 = vector.shape_cast %161 : vector<8x120xf32> to vector<8x1x120xf32>
    %163 = vector.extract_strided_slice %150 {offsets = [0, 720], sizes = [8, 120], strides = [1, 1]} : vector<8x960xf32> to vector<8x120xf32>
    %164 = vector.shape_cast %163 : vector<8x120xf32> to vector<8x1x120xf32>
    %165 = vector.extract_strided_slice %150 {offsets = [0, 840], sizes = [8, 120], strides = [1, 1]} : vector<8x960xf32> to vector<8x120xf32>
    %166 = vector.shape_cast %165 : vector<8x120xf32> to vector<8x1x120xf32>
    %167 = tpu.concatenate %152, %154, %156, %158, %160, %162, %164, %166 in 1 : vector<8x1x120xf32>, vector<8x1x120xf32>, vector<8x1x120xf32>, vector<8x1x120xf32>, vector<8x1x120xf32>, vector<8x1x120xf32>, vector<8x1x120xf32>, vector<8x1x120xf32> -> vector<8x8x120xf32>
    %168 = vector.extract_strided_slice %134 {offsets = [0, 0, 8], sizes = [8, 8, 7], strides = [1, 1, 1]} : vector<8x8x15xf32> to vector<8x8x7xf32>
    %169 = vector.extract_strided_slice %134 {offsets = [0, 0, 0], sizes = [8, 8, 7], strides = [1, 1, 1]} : vector<8x8x15xf32> to vector<8x8x7xf32>
    %170 = tpu.concatenate %168, %134, %169 in 2 : vector<8x8x7xf32>, vector<8x8x15xf32>, vector<8x8x7xf32> -> vector<8x8x29xf32>
    %171 = vector.extract_strided_slice %170 {offsets = [0, 0, 0], sizes = [8, 8, 15], strides = [1, 1, 1]} : vector<8x8x29xf32> to vector<8x8x15xf32>
    %172 = vector.extract_strided_slice %170 {offsets = [0, 0, 1], sizes = [8, 8, 15], strides = [1, 1, 1]} : vector<8x8x29xf32> to vector<8x8x15xf32>
    %173 = vector.extract_strided_slice %170 {offsets = [0, 0, 2], sizes = [8, 8, 15], strides = [1, 1, 1]} : vector<8x8x29xf32> to vector<8x8x15xf32>
    %174 = vector.extract_strided_slice %170 {offsets = [0, 0, 3], sizes = [8, 8, 15], strides = [1, 1, 1]} : vector<8x8x29xf32> to vector<8x8x15xf32>
    %175 = vector.extract_strided_slice %170 {offsets = [0, 0, 4], sizes = [8, 8, 15], strides = [1, 1, 1]} : vector<8x8x29xf32> to vector<8x8x15xf32>
    %176 = vector.extract_strided_slice %170 {offsets = [0, 0, 5], sizes = [8, 8, 15], strides = [1, 1, 1]} : vector<8x8x29xf32> to vector<8x8x15xf32>
    %177 = vector.extract_strided_slice %170 {offsets = [0, 0, 6], sizes = [8, 8, 15], strides = [1, 1, 1]} : vector<8x8x29xf32> to vector<8x8x15xf32>
    %178 = vector.extract_strided_slice %170 {offsets = [0, 0, 7], sizes = [8, 8, 15], strides = [1, 1, 1]} : vector<8x8x29xf32> to vector<8x8x15xf32>
    %179 = vector.extract_strided_slice %170 {offsets = [0, 0, 8], sizes = [8, 8, 15], strides = [1, 1, 1]} : vector<8x8x29xf32> to vector<8x8x15xf32>
    %180 = vector.extract_strided_slice %170 {offsets = [0, 0, 9], sizes = [8, 8, 15], strides = [1, 1, 1]} : vector<8x8x29xf32> to vector<8x8x15xf32>
    %181 = vector.extract_strided_slice %170 {offsets = [0, 0, 10], sizes = [8, 8, 15], strides = [1, 1, 1]} : vector<8x8x29xf32> to vector<8x8x15xf32>
    %182 = vector.extract_strided_slice %170 {offsets = [0, 0, 11], sizes = [8, 8, 15], strides = [1, 1, 1]} : vector<8x8x29xf32> to vector<8x8x15xf32>
    %183 = vector.extract_strided_slice %170 {offsets = [0, 0, 12], sizes = [8, 8, 15], strides = [1, 1, 1]} : vector<8x8x29xf32> to vector<8x8x15xf32>
    %184 = vector.extract_strided_slice %170 {offsets = [0, 0, 13], sizes = [8, 8, 15], strides = [1, 1, 1]} : vector<8x8x29xf32> to vector<8x8x15xf32>
    %185 = vector.extract_strided_slice %170 {offsets = [0, 0, 14], sizes = [8, 8, 15], strides = [1, 1, 1]} : vector<8x8x29xf32> to vector<8x8x15xf32>
    %186 = tpu.concatenate %171, %172, %173, %174, %175, %176, %177, %178, %179, %180, %181, %182, %183, %184, %185 in 1 : vector<8x8x15xf32>, vector<8x8x15xf32>, vector<8x8x15xf32>, vector<8x8x15xf32>, vector<8x8x15xf32>, vector<8x8x15xf32>, vector<8x8x15xf32>, vector<8x8x15xf32>, vector<8x8x15xf32>, vector<8x8x15xf32>, vector<8x8x15xf32>, vector<8x8x15xf32>, vector<8x8x15xf32>, vector<8x8x15xf32>, vector<8x8x15xf32> -> vector<8x120x15xf32>
    %187 = arith.truncf %167 : vector<8x8x120xf32> to vector<8x8x120xbf16>
    %188 = arith.truncf %186 : vector<8x120x15xf32> to vector<8x120x15xbf16>
    %cst_51 = arith.constant dense<0.000000e+00> : vector<8x8x15xf32>
    %189 = tpu.matmul %187, %188, %cst_51 {dimension_numbers = #tpu.dot_dimension_numbers<[2], [1], [1], [2], [0, 0, 0, 1, 1, 2], [0], [0]>} : vector<8x8x120xbf16>, vector<8x120x15xbf16>, vector<8x8x15xf32> -> vector<8x8x15xf32>
    %cst_52 = arith.constant 0.000000e+00 : f32
    %190 = vector.broadcast %cst_52 : f32 to vector<8x8x15xf32>
    %191 = arith.maximumf %189, %190 : vector<8x8x15xf32>
    %192 = arith.truncf %18 : vector<8x32xf32> to vector<8x32xbf16>
    %c0_53 = arith.constant 0 : index
    %c0_54 = arith.constant 0 : index
    %193 = vector.load %arg20[%c0_53, %c0_54] : memref<120x32xf32, #tpu.memory_space<vmem>>, vector<120x32xf32>
    %194 = arith.truncf %193 : vector<120x32xf32> to vector<120x32xbf16>
    %cst_55 = arith.constant dense<0.000000e+00> : vector<8x120xf32>
    %195 = tpu.matmul %192, %194, %cst_55 {dimension_numbers = #tpu.dot_dimension_numbers<[1], [1], [0], [0], [0, 0, 1, 0], [], []>} : vector<8x32xbf16>, vector<120x32xbf16>, vector<8x120xf32> -> vector<8x120xf32>
    %c0_56 = arith.constant 0 : index
    %c0_57 = arith.constant 0 : index
    %196 = vector.load %arg21[%c0_56, %c0_57] : memref<1x120xf32, #tpu.memory_space<vmem>>, vector<1x120xf32>
    %197 = vector.broadcast %196 : vector<1x120xf32> to vector<8x120xf32>
    %198 = arith.addf %195, %197 : vector<8x120xf32>
    %cst_58 = arith.constant 0.000000e+00 : f32
    %199 = vector.broadcast %cst_58 : f32 to vector<8x120xf32>
    %200 = arith.maximumf %198, %199 : vector<8x120xf32>
    %201 = arith.truncf %200 : vector<8x120xf32> to vector<8x120xbf16>
    %c0_59 = arith.constant 0 : index
    %c0_60 = arith.constant 0 : index
    %202 = vector.load %arg22[%c0_59, %c0_60] : memref<120x120xf32, #tpu.memory_space<vmem>>, vector<120x120xf32>
    %203 = arith.truncf %202 : vector<120x120xf32> to vector<120x120xbf16>
    %cst_61 = arith.constant dense<0.000000e+00> : vector<8x120xf32>
    %204 = tpu.matmul %201, %203, %cst_61 {dimension_numbers = #tpu.dot_dimension_numbers<[1], [1], [0], [0], [0, 0, 1, 0], [], []>} : vector<8x120xbf16>, vector<120x120xbf16>, vector<8x120xf32> -> vector<8x120xf32>
    %c0_62 = arith.constant 0 : index
    %c0_63 = arith.constant 0 : index
    %205 = vector.load %arg23[%c0_62, %c0_63] : memref<1x120xf32, #tpu.memory_space<vmem>>, vector<1x120xf32>
    %206 = vector.broadcast %205 : vector<1x120xf32> to vector<8x120xf32>
    %207 = arith.addf %204, %206 : vector<8x120xf32>
    %208 = vector.shape_cast %207 : vector<8x120xf32> to vector<8x1x120xf32>
    %209 = vector.extract_strided_slice %191 {offsets = [0, 0, 8], sizes = [8, 8, 7], strides = [1, 1, 1]} : vector<8x8x15xf32> to vector<8x8x7xf32>
    %210 = vector.extract_strided_slice %191 {offsets = [0, 0, 0], sizes = [8, 8, 7], strides = [1, 1, 1]} : vector<8x8x15xf32> to vector<8x8x7xf32>
    %211 = tpu.concatenate %209, %191, %210 in 2 : vector<8x8x7xf32>, vector<8x8x15xf32>, vector<8x8x7xf32> -> vector<8x8x29xf32>
    %212 = vector.extract_strided_slice %211 {offsets = [0, 0, 0], sizes = [8, 8, 15], strides = [1, 1, 1]} : vector<8x8x29xf32> to vector<8x8x15xf32>
    %213 = vector.extract_strided_slice %211 {offsets = [0, 0, 1], sizes = [8, 8, 15], strides = [1, 1, 1]} : vector<8x8x29xf32> to vector<8x8x15xf32>
    %214 = vector.extract_strided_slice %211 {offsets = [0, 0, 2], sizes = [8, 8, 15], strides = [1, 1, 1]} : vector<8x8x29xf32> to vector<8x8x15xf32>
    %215 = vector.extract_strided_slice %211 {offsets = [0, 0, 3], sizes = [8, 8, 15], strides = [1, 1, 1]} : vector<8x8x29xf32> to vector<8x8x15xf32>
    %216 = vector.extract_strided_slice %211 {offsets = [0, 0, 4], sizes = [8, 8, 15], strides = [1, 1, 1]} : vector<8x8x29xf32> to vector<8x8x15xf32>
    %217 = vector.extract_strided_slice %211 {offsets = [0, 0, 5], sizes = [8, 8, 15], strides = [1, 1, 1]} : vector<8x8x29xf32> to vector<8x8x15xf32>
    %218 = vector.extract_strided_slice %211 {offsets = [0, 0, 6], sizes = [8, 8, 15], strides = [1, 1, 1]} : vector<8x8x29xf32> to vector<8x8x15xf32>
    %219 = vector.extract_strided_slice %211 {offsets = [0, 0, 7], sizes = [8, 8, 15], strides = [1, 1, 1]} : vector<8x8x29xf32> to vector<8x8x15xf32>
    %220 = vector.extract_strided_slice %211 {offsets = [0, 0, 8], sizes = [8, 8, 15], strides = [1, 1, 1]} : vector<8x8x29xf32> to vector<8x8x15xf32>
    %221 = vector.extract_strided_slice %211 {offsets = [0, 0, 9], sizes = [8, 8, 15], strides = [1, 1, 1]} : vector<8x8x29xf32> to vector<8x8x15xf32>
    %222 = vector.extract_strided_slice %211 {offsets = [0, 0, 10], sizes = [8, 8, 15], strides = [1, 1, 1]} : vector<8x8x29xf32> to vector<8x8x15xf32>
    %223 = vector.extract_strided_slice %211 {offsets = [0, 0, 11], sizes = [8, 8, 15], strides = [1, 1, 1]} : vector<8x8x29xf32> to vector<8x8x15xf32>
    %224 = vector.extract_strided_slice %211 {offsets = [0, 0, 12], sizes = [8, 8, 15], strides = [1, 1, 1]} : vector<8x8x29xf32> to vector<8x8x15xf32>
    %225 = vector.extract_strided_slice %211 {offsets = [0, 0, 13], sizes = [8, 8, 15], strides = [1, 1, 1]} : vector<8x8x29xf32> to vector<8x8x15xf32>
    %226 = vector.extract_strided_slice %211 {offsets = [0, 0, 14], sizes = [8, 8, 15], strides = [1, 1, 1]} : vector<8x8x29xf32> to vector<8x8x15xf32>
    %227 = tpu.concatenate %212, %213, %214, %215, %216, %217, %218, %219, %220, %221, %222, %223, %224, %225, %226 in 1 : vector<8x8x15xf32>, vector<8x8x15xf32>, vector<8x8x15xf32>, vector<8x8x15xf32>, vector<8x8x15xf32>, vector<8x8x15xf32>, vector<8x8x15xf32>, vector<8x8x15xf32>, vector<8x8x15xf32>, vector<8x8x15xf32>, vector<8x8x15xf32>, vector<8x8x15xf32>, vector<8x8x15xf32>, vector<8x8x15xf32>, vector<8x8x15xf32> -> vector<8x120x15xf32>
    %228 = arith.truncf %208 : vector<8x1x120xf32> to vector<8x1x120xbf16>
    %229 = arith.truncf %227 : vector<8x120x15xf32> to vector<8x120x15xbf16>
    %cst_64 = arith.constant dense<0.000000e+00> : vector<8x1x15xf32>
    %230 = tpu.matmul %228, %229, %cst_64 {dimension_numbers = #tpu.dot_dimension_numbers<[2], [1], [1], [2], [0, 0, 0, 1, 1, 2], [0], [0]>} : vector<8x1x120xbf16>, vector<8x120x15xbf16>, vector<8x1x15xf32> -> vector<8x1x15xf32>
    %231 = vector.shape_cast %230 : vector<8x1x15xf32> to vector<8x15xf32>
    %c0_65 = arith.constant 0 : index
    %c0_66 = arith.constant 0 : index
    %232 = vector.load %arg3[%c0_65, %c0_66] : memref<8x1xf32, #tpu.memory_space<vmem>>, vector<8x1xf32>
    %233 = vector.broadcast %232 : vector<8x1xf32> to vector<8x15xf32>
    %234 = arith.mulf %231, %233 : vector<8x15xf32>
    %c0_67 = arith.constant 0 : index
    %c0_68 = arith.constant 0 : index
    %235 = vector.load %arg24[%c0_67, %c0_68] : memref<8x15xf32, #tpu.memory_space<vmem>>, vector<8x15xf32>
    tpu.vector_store %arg24[%c0_67, %c0_68], %234 {strides = array<i32>} : memref<8x15xf32, #tpu.memory_space<vmem>>, vector<8x15xf32>,
    return
  }
  func.func @transform_0(%arg0: i32) -> (i32, i32) {
    %c0_i32 = arith.constant 0 : i32
    %c0_i32_0 = arith.constant 0 : i32
    return %arg0, %c0_i32 : i32, i32
  }
  func.func @transform_1(%arg0: i32) -> (i32, i32) {
    %c0_i32 = arith.constant 0 : i32
    %c0_i32_0 = arith.constant 0 : i32
    return %arg0, %c0_i32 : i32, i32
  }
  func.func @transform_2(%arg0: i32) -> (i32, i32) {
    %c0_i32 = arith.constant 0 : i32
    %c0_i32_0 = arith.constant 0 : i32
    return %arg0, %c0_i32 : i32, i32
  }
  func.func @transform_3(%arg0: i32) -> (i32, i32) {
    %c0_i32 = arith.constant 0 : i32
    %c0_i32_0 = arith.constant 0 : i32
    %c0_i32_1 = arith.constant 0 : i32
    return %c0_i32, %c0_i32_0 : i32, i32
  }
  func.func @transform_4(%arg0: i32) -> (i32, i32) {
    %c0_i32 = arith.constant 0 : i32
    %c0_i32_0 = arith.constant 0 : i32
    %c0_i32_1 = arith.constant 0 : i32
    return %c0_i32, %c0_i32_0 : i32, i32
  }
  func.func @transform_5(%arg0: i32) -> (i32, i32) {
    %c0_i32 = arith.constant 0 : i32
    %c0_i32_0 = arith.constant 0 : i32
    %c0_i32_1 = arith.constant 0 : i32
    return %c0_i32, %c0_i32_0 : i32, i32
  }
  func.func @transform_6(%arg0: i32) -> (i32, i32) {
    %c0_i32 = arith.constant 0 : i32
    %c0_i32_0 = arith.constant 0 : i32
    %c0_i32_1 = arith.constant 0 : i32
    return %c0_i32, %c0_i32_0 : i32, i32
  }
  func.func @transform_7(%arg0: i32) -> (i32, i32) {
    %c0_i32 = arith.constant 0 : i32
    %c0_i32_0 = arith.constant 0 : i32
    %c0_i32_1 = arith.constant 0 : i32
    return %c0_i32, %c0_i32_0 : i32, i32
  }
  func.func @transform_8(%arg0: i32) -> (i32, i32) {
    %c0_i32 = arith.constant 0 : i32
    %c0_i32_0 = arith.constant 0 : i32
    %c0_i32_1 = arith.constant 0 : i32
    return %c0_i32, %c0_i32_0 : i32, i32
  }
  func.func @transform_9(%arg0: i32) -> (i32, i32) {
    %c0_i32 = arith.constant 0 : i32
    %c0_i32_0 = arith.constant 0 : i32
    %c0_i32_1 = arith.constant 0 : i32
    return %c0_i32, %c0_i32_0 : i32, i32
  }
  func.func @transform_10(%arg0: i32) -> (i32, i32) {
    %c0_i32 = arith.constant 0 : i32
    %c0_i32_0 = arith.constant 0 : i32
    %c0_i32_1 = arith.constant 0 : i32
    return %c0_i32, %c0_i32_0 : i32, i32
  }
  func.func @transform_11(%arg0: i32) -> (i32, i32) {
    %c0_i32 = arith.constant 0 : i32
    %c0_i32_0 = arith.constant 0 : i32
    %c0_i32_1 = arith.constant 0 : i32
    return %c0_i32, %c0_i32_0 : i32, i32
  }
  func.func @transform_12(%arg0: i32) -> (i32, i32) {
    %c0_i32 = arith.constant 0 : i32
    %c0_i32_0 = arith.constant 0 : i32
    %c0_i32_1 = arith.constant 0 : i32
    return %c0_i32, %c0_i32_0 : i32, i32
  }
  func.func @transform_13(%arg0: i32) -> (i32, i32) {
    %c0_i32 = arith.constant 0 : i32
    %c0_i32_0 = arith.constant 0 : i32
    %c0_i32_1 = arith.constant 0 : i32
    return %c0_i32, %c0_i32_0 : i32, i32
  }
  func.func @transform_14(%arg0: i32) -> (i32, i32) {
    %c0_i32 = arith.constant 0 : i32
    %c0_i32_0 = arith.constant 0 : i32
    %c0_i32_1 = arith.constant 0 : i32
    return %c0_i32, %c0_i32_0 : i32, i32
  }
  func.func @transform_15(%arg0: i32) -> (i32, i32) {
    %c0_i32 = arith.constant 0 : i32
    %c0_i32_0 = arith.constant 0 : i32
    %c0_i32_1 = arith.constant 0 : i32
    return %c0_i32, %c0_i32_0 : i32, i32
  }
  func.func @transform_16(%arg0: i32) -> (i32, i32) {
    %c0_i32 = arith.constant 0 : i32
    %c0_i32_0 = arith.constant 0 : i32
    %c0_i32_1 = arith.constant 0 : i32
    return %c0_i32, %c0_i32_0 : i32, i32
  }
  func.func @transform_17(%arg0: i32) -> (i32, i32) {
    %c0_i32 = arith.constant 0 : i32
    %c0_i32_0 = arith.constant 0 : i32
    %c0_i32_1 = arith.constant 0 : i32
    return %c0_i32, %c0_i32_0 : i32, i32
  }
  func.func @transform_18(%arg0: i32) -> (i32, i32) {
    %c0_i32 = arith.constant 0 : i32
    %c0_i32_0 = arith.constant 0 : i32
    %c0_i32_1 = arith.constant 0 : i32
    return %c0_i32, %c0_i32_0 : i32, i32
  }
  func.func @transform_19(%arg0: i32) -> (i32, i32) {
    %c0_i32 = arith.constant 0 : i32
    %c0_i32_0 = arith.constant 0 : i32
    %c0_i32_1 = arith.constant 0 : i32
    return %c0_i32, %c0_i32_0 : i32, i32
  }
  func.func @transform_20(%arg0: i32) -> (i32, i32) {
    %c0_i32 = arith.constant 0 : i32
    %c0_i32_0 = arith.constant 0 : i32
    %c0_i32_1 = arith.constant 0 : i32
    return %c0_i32, %c0_i32_0 : i32, i32
  }
  func.func @transform_21(%arg0: i32) -> (i32, i32) {
    %c0_i32 = arith.constant 0 : i32
    %c0_i32_0 = arith.constant 0 : i32
    %c0_i32_1 = arith.constant 0 : i32
    return %c0_i32, %c0_i32_0 : i32, i32
  }
  func.func @transform_22(%arg0: i32) -> (i32, i32) {
    %c0_i32 = arith.constant 0 : i32
    %c0_i32_0 = arith.constant 0 : i32
    %c0_i32_1 = arith.constant 0 : i32
    return %c0_i32, %c0_i32_0 : i32, i32
  }
  func.func @transform_23(%arg0: i32) -> (i32, i32) {
    %c0_i32 = arith.constant 0 : i32
    %c0_i32_0 = arith.constant 0 : i32
    return %arg0, %c0_i32 : i32, i32
  }
}

</mosaic_0001>

<llo_original>
// kernel: convolutional_forward.1
$region0: #{convolutional_forward.1}
  #allocation0 [shape = 'u32[]', space=smem, size = 0x4, offset = 0x4, fixed_abs, tag = 'smem constant byte address 0x4 - core index']
  #allocation1 [shape = 'u32[144,128]{1,0:T(1,128)}', space=vmem, size = 0x12000, scoped, tag = 'internal scratch']
  %s0 = inlined_call_operand.vmem [shape: f32[16,32], index: 0, kind: input, shape index: {}]
  %s1 = inlined_call_operand.vmem [shape: f32[16,15], index: 1, kind: input, shape index: {}]
  %s2 = inlined_call_operand.vmem [shape: f32[16,1], index: 2, kind: input, shape index: {}]
  %s3 = inlined_call_operand.vmem [shape: f32[32,32], index: 3, kind: input, shape index: {}]
  %s4 = inlined_call_operand.vmem [shape: f32[1,32], index: 4, kind: input, shape index: {}]
  %s5 = inlined_call_operand.vmem [shape: f32[32,32], index: 5, kind: input, shape index: {}]
  %s6 = inlined_call_operand.vmem [shape: f32[1,32], index: 6, kind: input, shape index: {}]
  %s7 = inlined_call_operand.vmem [shape: f32[120,32], index: 7, kind: input, shape index: {}]
  %s8 = inlined_call_operand.vmem [shape: f32[1,120], index: 8, kind: input, shape index: {}]
  %s9 = inlined_call_operand.vmem [shape: f32[120,120], index: 9, kind: input, shape index: {}]
  %s10 = inlined_call_operand.vmem [shape: f32[1,120], index: 10, kind: input, shape index: {}]
  %s11 = inlined_call_operand.vmem [shape: f32[120,32], index: 11, kind: input, shape index: {}]
  %s12 = inlined_call_operand.vmem [shape: f32[1,120], index: 12, kind: input, shape index: {}]
  %s13 = inlined_call_operand.hbm [shape: f32[960,120], index: 13, kind: input, shape index: {}]
  %s14 = inlined_call_operand.vmem [shape: f32[1,960], index: 14, kind: input, shape index: {}]
  %s15 = inlined_call_operand.vmem [shape: f32[120,32], index: 15, kind: input, shape index: {}]
  %s16 = inlined_call_operand.vmem [shape: f32[1,120], index: 16, kind: input, shape index: {}]
  %s17 = inlined_call_operand.hbm [shape: f32[960,120], index: 17, kind: input, shape index: {}]
  %s18 = inlined_call_operand.vmem [shape: f32[1,960], index: 18, kind: input, shape index: {}]
  %s19 = inlined_call_operand.vmem [shape: f32[120,32], index: 19, kind: input, shape index: {}]
  %s20 = inlined_call_operand.vmem [shape: f32[1,120], index: 20, kind: input, shape index: {}]
  %s21 = inlined_call_operand.vmem [shape: f32[120,120], index: 21, kind: input, shape index: {}]
  %s22 = inlined_call_operand.vmem [shape: f32[1,120], index: 22, kind: input, shape index: {}]
  %s23 = inlined_call_operand.hbm [shape: f32[16,15], index: 23, kind: output, shape index: {}]
  %s24 = sld [smem:[#allocation0]]
  $region133: #{convolutional_forward.1} parent=0
    _
  %s26 = ssub.s32 1, %s24
  %s27 = scalar_select 0, %s26, %s24
  $region1: #{convolutional_forward.1} parent=0
    #allocation2 [shape = 'u8[491520]{0}', space=vmem, size = 0x78000, scoped, tag = 'input window, operand 13, single buffered']
    #allocation3 [shape = 's32[2]{0}', space=sflag, size = 0x8, scoped, tag = 'scoped memory for convolutional_forward.1']
    #allocation4 [shape = 's32[2]{0}', space=sflag, size = 0x8, scoped, tag = 'scoped memory for convolutional_forward.1']
    #allocation5 [shape = 'u8[491520]{0}', space=vmem, size = 0x78000, scoped, tag = 'input window, operand 17, single buffered']
    #allocation6 [shape = 's32[1]{0}', space=sflag, size = 0x4, scoped, tag = 'scoped memory for convolutional_forward.1']
    #allocation7 [shape = 'u8[8192]{0}', space=vmem, size = 0x2000, scoped, tag = 'output window, operand 0']
    %28 = vsyncpa [#allocation3], 0
    %29 = vsyncpa [#allocation6], 0
    %30 = vsyncpa [#allocation4], 0
    %s31 = scalar_lea.sflag [#allocation4], 1
    %32 = vsyncpa %s31, 0
    loop: start=0, step=1, limit=4
    $region2: #{convolutional_forward.1} parent=1 // loop_pre_header
      _
    $region3: #{convolutional_forward.1} parent=1 // loop_header
      %s34 = sphi 0, %s38
      %p35 = scmp.ge.s32.totalorder %s34, 4
      %s44 = sphi 0, %s46
      %s47 = sphi 0, %s44
      %s48 = sphi 0, %s47
      %s64 = sphi 0, %s48
      %s70 = sphi 0, %s72
      %s73 = sphi 0, %s70
      %s74 = sphi 0, %s73
      %s90 = sphi 0, %s74
      %s96 = sphi 0, %s98
      %s99 = sphi 0, %s96
      %s100 = sphi 0, %s99
      %s116 = sphi 0, %s100
      %s120 = sphi 0, %s120
      %s122 = sphi 0, %s120
      %s123 = sphi 0, %s122
      %s137 = sphi 0, %s123
      %s141 = sphi 0, %s141
      %s143 = sphi 0, %s141
      %s144 = sphi 0, %s143
      %s158 = sphi 0, %s144
      %s162 = sphi 0, %s162
      %s164 = sphi 0, %s162
      %s165 = sphi 0, %s164
      %s179 = sphi 0, %s165
      %s183 = sphi 0, %s183
      %s185 = sphi 0, %s183
      %s186 = sphi 0, %s185
      %s200 = sphi 0, %s186
      %s204 = sphi 0, %s204
      %s206 = sphi 0, %s204
      %s207 = sphi 0, %s206
      %s221 = sphi 0, %s207
      %s225 = sphi 0, %s225
      %s227 = sphi 0, %s225
      %s228 = sphi 0, %s227
      %s242 = sphi 0, %s228
      %s246 = sphi 0, %s246
      %s248 = sphi 0, %s246
      %s249 = sphi 0, %s248
      %s263 = sphi 0, %s249
      %s267 = sphi 0, %s267
      %s269 = sphi 0, %s267
      %s270 = sphi 0, %s269
      %s284 = sphi 0, %s270
      %s288 = sphi 0, %s288
      %s290 = sphi 0, %s288
      %s291 = sphi 0, %s290
      %s305 = sphi 0, %s291
      %s309 = sphi 0, %s309
      %s311 = sphi 0, %s309
      %s312 = sphi 0, %s311
      %s326 = sphi 0, %s312
      %s330 = sphi 0, %s330
      %s332 = sphi 0, %s330
      %s333 = sphi 0, %s332
      %s347 = sphi 0, %s333
      %s351 = sphi 0, %s351
      %s353 = sphi 0, %s351
      %s354 = sphi 0, %s353
      %s368 = sphi 0, %s354
      %s372 = sphi 0, %s372
      %s374 = sphi 0, %s372
      %s375 = sphi 0, %s374
      %s389 = sphi 0, %s375
      %s393 = sphi 0, %s393
      %s395 = sphi 0, %s393
      %s396 = sphi 0, %s395
      %s410 = sphi 0, %s396
      %s414 = sphi 0, %s414
      %s416 = sphi 0, %s414
      %s417 = sphi 0, %s416
      %s431 = sphi 0, %s417
      %s435 = sphi 0, %s435
      %s437 = sphi 0, %s435
      %s438 = sphi 0, %s437
      %s452 = sphi 0, %s438
      %s456 = sphi 0, %s456
      %s458 = sphi 0, %s456
      %s459 = sphi 0, %s458
      %s473 = sphi 0, %s459
      %s477 = sphi 0, %s477
      %s479 = sphi 0, %s477
      %s480 = sphi 0, %s479
      %s494 = sphi 0, %s480
      %s498 = sphi 0, %s498
      %s500 = sphi 0, %s498
      %s501 = sphi 0, %s500
      %s515 = sphi 0, %s501
      %s519 = sphi 0, %s519
      %s521 = sphi 0, %s519
      %s522 = sphi 0, %s521
      %s536 = sphi 0, %s522
      %s542 = sphi 0, %s544
      %s545 = sphi 0, %s542
      %s546 = sphi 0, %s545
      %s562 = sphi 0, %s546
    $region4: #{convolutional_forward.1} parent=1 // loop_header_branch
      %37 = sbr.rel (%p35) target = $region8
    $region5: #{convolutional_forward.1} parent=1 // loop_body
      %s39 = ssub.s32 %s34, 1
      %s40 = ssub.s32 %s34, 2
      %s41 = sadd.s32 %s34, 1
      %s42 = ssub.s32 %s34, %s41
      %p43 = scmp.eq.s32.totalorder %s42, 0
      %s45 = sadd.s32 %s44, 1
      %s46 = scalar_select %p43, %s44, %s45
      %p49 = pneg %p43
      %p50 = scmp.eq.s32.totalorder %s34, 1
      %p51 = por %p49, %p50
      %p52 = scmp.ne.s32.totalorder %s44, %s47
      %p53 = scmp.eq.s32.totalorder %s34, 0
      %p54 = por %p52, %p53
      %p55 = scmp.ne.s32.totalorder %s44, %s47
      %p56 = scmp.eq.s32.totalorder %s39, 1
      %p57 = por %p55, %p56
      %p58 = scmp.ne.s32.totalorder %s47, %s48
      %p59 = scmp.eq.s32.totalorder %s39, 0
      %p60 = por %p58, %p59
      %p61 = scmp.ne.s32.totalorder %s47, %s48
      %p62 = scmp.eq.s32.totalorder %s40, 1
      %p63 = por %p61, %p62
      %p65 = scmp.ne.s32.totalorder %s48, %s64
      %p66 = scmp.eq.s32.totalorder %s40, 0
      %p67 = por %p65, %p66
      %s68 = ssub.s32 %s34, %s41
      %p69 = scmp.eq.s32.totalorder %s68, 0
      %s71 = sadd.s32 %s70, 1
      %s72 = scalar_select %p69, %s70, %s71
      %p75 = pneg %p69
      %p76 = scmp.eq.s32.totalorder %s34, 1
      %p77 = por %p75, %p76
      %p78 = scmp.ne.s32.totalorder %s70, %s73
      %p79 = scmp.eq.s32.totalorder %s34, 0
      %p80 = por %p78, %p79
      %p81 = scmp.ne.s32.totalorder %s70, %s73
      %p82 = scmp.eq.s32.totalorder %s39, 1
      %p83 = por %p81, %p82
      %p84 = scmp.ne.s32.totalorder %s73, %s74
      %p85 = scmp.eq.s32.totalorder %s39, 0
      %p86 = por %p84, %p85
      %p87 = scmp.ne.s32.totalorder %s73, %s74
      %p88 = scmp.eq.s32.totalorder %s40, 1
      %p89 = por %p87, %p88
      %p91 = scmp.ne.s32.totalorder %s74, %s90
      %p92 = scmp.eq.s32.totalorder %s40, 0
      %p93 = por %p91, %p92
      %s94 = ssub.s32 %s34, %s41
      %p95 = scmp.eq.s32.totalorder %s94, 0
      %s97 = sadd.s32 %s96, 1
      %s98 = scalar_select %p95, %s96, %s97
      %p101 = pneg %p95
      %p102 = scmp.eq.s32.totalorder %s34, 1
      %p103 = por %p101, %p102
      %p104 = scmp.ne.s32.totalorder %s96, %s99
      %p105 = scmp.eq.s32.totalorder %s34, 0
      %p106 = por %p104, %p105
      %p107 = scmp.ne.s32.totalorder %s96, %s99
      %p108 = scmp.eq.s32.totalorder %s39, 1
      %p109 = por %p107, %p108
      %p110 = scmp.ne.s32.totalorder %s99, %s100
      %p111 = scmp.eq.s32.totalorder %s39, 0
      %p112 = por %p110, %p111
      %p113 = scmp.ne.s32.totalorder %s99, %s100
      %p114 = scmp.eq.s32.totalorder %s40, 1
      %p115 = por %p113, %p114
      %p117 = scmp.ne.s32.totalorder %s100, %s116
      %p118 = scmp.eq.s32.totalorder %s40, 0
      %p119 = por %p117, %p118
      %s121 = sadd.s32 %s120, 1
      %p124 = scmp.eq.s32.totalorder %s34, 1
      %p125 = scmp.ne.s32.totalorder %s120, %s122
      %p126 = scmp.eq.s32.totalorder %s34, 0
      %p127 = por %p125, %p126
      %p128 = scmp.ne.s32.totalorder %s120, %s122
      %p129 = scmp.eq.s32.totalorder %s39, 1
      %p130 = por %p128, %p129
      %p131 = scmp.ne.s32.totalorder %s122, %s123
      %p132 = scmp.eq.s32.totalorder %s39, 0
      %p133 = por %p131, %p132
      %p134 = scmp.ne.s32.totalorder %s122, %s123
      %p135 = scmp.eq.s32.totalorder %s40, 1
      %p136 = por %p134, %p135
      %p138 = scmp.ne.s32.totalorder %s123, %s137
      %p139 = scmp.eq.s32.totalorder %s40, 0
      %p140 = por %p138, %p139
      %s142 = sadd.s32 %s141, 1
      %p145 = scmp.eq.s32.totalorder %s34, 1
      %p146 = scmp.ne.s32.totalorder %s141, %s143
      %p147 = scmp.eq.s32.totalorder %s34, 0
      %p148 = por %p146, %p147
      %p149 = scmp.ne.s32.totalorder %s141, %s143
      %p150 = scmp.eq.s32.totalorder %s39, 1
      %p151 = por %p149, %p150
      %p152 = scmp.ne.s32.totalorder %s143, %s144
      %p153 = scmp.eq.s32.totalorder %s39, 0
      %p154 = por %p152, %p153
      %p155 = scmp.ne.s32.totalorder %s143, %s144
      %p156 = scmp.eq.s32.totalorder %s40, 1
      %p157 = por %p155, %p156
      %p159 = scmp.ne.s32.totalorder %s144, %s158
      %p160 = scmp.eq.s32.totalorder %s40, 0
      %p161 = por %p159, %p160
      %s163 = sadd.s32 %s162, 1
      %p166 = scmp.eq.s32.totalorder %s34, 1
      %p167 = scmp.ne.s32.totalorder %s162, %s164
      %p168 = scmp.eq.s32.totalorder %s34, 0
      %p169 = por %p167, %p168
      %p170 = scmp.ne.s32.totalorder %s162, %s164
      %p171 = scmp.eq.s32.totalorder %s39, 1
      %p172 = por %p170, %p171
      %p173 = scmp.ne.s32.totalorder %s164, %s165
      %p174 = scmp.eq.s32.totalorder %s39, 0
      %p175 = por %p173, %p174
      %p176 = scmp.ne.s32.totalorder %s164, %s165
      %p177 = scmp.eq.s32.totalorder %s40, 1
      %p178 = por %p176, %p177
      %p180 = scmp.ne.s32.totalorder %s165, %s179
      %p181 = scmp.eq.s32.totalorder %s40, 0
      %p182 = por %p180, %p181
      %s184 = sadd.s32 %s183, 1
      %p187 = scmp.eq.s32.totalorder %s34, 1
      %p188 = scmp.ne.s32.totalorder %s183, %s185
      %p189 = scmp.eq.s32.totalorder %s34, 0
      %p190 = por %p188, %p189
      %p191 = scmp.ne.s32.totalorder %s183, %s185
      %p192 = scmp.eq.s32.totalorder %s39, 1
      %p193 = por %p191, %p192
      %p194 = scmp.ne.s32.totalorder %s185, %s186
      %p195 = scmp.eq.s32.totalorder %s39, 0
      %p196 = por %p194, %p195
      %p197 = scmp.ne.s32.totalorder %s185, %s186
      %p198 = scmp.eq.s32.totalorder %s40, 1
      %p199 = por %p197, %p198
      %p201 = scmp.ne.s32.totalorder %s186, %s200
      %p202 = scmp.eq.s32.totalorder %s40, 0
      %p203 = por %p201, %p202
      %s205 = sadd.s32 %s204, 1
      %p208 = scmp.eq.s32.totalorder %s34, 1
      %p209 = scmp.ne.s32.totalorder %s204, %s206
      %p210 = scmp.eq.s32.totalorder %s34, 0
      %p211 = por %p209, %p210
      %p212 = scmp.ne.s32.totalorder %s204, %s206
      %p213 = scmp.eq.s32.totalorder %s39, 1
      %p214 = por %p212, %p213
      %p215 = scmp.ne.s32.totalorder %s206, %s207
      %p216 = scmp.eq.s32.totalorder %s39, 0
      %p217 = por %p215, %p216
      %p218 = scmp.ne.s32.totalorder %s206, %s207
      %p219 = scmp.eq.s32.totalorder %s40, 1
      %p220 = por %p218, %p219
      %p222 = scmp.ne.s32.totalorder %s207, %s221
      %p223 = scmp.eq.s32.totalorder %s40, 0
      %p224 = por %p222, %p223
      %s226 = sadd.s32 %s225, 1
      %p229 = scmp.eq.s32.totalorder %s34, 1
      %p230 = scmp.ne.s32.totalorder %s225, %s227
      %p231 = scmp.eq.s32.totalorder %s34, 0
      %p232 = por %p230, %p231
      %p233 = scmp.ne.s32.totalorder %s225, %s227
      %p234 = scmp.eq.s32.totalorder %s39, 1
      %p235 = por %p233, %p234
      %p236 = scmp.ne.s32.totalorder %s227, %s228
      %p237 = scmp.eq.s32.totalorder %s39, 0
      %p238 = por %p236, %p237
      %p239 = scmp.ne.s32.totalorder %s227, %s228
      %p240 = scmp.eq.s32.totalorder %s40, 1
      %p241 = por %p239, %p240
      %p243 = scmp.ne.s32.totalorder %s228, %s242
      %p244 = scmp.eq.s32.totalorder %s40, 0
      %p245 = por %p243, %p244
      %s247 = sadd.s32 %s246, 1
      %p250 = scmp.eq.s32.totalorder %s34, 1
      %p251 = scmp.ne.s32.totalorder %s246, %s248
      %p252 = scmp.eq.s32.totalorder %s34, 0
      %p253 = por %p251, %p252
      %p254 = scmp.ne.s32.totalorder %s246, %s248
      %p255 = scmp.eq.s32.totalorder %s39, 1
      %p256 = por %p254, %p255
      %p257 = scmp.ne.s32.totalorder %s248, %s249
      %p258 = scmp.eq.s32.totalorder %s39, 0
      %p259 = por %p257, %p258
      %p260 = scmp.ne.s32.totalorder %s248, %s249
      %p261 = scmp.eq.s32.totalorder %s40, 1
      %p262 = por %p260, %p261
      %p264 = scmp.ne.s32.totalorder %s249, %s263
      %p265 = scmp.eq.s32.totalorder %s40, 0
      %p266 = por %p264, %p265
      %s268 = sadd.s32 %s267, 1
      %p271 = scmp.eq.s32.totalorder %s34, 1
      %p272 = scmp.ne.s32.totalorder %s267, %s269
      %p273 = scmp.eq.s32.totalorder %s34, 0
      %p274 = por %p272, %p273
      %p275 = scmp.ne.s32.totalorder %s267, %s269
      %p276 = scmp.eq.s32.totalorder %s39, 1
      %p277 = por %p275, %p276
      %p278 = scmp.ne.s32.totalorder %s269, %s270
      %p279 = scmp.eq.s32.totalorder %s39, 0
      %p280 = por %p278, %p279
      %p281 = scmp.ne.s32.totalorder %s269, %s270
      %p282 = scmp.eq.s32.totalorder %s40, 1
      %p283 = por %p281, %p282
      %p285 = scmp.ne.s32.totalorder %s270, %s284
      %p286 = scmp.eq.s32.totalorder %s40, 0
      %p287 = por %p285, %p286
      %s289 = sadd.s32 %s288, 1
      %p292 = scmp.eq.s32.totalorder %s34, 1
      %p293 = scmp.ne.s32.totalorder %s288, %s290
      %p294 = scmp.eq.s32.totalorder %s34, 0
      %p295 = por %p293, %p294
      %p296 = scmp.ne.s32.totalorder %s288, %s290
      %p297 = scmp.eq.s32.totalorder %s39, 1
      %p298 = por %p296, %p297
      %p299 = scmp.ne.s32.totalorder %s290, %s291
      %p300 = scmp.eq.s32.totalorder %s39, 0
      %p301 = por %p299, %p300
      %p302 = scmp.ne.s32.totalorder %s290, %s291
      %p303 = scmp.eq.s32.totalorder %s40, 1
      %p304 = por %p302, %p303
      %p306 = scmp.ne.s32.totalorder %s291, %s305
      %p307 = scmp.eq.s32.totalorder %s40, 0
      %p308 = por %p306, %p307
      %s310 = sadd.s32 %s309, 1
      %p313 = scmp.eq.s32.totalorder %s34, 1
      %p314 = scmp.ne.s32.totalorder %s309, %s311
      %p315 = scmp.eq.s32.totalorder %s34, 0
      %p316 = por %p314, %p315
      %p317 = scmp.ne.s32.totalorder %s309, %s311
      %p318 = scmp.eq.s32.totalorder %s39, 1
      %p319 = por %p317, %p318
      %p320 = scmp.ne.s32.totalorder %s311, %s312
      %p321 = scmp.eq.s32.totalorder %s39, 0
      %p322 = por %p320, %p321
      %p323 = scmp.ne.s32.totalorder %s311, %s312
      %p324 = scmp.eq.s32.totalorder %s40, 1
      %p325 = por %p323, %p324
      %p327 = scmp.ne.s32.totalorder %s312, %s326
      %p328 = scmp.eq.s32.totalorder %s40, 0
      %p329 = por %p327, %p328
      %s331 = sadd.s32 %s330, 1
      %p334 = scmp.eq.s32.totalorder %s34, 1
      %p335 = scmp.ne.s32.totalorder %s330, %s332
      %p336 = scmp.eq.s32.totalorder %s34, 0
      %p337 = por %p335, %p336
      %p338 = scmp.ne.s32.totalorder %s330, %s332
      %p339 = scmp.eq.s32.totalorder %s39, 1
      %p340 = por %p338, %p339
      %p341 = scmp.ne.s32.totalorder %s332, %s333
      %p342 = scmp.eq.s32.totalorder %s39, 0
      %p343 = por %p341, %p342
      %p344 = scmp.ne.s32.totalorder %s332, %s333
      %p345 = scmp.eq.s32.totalorder %s40, 1
      %p346 = por %p344, %p345
      %p348 = scmp.ne.s32.totalorder %s333, %s347
      %p349 = scmp.eq.s32.totalorder %s40, 0
      %p350 = por %p348, %p349
      %s352 = sadd.s32 %s351, 1
      %p355 = scmp.eq.s32.totalorder %s34, 1
      %p356 = scmp.ne.s32.totalorder %s351, %s353
      %p357 = scmp.eq.s32.totalorder %s34, 0
      %p358 = por %p356, %p357
      %p359 = scmp.ne.s32.totalorder %s351, %s353
      %p360 = scmp.eq.s32.totalorder %s39, 1
      %p361 = por %p359, %p360
      %p362 = scmp.ne.s32.totalorder %s353, %s354
      %p363 = scmp.eq.s32.totalorder %s39, 0
      %p364 = por %p362, %p363
      %p365 = scmp.ne.s32.totalorder %s353, %s354
      %p366 = scmp.eq.s32.totalorder %s40, 1
      %p367 = por %p365, %p366
      %p369 = scmp.ne.s32.totalorder %s354, %s368
      %p370 = scmp.eq.s32.totalorder %s40, 0
      %p371 = por %p369, %p370
      %s373 = sadd.s32 %s372, 1
      %p376 = scmp.eq.s32.totalorder %s34, 1
      %p377 = scmp.ne.s32.totalorder %s372, %s374
      %p378 = scmp.eq.s32.totalorder %s34, 0
      %p379 = por %p377, %p378
      %p380 = scmp.ne.s32.totalorder %s372, %s374
      %p381 = scmp.eq.s32.totalorder %s39, 1
      %p382 = por %p380, %p381
      %p383 = scmp.ne.s32.totalorder %s374, %s375
      %p384 = scmp.eq.s32.totalorder %s39, 0
      %p385 = por %p383, %p384
      %p386 = scmp.ne.s32.totalorder %s374, %s375
      %p387 = scmp.eq.s32.totalorder %s40, 1
      %p388 = por %p386, %p387
      %p390 = scmp.ne.s32.totalorder %s375, %s389
      %p391 = scmp.eq.s32.totalorder %s40, 0
      %p392 = por %p390, %p391
      %s394 = sadd.s32 %s393, 1
      %p397 = scmp.eq.s32.totalorder %s34, 1
      %p398 = scmp.ne.s32.totalorder %s393, %s395
      %p399 = scmp.eq.s32.totalorder %s34, 0
      %p400 = por %p398, %p399
      %p401 = scmp.ne.s32.totalorder %s393, %s395
      %p402 = scmp.eq.s32.totalorder %s39, 1
      %p403 = por %p401, %p402
      %p404 = scmp.ne.s32.totalorder %s395, %s396
      %p405 = scmp.eq.s32.totalorder %s39, 0
      %p406 = por %p404, %p405
      %p407 = scmp.ne.s32.totalorder %s395, %s396
      %p408 = scmp.eq.s32.totalorder %s40, 1
      %p409 = por %p407, %p408
      %p411 = scmp.ne.s32.totalorder %s396, %s410
      %p412 = scmp.eq.s32.totalorder %s40, 0
      %p413 = por %p411, %p412
      %s415 = sadd.s32 %s414, 1
      %p418 = scmp.eq.s32.totalorder %s34, 1
      %p419 = scmp.ne.s32.totalorder %s414, %s416
      %p420 = scmp.eq.s32.totalorder %s34, 0
      %p421 = por %p419, %p420
      %p422 = scmp.ne.s32.totalorder %s414, %s416
      %p423 = scmp.eq.s32.totalorder %s39, 1
      %p424 = por %p422, %p423
      %p425 = scmp.ne.s32.totalorder %s416, %s417
      %p426 = scmp.eq.s32.totalorder %s39, 0
      %p427 = por %p425, %p426
      %p428 = scmp.ne.s32.totalorder %s416, %s417
      %p429 = scmp.eq.s32.totalorder %s40, 1
      %p430 = por %p428, %p429
      %p432 = scmp.ne.s32.totalorder %s417, %s431
      %p433 = scmp.eq.s32.totalorder %s40, 0
      %p434 = por %p432, %p433
      %s436 = sadd.s32 %s435, 1
      %p439 = scmp.eq.s32.totalorder %s34, 1
      %p440 = scmp.ne.s32.totalorder %s435, %s437
      %p441 = scmp.eq.s32.totalorder %s34, 0
      %p442 = por %p440, %p441
      %p443 = scmp.ne.s32.totalorder %s435, %s437
      %p444 = scmp.eq.s32.totalorder %s39, 1
      %p445 = por %p443, %p444
      %p446 = scmp.ne.s32.totalorder %s437, %s438
      %p447 = scmp.eq.s32.totalorder %s39, 0
      %p448 = por %p446, %p447
      %p449 = scmp.ne.s32.totalorder %s437, %s438
      %p450 = scmp.eq.s32.totalorder %s40, 1
      %p451 = por %p449, %p450
      %p453 = scmp.ne.s32.totalorder %s438, %s452
      %p454 = scmp.eq.s32.totalorder %s40, 0
      %p455 = por %p453, %p454
      %s457 = sadd.s32 %s456, 1
      %p460 = scmp.eq.s32.totalorder %s34, 1
      %p461 = scmp.ne.s32.totalorder %s456, %s458
      %p462 = scmp.eq.s32.totalorder %s34, 0
      %p463 = por %p461, %p462
      %p464 = scmp.ne.s32.totalorder %s456, %s458
      %p465 = scmp.eq.s32.totalorder %s39, 1
      %p466 = por %p464, %p465
      %p467 = scmp.ne.s32.totalorder %s458, %s459
      %p468 = scmp.eq.s32.totalorder %s39, 0
      %p469 = por %p467, %p468
      %p470 = scmp.ne.s32.totalorder %s458, %s459
      %p471 = scmp.eq.s32.totalorder %s40, 1
      %p472 = por %p470, %p471
      %p474 = scmp.ne.s32.totalorder %s459, %s473
      %p475 = scmp.eq.s32.totalorder %s40, 0
      %p476 = por %p474, %p475
      %s478 = sadd.s32 %s477, 1
      %p481 = scmp.eq.s32.totalorder %s34, 1
      %p482 = scmp.ne.s32.totalorder %s477, %s479
      %p483 = scmp.eq.s32.totalorder %s34, 0
      %p484 = por %p482, %p483
      %p485 = scmp.ne.s32.totalorder %s477, %s479
      %p486 = scmp.eq.s32.totalorder %s39, 1
      %p487 = por %p485, %p486
      %p488 = scmp.ne.s32.totalorder %s479, %s480
      %p489 = scmp.eq.s32.totalorder %s39, 0
      %p490 = por %p488, %p489
      %p491 = scmp.ne.s32.totalorder %s479, %s480
      %p492 = scmp.eq.s32.totalorder %s40, 1
      %p493 = por %p491, %p492
      %p495 = scmp.ne.s32.totalorder %s480, %s494
      %p496 = scmp.eq.s32.totalorder %s40, 0
      %p497 = por %p495, %p496
      %s499 = sadd.s32 %s498, 1
      %p502 = scmp.eq.s32.totalorder %s34, 1
      %p503 = scmp.ne.s32.totalorder %s498, %s500
      %p504 = scmp.eq.s32.totalorder %s34, 0
      %p505 = por %p503, %p504
      %p506 = scmp.ne.s32.totalorder %s498, %s500
      %p507 = scmp.eq.s32.totalorder %s39, 1
      %p508 = por %p506, %p507
      %p509 = scmp.ne.s32.totalorder %s500, %s501
      %p510 = scmp.eq.s32.totalorder %s39, 0
      %p511 = por %p509, %p510
      %p512 = scmp.ne.s32.totalorder %s500, %s501
      %p513 = scmp.eq.s32.totalorder %s40, 1
      %p514 = por %p512, %p513
      %p516 = scmp.ne.s32.totalorder %s501, %s515
      %p517 = scmp.eq.s32.totalorder %s40, 0
      %p518 = por %p516, %p517
      %s520 = sadd.s32 %s519, 1
      %p523 = scmp.eq.s32.totalorder %s34, 1
      %p524 = scmp.ne.s32.totalorder %s519, %s521
      %p525 = scmp.eq.s32.totalorder %s34, 0
      %p526 = por %p524, %p525
      %p527 = scmp.ne.s32.totalorder %s519, %s521
      %p528 = scmp.eq.s32.totalorder %s39, 1
      %p529 = por %p527, %p528
      %p530 = scmp.ne.s32.totalorder %s521, %s522
      %p531 = scmp.eq.s32.totalorder %s39, 0
      %p532 = por %p530, %p531
      %p533 = scmp.ne.s32.totalorder %s521, %s522
      %p534 = scmp.eq.s32.totalorder %s40, 1
      %p535 = por %p533, %p534
      %p537 = scmp.ne.s32.totalorder %s522, %s536
      %p538 = scmp.eq.s32.totalorder %s40, 0
      %p539 = por %p537, %p538
      %s540 = ssub.s32 %s34, %s41
      %p541 = scmp.eq.s32.totalorder %s540, 0
      %s543 = sadd.s32 %s542, 1
      %s544 = scalar_select %p541, %s542, %s543
      %p547 = pneg %p541
      %p548 = scmp.eq.s32.totalorder %s34, 1
      %p549 = por %p547, %p548
      %p550 = scmp.ne.s32.totalorder %s542, %s545
      %p551 = scmp.eq.s32.totalorder %s34, 0
      %p552 = por %p550, %p551
      %p553 = scmp.ne.s32.totalorder %s542, %s545
      %p554 = scmp.eq.s32.totalorder %s39, 1
      %p555 = por %p553, %p554
      %p556 = scmp.ne.s32.totalorder %s545, %s546
      %p557 = scmp.eq.s32.totalorder %s39, 0
      %p558 = por %p556, %p557
      %p559 = scmp.ne.s32.totalorder %s545, %s546
      %p560 = scmp.eq.s32.totalorder %s40, 1
      %p561 = por %p559, %p560
      %p563 = scmp.ne.s32.totalorder %s546, %s562
      %p564 = scmp.eq.s32.totalorder %s40, 0
      %p565 = por %p563, %p564
      %p566 = scmp.le.s32.totalorder 1, %s34
      %p567 = scmp.lt.s32.totalorder %s34, 3
      %p568 = pnand %p566, %p567
      %p569 = pneg %p568
      // Predicated region
      $region9: #{convolutional_forward.1} parent=5 // pred_check
        _
      $region10: #{convolutional_forward.1} parent=5 // pred_check_branch
        %571 = sbr.rel (%p568) target = $region12
      $region11: #{convolutional_forward.1} parent=5 // pred_region
        %s572 = ssub.s32 %s34, 1
        // Predicated region
        $region13: #{convolutional_forward.1} parent=11 // pred_check
          %p573 = pneg %p133
        $region14: #{convolutional_forward.1} parent=11 // pred_check_branch
          %575 = sbr.rel (%p573) target = $region16
        $region15: #{convolutional_forward.1} parent=11 // pred_region
          _
        $region16: #{convolutional_forward.1} parent=11 // pred_fallthru
          _
        // Predicated region
        $region17: #{convolutional_forward.1} parent=11 // pred_check
          %p576 = pneg %p154
        $region18: #{convolutional_forward.1} parent=11 // pred_check_branch
          %578 = sbr.rel (%p576) target = $region20
        $region19: #{convolutional_forward.1} parent=11 // pred_region
          _
        $region20: #{convolutional_forward.1} parent=11 // pred_fallthru
          _
        // Predicated region
        $region21: #{convolutional_forward.1} parent=11 // pred_check
          %p579 = pneg %p175
        $region22: #{convolutional_forward.1} parent=11 // pred_check_branch
          %581 = sbr.rel (%p579) target = $region24
        $region23: #{convolutional_forward.1} parent=11 // pred_region
          _
        $region24: #{convolutional_forward.1} parent=11 // pred_fallthru
          _
        // Predicated region
        $region25: #{convolutional_forward.1} parent=11 // pred_check
          %p582 = pneg %p196
        $region26: #{convolutional_forward.1} parent=11 // pred_check_branch
          %584 = sbr.rel (%p582) target = $region28
        $region27: #{convolutional_forward.1} parent=11 // pred_region
          _
        $region28: #{convolutional_forward.1} parent=11 // pred_fallthru
          _
        // Predicated region
        $region29: #{convolutional_forward.1} parent=11 // pred_check
          %p585 = pneg %p217
        $region30: #{convolutional_forward.1} parent=11 // pred_check_branch
          %587 = sbr.rel (%p585) target = $region32
        $region31: #{convolutional_forward.1} parent=11 // pred_region
          _
        $region32: #{convolutional_forward.1} parent=11 // pred_fallthru
          _
        // Predicated region
        $region33: #{convolutional_forward.1} parent=11 // pred_check
          %p588 = pneg %p238
        $region34: #{convolutional_forward.1} parent=11 // pred_check_branch
          %590 = sbr.rel (%p588) target = $region36
        $region35: #{convolutional_forward.1} parent=11 // pred_region
          _
        $region36: #{convolutional_forward.1} parent=11 // pred_fallthru
          _
        // Predicated region
        $region37: #{convolutional_forward.1} parent=11 // pred_check
          %p591 = pneg %p259
        $region38: #{convolutional_forward.1} parent=11 // pred_check_branch
          %593 = sbr.rel (%p591) target = $region40
        $region39: #{convolutional_forward.1} parent=11 // pred_region
          _
        $region40: #{convolutional_forward.1} parent=11 // pred_fallthru
          _
        // Predicated region
        $region41: #{convolutional_forward.1} parent=11 // pred_check
          %p594 = pneg %p280
        $region42: #{convolutional_forward.1} parent=11 // pred_check_branch
          %596 = sbr.rel (%p594) target = $region44
        $region43: #{convolutional_forward.1} parent=11 // pred_region
          _
        $region44: #{convolutional_forward.1} parent=11 // pred_fallthru
          _
        // Predicated region
        $region45: #{convolutional_forward.1} parent=11 // pred_check
          %p597 = pneg %p301
        $region46: #{convolutional_forward.1} parent=11 // pred_check_branch
          %599 = sbr.rel (%p597) target = $region48
        $region47: #{convolutional_forward.1} parent=11 // pred_region
          _
        $region48: #{convolutional_forward.1} parent=11 // pred_fallthru
          _
        // Predicated region
        $region49: #{convolutional_forward.1} parent=11 // pred_check
          %p600 = pneg %p322
        $region50: #{convolutional_forward.1} parent=11 // pred_check_branch
          %602 = sbr.rel (%p600) target = $region52
        $region51: #{convolutional_forward.1} parent=11 // pred_region
          _
        $region52: #{convolutional_forward.1} parent=11 // pred_fallthru
          _
        // Predicated region
        $region53: #{convolutional_forward.1} parent=11 // pred_check
          %p603 = pneg %p343
        $region54: #{convolutional_forward.1} parent=11 // pred_check_branch
          %605 = sbr.rel (%p603) target = $region56
        $region55: #{convolutional_forward.1} parent=11 // pred_region
          %s607 = ssub.s32 15360, 15360
          %608 = vsyncadd [#allocation3], %s607
          %s609 = sshll.u32 [#allocation2], 4
          %s610 = int_to_ptr.vmem [resolvable:$true] %s609
          %615 = dma.hbm_to_vmem [thread:$0]  %s13, 15360, %s610, [#allocation3], 128, 128, 8
        $region56: #{convolutional_forward.1} parent=11 // pred_fallthru
          _
        // Predicated region
        $region57: #{convolutional_forward.1} parent=11 // pred_check
          %p616 = pneg %p364
        $region58: #{convolutional_forward.1} parent=11 // pred_check_branch
          %618 = sbr.rel (%p616) target = $region60
        $region59: #{convolutional_forward.1} parent=11 // pred_region
          _
        $region60: #{convolutional_forward.1} parent=11 // pred_fallthru
          _
        // Predicated region
        $region61: #{convolutional_forward.1} parent=11 // pred_check
          %p619 = pneg %p385
        $region62: #{convolutional_forward.1} parent=11 // pred_check_branch
          %621 = sbr.rel (%p619) target = $region64
        $region63: #{convolutional_forward.1} parent=11 // pred_region
          _
        $region64: #{convolutional_forward.1} parent=11 // pred_fallthru
          _
        // Predicated region
        $region65: #{convolutional_forward.1} parent=11 // pred_check
          %p622 = pneg %p406
        $region66: #{convolutional_forward.1} parent=11 // pred_check_branch
          %624 = sbr.rel (%p622) target = $region68
        $region67: #{convolutional_forward.1} parent=11 // pred_region
          _
        $region68: #{convolutional_forward.1} parent=11 // pred_fallthru
          _
        // Predicated region
        $region69: #{convolutional_forward.1} parent=11 // pred_check
          %p625 = pneg %p427
        $region70: #{convolutional_forward.1} parent=11 // pred_check_branch
          %627 = sbr.rel (%p625) target = $region72
        $region71: #{convolutional_forward.1} parent=11 // pred_region
          %s629 = ssub.s32 15360, 15360
          %630 = vsyncadd [#allocation6], %s629
          %s631 = sshll.u32 [#allocation5], 4
          %s632 = int_to_ptr.vmem [resolvable:$true] %s631
          %637 = dma.hbm_to_vmem [thread:$0]  %s17, 15360, %s632, [#allocation6], 128, 128, 8
        $region72: #{convolutional_forward.1} parent=11 // pred_fallthru
          _
        // Predicated region
        $region73: #{convolutional_forward.1} parent=11 // pred_check
          %p638 = pneg %p448
        $region74: #{convolutional_forward.1} parent=11 // pred_check_branch
          %640 = sbr.rel (%p638) target = $region76
        $region75: #{convolutional_forward.1} parent=11 // pred_region
          _
        $region76: #{convolutional_forward.1} parent=11 // pred_fallthru
          _
        // Predicated region
        $region77: #{convolutional_forward.1} parent=11 // pred_check
          %p641 = pneg %p469
        $region78: #{convolutional_forward.1} parent=11 // pred_check_branch
          %643 = sbr.rel (%p641) target = $region80
        $region79: #{convolutional_forward.1} parent=11 // pred_region
          _
        $region80: #{convolutional_forward.1} parent=11 // pred_fallthru
          _
        // Predicated region
        $region81: #{convolutional_forward.1} parent=11 // pred_check
          %p644 = pneg %p490
        $region82: #{convolutional_forward.1} parent=11 // pred_check_branch
          %646 = sbr.rel (%p644) target = $region84
        $region83: #{convolutional_forward.1} parent=11 // pred_region
          _
        $region84: #{convolutional_forward.1} parent=11 // pred_fallthru
          _
        // Predicated region
        $region85: #{convolutional_forward.1} parent=11 // pred_check
          %p647 = pneg %p511
        $region86: #{convolutional_forward.1} parent=11 // pred_check_branch
          %649 = sbr.rel (%p647) target = $region88
        $region87: #{convolutional_forward.1} parent=11 // pred_region
          _
        $region88: #{convolutional_forward.1} parent=11 // pred_fallthru
          _
        // Predicated region
        $region89: #{convolutional_forward.1} parent=11 // pred_check
          %p650 = pneg %p532
        $region90: #{convolutional_forward.1} parent=11 // pred_check_branch
          %652 = sbr.rel (%p650) target = $region92
        $region91: #{convolutional_forward.1} parent=11 // pred_region
          _
        $region92: #{convolutional_forward.1} parent=11 // pred_fallthru
          _
      $region12: #{convolutional_forward.1} parent=5 // pred_fallthru
        _
      %p653 = scmp.lt.s32.totalorder %s34, 2
      // Predicated region
      $region93: #{convolutional_forward.1} parent=5 // pred_check
        %p654 = pneg %p653
      $region94: #{convolutional_forward.1} parent=5 // pred_check_branch
        %656 = sbr.rel (%p654) target = $region96
      $region95: #{convolutional_forward.1} parent=5 // pred_region
        // Predicated region
        $region97: #{convolutional_forward.1} parent=95 // pred_check
          %p657 = pneg %p54
        $region98: #{convolutional_forward.1} parent=95 // pred_check_branch
          %659 = sbr.rel (%p657) target = $region100
        $region99: #{convolutional_forward.1} parent=95 // pred_region
          %p660 = scmp.lt.s32.totalorder %s34, 1
          %s661 = scalar_select %p660, %s34, 1
          %s662 = smul.addr %s661, 8
          %s663 = scalar_lea.vmem %s0, %s662
        $region100: #{convolutional_forward.1} parent=95 // pred_fallthru
          _
        // Predicated region
        $region101: #{convolutional_forward.1} parent=95 // pred_check
          %p664 = pneg %p80
        $region102: #{convolutional_forward.1} parent=95 // pred_check_branch
          %666 = sbr.rel (%p664) target = $region104
        $region103: #{convolutional_forward.1} parent=95 // pred_region
          %p667 = scmp.lt.s32.totalorder %s34, 1
          %s668 = scalar_select %p667, %s34, 1
          %s669 = smul.addr %s668, 8
          %s670 = scalar_lea.vmem %s1, %s669
        $region104: #{convolutional_forward.1} parent=95 // pred_fallthru
          _
        // Predicated region
        $region105: #{convolutional_forward.1} parent=95 // pred_check
          %p671 = pneg %p106
        $region106: #{convolutional_forward.1} parent=95 // pred_check_branch
          %673 = sbr.rel (%p671) target = $region108
        $region107: #{convolutional_forward.1} parent=95 // pred_region
          %p674 = scmp.lt.s32.totalorder %s34, 1
          %s675 = scalar_select %p674, %s34, 1
          %s676 = smul.addr %s675, 8
          %s677 = scalar_lea.vmem %s2, %s676
        $region108: #{convolutional_forward.1} parent=95 // pred_fallthru
          _
      $region96: #{convolutional_forward.1} parent=5 // pred_fallthru
        _
      %p678 = scmp.le.s32.totalorder 1, %s34
      %p679 = scmp.lt.s32.totalorder %s34, 3
      %p680 = pnand %p678, %p679
      %p681 = pneg %p680
      // Predicated region
      $region109: #{convolutional_forward.1} parent=5 // pred_check
        _
      $region110: #{convolutional_forward.1} parent=5 // pred_check_branch
        %683 = sbr.rel (%p680) target = $region112
      $region111: #{convolutional_forward.1} parent=5 // pred_region
        %s684 = ssub.s32 %s34, 1
        // Predicated region
        $region113: #{convolutional_forward.1} parent=111 // pred_check
          %p685 = pneg %p343
        $region114: #{convolutional_forward.1} parent=111 // pred_check_branch
          %687 = sbr.rel (%p685) target = $region116
        $region115: #{convolutional_forward.1} parent=111 // pred_region
          %688 = dma.done [#allocation3], 15360
        $region116: #{convolutional_forward.1} parent=111 // pred_fallthru
          _
        // Predicated region
        $region117: #{convolutional_forward.1} parent=111 // pred_check
          %p689 = pneg %p427
        $region118: #{convolutional_forward.1} parent=111 // pred_check_branch
          %691 = sbr.rel (%p689) target = $region120
        $region119: #{convolutional_forward.1} parent=111 // pred_region
          %692 = dma.done [#allocation6], 15360
        $region120: #{convolutional_forward.1} parent=111 // pred_fallthru
          _
        %p693 = scmp.lt.s32.totalorder %s39, 1
        %s694 = scalar_select %p693, %s39, 1
        %s695 = smul.addr %s694, 8
        %s696 = scalar_lea.vmem %s0, %s695
        %p697 = pneg %p60
        %p698 = pneg %p57
        %p699 = scmp.lt.s32.totalorder %s39, 1
        %s700 = scalar_select %p699, %s39, 1
        %s701 = smul.addr %s700, 8
        %s702 = scalar_lea.vmem %s1, %s701
        %p703 = pneg %p86
        %p704 = pneg %p83
        %p705 = scmp.lt.s32.totalorder %s39, 1
        %s706 = scalar_select %p705, %s39, 1
        %s707 = smul.addr %s706, 8
        %s708 = scalar_lea.vmem %s2, %s707
        %p709 = pneg %p112
        %p710 = pneg %p109
        %p711 = pneg %p133
        %p712 = pneg %p130
        %p713 = pneg %p154
        %p714 = pneg %p151
        %p715 = pneg %p175
        %p716 = pneg %p172
        %p717 = pneg %p196
        %p718 = pneg %p193
        %p719 = pneg %p217
        %p720 = pneg %p214
        %p721 = pneg %p238
        %p722 = pneg %p235
        %p723 = pneg %p259
        %p724 = pneg %p256
        %p725 = pneg %p280
        %p726 = pneg %p277
        %p727 = pneg %p301
        %p728 = pneg %p298
        %p729 = pneg %p322
        %p730 = pneg %p319
        %p731 = pneg %p343
        %p732 = pneg %p340
        %p733 = pneg %p364
        %p734 = pneg %p361
        %p735 = pneg %p385
        %p736 = pneg %p382
        %p737 = pneg %p406
        %p738 = pneg %p403
        %p739 = pneg %p427
        %p740 = pneg %p424
        %p741 = pneg %p448
        %p742 = pneg %p445
        %p743 = pneg %p469
        %p744 = pneg %p466
        %p745 = pneg %p490
        %p746 = pneg %p487
        %p747 = pneg %p511
        %p748 = pneg %p508
        %p749 = pneg %p532
        %p750 = pneg %p529
        %p751 = pneg %p558
        %p752 = pneg %p555
        %s753 = sand.u32 %s545, 1
        %s754 = scalar_lea.sflag [#allocation4], %s753
        %s755 = sand.u32 %s545, 1
        %s756 = smul.addr %s755, 8
        %s757 = scalar_lea.vmem [#allocation7], %s756
        %p758 = scmp.lt.s32.totalorder %s39, 1
        %s759 = scalar_select %p758, %s39, 1
        %s760 = smul.addr %s759, 8
        %s761 = scalar_lea.vmem %s0, %s760
        %p762 = scmp.lt.s32.totalorder %s39, 1
        %s763 = scalar_select %p762, %s39, 1
        %s764 = smul.addr %s763, 8
        %s765 = scalar_lea.vmem %s1, %s764
        %p766 = scmp.lt.s32.totalorder %s39, 1
        %s767 = scalar_select %p766, %s39, 1
        %s768 = smul.addr %s767, 8
        %s769 = scalar_lea.vmem %s2, %s768
        %v771 = vld [vmem:[%s761] sm:$0xff]
        %v772 = vpack.c.bf16 %v771, %v771
        %v773 = vld [vmem:[%s3] sm:$0xff]
        %v774 = vld [vmem:[%s3 + $0x8] sm:$0xff]
        %v775 = vld [vmem:[%s3 + $0x10] sm:$0xff]
        %v776 = vld [vmem:[%s3 + $0x18] sm:$0xff]
        %v777 = vpack.c.bf16 %v774, %v773
        %v778 = vpack.c.bf16 %v776, %v775
        %v779 = vld [vmem:[%s4] sm:$0x1]
        %v781 = vlaneseq
        %v782 = vshrl.u32 %v781, 7
        %v783 = vsub.s32 0, %v782
        %v784 = vrot.slane %v779, %v783
        %vm786 = vcmask 261120
        %v788 = vsel %vm786, %v772, 0
        %v791 = vsel %vm786, %v777, 0
        %v794 = vsel %vm786, %v778, 0
        %796 = vmatprep.subr.bf16.mxu0 0
        %797 = vmatpush1.bf16.xpose.msra.mxu0 %v791
        %798 = vmatprep.subr.bf16.mxu0 0
        %799 = vmatpush1.bf16.xpose.msra.mxu0 %v794
        %800 = vmatprep.subr.bf16.mxu0 0
        %801 = vmatpush1.bf16.xpose.msra.mxu0 0
        %802 = vmatprep.subr.bf16.mxu0 0
        %803 = vmatpush1.bf16.xpose.msra.mxu0 0
        %804 = vmatprep.subr.bf16.mxu0 0
        %805 = vmatpush1.bf16.xpose.msra.mxu0 0
        %806 = vmatprep.subr.bf16.mxu0 0
        %807 = vmatpush1.bf16.xpose.msra.mxu0 0
        %808 = vmatprep.subr.bf16.mxu0 0
        %809 = vmatpush1.bf16.xpose.msra.mxu0 0
        %810 = vmatprep.subr.bf16.mxu0 0
        %811 = vmatpush1.bf16.xpose.msra.mxu0 0
        %812 = vmatprep.subr.bf16.mxu0 0
        %813 = vmatpush1.bf16.xpose.msra.mxu0 0
        %814 = vmatprep.subr.bf16.mxu0 0
        %815 = vmatpush1.bf16.xpose.msra.mxu0 0
        %816 = vmatprep.subr.bf16.mxu0 0
        %817 = vmatpush1.bf16.xpose.msra.mxu0 0
        %818 = vmatprep.subr.bf16.mxu0 0
        %819 = vmatpush1.bf16.xpose.msra.mxu0 0
        %820 = vmatprep.subr.bf16.mxu0 0
        %821 = vmatpush1.bf16.xpose.msra.mxu0 0
        %822 = vmatprep.subr.bf16.mxu0 0
        %823 = vmatpush1.bf16.xpose.msra.mxu0 0
        %824 = vmatprep.subr.bf16.mxu0 0
        %825 = vmatpush1.bf16.xpose.msra.mxu0 0
        %826 = vmatprep.subr.bf16.mxu0 0
        %827 = vmatpush1.bf16.xpose.msra.mxu0 0
        %828 = vmatprep.mubr.bf16.mxu0 0
        %829 = vmatmul.mubr.bf16.gmra.mrb[0].mxu0 %v788
        %v830 = vpop.f32.mrb[0].mxu0
        %v831 = vadd.f32 %v784, %v830
        %v832 = vpop.f32.mrb[0].mxu0
        %v833 = vpop.f32.mrb[0].mxu0
        %v834 = vpop.f32.mrb[0].mxu0
        %835 = vdwg.mxu0
        %v836 = vmax.f32 %v831, 0.0
        %v837 = vpack.c.bf16 %v836, %v836
        %v838 = vld [vmem:[%s5] sm:$0xff]
        %v839 = vld [vmem:[%s5 + $0x8] sm:$0xff]
        %v840 = vld [vmem:[%s5 + $0x10] sm:$0xff]
        %v841 = vld [vmem:[%s5 + $0x18] sm:$0xff]
        %v842 = vpack.c.bf16 %v839, %v838
        %v843 = vpack.c.bf16 %v841, %v840
        %v844 = vld [vmem:[%s6] sm:$0x1]
        %v846 = vlaneseq
        %v847 = vshrl.u32 %v846, 7
        %v848 = vsub.s32 0, %v847
        %v849 = vrot.slane %v844, %v848
        %v852 = vsel %vm786, %v837, 0
        %v855 = vsel %vm786, %v842, 0
        %v858 = vsel %vm786, %v843, 0
        %860 = vmatprep.subr.bf16.mxu0 0
        %861 = vmatpush1.bf16.xpose.msra.mxu0 %v855
        %862 = vmatprep.subr.bf16.mxu0 0
        %863 = vmatpush1.bf16.xpose.msra.mxu0 %v858
        %864 = vmatprep.subr.bf16.mxu0 0
        %865 = vmatpush1.bf16.xpose.msra.mxu0 0
        %866 = vmatprep.subr.bf16.mxu0 0
        %867 = vmatpush1.bf16.xpose.msra.mxu0 0
        %868 = vmatprep.subr.bf16.mxu0 0
        %869 = vmatpush1.bf16.xpose.msra.mxu0 0
        %870 = vmatprep.subr.bf16.mxu0 0
        %871 = vmatpush1.bf16.xpose.msra.mxu0 0
        %872 = vmatprep.subr.bf16.mxu0 0
        %873 = vmatpush1.bf16.xpose.msra.mxu0 0
        %874 = vmatprep.subr.bf16.mxu0 0
        %875 = vmatpush1.bf16.xpose.msra.mxu0 0
        %876 = vmatprep.subr.bf16.mxu0 0
        %877 = vmatpush1.bf16.xpose.msra.mxu0 0
        %878 = vmatprep.subr.bf16.mxu0 0
        %879 = vmatpush1.bf16.xpose.msra.mxu0 0
        %880 = vmatprep.subr.bf16.mxu0 0
        %881 = vmatpush1.bf16.xpose.msra.mxu0 0
        %882 = vmatprep.subr.bf16.mxu0 0
        %883 = vmatpush1.bf16.xpose.msra.mxu0 0
        %884 = vmatprep.subr.bf16.mxu0 0
        %885 = vmatpush1.bf16.xpose.msra.mxu0 0
        %886 = vmatprep.subr.bf16.mxu0 0
        %887 = vmatpush1.bf16.xpose.msra.mxu0 0
        %888 = vmatprep.subr.bf16.mxu0 0
        %889 = vmatpush1.bf16.xpose.msra.mxu0 0
        %890 = vmatprep.subr.bf16.mxu0 0
        %891 = vmatpush1.bf16.xpose.msra.mxu0 0
        %892 = vmatprep.mubr.bf16.mxu0 0
        %893 = vmatmul.mubr.bf16.gmra.mrb[0].mxu0 %v852
        %v894 = vpop.f32.mrb[0].mxu0
        %v895 = vadd.f32 %v849, %v894
        %v896 = vpop.f32.mrb[0].mxu0
        %v897 = vpop.f32.mrb[0].mxu0
        %v898 = vpop.f32.mrb[0].mxu0
        %899 = vdwg.mxu0
        %v900 = vmax.f32 %v895, 0.0
        %v901 = vld [vmem:[%s765] sm:$0xff]
        %v903 = vcombine.high %v901, %v901
        %v905 = vunpack.c.l.s4 1966171168
        %v906 = vunpack.c.0.s8 %v905
        %v907 = vlaneseq
        %v908 = vshrl.u32 %v907, 7
        %v909 = vsub.s32 %v906, %v908
        %v910 = vrot.slane %v901, %v909
        %v912 = vunpack.c.l.s4 1966171168
        %v913 = vunpack.c.0.s8 %v912
        %v914 = vlaneseq
        %v915 = vshrl.u32 %v914, 7
        %v916 = vsub.s32 %v913, %v915
        %v917 = vrot.slane %v903, %v916
        %v918 = vcombine.high %v910, %v910
        %v919 = vcombine.high %v917, %v917
        %v921 = vunpack.c.l.s4 1966171168
        %v922 = vunpack.c.0.s8 %v921
        %v923 = vlaneseq
        %v924 = vshrl.u32 %v923, 7
        %v925 = vsub.s32 %v922, %v924
        %v926 = vrot.slane %v910, %v925
        %v928 = vunpack.c.l.s4 1966171168
        %v929 = vunpack.c.0.s8 %v928
        %v930 = vlaneseq
        %v931 = vshrl.u32 %v930, 7
        %v932 = vsub.s32 %v929, %v931
        %v933 = vrot.slane %v917, %v932
        %v935 = vunpack.c.l.s4 1966171168
        %v936 = vunpack.c.0.s8 %v935
        %v937 = vlaneseq
        %v938 = vshrl.u32 %v937, 7
        %v939 = vsub.s32 %v936, %v938
        %v940 = vrot.slane %v918, %v939
        %v942 = vunpack.c.l.s4 1966171168
        %v943 = vunpack.c.0.s8 %v942
        %v944 = vlaneseq
        %v945 = vshrl.u32 %v944, 7
        %v946 = vsub.s32 %v943, %v945
        %v947 = vrot.slane %v919, %v946
        %v948 = vcombine.high %v926, %v926
        %v949 = vcombine.high %v933, %v933
        %v950 = vcombine.high %v940, %v940
        %v951 = vcombine.high %v947, %v947
        %v952 = vpack.c.bf16 %v900, %v900
        %v953 = vld [vmem:[%s7] sm:$0xff]
        %v954 = vld [vmem:[%s7 + $0x8] sm:$0xff]
        %v955 = vld [vmem:[%s7 + $0x10] sm:$0xff]
        %v956 = vld [vmem:[%s7 + $0x18] sm:$0xff]
        %v957 = vld [vmem:[%s7 + $0x20] sm:$0xff]
        %v958 = vld [vmem:[%s7 + $0x28] sm:$0xff]
        %v959 = vld [vmem:[%s7 + $0x30] sm:$0xff]
        %v960 = vld [vmem:[%s7 + $0x38] sm:$0xff]
        %v961 = vld [vmem:[%s7 + $0x40] sm:$0xff]
        %v962 = vld [vmem:[%s7 + $0x48] sm:$0xff]
        %v963 = vld [vmem:[%s7 + $0x50] sm:$0xff]
        %v964 = vld [vmem:[%s7 + $0x58] sm:$0xff]
        %v965 = vld [vmem:[%s7 + $0x60] sm:$0xff]
        %v966 = vld [vmem:[%s7 + $0x68] sm:$0xff]
        %v967 = vld [vmem:[%s7 + $0x70] sm:$0xff]
        %v968 = vpack.c.bf16 %v954, %v953
        %v969 = vpack.c.bf16 %v956, %v955
        %v970 = vpack.c.bf16 %v958, %v957
        %v971 = vpack.c.bf16 %v960, %v959
        %v972 = vpack.c.bf16 %v962, %v961
        %v973 = vpack.c.bf16 %v964, %v963
        %v974 = vpack.c.bf16 %v966, %v965
        %v975 = vpack.c.bf16 %v967, %v967
        %v976 = vld [vmem:[%s8] sm:$0x1]
        %v978 = vlaneseq
        %v979 = vshrl.u32 %v978, 7
        %v980 = vsub.s32 0, %v979
        %v981 = vrot.slane %v976, %v980
        %v984 = vsel %vm786, %v952, 0
        %v987 = vsel %vm786, %v968, 0
        %v990 = vsel %vm786, %v969, 0
        %v993 = vsel %vm786, %v970, 0
        %v996 = vsel %vm786, %v971, 0
        %v999 = vsel %vm786, %v972, 0
        %v1002 = vsel %vm786, %v973, 0
        %v1005 = vsel %vm786, %v974, 0
        %v1008 = vsel %vm786, %v975, 0
        %1010 = vmatprep.subr.bf16.mxu0 0
        %1011 = vmatpush1.bf16.xpose.msra.mxu0 %v987
        %1012 = vmatprep.subr.bf16.mxu0 0
        %1013 = vmatpush1.bf16.xpose.msra.mxu0 %v990
        %1014 = vmatprep.subr.bf16.mxu0 0
        %1015 = vmatpush1.bf16.xpose.msra.mxu0 %v993
        %1016 = vmatprep.subr.bf16.mxu0 0
        %1017 = vmatpush1.bf16.xpose.msra.mxu0 %v996
        %1018 = vmatprep.subr.bf16.mxu0 0
        %1019 = vmatpush1.bf16.xpose.msra.mxu0 %v999
        %1020 = vmatprep.subr.bf16.mxu0 0
        %1021 = vmatpush1.bf16.xpose.msra.mxu0 %v1002
        %1022 = vmatprep.subr.bf16.mxu0 0
        %1023 = vmatpush1.bf16.xpose.msra.mxu0 %v1005
        %1024 = vmatprep.subr.bf16.mxu0 0
        %1025 = vmatpush1.bf16.xpose.msra.mxu0 %v1008
        %1026 = vmatprep.subr.bf16.mxu0 0
        %1027 = vmatpush1.bf16.xpose.msra.mxu0 0
        %1028 = vmatprep.subr.bf16.mxu0 0
        %1029 = vmatpush1.bf16.xpose.msra.mxu0 0
        %1030 = vmatprep.subr.bf16.mxu0 0
        %1031 = vmatpush1.bf16.xpose.msra.mxu0 0
        %1032 = vmatprep.subr.bf16.mxu0 0
        %1033 = vmatpush1.bf16.xpose.msra.mxu0 0
        %1034 = vmatprep.subr.bf16.mxu0 0
        %1035 = vmatpush1.bf16.xpose.msra.mxu0 0
        %1036 = vmatprep.subr.bf16.mxu0 0
        %1037 = vmatpush1.bf16.xpose.msra.mxu0 0
        %1038 = vmatprep.subr.bf16.mxu0 0
        %1039 = vmatpush1.bf16.xpose.msra.mxu0 0
        %1040 = vmatprep.subr.bf16.mxu0 0
        %1041 = vmatpush1.bf16.xpose.msra.mxu0 0
        %1042 = vmatprep.mubr.bf16.mxu0 0
        %1043 = vmatmul.mubr.bf16.gmra.mrb[0].mxu0 %v984
        %v1044 = vpop.f32.mrb[0].mxu0
        %v1045 = vadd.f32 %v981, %v1044
        %v1046 = vpop.f32.mrb[0].mxu0
        %v1047 = vpop.f32.mrb[0].mxu0
        %v1048 = vpop.f32.mrb[0].mxu0
        %1049 = vdwg.mxu0
        %v1050 = vmax.f32 %v1045, 0.0
        %v1051 = vpack.c.bf16 %v1050, %v1050
        %v1052 = vld [vmem:[%s9] sm:$0xff]
        %v1053 = vld [vmem:[%s9 + $0x8] sm:$0xff]
        %v1054 = vld [vmem:[%s9 + $0x10] sm:$0xff]
        %v1055 = vld [vmem:[%s9 + $0x18] sm:$0xff]
        %v1056 = vld [vmem:[%s9 + $0x20] sm:$0xff]
        %v1057 = vld [vmem:[%s9 + $0x28] sm:$0xff]
        %v1058 = vld [vmem:[%s9 + $0x30] sm:$0xff]
        %v1059 = vld [vmem:[%s9 + $0x38] sm:$0xff]
        %v1060 = vld [vmem:[%s9 + $0x40] sm:$0xff]
        %v1061 = vld [vmem:[%s9 + $0x48] sm:$0xff]
        %v1062 = vld [vmem:[%s9 + $0x50] sm:$0xff]
        %v1063 = vld [vmem:[%s9 + $0x58] sm:$0xff]
        %v1064 = vld [vmem:[%s9 + $0x60] sm:$0xff]
        %v1065 = vld [vmem:[%s9 + $0x68] sm:$0xff]
        %v1066 = vld [vmem:[%s9 + $0x70] sm:$0xff]
        %v1067 = vpack.c.bf16 %v1053, %v1052
        %v1068 = vpack.c.bf16 %v1055, %v1054
        %v1069 = vpack.c.bf16 %v1057, %v1056
        %v1070 = vpack.c.bf16 %v1059, %v1058
        %v1071 = vpack.c.bf16 %v1061, %v1060
        %v1072 = vpack.c.bf16 %v1063, %v1062
        %v1073 = vpack.c.bf16 %v1065, %v1064
        %v1074 = vpack.c.bf16 %v1066, %v1066
        %v1075 = vld [vmem:[%s10] sm:$0x1]
        %v1077 = vlaneseq
        %v1078 = vshrl.u32 %v1077, 7
        %v1079 = vsub.s32 0, %v1078
        %v1080 = vrot.slane %v1075, %v1079
        %vm1082 = vcmask 982016
        %v1084 = vsel %vm1082, %v1051, 0
        %v1087 = vsel %vm1082, %v1067, 0
        %v1090 = vsel %vm1082, %v1068, 0
        %v1093 = vsel %vm1082, %v1069, 0
        %v1096 = vsel %vm1082, %v1070, 0
        %v1099 = vsel %vm1082, %v1071, 0
        %v1102 = vsel %vm1082, %v1072, 0
        %v1105 = vsel %vm1082, %v1073, 0
        %v1108 = vsel %vm1082, %v1074, 0
        %1110 = vmatprep.subr.bf16.mxu0 0
        %1111 = vmatpush1.bf16.xpose.msra.mxu0 %v1087
        %1112 = vmatprep.subr.bf16.mxu0 0
        %1113 = vmatpush1.bf16.xpose.msra.mxu0 %v1090
        %1114 = vmatprep.subr.bf16.mxu0 0
        %1115 = vmatpush1.bf16.xpose.msra.mxu0 %v1093
        %1116 = vmatprep.subr.bf16.mxu0 0
        %1117 = vmatpush1.bf16.xpose.msra.mxu0 %v1096
        %1118 = vmatprep.subr.bf16.mxu0 0
        %1119 = vmatpush1.bf16.xpose.msra.mxu0 %v1099
        %1120 = vmatprep.subr.bf16.mxu0 0
        %1121 = vmatpush1.bf16.xpose.msra.mxu0 %v1102
        %1122 = vmatprep.subr.bf16.mxu0 0
        %1123 = vmatpush1.bf16.xpose.msra.mxu0 %v1105
        %1124 = vmatprep.subr.bf16.mxu0 0
        %1125 = vmatpush1.bf16.xpose.msra.mxu0 %v1108
        %1126 = vmatprep.subr.bf16.mxu0 0
        %1127 = vmatpush1.bf16.xpose.msra.mxu0 0
        %1128 = vmatprep.subr.bf16.mxu0 0
        %1129 = vmatpush1.bf16.xpose.msra.mxu0 0
        %1130 = vmatprep.subr.bf16.mxu0 0
        %1131 = vmatpush1.bf16.xpose.msra.mxu0 0
        %1132 = vmatprep.subr.bf16.mxu0 0
        %1133 = vmatpush1.bf16.xpose.msra.mxu0 0
        %1134 = vmatprep.subr.bf16.mxu0 0
        %1135 = vmatpush1.bf16.xpose.msra.mxu0 0
        %1136 = vmatprep.subr.bf16.mxu0 0
        %1137 = vmatpush1.bf16.xpose.msra.mxu0 0
        %1138 = vmatprep.subr.bf16.mxu0 0
        %1139 = vmatpush1.bf16.xpose.msra.mxu0 0
        %1140 = vmatprep.subr.bf16.mxu0 0
        %1141 = vmatpush1.bf16.xpose.msra.mxu0 0
        %1142 = vmatprep.mubr.bf16.mxu0 0
        %1143 = vmatmul.mubr.bf16.gmra.mrb[0].mxu0 %v1084
        %v1144 = vpop.f32.mrb[0].mxu0
        %v1145 = vadd.f32 %v1080, %v1144
        %v1146 = vpop.f32.mrb[0].mxu0
        %v1147 = vpop.f32.mrb[0].mxu0
        %v1148 = vpop.f32.mrb[0].mxu0
        %1149 = vdwg.mxu0
        %v1151 = vcombine.high %v1145, %v1145
        %v1153 = vunpack.c.l.s4 1966171168
        %v1154 = vunpack.c.0.s8 %v1153
        %v1155 = vlaneseq
        %v1156 = vshrl.u32 %v1155, 7
        %v1157 = vsub.s32 %v1154, %v1156
        %v1158 = vrot.slane %v1145, %v1157
        %v1160 = vunpack.c.l.s4 1966171168
        %v1161 = vunpack.c.0.s8 %v1160
        %v1162 = vlaneseq
        %v1163 = vshrl.u32 %v1162, 7
        %v1164 = vsub.s32 %v1161, %v1163
        %v1165 = vrot.slane %v1151, %v1164
        %v1166 = vcombine.high %v1158, %v1158
        %v1167 = vcombine.high %v1165, %v1165
        %v1169 = vunpack.c.l.s4 1966171168
        %v1170 = vunpack.c.0.s8 %v1169
        %v1171 = vlaneseq
        %v1172 = vshrl.u32 %v1171, 7
        %v1173 = vsub.s32 %v1170, %v1172
        %v1174 = vrot.slane %v1158, %v1173
        %v1176 = vunpack.c.l.s4 1966171168
        %v1177 = vunpack.c.0.s8 %v1176
        %v1178 = vlaneseq
        %v1179 = vshrl.u32 %v1178, 7
        %v1180 = vsub.s32 %v1177, %v1179
        %v1181 = vrot.slane %v1165, %v1180
        %v1183 = vunpack.c.l.s4 1966171168
        %v1184 = vunpack.c.0.s8 %v1183
        %v1185 = vlaneseq
        %v1186 = vshrl.u32 %v1185, 7
        %v1187 = vsub.s32 %v1184, %v1186
        %v1188 = vrot.slane %v1166, %v1187
        %v1190 = vunpack.c.l.s4 1966171168
        %v1191 = vunpack.c.0.s8 %v1190
        %v1192 = vlaneseq
        %v1193 = vshrl.u32 %v1192, 7
        %v1194 = vsub.s32 %v1191, %v1193
        %v1195 = vrot.slane %v1167, %v1194
        %v1196 = vcombine.high %v1174, %v1174
        %v1197 = vcombine.high %v1181, %v1181
        %v1198 = vcombine.high %v1188, %v1188
        %v1199 = vcombine.high %v1195, %v1195
        %v1208 = vlaneseq
        %v1209 = vshrl.u32 %v1208, 7
        %v1210 = vsub.s32 0, %v1209
        %v1211 = vrot.slane %v1174, %v1210
        %v1212 = vlaneseq
        %v1213 = vshrl.u32 %v1212, 7
        %v1214 = vsub.s32 0, %v1213
        %v1215 = vrot.slane %v1188, %v1214
        %v1216 = vlaneseq
        %v1217 = vshrl.u32 %v1216, 7
        %v1218 = vsub.s32 0, %v1217
        %v1219 = vrot.slane %v1196, %v1218
        %v1220 = vlaneseq
        %v1221 = vshrl.u32 %v1220, 7
        %v1222 = vsub.s32 0, %v1221
        %v1223 = vrot.slane %v1198, %v1222
        %v1224 = vlaneseq
        %v1225 = vshrl.u32 %v1224, 7
        %v1226 = vsub.s32 0, %v1225
        %v1227 = vrot.slane %v1181, %v1226
        %v1228 = vlaneseq
        %v1229 = vshrl.u32 %v1228, 7
        %v1230 = vsub.s32 0, %v1229
        %v1231 = vrot.slane %v1195, %v1230
        %v1232 = vlaneseq
        %v1233 = vshrl.u32 %v1232, 7
        %v1234 = vsub.s32 0, %v1233
        %v1235 = vrot.slane %v1197, %v1234
        %v1236 = vlaneseq
        %v1237 = vshrl.u32 %v1236, 7
        %v1238 = vsub.s32 0, %v1237
        %v1239 = vrot.slane %v1199, %v1238
        %1240 = vrot.lane.b32.xlu0 %v1211, 113
        %v1241 = vpop.permute.xlu0 %1240
        %1242 = vrot.lane.b32.xlu0 %v1215, 113
        %v1243 = vpop.permute.xlu0 %1242
        %1244 = vrot.lane.b32.xlu0 %v1219, 113
        %v1245 = vpop.permute.xlu0 %1244
        %1246 = vrot.lane.b32.xlu0 %v1223, 113
        %v1247 = vpop.permute.xlu0 %1246
        %1248 = vrot.lane.b32.xlu0 %v1227, 113
        %v1249 = vpop.permute.xlu0 %1248
        %1250 = vrot.lane.b32.xlu0 %v1231, 113
        %v1251 = vpop.permute.xlu0 %1250
        %1252 = vrot.lane.b32.xlu0 %v1235, 113
        %v1253 = vpop.permute.xlu0 %1252
        %1254 = vrot.lane.b32.xlu0 %v1239, 113
        %v1255 = vpop.permute.xlu0 %1254
        %1264 = vrot.lane.b32.xlu0 %v1211, 98
        %v1265 = vpop.permute.xlu0 %1264
        %1266 = vrot.lane.b32.xlu0 %v1215, 98
        %v1267 = vpop.permute.xlu0 %1266
        %1268 = vrot.lane.b32.xlu0 %v1219, 98
        %v1269 = vpop.permute.xlu0 %1268
        %1270 = vrot.lane.b32.xlu0 %v1223, 98
        %v1271 = vpop.permute.xlu0 %1270
        %1272 = vrot.lane.b32.xlu0 %v1227, 98
        %v1273 = vpop.permute.xlu0 %1272
        %1274 = vrot.lane.b32.xlu0 %v1231, 98
        %v1275 = vpop.permute.xlu0 %1274
        %1276 = vrot.lane.b32.xlu0 %v1235, 98
        %v1277 = vpop.permute.xlu0 %1276
        %1278 = vrot.lane.b32.xlu0 %v1239, 98
        %v1279 = vpop.permute.xlu0 %1278
        %1288 = vrot.lane.b32.xlu0 %v1211, 83
        %v1289 = vpop.permute.xlu0 %1288
        %1290 = vrot.lane.b32.xlu0 %v1215, 83
        %v1291 = vpop.permute.xlu0 %1290
        %1292 = vrot.lane.b32.xlu0 %v1219, 83
        %v1293 = vpop.permute.xlu0 %1292
        %1294 = vrot.lane.b32.xlu0 %v1223, 83
        %v1295 = vpop.permute.xlu0 %1294
        %1296 = vrot.lane.b32.xlu0 %v1227, 83
        %v1297 = vpop.permute.xlu0 %1296
        %1298 = vrot.lane.b32.xlu0 %v1231, 83
        %v1299 = vpop.permute.xlu0 %1298
        %1300 = vrot.lane.b32.xlu0 %v1235, 83
        %v1301 = vpop.permute.xlu0 %1300
        %1302 = vrot.lane.b32.xlu0 %v1239, 83
        %v1303 = vpop.permute.xlu0 %1302
        %1312 = vrot.lane.b32.xlu0 %v1211, 68
        %v1313 = vpop.permute.xlu0 %1312
        %1314 = vrot.lane.b32.xlu0 %v1215, 68
        %v1315 = vpop.permute.xlu0 %1314
        %1316 = vrot.lane.b32.xlu0 %v1219, 68
        %v1317 = vpop.permute.xlu0 %1316
        %1318 = vrot.lane.b32.xlu0 %v1223, 68
        %v1319 = vpop.permute.xlu0 %1318
        %1320 = vrot.lane.b32.xlu0 %v1227, 68
        %v1321 = vpop.permute.xlu0 %1320
        %1322 = vrot.lane.b32.xlu0 %v1231, 68
        %v1323 = vpop.permute.xlu0 %1322
        %1324 = vrot.lane.b32.xlu0 %v1235, 68
        %v1325 = vpop.permute.xlu0 %1324
        %1326 = vrot.lane.b32.xlu0 %v1239, 68
        %v1327 = vpop.permute.xlu0 %1326
        %1336 = vrot.lane.b32.xlu0 %v1211, 53
        %v1337 = vpop.permute.xlu0 %1336
        %1338 = vrot.lane.b32.xlu0 %v1215, 53
        %v1339 = vpop.permute.xlu0 %1338
        %1340 = vrot.lane.b32.xlu0 %v1219, 53
        %v1341 = vpop.permute.xlu0 %1340
        %1342 = vrot.lane.b32.xlu0 %v1223, 53
        %v1343 = vpop.permute.xlu0 %1342
        %1344 = vrot.lane.b32.xlu0 %v1227, 53
        %v1345 = vpop.permute.xlu0 %1344
        %1346 = vrot.lane.b32.xlu0 %v1231, 53
        %v1347 = vpop.permute.xlu0 %1346
        %1348 = vrot.lane.b32.xlu0 %v1235, 53
        %v1349 = vpop.permute.xlu0 %1348
        %1350 = vrot.lane.b32.xlu0 %v1239, 53
        %v1351 = vpop.permute.xlu0 %1350
        %1360 = vrot.lane.b32.xlu0 %v1211, 38
        %v1361 = vpop.permute.xlu0 %1360
        %1362 = vrot.lane.b32.xlu0 %v1215, 38
        %v1363 = vpop.permute.xlu0 %1362
        %1364 = vrot.lane.b32.xlu0 %v1219, 38
        %v1365 = vpop.permute.xlu0 %1364
        %1366 = vrot.lane.b32.xlu0 %v1223, 38
        %v1367 = vpop.permute.xlu0 %1366
        %1368 = vrot.lane.b32.xlu0 %v1227, 38
        %v1369 = vpop.permute.xlu0 %1368
        %1370 = vrot.lane.b32.xlu0 %v1231, 38
        %v1371 = vpop.permute.xlu0 %1370
        %1372 = vrot.lane.b32.xlu0 %v1235, 38
        %v1373 = vpop.permute.xlu0 %1372
        %1374 = vrot.lane.b32.xlu0 %v1239, 38
        %v1375 = vpop.permute.xlu0 %1374
        %1384 = vrot.lane.b32.xlu0 %v1211, 23
        %v1385 = vpop.permute.xlu0 %1384
        %1386 = vrot.lane.b32.xlu0 %v1215, 23
        %v1387 = vpop.permute.xlu0 %1386
        %1388 = vrot.lane.b32.xlu0 %v1219, 23
        %v1389 = vpop.permute.xlu0 %1388
        %1390 = vrot.lane.b32.xlu0 %v1223, 23
        %v1391 = vpop.permute.xlu0 %1390
        %1392 = vrot.lane.b32.xlu0 %v1227, 23
        %v1393 = vpop.permute.xlu0 %1392
        %1394 = vrot.lane.b32.xlu0 %v1231, 23
        %v1395 = vpop.permute.xlu0 %1394
        %1396 = vrot.lane.b32.xlu0 %v1235, 23
        %v1397 = vpop.permute.xlu0 %1396
        %1398 = vrot.lane.b32.xlu0 %v1239, 23
        %v1399 = vpop.permute.xlu0 %1398
        %vm1408 = vcmask 1040384
        %v1409 = vsel %vm1408, %v1174, %v1241
        %v1410 = vsel %vm1408, %v1188, %v1243
        %v1411 = vsel %vm1408, %v1196, %v1245
        %v1412 = vsel %vm1408, %v1198, %v1247
        %v1413 = vsel %vm1408, %v1181, %v1249
        %v1414 = vsel %vm1408, %v1195, %v1251
        %v1415 = vsel %vm1408, %v1197, %v1253
        %v1416 = vsel %vm1408, %v1199, %v1255
        %vm1417 = vcmask 1041408
        %v1418 = vsel %vm1417, %v1409, %v1265
        %v1419 = vsel %vm1417, %v1410, %v1267
        %v1420 = vsel %vm1417, %v1411, %v1269
        %v1421 = vsel %vm1417, %v1412, %v1271
        %v1422 = vsel %vm1417, %v1413, %v1273
        %v1423 = vsel %vm1417, %v1414, %v1275
        %v1424 = vsel %vm1417, %v1415, %v1277
        %v1425 = vsel %vm1417, %v1416, %v1279
        %vm1426 = vcmask 1042432
        %v1427 = vsel %vm1426, %v1418, %v1289
        %v1428 = vsel %vm1426, %v1419, %v1291
        %v1429 = vsel %vm1426, %v1420, %v1293
        %v1430 = vsel %vm1426, %v1421, %v1295
        %v1431 = vsel %vm1426, %v1422, %v1297
        %v1432 = vsel %vm1426, %v1423, %v1299
        %v1433 = vsel %vm1426, %v1424, %v1301
        %v1434 = vsel %vm1426, %v1425, %v1303
        %vm1435 = vcmask 1043456
        %v1436 = vsel %vm1435, %v1427, %v1313
        %v1437 = vsel %vm1435, %v1428, %v1315
        %v1438 = vsel %vm1435, %v1429, %v1317
        %v1439 = vsel %vm1435, %v1430, %v1319
        %v1440 = vsel %vm1435, %v1431, %v1321
        %v1441 = vsel %vm1435, %v1432, %v1323
        %v1442 = vsel %vm1435, %v1433, %v1325
        %v1443 = vsel %vm1435, %v1434, %v1327
        %vm1444 = vcmask 1044480
        %v1445 = vsel %vm1444, %v1436, %v1337
        %v1446 = vsel %vm1444, %v1437, %v1339
        %v1447 = vsel %vm1444, %v1438, %v1341
        %v1448 = vsel %vm1444, %v1439, %v1343
        %v1449 = vsel %vm1444, %v1440, %v1345
        %v1450 = vsel %vm1444, %v1441, %v1347
        %v1451 = vsel %vm1444, %v1442, %v1349
        %v1452 = vsel %vm1444, %v1443, %v1351
        %vm1453 = vcmask 1045504
        %v1454 = vsel %vm1453, %v1445, %v1361
        %v1455 = vsel %vm1453, %v1446, %v1363
        %v1456 = vsel %vm1453, %v1447, %v1365
        %v1457 = vsel %vm1453, %v1448, %v1367
        %v1458 = vsel %vm1453, %v1449, %v1369
        %v1459 = vsel %vm1453, %v1450, %v1371
        %v1460 = vsel %vm1453, %v1451, %v1373
        %v1461 = vsel %vm1453, %v1452, %v1375
        %vm1462 = vcmask 1046528
        %v1463 = vsel %vm1462, %v1454, %v1385
        %v1464 = vsel %vm1462, %v1455, %v1387
        %v1465 = vsel %vm1462, %v1456, %v1389
        %v1466 = vsel %vm1462, %v1457, %v1391
        %v1467 = vsel %vm1462, %v1458, %v1393
        %v1468 = vsel %vm1462, %v1459, %v1395
        %v1469 = vsel %vm1462, %v1460, %v1397
        %v1470 = vsel %vm1462, %v1461, %v1399
        %v1471 = vlaneseq
        %v1472 = vshrl.u32 %v1471, 7
        %v1473 = vsub.s32 0, %v1472
        %v1474 = vrot.slane %v926, %v1473
        %v1475 = vlaneseq
        %v1476 = vshrl.u32 %v1475, 7
        %v1477 = vsub.s32 0, %v1476
        %v1478 = vrot.slane %v940, %v1477
        %v1479 = vlaneseq
        %v1480 = vshrl.u32 %v1479, 7
        %v1481 = vsub.s32 0, %v1480
        %v1482 = vrot.slane %v948, %v1481
        %v1483 = vlaneseq
        %v1484 = vshrl.u32 %v1483, 7
        %v1485 = vsub.s32 0, %v1484
        %v1486 = vrot.slane %v950, %v1485
        %v1487 = vlaneseq
        %v1488 = vshrl.u32 %v1487, 7
        %v1489 = vsub.s32 0, %v1488
        %v1490 = vrot.slane %v933, %v1489
        %v1491 = vlaneseq
        %v1492 = vshrl.u32 %v1491, 7
        %v1493 = vsub.s32 0, %v1492
        %v1494 = vrot.slane %v947, %v1493
        %v1495 = vlaneseq
        %v1496 = vshrl.u32 %v1495, 7
        %v1497 = vsub.s32 0, %v1496
        %v1498 = vrot.slane %v949, %v1497
        %v1499 = vlaneseq
        %v1500 = vshrl.u32 %v1499, 7
        %v1501 = vsub.s32 0, %v1500
        %v1502 = vrot.slane %v951, %v1501
        %1503 = vrot.lane.b32.xlu0 %v1474, 120
        %v1504 = vpop.permute.xlu0 %1503
        %1505 = vrot.lane.b32.xlu0 %v1478, 120
        %v1506 = vpop.permute.xlu0 %1505
        %1507 = vrot.lane.b32.xlu0 %v1482, 120
        %v1508 = vpop.permute.xlu0 %1507
        %1509 = vrot.lane.b32.xlu0 %v1486, 120
        %v1510 = vpop.permute.xlu0 %1509
        %1511 = vrot.lane.b32.xlu0 %v1490, 120
        %v1512 = vpop.permute.xlu0 %1511
        %1513 = vrot.lane.b32.xlu0 %v1494, 120
        %v1514 = vpop.permute.xlu0 %1513
        %1515 = vrot.lane.b32.xlu0 %v1498, 120
        %v1516 = vpop.permute.xlu0 %1515
        %1517 = vrot.lane.b32.xlu0 %v1502, 120
        %v1518 = vpop.permute.xlu0 %1517
        %1527 = vrot.lane.b32.xlu0 %v1474, 7
        %v1528 = vpop.permute.xlu0 %1527
        %1529 = vrot.lane.b32.xlu0 %v1478, 7
        %v1530 = vpop.permute.xlu0 %1529
        %1531 = vrot.lane.b32.xlu0 %v1482, 7
        %v1532 = vpop.permute.xlu0 %1531
        %1533 = vrot.lane.b32.xlu0 %v1486, 7
        %v1534 = vpop.permute.xlu0 %1533
        %1535 = vrot.lane.b32.xlu0 %v1490, 7
        %v1536 = vpop.permute.xlu0 %1535
        %1537 = vrot.lane.b32.xlu0 %v1494, 7
        %v1538 = vpop.permute.xlu0 %1537
        %1539 = vrot.lane.b32.xlu0 %v1498, 7
        %v1540 = vpop.permute.xlu0 %1539
        %1541 = vrot.lane.b32.xlu0 %v1502, 7
        %v1542 = vpop.permute.xlu0 %1541
        %1551 = vrot.lane.b32.xlu0 %v1474, 22
        %v1552 = vpop.permute.xlu0 %1551
        %1553 = vrot.lane.b32.xlu0 %v1478, 22
        %v1554 = vpop.permute.xlu0 %1553
        %1555 = vrot.lane.b32.xlu0 %v1482, 22
        %v1556 = vpop.permute.xlu0 %1555
        %1557 = vrot.lane.b32.xlu0 %v1486, 22
        %v1558 = vpop.permute.xlu0 %1557
        %1559 = vrot.lane.b32.xlu0 %v1490, 22
        %v1560 = vpop.permute.xlu0 %1559
        %1561 = vrot.lane.b32.xlu0 %v1494, 22
        %v1562 = vpop.permute.xlu0 %1561
        %1563 = vrot.lane.b32.xlu0 %v1498, 22
        %v1564 = vpop.permute.xlu0 %1563
        %1565 = vrot.lane.b32.xlu0 %v1502, 22
        %v1566 = vpop.permute.xlu0 %1565
        %vm1575 = vcmask 56320
        %v1576 = vsel %vm1575, %v1504, %v1528
        %v1577 = vsel %vm1575, %v1506, %v1530
        %v1578 = vsel %vm1575, %v1508, %v1532
        %v1579 = vsel %vm1575, %v1510, %v1534
        %v1580 = vsel %vm1575, %v1512, %v1536
        %v1581 = vsel %vm1575, %v1514, %v1538
        %v1582 = vsel %vm1575, %v1516, %v1540
        %v1583 = vsel %vm1575, %v1518, %v1542
        %vm1584 = vcmask 179200
        %v1585 = vsel %vm1584, %v1576, %v1552
        %v1586 = vsel %vm1584, %v1577, %v1554
        %v1587 = vsel %vm1584, %v1578, %v1556
        %v1588 = vsel %vm1584, %v1579, %v1558
        %v1589 = vsel %vm1584, %v1580, %v1560
        %v1590 = vsel %vm1584, %v1581, %v1562
        %v1591 = vsel %vm1584, %v1582, %v1564
        %v1592 = vsel %vm1584, %v1583, %v1566
        %v1601 = vrot.slane %v1585, 7
        %v1602 = vrot.slane %v1586, 7
        %v1603 = vrot.slane %v1587, 7
        %v1604 = vrot.slane %v1588, 7
        %v1605 = vrot.slane %v1589, 7
        %v1606 = vrot.slane %v1590, 7
        %v1607 = vrot.slane %v1591, 7
        %v1608 = vrot.slane %v1592, 7
        %1609 = vrot.lane.b32.xlu0 %v1601, 127
        %v1610 = vpop.permute.xlu0 %1609
        %1611 = vrot.lane.b32.xlu0 %v1602, 127
        %v1612 = vpop.permute.xlu0 %1611
        %1613 = vrot.lane.b32.xlu0 %v1603, 127
        %v1614 = vpop.permute.xlu0 %1613
        %1615 = vrot.lane.b32.xlu0 %v1604, 127
        %v1616 = vpop.permute.xlu0 %1615
        %1617 = vrot.lane.b32.xlu0 %v1605, 127
        %v1618 = vpop.permute.xlu0 %1617
        %1619 = vrot.lane.b32.xlu0 %v1606, 127
        %v1620 = vpop.permute.xlu0 %1619
        %1621 = vrot.lane.b32.xlu0 %v1607, 127
        %v1622 = vpop.permute.xlu0 %1621
        %1623 = vrot.lane.b32.xlu0 %v1608, 127
        %v1624 = vpop.permute.xlu0 %1623
        %v1633 = vrot.slane %v1585, 6
        %v1634 = vrot.slane %v1586, 6
        %v1635 = vrot.slane %v1587, 6
        %v1636 = vrot.slane %v1588, 6
        %v1637 = vrot.slane %v1589, 6
        %v1638 = vrot.slane %v1590, 6
        %v1639 = vrot.slane %v1591, 6
        %v1640 = vrot.slane %v1592, 6
        %1641 = vrot.lane.b32.xlu0 %v1633, 126
        %v1642 = vpop.permute.xlu0 %1641
        %1643 = vrot.lane.b32.xlu0 %v1634, 126
        %v1644 = vpop.permute.xlu0 %1643
        %1645 = vrot.lane.b32.xlu0 %v1635, 126
        %v1646 = vpop.permute.xlu0 %1645
        %1647 = vrot.lane.b32.xlu0 %v1636, 126
        %v1648 = vpop.permute.xlu0 %1647
        %1649 = vrot.lane.b32.xlu0 %v1637, 126
        %v1650 = vpop.permute.xlu0 %1649
        %1651 = vrot.lane.b32.xlu0 %v1638, 126
        %v1652 = vpop.permute.xlu0 %1651
        %1653 = vrot.lane.b32.xlu0 %v1639, 126
        %v1654 = vpop.permute.xlu0 %1653
        %1655 = vrot.lane.b32.xlu0 %v1640, 126
        %v1656 = vpop.permute.xlu0 %1655
        %v1665 = vrot.slane %v1585, 5
        %v1666 = vrot.slane %v1586, 5
        %v1667 = vrot.slane %v1587, 5
        %v1668 = vrot.slane %v1588, 5
        %v1669 = vrot.slane %v1589, 5
        %v1670 = vrot.slane %v1590, 5
        %v1671 = vrot.slane %v1591, 5
        %v1672 = vrot.slane %v1592, 5
        %1673 = vrot.lane.b32.xlu0 %v1665, 125
        %v1674 = vpop.permute.xlu0 %1673
        %1675 = vrot.lane.b32.xlu0 %v1666, 125
        %v1676 = vpop.permute.xlu0 %1675
        %1677 = vrot.lane.b32.xlu0 %v1667, 125
        %v1678 = vpop.permute.xlu0 %1677
        %1679 = vrot.lane.b32.xlu0 %v1668, 125
        %v1680 = vpop.permute.xlu0 %1679
        %1681 = vrot.lane.b32.xlu0 %v1669, 125
        %v1682 = vpop.permute.xlu0 %1681
        %1683 = vrot.lane.b32.xlu0 %v1670, 125
        %v1684 = vpop.permute.xlu0 %1683
        %1685 = vrot.lane.b32.xlu0 %v1671, 125
        %v1686 = vpop.permute.xlu0 %1685
        %1687 = vrot.lane.b32.xlu0 %v1672, 125
        %v1688 = vpop.permute.xlu0 %1687
        %v1697 = vrot.slane %v1585, 4
        %v1698 = vrot.slane %v1586, 4
        %v1699 = vrot.slane %v1587, 4
        %v1700 = vrot.slane %v1588, 4
        %v1701 = vrot.slane %v1589, 4
        %v1702 = vrot.slane %v1590, 4
        %v1703 = vrot.slane %v1591, 4
        %v1704 = vrot.slane %v1592, 4
        %1705 = vrot.lane.b32.xlu0 %v1697, 124
        %v1706 = vpop.permute.xlu0 %1705
        %1707 = vrot.lane.b32.xlu0 %v1698, 124
        %v1708 = vpop.permute.xlu0 %1707
        %1709 = vrot.lane.b32.xlu0 %v1699, 124
        %v1710 = vpop.permute.xlu0 %1709
        %1711 = vrot.lane.b32.xlu0 %v1700, 124
        %v1712 = vpop.permute.xlu0 %1711
        %1713 = vrot.lane.b32.xlu0 %v1701, 124
        %v1714 = vpop.permute.xlu0 %1713
        %1715 = vrot.lane.b32.xlu0 %v1702, 124
        %v1716 = vpop.permute.xlu0 %1715
        %1717 = vrot.lane.b32.xlu0 %v1703, 124
        %v1718 = vpop.permute.xlu0 %1717
        %1719 = vrot.lane.b32.xlu0 %v1704, 124
        %v1720 = vpop.permute.xlu0 %1719
        %v1729 = vrot.slane %v1585, 3
        %v1730 = vrot.slane %v1586, 3
        %v1731 = vrot.slane %v1587, 3
        %v1732 = vrot.slane %v1588, 3
        %v1733 = vrot.slane %v1589, 3
        %v1734 = vrot.slane %v1590, 3
        %v1735 = vrot.slane %v1591, 3
        %v1736 = vrot.slane %v1592, 3
        %1737 = vrot.lane.b32.xlu0 %v1729, 123
        %v1738 = vpop.permute.xlu0 %1737
        %1739 = vrot.lane.b32.xlu0 %v1730, 123
        %v1740 = vpop.permute.xlu0 %1739
        %1741 = vrot.lane.b32.xlu0 %v1731, 123
        %v1742 = vpop.permute.xlu0 %1741
        %1743 = vrot.lane.b32.xlu0 %v1732, 123
        %v1744 = vpop.permute.xlu0 %1743
        %1745 = vrot.lane.b32.xlu0 %v1733, 123
        %v1746 = vpop.permute.xlu0 %1745
        %1747 = vrot.lane.b32.xlu0 %v1734, 123
        %v1748 = vpop.permute.xlu0 %1747
        %1749 = vrot.lane.b32.xlu0 %v1735, 123
        %v1750 = vpop.permute.xlu0 %1749
        %1751 = vrot.lane.b32.xlu0 %v1736, 123
        %v1752 = vpop.permute.xlu0 %1751
        %v1761 = vrot.slane %v1585, 2
        %v1762 = vrot.slane %v1586, 2
        %v1763 = vrot.slane %v1587, 2
        %v1764 = vrot.slane %v1588, 2
        %v1765 = vrot.slane %v1589, 2
        %v1766 = vrot.slane %v1590, 2
        %v1767 = vrot.slane %v1591, 2
        %v1768 = vrot.slane %v1592, 2
        %1769 = vrot.lane.b32.xlu0 %v1761, 122
        %v1770 = vpop.permute.xlu0 %1769
        %1771 = vrot.lane.b32.xlu0 %v1762, 122
        %v1772 = vpop.permute.xlu0 %1771
        %1773 = vrot.lane.b32.xlu0 %v1763, 122
        %v1774 = vpop.permute.xlu0 %1773
        %1775 = vrot.lane.b32.xlu0 %v1764, 122
        %v1776 = vpop.permute.xlu0 %1775
        %1777 = vrot.lane.b32.xlu0 %v1765, 122
        %v1778 = vpop.permute.xlu0 %1777
        %1779 = vrot.lane.b32.xlu0 %v1766, 122
        %v1780 = vpop.permute.xlu0 %1779
        %1781 = vrot.lane.b32.xlu0 %v1767, 122
        %v1782 = vpop.permute.xlu0 %1781
        %1783 = vrot.lane.b32.xlu0 %v1768, 122
        %v1784 = vpop.permute.xlu0 %1783
        %v1793 = vrot.slane %v1585, 1
        %v1794 = vrot.slane %v1586, 1
        %v1795 = vrot.slane %v1587, 1
        %v1796 = vrot.slane %v1588, 1
        %v1797 = vrot.slane %v1589, 1
        %v1798 = vrot.slane %v1590, 1
        %v1799 = vrot.slane %v1591, 1
        %v1800 = vrot.slane %v1592, 1
        %1801 = vrot.lane.b32.xlu0 %v1793, 121
        %v1802 = vpop.permute.xlu0 %1801
        %1803 = vrot.lane.b32.xlu0 %v1794, 121
        %v1804 = vpop.permute.xlu0 %1803
        %1805 = vrot.lane.b32.xlu0 %v1795, 121
        %v1806 = vpop.permute.xlu0 %1805
        %1807 = vrot.lane.b32.xlu0 %v1796, 121
        %v1808 = vpop.permute.xlu0 %1807
        %1809 = vrot.lane.b32.xlu0 %v1797, 121
        %v1810 = vpop.permute.xlu0 %1809
        %1811 = vrot.lane.b32.xlu0 %v1798, 121
        %v1812 = vpop.permute.xlu0 %1811
        %1813 = vrot.lane.b32.xlu0 %v1799, 121
        %v1814 = vpop.permute.xlu0 %1813
        %1815 = vrot.lane.b32.xlu0 %v1800, 121
        %v1816 = vpop.permute.xlu0 %1815
        %1825 = vrot.lane.b32.xlu0 %v1585, 120
        %v1826 = vpop.permute.xlu0 %1825
        %1827 = vrot.lane.b32.xlu0 %v1586, 120
        %v1828 = vpop.permute.xlu0 %1827
        %1829 = vrot.lane.b32.xlu0 %v1587, 120
        %v1830 = vpop.permute.xlu0 %1829
        %1831 = vrot.lane.b32.xlu0 %v1588, 120
        %v1832 = vpop.permute.xlu0 %1831
        %1833 = vrot.lane.b32.xlu0 %v1589, 120
        %v1834 = vpop.permute.xlu0 %1833
        %1835 = vrot.lane.b32.xlu0 %v1590, 120
        %v1836 = vpop.permute.xlu0 %1835
        %1837 = vrot.lane.b32.xlu0 %v1591, 120
        %v1838 = vpop.permute.xlu0 %1837
        %1839 = vrot.lane.b32.xlu0 %v1592, 120
        %v1840 = vpop.permute.xlu0 %1839
        %1849 = vrot.lane.b32.xlu0 %v1601, 119
        %v1850 = vpop.permute.xlu0 %1849
        %1851 = vrot.lane.b32.xlu0 %v1602, 119
        %v1852 = vpop.permute.xlu0 %1851
        %1853 = vrot.lane.b32.xlu0 %v1603, 119
        %v1854 = vpop.permute.xlu0 %1853
        %1855 = vrot.lane.b32.xlu0 %v1604, 119
        %v1856 = vpop.permute.xlu0 %1855
        %1857 = vrot.lane.b32.xlu0 %v1605, 119
        %v1858 = vpop.permute.xlu0 %1857
        %1859 = vrot.lane.b32.xlu0 %v1606, 119
        %v1860 = vpop.permute.xlu0 %1859
        %1861 = vrot.lane.b32.xlu0 %v1607, 119
        %v1862 = vpop.permute.xlu0 %1861
        %1863 = vrot.lane.b32.xlu0 %v1608, 119
        %v1864 = vpop.permute.xlu0 %1863
        %1873 = vrot.lane.b32.xlu0 %v1633, 118
        %v1874 = vpop.permute.xlu0 %1873
        %1875 = vrot.lane.b32.xlu0 %v1634, 118
        %v1876 = vpop.permute.xlu0 %1875
        %1877 = vrot.lane.b32.xlu0 %v1635, 118
        %v1878 = vpop.permute.xlu0 %1877
        %1879 = vrot.lane.b32.xlu0 %v1636, 118
        %v1880 = vpop.permute.xlu0 %1879
        %1881 = vrot.lane.b32.xlu0 %v1637, 118
        %v1882 = vpop.permute.xlu0 %1881
        %1883 = vrot.lane.b32.xlu0 %v1638, 118
        %v1884 = vpop.permute.xlu0 %1883
        %1885 = vrot.lane.b32.xlu0 %v1639, 118
        %v1886 = vpop.permute.xlu0 %1885
        %1887 = vrot.lane.b32.xlu0 %v1640, 118
        %v1888 = vpop.permute.xlu0 %1887
        %1897 = vrot.lane.b32.xlu0 %v1665, 117
        %v1898 = vpop.permute.xlu0 %1897
        %1899 = vrot.lane.b32.xlu0 %v1666, 117
        %v1900 = vpop.permute.xlu0 %1899
        %1901 = vrot.lane.b32.xlu0 %v1667, 117
        %v1902 = vpop.permute.xlu0 %1901
        %1903 = vrot.lane.b32.xlu0 %v1668, 117
        %v1904 = vpop.permute.xlu0 %1903
        %1905 = vrot.lane.b32.xlu0 %v1669, 117
        %v1906 = vpop.permute.xlu0 %1905
        %1907 = vrot.lane.b32.xlu0 %v1670, 117
        %v1908 = vpop.permute.xlu0 %1907
        %1909 = vrot.lane.b32.xlu0 %v1671, 117
        %v1910 = vpop.permute.xlu0 %1909
        %1911 = vrot.lane.b32.xlu0 %v1672, 117
        %v1912 = vpop.permute.xlu0 %1911
        %1921 = vrot.lane.b32.xlu0 %v1697, 116
        %v1922 = vpop.permute.xlu0 %1921
        %1923 = vrot.lane.b32.xlu0 %v1698, 116
        %v1924 = vpop.permute.xlu0 %1923
        %1925 = vrot.lane.b32.xlu0 %v1699, 116
        %v1926 = vpop.permute.xlu0 %1925
        %1927 = vrot.lane.b32.xlu0 %v1700, 116
        %v1928 = vpop.permute.xlu0 %1927
        %1929 = vrot.lane.b32.xlu0 %v1701, 116
        %v1930 = vpop.permute.xlu0 %1929
        %1931 = vrot.lane.b32.xlu0 %v1702, 116
        %v1932 = vpop.permute.xlu0 %1931
        %1933 = vrot.lane.b32.xlu0 %v1703, 116
        %v1934 = vpop.permute.xlu0 %1933
        %1935 = vrot.lane.b32.xlu0 %v1704, 116
        %v1936 = vpop.permute.xlu0 %1935
        %1945 = vrot.lane.b32.xlu0 %v1729, 115
        %v1946 = vpop.permute.xlu0 %1945
        %1947 = vrot.lane.b32.xlu0 %v1730, 115
        %v1948 = vpop.permute.xlu0 %1947
        %1949 = vrot.lane.b32.xlu0 %v1731, 115
        %v1950 = vpop.permute.xlu0 %1949
        %1951 = vrot.lane.b32.xlu0 %v1732, 115
        %v1952 = vpop.permute.xlu0 %1951
        %1953 = vrot.lane.b32.xlu0 %v1733, 115
        %v1954 = vpop.permute.xlu0 %1953
        %1955 = vrot.lane.b32.xlu0 %v1734, 115
        %v1956 = vpop.permute.xlu0 %1955
        %1957 = vrot.lane.b32.xlu0 %v1735, 115
        %v1958 = vpop.permute.xlu0 %1957
        %1959 = vrot.lane.b32.xlu0 %v1736, 115
        %v1960 = vpop.permute.xlu0 %1959
        %1969 = vrot.lane.b32.xlu0 %v1761, 114
        %v1970 = vpop.permute.xlu0 %1969
        %1971 = vrot.lane.b32.xlu0 %v1762, 114
        %v1972 = vpop.permute.xlu0 %1971
        %1973 = vrot.lane.b32.xlu0 %v1763, 114
        %v1974 = vpop.permute.xlu0 %1973
        %1975 = vrot.lane.b32.xlu0 %v1764, 114
        %v1976 = vpop.permute.xlu0 %1975
        %1977 = vrot.lane.b32.xlu0 %v1765, 114
        %v1978 = vpop.permute.xlu0 %1977
        %1979 = vrot.lane.b32.xlu0 %v1766, 114
        %v1980 = vpop.permute.xlu0 %1979
        %1981 = vrot.lane.b32.xlu0 %v1767, 114
        %v1982 = vpop.permute.xlu0 %1981
        %1983 = vrot.lane.b32.xlu0 %v1768, 114
        %v1984 = vpop.permute.xlu0 %1983
        %v1993 = vsel %vm1408, %v1585, %v1610
        %v1994 = vsel %vm1408, %v1586, %v1612
        %v1995 = vsel %vm1408, %v1587, %v1614
        %v1996 = vsel %vm1408, %v1588, %v1616
        %v1997 = vsel %vm1408, %v1589, %v1618
        %v1998 = vsel %vm1408, %v1590, %v1620
        %v1999 = vsel %vm1408, %v1591, %v1622
        %v2000 = vsel %vm1408, %v1592, %v1624
        %v2001 = vsel %vm1417, %v1993, %v1642
        %v2002 = vsel %vm1417, %v1994, %v1644
        %v2003 = vsel %vm1417, %v1995, %v1646
        %v2004 = vsel %vm1417, %v1996, %v1648
        %v2005 = vsel %vm1417, %v1997, %v1650
        %v2006 = vsel %vm1417, %v1998, %v1652
        %v2007 = vsel %vm1417, %v1999, %v1654
        %v2008 = vsel %vm1417, %v2000, %v1656
        %v2009 = vsel %vm1426, %v2001, %v1674
        %v2010 = vsel %vm1426, %v2002, %v1676
        %v2011 = vsel %vm1426, %v2003, %v1678
        %v2012 = vsel %vm1426, %v2004, %v1680
        %v2013 = vsel %vm1426, %v2005, %v1682
        %v2014 = vsel %vm1426, %v2006, %v1684
        %v2015 = vsel %vm1426, %v2007, %v1686
        %v2016 = vsel %vm1426, %v2008, %v1688
        %v2017 = vsel %vm1435, %v2009, %v1706
        %v2018 = vsel %vm1435, %v2010, %v1708
        %v2019 = vsel %vm1435, %v2011, %v1710
        %v2020 = vsel %vm1435, %v2012, %v1712
        %v2021 = vsel %vm1435, %v2013, %v1714
        %v2022 = vsel %vm1435, %v2014, %v1716
        %v2023 = vsel %vm1435, %v2015, %v1718
        %v2024 = vsel %vm1435, %v2016, %v1720
        %v2025 = vsel %vm1444, %v2017, %v1738
        %v2026 = vsel %vm1444, %v2018, %v1740
        %v2027 = vsel %vm1444, %v2019, %v1742
        %v2028 = vsel %vm1444, %v2020, %v1744
        %v2029 = vsel %vm1444, %v2021, %v1746
        %v2030 = vsel %vm1444, %v2022, %v1748
        %v2031 = vsel %vm1444, %v2023, %v1750
        %v2032 = vsel %vm1444, %v2024, %v1752
        %v2033 = vsel %vm1453, %v2025, %v1770
        %v2034 = vsel %vm1453, %v2026, %v1772
        %v2035 = vsel %vm1453, %v2027, %v1774
        %v2036 = vsel %vm1453, %v2028, %v1776
        %v2037 = vsel %vm1453, %v2029, %v1778
        %v2038 = vsel %vm1453, %v2030, %v1780
        %v2039 = vsel %vm1453, %v2031, %v1782
        %v2040 = vsel %vm1453, %v2032, %v1784
        %v2041 = vsel %vm1462, %v2033, %v1802
        %v2042 = vsel %vm1462, %v2034, %v1804
        %v2043 = vsel %vm1462, %v2035, %v1806
        %v2044 = vsel %vm1462, %v2036, %v1808
        %v2045 = vsel %vm1462, %v2037, %v1810
        %v2046 = vsel %vm1462, %v2038, %v1812
        %v2047 = vsel %vm1462, %v2039, %v1814
        %v2048 = vsel %vm1462, %v2040, %v1816
        %v2049 = vsel %vm1408, %v1826, %v1850
        %v2050 = vsel %vm1408, %v1828, %v1852
        %v2051 = vsel %vm1408, %v1830, %v1854
        %v2052 = vsel %vm1408, %v1832, %v1856
        %v2053 = vsel %vm1408, %v1834, %v1858
        %v2054 = vsel %vm1408, %v1836, %v1860
        %v2055 = vsel %vm1408, %v1838, %v1862
        %v2056 = vsel %vm1408, %v1840, %v1864
        %v2057 = vsel %vm1417, %v2049, %v1874
        %v2058 = vsel %vm1417, %v2050, %v1876
        %v2059 = vsel %vm1417, %v2051, %v1878
        %v2060 = vsel %vm1417, %v2052, %v1880
        %v2061 = vsel %vm1417, %v2053, %v1882
        %v2062 = vsel %vm1417, %v2054, %v1884
        %v2063 = vsel %vm1417, %v2055, %v1886
        %v2064 = vsel %vm1417, %v2056, %v1888
        %v2065 = vsel %vm1426, %v2057, %v1898
        %v2066 = vsel %vm1426, %v2058, %v1900
        %v2067 = vsel %vm1426, %v2059, %v1902
        %v2068 = vsel %vm1426, %v2060, %v1904
        %v2069 = vsel %vm1426, %v2061, %v1906
        %v2070 = vsel %vm1426, %v2062, %v1908
        %v2071 = vsel %vm1426, %v2063, %v1910
        %v2072 = vsel %vm1426, %v2064, %v1912
        %v2073 = vsel %vm1435, %v2065, %v1922
        %v2074 = vsel %vm1435, %v2066, %v1924
        %v2075 = vsel %vm1435, %v2067, %v1926
        %v2076 = vsel %vm1435, %v2068, %v1928
        %v2077 = vsel %vm1435, %v2069, %v1930
        %v2078 = vsel %vm1435, %v2070, %v1932
        %v2079 = vsel %vm1435, %v2071, %v1934
        %v2080 = vsel %vm1435, %v2072, %v1936
        %v2081 = vsel %vm1444, %v2073, %v1946
        %v2082 = vsel %vm1444, %v2074, %v1948
        %v2083 = vsel %vm1444, %v2075, %v1950
        %v2084 = vsel %vm1444, %v2076, %v1952
        %v2085 = vsel %vm1444, %v2077, %v1954
        %v2086 = vsel %vm1444, %v2078, %v1956
        %v2087 = vsel %vm1444, %v2079, %v1958
        %v2088 = vsel %vm1444, %v2080, %v1960
        %v2089 = vsel %vm1453, %v2081, %v1970
        %v2090 = vsel %vm1453, %v2082, %v1972
        %v2091 = vsel %vm1453, %v2083, %v1974
        %v2092 = vsel %vm1453, %v2084, %v1976
        %v2093 = vsel %vm1453, %v2085, %v1978
        %v2094 = vsel %vm1453, %v2086, %v1980
        %v2095 = vsel %vm1453, %v2087, %v1982
        %v2096 = vsel %vm1453, %v2088, %v1984
        %v2097 = vpack.c.bf16 %v1463, %v1463
        %v2098 = vpack.c.bf16 %v1464, %v1464
        %v2099 = vpack.c.bf16 %v1465, %v1465
        %v2100 = vpack.c.bf16 %v1466, %v1466
        %v2101 = vpack.c.bf16 %v1467, %v1467
        %v2102 = vpack.c.bf16 %v1468, %v1468
        %v2103 = vpack.c.bf16 %v1469, %v1469
        %v2104 = vpack.c.bf16 %v1470, %v1470
        %v2105 = vpack.c.bf16 %v2089, %v2041
        %v2106 = vpack.c.bf16 %v2090, %v2042
        %v2107 = vpack.c.bf16 %v2091, %v2043
        %v2108 = vpack.c.bf16 %v2092, %v2044
        %v2109 = vpack.c.bf16 %v2093, %v2045
        %v2110 = vpack.c.bf16 %v2094, %v2046
        %v2111 = vpack.c.bf16 %v2095, %v2047
        %v2112 = vpack.c.bf16 %v2096, %v2048
        %vm2113 = vcmask 121856
        %v2115 = vsel %vm2113, %v2097, 0
        %vm2117 = vcmask 1047552
        %v2118 = vsel %vm1462, 4294967295, 65535
        %v2119 = vsel %vm2117, %v2118, 0
        %v2121 = vand.u32 %v2105, %v2119
        %2123 = vmatprep.subr.bf16.mxu0 0
        %2124 = vmatpush1.bf16.msra.mxu0 %v2121
        %2125 = vmatprep.subr.bf16.mxu0 0
        %2126 = vmatpush1.bf16.msra.mxu0 0
        %2127 = vmatprep.subr.bf16.mxu0 0
        %2128 = vmatpush1.bf16.msra.mxu0 0
        %2129 = vmatprep.subr.bf16.mxu0 0
        %2130 = vmatpush1.bf16.msra.mxu0 0
        %2131 = vmatprep.subr.bf16.mxu0 0
        %2132 = vmatpush1.bf16.msra.mxu0 0
        %2133 = vmatprep.subr.bf16.mxu0 0
        %2134 = vmatpush1.bf16.msra.mxu0 0
        %2135 = vmatprep.subr.bf16.mxu0 0
        %2136 = vmatpush1.bf16.msra.mxu0 0
        %2137 = vmatprep.subr.bf16.mxu0 0
        %2138 = vmatpush1.bf16.msra.mxu0 0
        %2139 = vmatprep.subr.bf16.mxu0 0
        %2140 = vmatpush1.bf16.msra.mxu0 0
        %2141 = vmatprep.subr.bf16.mxu0 0
        %2142 = vmatpush1.bf16.msra.mxu0 0
        %2143 = vmatprep.subr.bf16.mxu0 0
        %2144 = vmatpush1.bf16.msra.mxu0 0
        %2145 = vmatprep.subr.bf16.mxu0 0
        %2146 = vmatpush1.bf16.msra.mxu0 0
        %2147 = vmatprep.subr.bf16.mxu0 0
        %2148 = vmatpush1.bf16.msra.mxu0 0
        %2149 = vmatprep.subr.bf16.mxu0 0
        %2150 = vmatpush1.bf16.msra.mxu0 0
        %2151 = vmatprep.subr.bf16.mxu0 0
        %2152 = vmatpush1.bf16.msra.mxu0 0
        %2153 = vmatprep.subr.bf16.mxu0 0
        %2154 = vmatpush1.bf16.msra.mxu0 0
        %2155 = vmatprep.mubr.bf16.mxu0 0
        %2156 = vmatmul.mubr.bf16.gmra.mrb[0].mxu0 %v2115
        %v2157 = vpop.f32.mrb[0].mxu0
        %v2158 = vadd.f32 0.0, %v2157
        %v2159 = vpop.f32.mrb[0].mxu0
        %v2160 = vpop.f32.mrb[0].mxu0
        %v2161 = vpop.f32.mrb[0].mxu0
        %2162 = vdwg.mxu0
        %v2164 = vsel %vm2113, %v2098, 0
        %v2167 = vand.u32 %v2106, %v2119
        %2169 = vmatprep.subr.bf16.mxu0 0
        %2170 = vmatpush1.bf16.msra.mxu0 %v2167
        %2171 = vmatprep.subr.bf16.mxu0 0
        %2172 = vmatpush1.bf16.msra.mxu0 0
        %2173 = vmatprep.subr.bf16.mxu0 0
        %2174 = vmatpush1.bf16.msra.mxu0 0
        %2175 = vmatprep.subr.bf16.mxu0 0
        %2176 = vmatpush1.bf16.msra.mxu0 0
        %2177 = vmatprep.subr.bf16.mxu0 0
        %2178 = vmatpush1.bf16.msra.mxu0 0
        %2179 = vmatprep.subr.bf16.mxu0 0
        %2180 = vmatpush1.bf16.msra.mxu0 0
        %2181 = vmatprep.subr.bf16.mxu0 0
        %2182 = vmatpush1.bf16.msra.mxu0 0
        %2183 = vmatprep.subr.bf16.mxu0 0
        %2184 = vmatpush1.bf16.msra.mxu0 0
        %2185 = vmatprep.subr.bf16.mxu0 0
        %2186 = vmatpush1.bf16.msra.mxu0 0
        %2187 = vmatprep.subr.bf16.mxu0 0
        %2188 = vmatpush1.bf16.msra.mxu0 0
        %2189 = vmatprep.subr.bf16.mxu0 0
        %2190 = vmatpush1.bf16.msra.mxu0 0
        %2191 = vmatprep.subr.bf16.mxu0 0
        %2192 = vmatpush1.bf16.msra.mxu0 0
        %2193 = vmatprep.subr.bf16.mxu0 0
        %2194 = vmatpush1.bf16.msra.mxu0 0
        %2195 = vmatprep.subr.bf16.mxu0 0
        %2196 = vmatpush1.bf16.msra.mxu0 0
        %2197 = vmatprep.subr.bf16.mxu0 0
        %2198 = vmatpush1.bf16.msra.mxu0 0
        %2199 = vmatprep.subr.bf16.mxu0 0
        %2200 = vmatpush1.bf16.msra.mxu0 0
        %2201 = vmatprep.mubr.bf16.mxu0 0
        %2202 = vmatmul.mubr.bf16.gmra.mrb[0].mxu0 %v2164
        %v2203 = vpop.f32.mrb[0].mxu0
        %v2204 = vadd.f32 0.0, %v2203
        %v2205 = vpop.f32.mrb[0].mxu0
        %v2206 = vpop.f32.mrb[0].mxu0
        %v2207 = vpop.f32.mrb[0].mxu0
        %2208 = vdwg.mxu0
        %v2210 = vsel %vm2113, %v2099, 0
        %v2213 = vand.u32 %v2107, %v2119
        %2215 = vmatprep.subr.bf16.mxu0 0
        %2216 = vmatpush1.bf16.msra.mxu0 %v2213
        %2217 = vmatprep.subr.bf16.mxu0 0
        %2218 = vmatpush1.bf16.msra.mxu0 0
        %2219 = vmatprep.subr.bf16.mxu0 0
        %2220 = vmatpush1.bf16.msra.mxu0 0
        %2221 = vmatprep.subr.bf16.mxu0 0
        %2222 = vmatpush1.bf16.msra.mxu0 0
        %2223 = vmatprep.subr.bf16.mxu0 0
        %2224 = vmatpush1.bf16.msra.mxu0 0
        %2225 = vmatprep.subr.bf16.mxu0 0
        %2226 = vmatpush1.bf16.msra.mxu0 0
        %2227 = vmatprep.subr.bf16.mxu0 0
        %2228 = vmatpush1.bf16.msra.mxu0 0
        %2229 = vmatprep.subr.bf16.mxu0 0
        %2230 = vmatpush1.bf16.msra.mxu0 0
        %2231 = vmatprep.subr.bf16.mxu0 0
        %2232 = vmatpush1.bf16.msra.mxu0 0
        %2233 = vmatprep.subr.bf16.mxu0 0
        %2234 = vmatpush1.bf16.msra.mxu0 0
        %2235 = vmatprep.subr.bf16.mxu0 0
        %2236 = vmatpush1.bf16.msra.mxu0 0
        %2237 = vmatprep.subr.bf16.mxu0 0
        %2238 = vmatpush1.bf16.msra.mxu0 0
        %2239 = vmatprep.subr.bf16.mxu0 0
        %2240 = vmatpush1.bf16.msra.mxu0 0
        %2241 = vmatprep.subr.bf16.mxu0 0
        %2242 = vmatpush1.bf16.msra.mxu0 0
        %2243 = vmatprep.subr.bf16.mxu0 0
        %2244 = vmatpush1.bf16.msra.mxu0 0
        %2245 = vmatprep.subr.bf16.mxu0 0
        %2246 = vmatpush1.bf16.msra.mxu0 0
        %2247 = vmatprep.mubr.bf16.mxu0 0
        %2248 = vmatmul.mubr.bf16.gmra.mrb[0].mxu0 %v2210
        %v2249 = vpop.f32.mrb[0].mxu0
        %v2250 = vadd.f32 0.0, %v2249
        %v2251 = vpop.f32.mrb[0].mxu0
        %v2252 = vpop.f32.mrb[0].mxu0
        %v2253 = vpop.f32.mrb[0].mxu0
        %2254 = vdwg.mxu0
        %v2256 = vsel %vm2113, %v2100, 0
        %v2259 = vand.u32 %v2108, %v2119
        %2261 = vmatprep.subr.bf16.mxu0 0
        %2262 = vmatpush1.bf16.msra.mxu0 %v2259
        %2263 = vmatprep.subr.bf16.mxu0 0
        %2264 = vmatpush1.bf16.msra.mxu0 0
        %2265 = vmatprep.subr.bf16.mxu0 0
        %2266 = vmatpush1.bf16.msra.mxu0 0
        %2267 = vmatprep.subr.bf16.mxu0 0
        %2268 = vmatpush1.bf16.msra.mxu0 0
        %2269 = vmatprep.subr.bf16.mxu0 0
        %2270 = vmatpush1.bf16.msra.mxu0 0
        %2271 = vmatprep.subr.bf16.mxu0 0
        %2272 = vmatpush1.bf16.msra.mxu0 0
        %2273 = vmatprep.subr.bf16.mxu0 0
        %2274 = vmatpush1.bf16.msra.mxu0 0
        %2275 = vmatprep.subr.bf16.mxu0 0
        %2276 = vmatpush1.bf16.msra.mxu0 0
        %2277 = vmatprep.subr.bf16.mxu0 0
        %2278 = vmatpush1.bf16.msra.mxu0 0
        %2279 = vmatprep.subr.bf16.mxu0 0
        %2280 = vmatpush1.bf16.msra.mxu0 0
        %2281 = vmatprep.subr.bf16.mxu0 0
        %2282 = vmatpush1.bf16.msra.mxu0 0
        %2283 = vmatprep.subr.bf16.mxu0 0
        %2284 = vmatpush1.bf16.msra.mxu0 0
        %2285 = vmatprep.subr.bf16.mxu0 0
        %2286 = vmatpush1.bf16.msra.mxu0 0
        %2287 = vmatprep.subr.bf16.mxu0 0
        %2288 = vmatpush1.bf16.msra.mxu0 0
        %2289 = vmatprep.subr.bf16.mxu0 0
        %2290 = vmatpush1.bf16.msra.mxu0 0
        %2291 = vmatprep.subr.bf16.mxu0 0
        %2292 = vmatpush1.bf16.msra.mxu0 0
        %2293 = vmatprep.mubr.bf16.mxu0 0
        %2294 = vmatmul.mubr.bf16.gmra.mrb[0].mxu0 %v2256
        %v2295 = vpop.f32.mrb[0].mxu0
        %v2296 = vadd.f32 0.0, %v2295
        %v2297 = vpop.f32.mrb[0].mxu0
        %v2298 = vpop.f32.mrb[0].mxu0
        %v2299 = vpop.f32.mrb[0].mxu0
        %2300 = vdwg.mxu0
        %v2302 = vsel %vm2113, %v2101, 0
        %v2305 = vand.u32 %v2109, %v2119
        %2307 = vmatprep.subr.bf16.mxu0 0
        %2308 = vmatpush1.bf16.msra.mxu0 %v2305
        %2309 = vmatprep.subr.bf16.mxu0 0
        %2310 = vmatpush1.bf16.msra.mxu0 0
        %2311 = vmatprep.subr.bf16.mxu0 0
        %2312 = vmatpush1.bf16.msra.mxu0 0
        %2313 = vmatprep.subr.bf16.mxu0 0
        %2314 = vmatpush1.bf16.msra.mxu0 0
        %2315 = vmatprep.subr.bf16.mxu0 0
        %2316 = vmatpush1.bf16.msra.mxu0 0
        %2317 = vmatprep.subr.bf16.mxu0 0
        %2318 = vmatpush1.bf16.msra.mxu0 0
        %2319 = vmatprep.subr.bf16.mxu0 0
        %2320 = vmatpush1.bf16.msra.mxu0 0
        %2321 = vmatprep.subr.bf16.mxu0 0
        %2322 = vmatpush1.bf16.msra.mxu0 0
        %2323 = vmatprep.subr.bf16.mxu0 0
        %2324 = vmatpush1.bf16.msra.mxu0 0
        %2325 = vmatprep.subr.bf16.mxu0 0
        %2326 = vmatpush1.bf16.msra.mxu0 0
        %2327 = vmatprep.subr.bf16.mxu0 0
        %2328 = vmatpush1.bf16.msra.mxu0 0
        %2329 = vmatprep.subr.bf16.mxu0 0
        %2330 = vmatpush1.bf16.msra.mxu0 0
        %2331 = vmatprep.subr.bf16.mxu0 0
        %2332 = vmatpush1.bf16.msra.mxu0 0
        %2333 = vmatprep.subr.bf16.mxu0 0
        %2334 = vmatpush1.bf16.msra.mxu0 0
        %2335 = vmatprep.subr.bf16.mxu0 0
        %2336 = vmatpush1.bf16.msra.mxu0 0
        %2337 = vmatprep.subr.bf16.mxu0 0
        %2338 = vmatpush1.bf16.msra.mxu0 0
        %2339 = vmatprep.mubr.bf16.mxu0 0
        %2340 = vmatmul.mubr.bf16.gmra.mrb[0].mxu0 %v2302
        %v2341 = vpop.f32.mrb[0].mxu0
        %v2342 = vadd.f32 0.0, %v2341
        %v2343 = vpop.f32.mrb[0].mxu0
        %v2344 = vpop.f32.mrb[0].mxu0
        %v2345 = vpop.f32.mrb[0].mxu0
        %2346 = vdwg.mxu0
        %v2348 = vsel %vm2113, %v2102, 0
        %v2351 = vand.u32 %v2110, %v2119
        %2353 = vmatprep.subr.bf16.mxu0 0
        %2354 = vmatpush1.bf16.msra.mxu0 %v2351
        %2355 = vmatprep.subr.bf16.mxu0 0
        %2356 = vmatpush1.bf16.msra.mxu0 0
        %2357 = vmatprep.subr.bf16.mxu0 0
        %2358 = vmatpush1.bf16.msra.mxu0 0
        %2359 = vmatprep.subr.bf16.mxu0 0
        %2360 = vmatpush1.bf16.msra.mxu0 0
        %2361 = vmatprep.subr.bf16.mxu0 0
        %2362 = vmatpush1.bf16.msra.mxu0 0
        %2363 = vmatprep.subr.bf16.mxu0 0
        %2364 = vmatpush1.bf16.msra.mxu0 0
        %2365 = vmatprep.subr.bf16.mxu0 0
        %2366 = vmatpush1.bf16.msra.mxu0 0
        %2367 = vmatprep.subr.bf16.mxu0 0
        %2368 = vmatpush1.bf16.msra.mxu0 0
        %2369 = vmatprep.subr.bf16.mxu0 0
        %2370 = vmatpush1.bf16.msra.mxu0 0
        %2371 = vmatprep.subr.bf16.mxu0 0
        %2372 = vmatpush1.bf16.msra.mxu0 0
        %2373 = vmatprep.subr.bf16.mxu0 0
        %2374 = vmatpush1.bf16.msra.mxu0 0
        %2375 = vmatprep.subr.bf16.mxu0 0
        %2376 = vmatpush1.bf16.msra.mxu0 0
        %2377 = vmatprep.subr.bf16.mxu0 0
        %2378 = vmatpush1.bf16.msra.mxu0 0
        %2379 = vmatprep.subr.bf16.mxu0 0
        %2380 = vmatpush1.bf16.msra.mxu0 0
        %2381 = vmatprep.subr.bf16.mxu0 0
        %2382 = vmatpush1.bf16.msra.mxu0 0
        %2383 = vmatprep.subr.bf16.mxu0 0
        %2384 = vmatpush1.bf16.msra.mxu0 0
        %2385 = vmatprep.mubr.bf16.mxu0 0
        %2386 = vmatmul.mubr.bf16.gmra.mrb[0].mxu0 %v2348
        %v2387 = vpop.f32.mrb[0].mxu0
        %v2388 = vadd.f32 0.0, %v2387
        %v2389 = vpop.f32.mrb[0].mxu0
        %v2390 = vpop.f32.mrb[0].mxu0
        %v2391 = vpop.f32.mrb[0].mxu0
        %2392 = vdwg.mxu0
        %v2394 = vsel %vm2113, %v2103, 0
        %v2397 = vand.u32 %v2111, %v2119
        %2399 = vmatprep.subr.bf16.mxu0 0
        %2400 = vmatpush1.bf16.msra.mxu0 %v2397
        %2401 = vmatprep.subr.bf16.mxu0 0
        %2402 = vmatpush1.bf16.msra.mxu0 0
        %2403 = vmatprep.subr.bf16.mxu0 0
        %2404 = vmatpush1.bf16.msra.mxu0 0
        %2405 = vmatprep.subr.bf16.mxu0 0
        %2406 = vmatpush1.bf16.msra.mxu0 0
        %2407 = vmatprep.subr.bf16.mxu0 0
        %2408 = vmatpush1.bf16.msra.mxu0 0
        %2409 = vmatprep.subr.bf16.mxu0 0
        %2410 = vmatpush1.bf16.msra.mxu0 0
        %2411 = vmatprep.subr.bf16.mxu0 0
        %2412 = vmatpush1.bf16.msra.mxu0 0
        %2413 = vmatprep.subr.bf16.mxu0 0
        %2414 = vmatpush1.bf16.msra.mxu0 0
        %2415 = vmatprep.subr.bf16.mxu0 0
        %2416 = vmatpush1.bf16.msra.mxu0 0
        %2417 = vmatprep.subr.bf16.mxu0 0
        %2418 = vmatpush1.bf16.msra.mxu0 0
        %2419 = vmatprep.subr.bf16.mxu0 0
        %2420 = vmatpush1.bf16.msra.mxu0 0
        %2421 = vmatprep.subr.bf16.mxu0 0
        %2422 = vmatpush1.bf16.msra.mxu0 0
        %2423 = vmatprep.subr.bf16.mxu0 0
        %2424 = vmatpush1.bf16.msra.mxu0 0
        %2425 = vmatprep.subr.bf16.mxu0 0
        %2426 = vmatpush1.bf16.msra.mxu0 0
        %2427 = vmatprep.subr.bf16.mxu0 0
        %2428 = vmatpush1.bf16.msra.mxu0 0
        %2429 = vmatprep.subr.bf16.mxu0 0
        %2430 = vmatpush1.bf16.msra.mxu0 0
        %2431 = vmatprep.mubr.bf16.mxu0 0
        %2432 = vmatmul.mubr.bf16.gmra.mrb[0].mxu0 %v2394
        %v2433 = vpop.f32.mrb[0].mxu0
        %v2434 = vadd.f32 0.0, %v2433
        %v2435 = vpop.f32.mrb[0].mxu0
        %v2436 = vpop.f32.mrb[0].mxu0
        %v2437 = vpop.f32.mrb[0].mxu0
        %2438 = vdwg.mxu0
        %v2440 = vsel %vm2113, %v2104, 0
        %v2443 = vand.u32 %v2112, %v2119
        %2445 = vmatprep.subr.bf16.mxu0 0
        %2446 = vmatpush1.bf16.msra.mxu0 %v2443
        %2447 = vmatprep.subr.bf16.mxu0 0
        %2448 = vmatpush1.bf16.msra.mxu0 0
        %2449 = vmatprep.subr.bf16.mxu0 0
        %2450 = vmatpush1.bf16.msra.mxu0 0
        %2451 = vmatprep.subr.bf16.mxu0 0
        %2452 = vmatpush1.bf16.msra.mxu0 0
        %2453 = vmatprep.subr.bf16.mxu0 0
        %2454 = vmatpush1.bf16.msra.mxu0 0
        %2455 = vmatprep.subr.bf16.mxu0 0
        %2456 = vmatpush1.bf16.msra.mxu0 0
        %2457 = vmatprep.subr.bf16.mxu0 0
        %2458 = vmatpush1.bf16.msra.mxu0 0
        %2459 = vmatprep.subr.bf16.mxu0 0
        %2460 = vmatpush1.bf16.msra.mxu0 0
        %2461 = vmatprep.subr.bf16.mxu0 0
        %2462 = vmatpush1.bf16.msra.mxu0 0
        %2463 = vmatprep.subr.bf16.mxu0 0
        %2464 = vmatpush1.bf16.msra.mxu0 0
        %2465 = vmatprep.subr.bf16.mxu0 0
        %2466 = vmatpush1.bf16.msra.mxu0 0
        %2467 = vmatprep.subr.bf16.mxu0 0
        %2468 = vmatpush1.bf16.msra.mxu0 0
        %2469 = vmatprep.subr.bf16.mxu0 0
        %2470 = vmatpush1.bf16.msra.mxu0 0
        %2471 = vmatprep.subr.bf16.mxu0 0
        %2472 = vmatpush1.bf16.msra.mxu0 0
        %2473 = vmatprep.subr.bf16.mxu0 0
        %2474 = vmatpush1.bf16.msra.mxu0 0
        %2475 = vmatprep.subr.bf16.mxu0 0
        %2476 = vmatpush1.bf16.msra.mxu0 0
        %2477 = vmatprep.mubr.bf16.mxu0 0
        %2478 = vmatmul.mubr.bf16.gmra.mrb[0].mxu0 %v2440
        %v2479 = vpop.f32.mrb[0].mxu0
        %v2480 = vadd.f32 0.0, %v2479
        %v2481 = vpop.f32.mrb[0].mxu0
        %v2482 = vpop.f32.mrb[0].mxu0
        %v2483 = vpop.f32.mrb[0].mxu0
        %2484 = vdwg.mxu0
        %v2485 = vmax.f32 %v2158, 0.0
        %v2486 = vmax.f32 %v2204, 0.0
        %v2487 = vmax.f32 %v2250, 0.0
        %v2488 = vmax.f32 %v2296, 0.0
        %v2489 = vmax.f32 %v2342, 0.0
        %v2490 = vmax.f32 %v2388, 0.0
        %v2491 = vmax.f32 %v2434, 0.0
        %v2492 = vmax.f32 %v2480, 0.0
        %v2493 = vld [vmem:[%s11] sm:$0xff]
        %v2494 = vld [vmem:[%s11 + $0x8] sm:$0xff]
        %v2495 = vld [vmem:[%s11 + $0x10] sm:$0xff]
        %v2496 = vld [vmem:[%s11 + $0x18] sm:$0xff]
        %v2497 = vld [vmem:[%s11 + $0x20] sm:$0xff]
        %v2498 = vld [vmem:[%s11 + $0x28] sm:$0xff]
        %v2499 = vld [vmem:[%s11 + $0x30] sm:$0xff]
        %v2500 = vld [vmem:[%s11 + $0x38] sm:$0xff]
        %v2501 = vld [vmem:[%s11 + $0x40] sm:$0xff]
        %v2502 = vld [vmem:[%s11 + $0x48] sm:$0xff]
        %v2503 = vld [vmem:[%s11 + $0x50] sm:$0xff]
        %v2504 = vld [vmem:[%s11 + $0x58] sm:$0xff]
        %v2505 = vld [vmem:[%s11 + $0x60] sm:$0xff]
        %v2506 = vld [vmem:[%s11 + $0x68] sm:$0xff]
        %v2507 = vld [vmem:[%s11 + $0x70] sm:$0xff]
        %v2508 = vpack.c.bf16 %v2494, %v2493
        %v2509 = vpack.c.bf16 %v2496, %v2495
        %v2510 = vpack.c.bf16 %v2498, %v2497
        %v2511 = vpack.c.bf16 %v2500, %v2499
        %v2512 = vpack.c.bf16 %v2502, %v2501
        %v2513 = vpack.c.bf16 %v2504, %v2503
        %v2514 = vpack.c.bf16 %v2506, %v2505
        %v2515 = vpack.c.bf16 %v2507, %v2507
        %v2516 = vld [vmem:[%s12] sm:$0x1]
        %v2518 = vlaneseq
        %v2519 = vshrl.u32 %v2518, 7
        %v2520 = vsub.s32 0, %v2519
        %v2521 = vrot.slane %v2516, %v2520
        %v2524 = vsel %vm786, %v2508, 0
        %v2527 = vsel %vm786, %v2509, 0
        %v2530 = vsel %vm786, %v2510, 0
        %v2533 = vsel %vm786, %v2511, 0
        %v2536 = vsel %vm786, %v2512, 0
        %v2539 = vsel %vm786, %v2513, 0
        %v2542 = vsel %vm786, %v2514, 0
        %v2545 = vsel %vm786, %v2515, 0
        %2547 = vmatprep.subr.bf16.mxu0 0
        %2548 = vmatpush1.bf16.xpose.msra.mxu0 %v2524
        %2549 = vmatprep.subr.bf16.mxu0 0
        %2550 = vmatpush1.bf16.xpose.msra.mxu0 %v2527
        %2551 = vmatprep.subr.bf16.mxu0 0
        %2552 = vmatpush1.bf16.xpose.msra.mxu0 %v2530
        %2553 = vmatprep.subr.bf16.mxu0 0
        %2554 = vmatpush1.bf16.xpose.msra.mxu0 %v2533
        %2555 = vmatprep.subr.bf16.mxu0 0
        %2556 = vmatpush1.bf16.xpose.msra.mxu0 %v2536
        %2557 = vmatprep.subr.bf16.mxu0 0
        %2558 = vmatpush1.bf16.xpose.msra.mxu0 %v2539
        %2559 = vmatprep.subr.bf16.mxu0 0
        %2560 = vmatpush1.bf16.xpose.msra.mxu0 %v2542
        %2561 = vmatprep.subr.bf16.mxu0 0
        %2562 = vmatpush1.bf16.xpose.msra.mxu0 %v2545
        %2563 = vmatprep.subr.bf16.mxu0 0
        %2564 = vmatpush1.bf16.xpose.msra.mxu0 0
        %2565 = vmatprep.subr.bf16.mxu0 0
        %2566 = vmatpush1.bf16.xpose.msra.mxu0 0
        %2567 = vmatprep.subr.bf16.mxu0 0
        %2568 = vmatpush1.bf16.xpose.msra.mxu0 0
        %2569 = vmatprep.subr.bf16.mxu0 0
        %2570 = vmatpush1.bf16.xpose.msra.mxu0 0
        %2571 = vmatprep.subr.bf16.mxu0 0
        %2572 = vmatpush1.bf16.xpose.msra.mxu0 0
        %2573 = vmatprep.subr.bf16.mxu0 0
        %2574 = vmatpush1.bf16.xpose.msra.mxu0 0
        %2575 = vmatprep.subr.bf16.mxu0 0
        %2576 = vmatpush1.bf16.xpose.msra.mxu0 0
        %2577 = vmatprep.subr.bf16.mxu0 0
        %2578 = vmatpush1.bf16.xpose.msra.mxu0 0
        %2579 = vmatprep.mubr.bf16.mxu0 0
        %2580 = vmatmul.mubr.bf16.gmra.mrb[0].mxu0 %v984
        %v2581 = vpop.f32.mrb[0].mxu0
        %v2582 = vadd.f32 %v2521, %v2581
        %v2583 = vpop.f32.mrb[0].mxu0
        %v2584 = vpop.f32.mrb[0].mxu0
        %v2585 = vpop.f32.mrb[0].mxu0
        %2586 = vdwg.mxu0
        %v2587 = vmax.f32 %v2582, 0.0
        %v2588 = vpack.c.bf16 %v2587, %v2587
        %v2589 = vld [vmem:[#allocation2] sm:$0xff]
        %v2590 = vld [vmem:[#allocation2 + $0x8] sm:$0xff]
        %v2591 = vld [vmem:[#allocation2 + $0x10] sm:$0xff]
        %v2592 = vld [vmem:[#allocation2 + $0x18] sm:$0xff]
        %v2593 = vld [vmem:[#allocation2 + $0x20] sm:$0xff]
        %v2594 = vld [vmem:[#allocation2 + $0x28] sm:$0xff]
        %v2595 = vld [vmem:[#allocation2 + $0x30] sm:$0xff]
        %v2596 = vld [vmem:[#allocation2 + $0x38] sm:$0xff]
        %v2597 = vld [vmem:[#allocation2 + $0x40] sm:$0xff]
        %v2598 = vld [vmem:[#allocation2 + $0x48] sm:$0xff]
        %v2599 = vld [vmem:[#allocation2 + $0x50] sm:$0xff]
        %v2600 = vld [vmem:[#allocation2 + $0x58] sm:$0xff]
        %v2601 = vld [vmem:[#allocation2 + $0x60] sm:$0xff]
        %v2602 = vld [vmem:[#allocation2 + $0x68] sm:$0xff]
        %v2603 = vld [vmem:[#allocation2 + $0x70] sm:$0xff]
        %v2604 = vld [vmem:[#allocation2 + $0x78] sm:$0xff]
        %v2605 = vld [vmem:[#allocation2 + $0x80] sm:$0xff]
        %v2606 = vld [vmem:[#allocation2 + $0x88] sm:$0xff]
        %v2607 = vld [vmem:[#allocation2 + $0x90] sm:$0xff]
        %v2608 = vld [vmem:[#allocation2 + $0x98] sm:$0xff]
        %v2609 = vld [vmem:[#allocation2 + $0xa0] sm:$0xff]
        %v2610 = vld [vmem:[#allocation2 + $0xa8] sm:$0xff]
        %v2611 = vld [vmem:[#allocation2 + $0xb0] sm:$0xff]
        %v2612 = vld [vmem:[#allocation2 + $0xb8] sm:$0xff]
        %v2613 = vld [vmem:[#allocation2 + $0xc0] sm:$0xff]
        %v2614 = vld [vmem:[#allocation2 + $0xc8] sm:$0xff]
        %v2615 = vld [vmem:[#allocation2 + $0xd0] sm:$0xff]
        %v2616 = vld [vmem:[#allocation2 + $0xd8] sm:$0xff]
        %v2617 = vld [vmem:[#allocation2 + $0xe0] sm:$0xff]
        %v2618 = vld [vmem:[#allocation2 + $0xe8] sm:$0xff]
        %v2619 = vld [vmem:[#allocation2 + $0xf0] sm:$0xff]
        %v2620 = vld [vmem:[#allocation2 + $0xf8] sm:$0xff]
        %v2621 = vld [vmem:[#allocation2 + $0x100] sm:$0xff]
        %v2622 = vld [vmem:[#allocation2 + $0x108] sm:$0xff]
        %v2623 = vld [vmem:[#allocation2 + $0x110] sm:$0xff]
        %v2624 = vld [vmem:[#allocation2 + $0x118] sm:$0xff]
        %v2625 = vld [vmem:[#allocation2 + $0x120] sm:$0xff]
        %v2626 = vld [vmem:[#allocation2 + $0x128] sm:$0xff]
        %v2627 = vld [vmem:[#allocation2 + $0x130] sm:$0xff]
        %v2628 = vld [vmem:[#allocation2 + $0x138] sm:$0xff]
        %v2629 = vld [vmem:[#allocation2 + $0x140] sm:$0xff]
        %v2630 = vld [vmem:[#allocation2 + $0x148] sm:$0xff]
        %v2631 = vld [vmem:[#allocation2 + $0x150] sm:$0xff]
        %v2632 = vld [vmem:[#allocation2 + $0x158] sm:$0xff]
        %v2633 = vld [vmem:[#allocation2 + $0x160] sm:$0xff]
        %v2634 = vld [vmem:[#allocation2 + $0x168] sm:$0xff]
        %v2635 = vld [vmem:[#allocation2 + $0x170] sm:$0xff]
        %v2636 = vld [vmem:[#allocation2 + $0x178] sm:$0xff]
        %v2637 = vld [vmem:[#allocation2 + $0x180] sm:$0xff]
        %v2638 = vld [vmem:[#allocation2 + $0x188] sm:$0xff]
        %v2639 = vld [vmem:[#allocation2 + $0x190] sm:$0xff]
        %v2640 = vld [vmem:[#allocation2 + $0x198] sm:$0xff]
        %v2641 = vld [vmem:[#allocation2 + $0x1a0] sm:$0xff]
        %v2642 = vld [vmem:[#allocation2 + $0x1a8] sm:$0xff]
        %v2643 = vld [vmem:[#allocation2 + $0x1b0] sm:$0xff]
        %v2644 = vld [vmem:[#allocation2 + $0x1b8] sm:$0xff]
        %v2645 = vld [vmem:[#allocation2 + $0x1c0] sm:$0xff]
        %v2646 = vld [vmem:[#allocation2 + $0x1c8] sm:$0xff]
        %v2647 = vld [vmem:[#allocation2 + $0x1d0] sm:$0xff]
        %v2648 = vld [vmem:[#allocation2 + $0x1d8] sm:$0xff]
        %v2649 = vld [vmem:[#allocation2 + $0x1e0] sm:$0xff]
        %v2650 = vld [vmem:[#allocation2 + $0x1e8] sm:$0xff]
        %v2651 = vld [vmem:[#allocation2 + $0x1f0] sm:$0xff]
        %v2652 = vld [vmem:[#allocation2 + $0x1f8] sm:$0xff]
        %v2653 = vld [vmem:[#allocation2 + $0x200] sm:$0xff]
        %v2654 = vld [vmem:[#allocation2 + $0x208] sm:$0xff]
        %v2655 = vld [vmem:[#allocation2 + $0x210] sm:$0xff]
        %v2656 = vld [vmem:[#allocation2 + $0x218] sm:$0xff]
        %v2657 = vld [vmem:[#allocation2 + $0x220] sm:$0xff]
        %v2658 = vld [vmem:[#allocation2 + $0x228] sm:$0xff]
        %v2659 = vld [vmem:[#allocation2 + $0x230] sm:$0xff]
        %v2660 = vld [vmem:[#allocation2 + $0x238] sm:$0xff]
        %v2661 = vld [vmem:[#allocation2 + $0x240] sm:$0xff]
        %v2662 = vld [vmem:[#allocation2 + $0x248] sm:$0xff]
        %v2663 = vld [vmem:[#allocation2 + $0x250] sm:$0xff]
        %v2664 = vld [vmem:[#allocation2 + $0x258] sm:$0xff]
        %v2665 = vld [vmem:[#allocation2 + $0x260] sm:$0xff]
        %v2666 = vld [vmem:[#allocation2 + $0x268] sm:$0xff]
        %v2667 = vld [vmem:[#allocation2 + $0x270] sm:$0xff]
        %v2668 = vld [vmem:[#allocation2 + $0x278] sm:$0xff]
        %v2669 = vld [vmem:[#allocation2 + $0x280] sm:$0xff]
        %v2670 = vld [vmem:[#allocation2 + $0x288] sm:$0xff]
        %v2671 = vld [vmem:[#allocation2 + $0x290] sm:$0xff]
        %v2672 = vld [vmem:[#allocation2 + $0x298] sm:$0xff]
        %v2673 = vld [vmem:[#allocation2 + $0x2a0] sm:$0xff]
        %v2674 = vld [vmem:[#allocation2 + $0x2a8] sm:$0xff]
        %v2675 = vld [vmem:[#allocation2 + $0x2b0] sm:$0xff]
        %v2676 = vld [vmem:[#allocation2 + $0x2b8] sm:$0xff]
        %v2677 = vld [vmem:[#allocation2 + $0x2c0] sm:$0xff]
        %v2678 = vld [vmem:[#allocation2 + $0x2c8] sm:$0xff]
        %v2679 = vld [vmem:[#allocation2 + $0x2d0] sm:$0xff]
        %v2680 = vld [vmem:[#allocation2 + $0x2d8] sm:$0xff]
        %v2681 = vld [vmem:[#allocation2 + $0x2e0] sm:$0xff]
        %v2682 = vld [vmem:[#allocation2 + $0x2e8] sm:$0xff]
        %v2683 = vld [vmem:[#allocation2 + $0x2f0] sm:$0xff]
        %v2684 = vld [vmem:[#allocation2 + $0x2f8] sm:$0xff]
        %v2685 = vld [vmem:[#allocation2 + $0x300] sm:$0xff]
        %v2686 = vld [vmem:[#allocation2 + $0x308] sm:$0xff]
        %v2687 = vld [vmem:[#allocation2 + $0x310] sm:$0xff]
        %v2688 = vld [vmem:[#allocation2 + $0x318] sm:$0xff]
        %v2689 = vld [vmem:[#allocation2 + $0x320] sm:$0xff]
        %v2690 = vld [vmem:[#allocation2 + $0x328] sm:$0xff]
        %v2691 = vld [vmem:[#allocation2 + $0x330] sm:$0xff]
        %v2692 = vld [vmem:[#allocation2 + $0x338] sm:$0xff]
        %v2693 = vld [vmem:[#allocation2 + $0x340] sm:$0xff]
        %v2694 = vld [vmem:[#allocation2 + $0x348] sm:$0xff]
        %v2695 = vld [vmem:[#allocation2 + $0x350] sm:$0xff]
        %v2696 = vld [vmem:[#allocation2 + $0x358] sm:$0xff]
        %v2697 = vld [vmem:[#allocation2 + $0x360] sm:$0xff]
        %v2698 = vld [vmem:[#allocation2 + $0x368] sm:$0xff]
        %v2699 = vld [vmem:[#allocation2 + $0x370] sm:$0xff]
        %v2700 = vld [vmem:[#allocation2 + $0x378] sm:$0xff]
        %v2701 = vld [vmem:[#allocation2 + $0x380] sm:$0xff]
        %v2702 = vld [vmem:[#allocation2 + $0x388] sm:$0xff]
        %v2703 = vld [vmem:[#allocation2 + $0x390] sm:$0xff]
        %v2704 = vld [vmem:[#allocation2 + $0x398] sm:$0xff]
        %v2705 = vld [vmem:[#allocation2 + $0x3a0] sm:$0xff]
        %v2706 = vld [vmem:[#allocation2 + $0x3a8] sm:$0xff]
        %v2707 = vld [vmem:[#allocation2 + $0x3b0] sm:$0xff]
        %v2708 = vld [vmem:[#allocation2 + $0x3b8] sm:$0xff]
        %v2709 = vpack.c.bf16 %v2590, %v2589
        %v2710 = vpack.c.bf16 %v2592, %v2591
        %v2711 = vpack.c.bf16 %v2594, %v2593
        %v2712 = vpack.c.bf16 %v2596, %v2595
        %v2713 = vpack.c.bf16 %v2598, %v2597
        %v2714 = vpack.c.bf16 %v2600, %v2599
        %v2715 = vpack.c.bf16 %v2602, %v2601
        %v2716 = vpack.c.bf16 %v2604, %v2603
        %v2717 = vpack.c.bf16 %v2606, %v2605
        %v2718 = vpack.c.bf16 %v2608, %v2607
        %v2719 = vpack.c.bf16 %v2610, %v2609
        %v2720 = vpack.c.bf16 %v2612, %v2611
        %v2721 = vpack.c.bf16 %v2614, %v2613
        %v2722 = vpack.c.bf16 %v2616, %v2615
        %v2723 = vpack.c.bf16 %v2618, %v2617
        %v2724 = vpack.c.bf16 %v2620, %v2619
        %v2725 = vpack.c.bf16 %v2622, %v2621
        %v2726 = vpack.c.bf16 %v2624, %v2623
        %v2727 = vpack.c.bf16 %v2626, %v2625
        %v2728 = vpack.c.bf16 %v2628, %v2627
        %v2729 = vpack.c.bf16 %v2630, %v2629
        %v2730 = vpack.c.bf16 %v2632, %v2631
        %v2731 = vpack.c.bf16 %v2634, %v2633
        %v2732 = vpack.c.bf16 %v2636, %v2635
        %v2733 = vpack.c.bf16 %v2638, %v2637
        %v2734 = vpack.c.bf16 %v2640, %v2639
        %v2735 = vpack.c.bf16 %v2642, %v2641
        %v2736 = vpack.c.bf16 %v2644, %v2643
        %v2737 = vpack.c.bf16 %v2646, %v2645
        %v2738 = vpack.c.bf16 %v2648, %v2647
        %v2739 = vpack.c.bf16 %v2650, %v2649
        %v2740 = vpack.c.bf16 %v2652, %v2651
        %v2741 = vpack.c.bf16 %v2654, %v2653
        %v2742 = vpack.c.bf16 %v2656, %v2655
        %v2743 = vpack.c.bf16 %v2658, %v2657
        %v2744 = vpack.c.bf16 %v2660, %v2659
        %v2745 = vpack.c.bf16 %v2662, %v2661
        %v2746 = vpack.c.bf16 %v2664, %v2663
        %v2747 = vpack.c.bf16 %v2666, %v2665
        %v2748 = vpack.c.bf16 %v2668, %v2667
        %v2749 = vpack.c.bf16 %v2670, %v2669
        %v2750 = vpack.c.bf16 %v2672, %v2671
        %v2751 = vpack.c.bf16 %v2674, %v2673
        %v2752 = vpack.c.bf16 %v2676, %v2675
        %v2753 = vpack.c.bf16 %v2678, %v2677
        %v2754 = vpack.c.bf16 %v2680, %v2679
        %v2755 = vpack.c.bf16 %v2682, %v2681
        %v2756 = vpack.c.bf16 %v2684, %v2683
        %v2757 = vpack.c.bf16 %v2686, %v2685
        %v2758 = vpack.c.bf16 %v2688, %v2687
        %v2759 = vpack.c.bf16 %v2690, %v2689
        %v2760 = vpack.c.bf16 %v2692, %v2691
        %v2761 = vpack.c.bf16 %v2694, %v2693
        %v2762 = vpack.c.bf16 %v2696, %v2695
        %v2763 = vpack.c.bf16 %v2698, %v2697
        %v2764 = vpack.c.bf16 %v2700, %v2699
        %v2765 = vpack.c.bf16 %v2702, %v2701
        %v2766 = vpack.c.bf16 %v2704, %v2703
        %v2767 = vpack.c.bf16 %v2706, %v2705
        %v2768 = vpack.c.bf16 %v2708, %v2707
        %v2769 = vld [vmem:[%s14] sm:$0xff]
        %v2771 = vlaneseq
        %v2772 = vshrl.u32 %v2771, 7
        %v2773 = vsub.s32 0, %v2772
        %v2774 = vrot.slane %v2769, %v2773
        %v2775 = vlaneseq
        %v2776 = vshrl.u32 %v2775, 7
        %v2777 = vsub.s32 1, %v2776
        %v2778 = vrot.slane %v2769, %v2777
        %v2779 = vlaneseq
        %v2780 = vshrl.u32 %v2779, 7
        %v2781 = vsub.s32 2, %v2780
        %v2782 = vrot.slane %v2769, %v2781
        %v2783 = vlaneseq
        %v2784 = vshrl.u32 %v2783, 7
        %v2785 = vsub.s32 3, %v2784
        %v2786 = vrot.slane %v2769, %v2785
        %v2787 = vlaneseq
        %v2788 = vshrl.u32 %v2787, 7
        %v2789 = vsub.s32 4, %v2788
        %v2790 = vrot.slane %v2769, %v2789
        %v2791 = vlaneseq
        %v2792 = vshrl.u32 %v2791, 7
        %v2793 = vsub.s32 5, %v2792
        %v2794 = vrot.slane %v2769, %v2793
        %v2795 = vlaneseq
        %v2796 = vshrl.u32 %v2795, 7
        %v2797 = vsub.s32 6, %v2796
        %v2798 = vrot.slane %v2769, %v2797
        %v2799 = vlaneseq
        %v2800 = vshrl.u32 %v2799, 7
        %v2801 = vsub.s32 7, %v2800
        %v2802 = vrot.slane %v2769, %v2801
        %v2812 = vsel %vm1082, %v2588, 0
        %v2815 = vsel %vm1082, %v2709, 0
        %v2818 = vsel %vm1082, %v2710, 0
        %v2821 = vsel %vm1082, %v2711, 0
        %v2824 = vsel %vm1082, %v2712, 0
        %v2827 = vsel %vm1082, %v2713, 0
        %v2830 = vsel %vm1082, %v2714, 0
        %v2833 = vsel %vm1082, %v2715, 0
        %v2836 = vsel %vm1082, %v2716, 0
        %v2839 = vsel %vm1082, %v2717, 0
        %v2842 = vsel %vm1082, %v2718, 0
        %v2845 = vsel %vm1082, %v2719, 0
        %v2848 = vsel %vm1082, %v2720, 0
        %v2851 = vsel %vm1082, %v2721, 0
        %v2854 = vsel %vm1082, %v2722, 0
        %v2857 = vsel %vm1082, %v2723, 0
        %v2860 = vsel %vm1082, %v2724, 0
        %v2863 = vsel %vm1082, %v2725, 0
        %v2866 = vsel %vm1082, %v2726, 0
        %v2869 = vsel %vm1082, %v2727, 0
        %v2872 = vsel %vm1082, %v2728, 0
        %v2875 = vsel %vm1082, %v2729, 0
        %v2878 = vsel %vm1082, %v2730, 0
        %v2881 = vsel %vm1082, %v2731, 0
        %v2884 = vsel %vm1082, %v2732, 0
        %v2887 = vsel %vm1082, %v2733, 0
        %v2890 = vsel %vm1082, %v2734, 0
        %v2893 = vsel %vm1082, %v2735, 0
        %v2896 = vsel %vm1082, %v2736, 0
        %v2899 = vsel %vm1082, %v2737, 0
        %v2902 = vsel %vm1082, %v2738, 0
        %v2905 = vsel %vm1082, %v2739, 0
        %v2908 = vsel %vm1082, %v2740, 0
        %v2911 = vsel %vm1082, %v2741, 0
        %v2914 = vsel %vm1082, %v2742, 0
        %v2917 = vsel %vm1082, %v2743, 0
        %v2920 = vsel %vm1082, %v2744, 0
        %v2923 = vsel %vm1082, %v2745, 0
        %v2926 = vsel %vm1082, %v2746, 0
        %v2929 = vsel %vm1082, %v2747, 0
        %v2932 = vsel %vm1082, %v2748, 0
        %v2935 = vsel %vm1082, %v2749, 0
        %v2938 = vsel %vm1082, %v2750, 0
        %v2941 = vsel %vm1082, %v2751, 0
        %v2944 = vsel %vm1082, %v2752, 0
        %v2947 = vsel %vm1082, %v2753, 0
        %v2950 = vsel %vm1082, %v2754, 0
        %v2953 = vsel %vm1082, %v2755, 0
        %v2956 = vsel %vm1082, %v2756, 0
        %v2959 = vsel %vm1082, %v2757, 0
        %v2962 = vsel %vm1082, %v2758, 0
        %v2965 = vsel %vm1082, %v2759, 0
        %v2968 = vsel %vm1082, %v2760, 0
        %v2971 = vsel %vm1082, %v2761, 0
        %v2974 = vsel %vm1082, %v2762, 0
        %v2977 = vsel %vm1082, %v2763, 0
        %v2980 = vsel %vm1082, %v2764, 0
        %v2983 = vsel %vm1082, %v2765, 0
        %v2986 = vsel %vm1082, %v2766, 0
        %v2989 = vsel %vm1082, %v2767, 0
        %v2992 = vsel %vm1082, %v2768, 0
        %2994 = vmatprep.subr.bf16.mxu0 0
        %2995 = vmatpush1.bf16.xpose.msra.mxu0 %v2815
        %2996 = vmatprep.subr.bf16.mxu0 0
        %2997 = vmatpush1.bf16.xpose.msra.mxu0 %v2818
        %2998 = vmatprep.subr.bf16.mxu0 0
        %2999 = vmatpush1.bf16.xpose.msra.mxu0 %v2821
        %3000 = vmatprep.subr.bf16.mxu0 0
        %3001 = vmatpush1.bf16.xpose.msra.mxu0 %v2824
        %3002 = vmatprep.subr.bf16.mxu0 0
        %3003 = vmatpush1.bf16.xpose.msra.mxu0 %v2827
        %3004 = vmatprep.subr.bf16.mxu0 0
        %3005 = vmatpush1.bf16.xpose.msra.mxu0 %v2830
        %3006 = vmatprep.subr.bf16.mxu0 0
        %3007 = vmatpush1.bf16.xpose.msra.mxu0 %v2833
        %3008 = vmatprep.subr.bf16.mxu0 0
        %3009 = vmatpush1.bf16.xpose.msra.mxu0 %v2836
        %3010 = vmatprep.subr.bf16.mxu0 0
        %3011 = vmatpush1.bf16.xpose.msra.mxu0 %v2839
        %3012 = vmatprep.subr.bf16.mxu0 0
        %3013 = vmatpush1.bf16.xpose.msra.mxu0 %v2842
        %3014 = vmatprep.subr.bf16.mxu0 0
        %3015 = vmatpush1.bf16.xpose.msra.mxu0 %v2845
        %3016 = vmatprep.subr.bf16.mxu0 0
        %3017 = vmatpush1.bf16.xpose.msra.mxu0 %v2848
        %3018 = vmatprep.subr.bf16.mxu0 0
        %3019 = vmatpush1.bf16.xpose.msra.mxu0 %v2851
        %3020 = vmatprep.subr.bf16.mxu0 0
        %3021 = vmatpush1.bf16.xpose.msra.mxu0 %v2854
        %3022 = vmatprep.subr.bf16.mxu0 0
        %3023 = vmatpush1.bf16.xpose.msra.mxu0 %v2857
        %3024 = vmatprep.subr.bf16.mxu0 0
        %3025 = vmatpush1.bf16.xpose.msra.mxu0 %v2860
        %3026 = vmatprep.mubr.bf16.mxu0 0
        %3027 = vmatmul.mubr.bf16.gmra.mrb[0].mxu0 %v2812
        %v3028 = vpop.f32.mrb[0].mxu0
        %v3029 = vadd.f32 %v2774, %v3028
        %v3030 = vpop.f32.mrb[0].mxu0
        %v3031 = vadd.f32 %v2778, %v3030
        %v3032 = vpop.f32.mrb[0].mxu0
        %v3033 = vpop.f32.mrb[0].mxu0
        %3034 = vdwg.mxu0
        %3035 = vmatprep.subr.bf16.mxu0 0
        %3036 = vmatpush1.bf16.xpose.msra.mxu0 %v2863
        %3037 = vmatprep.subr.bf16.mxu0 0
        %3038 = vmatpush1.bf16.xpose.msra.mxu0 %v2866
        %3039 = vmatprep.subr.bf16.mxu0 0
        %3040 = vmatpush1.bf16.xpose.msra.mxu0 %v2869
        %3041 = vmatprep.subr.bf16.mxu0 0
        %3042 = vmatpush1.bf16.xpose.msra.mxu0 %v2872
        %3043 = vmatprep.subr.bf16.mxu0 0
        %3044 = vmatpush1.bf16.xpose.msra.mxu0 %v2875
        %3045 = vmatprep.subr.bf16.mxu0 0
        %3046 = vmatpush1.bf16.xpose.msra.mxu0 %v2878
        %3047 = vmatprep.subr.bf16.mxu0 0
        %3048 = vmatpush1.bf16.xpose.msra.mxu0 %v2881
        %3049 = vmatprep.subr.bf16.mxu0 0
        %3050 = vmatpush1.bf16.xpose.msra.mxu0 %v2884
        %3051 = vmatprep.subr.bf16.mxu0 0
        %3052 = vmatpush1.bf16.xpose.msra.mxu0 %v2887
        %3053 = vmatprep.subr.bf16.mxu0 0
        %3054 = vmatpush1.bf16.xpose.msra.mxu0 %v2890
        %3055 = vmatprep.subr.bf16.mxu0 0
        %3056 = vmatpush1.bf16.xpose.msra.mxu0 %v2893
        %3057 = vmatprep.subr.bf16.mxu0 0
        %3058 = vmatpush1.bf16.xpose.msra.mxu0 %v2896
        %3059 = vmatprep.subr.bf16.mxu0 0
        %3060 = vmatpush1.bf16.xpose.msra.mxu0 %v2899
        %3061 = vmatprep.subr.bf16.mxu0 0
        %3062 = vmatpush1.bf16.xpose.msra.mxu0 %v2902
        %3063 = vmatprep.subr.bf16.mxu0 0
        %3064 = vmatpush1.bf16.xpose.msra.mxu0 %v2905
        %3065 = vmatprep.subr.bf16.mxu0 0
        %3066 = vmatpush1.bf16.xpose.msra.mxu0 %v2908
        %3067 = vmatprep.mubr.bf16.mxu0 0
        %3068 = vmatmul.mubr.bf16.gmra.mrb[0].mxu0 %v2812
        %v3069 = vpop.f32.mrb[0].mxu0
        %v3070 = vadd.f32 %v2782, %v3069
        %v3071 = vpop.f32.mrb[0].mxu0
        %v3072 = vadd.f32 %v2786, %v3071
        %v3073 = vpop.f32.mrb[0].mxu0
        %v3074 = vpop.f32.mrb[0].mxu0
        %3075 = vdwg.mxu0
        %3076 = vmatprep.subr.bf16.mxu0 0
        %3077 = vmatpush1.bf16.xpose.msra.mxu0 %v2911
        %3078 = vmatprep.subr.bf16.mxu0 0
        %3079 = vmatpush1.bf16.xpose.msra.mxu0 %v2914
        %3080 = vmatprep.subr.bf16.mxu0 0
        %3081 = vmatpush1.bf16.xpose.msra.mxu0 %v2917
        %3082 = vmatprep.subr.bf16.mxu0 0
        %3083 = vmatpush1.bf16.xpose.msra.mxu0 %v2920
        %3084 = vmatprep.subr.bf16.mxu0 0
        %3085 = vmatpush1.bf16.xpose.msra.mxu0 %v2923
        %3086 = vmatprep.subr.bf16.mxu0 0
        %3087 = vmatpush1.bf16.xpose.msra.mxu0 %v2926
        %3088 = vmatprep.subr.bf16.mxu0 0
        %3089 = vmatpush1.bf16.xpose.msra.mxu0 %v2929
        %3090 = vmatprep.subr.bf16.mxu0 0
        %3091 = vmatpush1.bf16.xpose.msra.mxu0 %v2932
        %3092 = vmatprep.subr.bf16.mxu0 0
        %3093 = vmatpush1.bf16.xpose.msra.mxu0 %v2935
        %3094 = vmatprep.subr.bf16.mxu0 0
        %3095 = vmatpush1.bf16.xpose.msra.mxu0 %v2938
        %3096 = vmatprep.subr.bf16.mxu0 0
        %3097 = vmatpush1.bf16.xpose.msra.mxu0 %v2941
        %3098 = vmatprep.subr.bf16.mxu0 0
        %3099 = vmatpush1.bf16.xpose.msra.mxu0 %v2944
        %3100 = vmatprep.subr.bf16.mxu0 0
        %3101 = vmatpush1.bf16.xpose.msra.mxu0 %v2947
        %3102 = vmatprep.subr.bf16.mxu0 0
        %3103 = vmatpush1.bf16.xpose.msra.mxu0 %v2950
        %3104 = vmatprep.subr.bf16.mxu0 0
        %3105 = vmatpush1.bf16.xpose.msra.mxu0 %v2953
        %3106 = vmatprep.subr.bf16.mxu0 0
        %3107 = vmatpush1.bf16.xpose.msra.mxu0 %v2956
        %3108 = vmatprep.mubr.bf16.mxu0 0
        %3109 = vmatmul.mubr.bf16.gmra.mrb[0].mxu0 %v2812
        %v3110 = vpop.f32.mrb[0].mxu0
        %v3111 = vadd.f32 %v2790, %v3110
        %v3112 = vpop.f32.mrb[0].mxu0
        %v3113 = vadd.f32 %v2794, %v3112
        %v3114 = vpop.f32.mrb[0].mxu0
        %v3115 = vpop.f32.mrb[0].mxu0
        %3116 = vdwg.mxu0
        %3117 = vmatprep.subr.bf16.mxu0 0
        %3118 = vmatpush1.bf16.xpose.msra.mxu0 %v2959
        %3119 = vmatprep.subr.bf16.mxu0 0
        %3120 = vmatpush1.bf16.xpose.msra.mxu0 %v2962
        %3121 = vmatprep.subr.bf16.mxu0 0
        %3122 = vmatpush1.bf16.xpose.msra.mxu0 %v2965
        %3123 = vmatprep.subr.bf16.mxu0 0
        %3124 = vmatpush1.bf16.xpose.msra.mxu0 %v2968
        %3125 = vmatprep.subr.bf16.mxu0 0
        %3126 = vmatpush1.bf16.xpose.msra.mxu0 %v2971
        %3127 = vmatprep.subr.bf16.mxu0 0
        %3128 = vmatpush1.bf16.xpose.msra.mxu0 %v2974
        %3129 = vmatprep.subr.bf16.mxu0 0
        %3130 = vmatpush1.bf16.xpose.msra.mxu0 %v2977
        %3131 = vmatprep.subr.bf16.mxu0 0
        %3132 = vmatpush1.bf16.xpose.msra.mxu0 %v2980
        %3133 = vmatprep.subr.bf16.mxu0 0
        %3134 = vmatpush1.bf16.xpose.msra.mxu0 %v2983
        %3135 = vmatprep.subr.bf16.mxu0 0
        %3136 = vmatpush1.bf16.xpose.msra.mxu0 %v2986
        %3137 = vmatprep.subr.bf16.mxu0 0
        %3138 = vmatpush1.bf16.xpose.msra.mxu0 %v2989
        %3139 = vmatprep.subr.bf16.mxu0 0
        %3140 = vmatpush1.bf16.xpose.msra.mxu0 %v2992
        %3141 = vmatprep.subr.bf16.mxu0 0
        %3142 = vmatpush1.bf16.xpose.msra.mxu0 0
        %3143 = vmatprep.subr.bf16.mxu0 0
        %3144 = vmatpush1.bf16.xpose.msra.mxu0 0
        %3145 = vmatprep.subr.bf16.mxu0 0
        %3146 = vmatpush1.bf16.xpose.msra.mxu0 0
        %3147 = vmatprep.subr.bf16.mxu0 0
        %3148 = vmatpush1.bf16.xpose.msra.mxu0 0
        %3149 = vmatprep.mubr.bf16.mxu0 0
        %3150 = vmatmul.mubr.bf16.gmra.mrb[0].mxu0 %v2812
        %v3151 = vpop.f32.mrb[0].mxu0
        %v3152 = vadd.f32 %v2798, %v3151
        %v3153 = vpop.f32.mrb[0].mxu0
        %v3154 = vadd.f32 %v2802, %v3153
        %v3155 = vpop.f32.mrb[0].mxu0
        %v3156 = vpop.f32.mrb[0].mxu0
        %3157 = vdwg.mxu0
        %v3159 = vcombine.high %v3029, %v3029
        %v3161 = vunpack.c.l.s4 1966171168
        %v3162 = vunpack.c.0.s8 %v3161
        %v3163 = vlaneseq
        %v3164 = vshrl.u32 %v3163, 7
        %v3165 = vsub.s32 %v3162, %v3164
        %v3166 = vrot.slane %v3029, %v3165
        %v3168 = vunpack.c.l.s4 1966171168
        %v3169 = vunpack.c.0.s8 %v3168
        %v3170 = vlaneseq
        %v3171 = vshrl.u32 %v3170, 7
        %v3172 = vsub.s32 %v3169, %v3171
        %v3173 = vrot.slane %v3159, %v3172
        %v3174 = vcombine.high %v3166, %v3166
        %v3175 = vcombine.high %v3173, %v3173
        %v3177 = vunpack.c.l.s4 1966171168
        %v3178 = vunpack.c.0.s8 %v3177
        %v3179 = vlaneseq
        %v3180 = vshrl.u32 %v3179, 7
        %v3181 = vsub.s32 %v3178, %v3180
        %v3182 = vrot.slane %v3166, %v3181
        %v3184 = vunpack.c.l.s4 1966171168
        %v3185 = vunpack.c.0.s8 %v3184
        %v3186 = vlaneseq
        %v3187 = vshrl.u32 %v3186, 7
        %v3188 = vsub.s32 %v3185, %v3187
        %v3189 = vrot.slane %v3173, %v3188
        %v3191 = vunpack.c.l.s4 1966171168
        %v3192 = vunpack.c.0.s8 %v3191
        %v3193 = vlaneseq
        %v3194 = vshrl.u32 %v3193, 7
        %v3195 = vsub.s32 %v3192, %v3194
        %v3196 = vrot.slane %v3174, %v3195
        %v3198 = vunpack.c.l.s4 1966171168
        %v3199 = vunpack.c.0.s8 %v3198
        %v3200 = vlaneseq
        %v3201 = vshrl.u32 %v3200, 7
        %v3202 = vsub.s32 %v3199, %v3201
        %v3203 = vrot.slane %v3175, %v3202
        %v3204 = vcombine.high %v3182, %v3182
        %v3205 = vcombine.high %v3189, %v3189
        %v3206 = vcombine.high %v3196, %v3196
        %v3207 = vcombine.high %v3203, %v3203
        %v3217 = vcombine.low %v3029, %v3031
        %v3218 = vcombine.high %v3029, %v3031
        %v3220 = vunpack.c.l.s4 1966171168
        %v3221 = vunpack.c.0.s8 %v3220
        %v3222 = vlaneseq
        %v3223 = vshrl.u32 %v3222, 7
        %v3224 = vsub.s32 %v3221, %v3223
        %v3225 = vrot.slane %v3217, %v3224
        %v3227 = vunpack.c.l.s4 1966171168
        %v3228 = vunpack.c.0.s8 %v3227
        %v3229 = vlaneseq
        %v3230 = vshrl.u32 %v3229, 7
        %v3231 = vsub.s32 %v3228, %v3230
        %v3232 = vrot.slane %v3218, %v3231
        %v3233 = vcombine.high %v3225, %v3225
        %v3234 = vcombine.high %v3232, %v3232
        %v3236 = vunpack.c.l.s4 1966171168
        %v3237 = vunpack.c.0.s8 %v3236
        %v3238 = vlaneseq
        %v3239 = vshrl.u32 %v3238, 7
        %v3240 = vsub.s32 %v3237, %v3239
        %v3241 = vrot.slane %v3225, %v3240
        %v3243 = vunpack.c.l.s4 1966171168
        %v3244 = vunpack.c.0.s8 %v3243
        %v3245 = vlaneseq
        %v3246 = vshrl.u32 %v3245, 7
        %v3247 = vsub.s32 %v3244, %v3246
        %v3248 = vrot.slane %v3232, %v3247
        %v3250 = vunpack.c.l.s4 1966171168
        %v3251 = vunpack.c.0.s8 %v3250
        %v3252 = vlaneseq
        %v3253 = vshrl.u32 %v3252, 7
        %v3254 = vsub.s32 %v3251, %v3253
        %v3255 = vrot.slane %v3233, %v3254
        %v3257 = vunpack.c.l.s4 1966171168
        %v3258 = vunpack.c.0.s8 %v3257
        %v3259 = vlaneseq
        %v3260 = vshrl.u32 %v3259, 7
        %v3261 = vsub.s32 %v3258, %v3260
        %v3262 = vrot.slane %v3234, %v3261
        %v3263 = vcombine.high %v3241, %v3241
        %v3264 = vcombine.high %v3248, %v3248
        %v3265 = vcombine.high %v3255, %v3255
        %v3266 = vcombine.high %v3262, %v3262
        %v3268 = vcombine.low %v3031, %v3070
        %v3269 = vcombine.high %v3031, %v3070
        %v3271 = vunpack.c.l.s4 1966171168
        %v3272 = vunpack.c.0.s8 %v3271
        %v3273 = vlaneseq
        %v3274 = vshrl.u32 %v3273, 7
        %v3275 = vsub.s32 %v3272, %v3274
        %v3276 = vrot.slane %v3268, %v3275
        %v3278 = vunpack.c.l.s4 1966171168
        %v3279 = vunpack.c.0.s8 %v3278
        %v3280 = vlaneseq
        %v3281 = vshrl.u32 %v3280, 7
        %v3282 = vsub.s32 %v3279, %v3281
        %v3283 = vrot.slane %v3269, %v3282
        %v3284 = vcombine.high %v3276, %v3276
        %v3285 = vcombine.high %v3283, %v3283
        %v3287 = vunpack.c.l.s4 1966171168
        %v3288 = vunpack.c.0.s8 %v3287
        %v3289 = vlaneseq
        %v3290 = vshrl.u32 %v3289, 7
        %v3291 = vsub.s32 %v3288, %v3290
        %v3292 = vrot.slane %v3276, %v3291
        %v3294 = vunpack.c.l.s4 1966171168
        %v3295 = vunpack.c.0.s8 %v3294
        %v3296 = vlaneseq
        %v3297 = vshrl.u32 %v3296, 7
        %v3298 = vsub.s32 %v3295, %v3297
        %v3299 = vrot.slane %v3283, %v3298
        %v3301 = vunpack.c.l.s4 1966171168
        %v3302 = vunpack.c.0.s8 %v3301
        %v3303 = vlaneseq
        %v3304 = vshrl.u32 %v3303, 7
        %v3305 = vsub.s32 %v3302, %v3304
        %v3306 = vrot.slane %v3284, %v3305
        %v3308 = vunpack.c.l.s4 1966171168
        %v3309 = vunpack.c.0.s8 %v3308
        %v3310 = vlaneseq
        %v3311 = vshrl.u32 %v3310, 7
        %v3312 = vsub.s32 %v3309, %v3311
        %v3313 = vrot.slane %v3285, %v3312
        %v3314 = vcombine.high %v3292, %v3292
        %v3315 = vcombine.high %v3299, %v3299
        %v3316 = vcombine.high %v3306, %v3306
        %v3317 = vcombine.high %v3313, %v3313
        %v3319 = vcombine.low %v3070, %v3072
        %v3320 = vcombine.high %v3070, %v3072
        %v3322 = vunpack.c.l.s4 1966171168
        %v3323 = vunpack.c.0.s8 %v3322
        %v3324 = vlaneseq
        %v3325 = vshrl.u32 %v3324, 7
        %v3326 = vsub.s32 %v3323, %v3325
        %v3327 = vrot.slane %v3319, %v3326
        %v3329 = vunpack.c.l.s4 1966171168
        %v3330 = vunpack.c.0.s8 %v3329
        %v3331 = vlaneseq
        %v3332 = vshrl.u32 %v3331, 7
        %v3333 = vsub.s32 %v3330, %v3332
        %v3334 = vrot.slane %v3320, %v3333
        %v3335 = vcombine.high %v3327, %v3327
        %v3336 = vcombine.high %v3334, %v3334
        %v3338 = vunpack.c.l.s4 1966171168
        %v3339 = vunpack.c.0.s8 %v3338
        %v3340 = vlaneseq
        %v3341 = vshrl.u32 %v3340, 7
        %v3342 = vsub.s32 %v3339, %v3341
        %v3343 = vrot.slane %v3327, %v3342
        %v3345 = vunpack.c.l.s4 1966171168
        %v3346 = vunpack.c.0.s8 %v3345
        %v3347 = vlaneseq
        %v3348 = vshrl.u32 %v3347, 7
        %v3349 = vsub.s32 %v3346, %v3348
        %v3350 = vrot.slane %v3334, %v3349
        %v3352 = vunpack.c.l.s4 1966171168
        %v3353 = vunpack.c.0.s8 %v3352
        %v3354 = vlaneseq
        %v3355 = vshrl.u32 %v3354, 7
        %v3356 = vsub.s32 %v3353, %v3355
        %v3357 = vrot.slane %v3335, %v3356
        %v3359 = vunpack.c.l.s4 1966171168
        %v3360 = vunpack.c.0.s8 %v3359
        %v3361 = vlaneseq
        %v3362 = vshrl.u32 %v3361, 7
        %v3363 = vsub.s32 %v3360, %v3362
        %v3364 = vrot.slane %v3336, %v3363
        %v3365 = vcombine.high %v3343, %v3343
        %v3366 = vcombine.high %v3350, %v3350
        %v3367 = vcombine.high %v3357, %v3357
        %v3368 = vcombine.high %v3364, %v3364
        %v3370 = vcombine.low %v3072, %v3111
        %v3371 = vcombine.high %v3072, %v3111
        %v3373 = vunpack.c.l.s4 1966171168
        %v3374 = vunpack.c.0.s8 %v3373
        %v3375 = vlaneseq
        %v3376 = vshrl.u32 %v3375, 7
        %v3377 = vsub.s32 %v3374, %v3376
        %v3378 = vrot.slane %v3370, %v3377
        %v3380 = vunpack.c.l.s4 1966171168
        %v3381 = vunpack.c.0.s8 %v3380
        %v3382 = vlaneseq
        %v3383 = vshrl.u32 %v3382, 7
        %v3384 = vsub.s32 %v3381, %v3383
        %v3385 = vrot.slane %v3371, %v3384
        %v3386 = vcombine.high %v3378, %v3378
        %v3387 = vcombine.high %v3385, %v3385
        %v3389 = vunpack.c.l.s4 1966171168
        %v3390 = vunpack.c.0.s8 %v3389
        %v3391 = vlaneseq
        %v3392 = vshrl.u32 %v3391, 7
        %v3393 = vsub.s32 %v3390, %v3392
        %v3394 = vrot.slane %v3378, %v3393
        %v3396 = vunpack.c.l.s4 1966171168
        %v3397 = vunpack.c.0.s8 %v3396
        %v3398 = vlaneseq
        %v3399 = vshrl.u32 %v3398, 7
        %v3400 = vsub.s32 %v3397, %v3399
        %v3401 = vrot.slane %v3385, %v3400
        %v3403 = vunpack.c.l.s4 1966171168
        %v3404 = vunpack.c.0.s8 %v3403
        %v3405 = vlaneseq
        %v3406 = vshrl.u32 %v3405, 7
        %v3407 = vsub.s32 %v3404, %v3406
        %v3408 = vrot.slane %v3386, %v3407
        %v3410 = vunpack.c.l.s4 1966171168
        %v3411 = vunpack.c.0.s8 %v3410
        %v3412 = vlaneseq
        %v3413 = vshrl.u32 %v3412, 7
        %v3414 = vsub.s32 %v3411, %v3413
        %v3415 = vrot.slane %v3387, %v3414
        %v3416 = vcombine.high %v3394, %v3394
        %v3417 = vcombine.high %v3401, %v3401
        %v3418 = vcombine.high %v3408, %v3408
        %v3419 = vcombine.high %v3415, %v3415
        %v3421 = vcombine.low %v3111, %v3113
        %v3422 = vcombine.high %v3111, %v3113
        %v3424 = vunpack.c.l.s4 1966171168
        %v3425 = vunpack.c.0.s8 %v3424
        %v3426 = vlaneseq
        %v3427 = vshrl.u32 %v3426, 7
        %v3428 = vsub.s32 %v3425, %v3427
        %v3429 = vrot.slane %v3421, %v3428
        %v3431 = vunpack.c.l.s4 1966171168
        %v3432 = vunpack.c.0.s8 %v3431
        %v3433 = vlaneseq
        %v3434 = vshrl.u32 %v3433, 7
        %v3435 = vsub.s32 %v3432, %v3434
        %v3436 = vrot.slane %v3422, %v3435
        %v3437 = vcombine.high %v3429, %v3429
        %v3438 = vcombine.high %v3436, %v3436
        %v3440 = vunpack.c.l.s4 1966171168
        %v3441 = vunpack.c.0.s8 %v3440
        %v3442 = vlaneseq
        %v3443 = vshrl.u32 %v3442, 7
        %v3444 = vsub.s32 %v3441, %v3443
        %v3445 = vrot.slane %v3429, %v3444
        %v3447 = vunpack.c.l.s4 1966171168
        %v3448 = vunpack.c.0.s8 %v3447
        %v3449 = vlaneseq
        %v3450 = vshrl.u32 %v3449, 7
        %v3451 = vsub.s32 %v3448, %v3450
        %v3452 = vrot.slane %v3436, %v3451
        %v3454 = vunpack.c.l.s4 1966171168
        %v3455 = vunpack.c.0.s8 %v3454
        %v3456 = vlaneseq
        %v3457 = vshrl.u32 %v3456, 7
        %v3458 = vsub.s32 %v3455, %v3457
        %v3459 = vrot.slane %v3437, %v3458
        %v3461 = vunpack.c.l.s4 1966171168
        %v3462 = vunpack.c.0.s8 %v3461
        %v3463 = vlaneseq
        %v3464 = vshrl.u32 %v3463, 7
        %v3465 = vsub.s32 %v3462, %v3464
        %v3466 = vrot.slane %v3438, %v3465
        %v3467 = vcombine.high %v3445, %v3445
        %v3468 = vcombine.high %v3452, %v3452
        %v3469 = vcombine.high %v3459, %v3459
        %v3470 = vcombine.high %v3466, %v3466
        %v3472 = vcombine.low %v3113, %v3152
        %v3473 = vcombine.high %v3113, %v3152
        %v3475 = vunpack.c.l.s4 1966171168
        %v3476 = vunpack.c.0.s8 %v3475
        %v3477 = vlaneseq
        %v3478 = vshrl.u32 %v3477, 7
        %v3479 = vsub.s32 %v3476, %v3478
        %v3480 = vrot.slane %v3472, %v3479
        %v3482 = vunpack.c.l.s4 1966171168
        %v3483 = vunpack.c.0.s8 %v3482
        %v3484 = vlaneseq
        %v3485 = vshrl.u32 %v3484, 7
        %v3486 = vsub.s32 %v3483, %v3485
        %v3487 = vrot.slane %v3473, %v3486
        %v3488 = vcombine.high %v3480, %v3480
        %v3489 = vcombine.high %v3487, %v3487
        %v3491 = vunpack.c.l.s4 1966171168
        %v3492 = vunpack.c.0.s8 %v3491
        %v3493 = vlaneseq
        %v3494 = vshrl.u32 %v3493, 7
        %v3495 = vsub.s32 %v3492, %v3494
        %v3496 = vrot.slane %v3480, %v3495
        %v3498 = vunpack.c.l.s4 1966171168
        %v3499 = vunpack.c.0.s8 %v3498
        %v3500 = vlaneseq
        %v3501 = vshrl.u32 %v3500, 7
        %v3502 = vsub.s32 %v3499, %v3501
        %v3503 = vrot.slane %v3487, %v3502
        %v3505 = vunpack.c.l.s4 1966171168
        %v3506 = vunpack.c.0.s8 %v3505
        %v3507 = vlaneseq
        %v3508 = vshrl.u32 %v3507, 7
        %v3509 = vsub.s32 %v3506, %v3508
        %v3510 = vrot.slane %v3488, %v3509
        %v3512 = vunpack.c.l.s4 1966171168
        %v3513 = vunpack.c.0.s8 %v3512
        %v3514 = vlaneseq
        %v3515 = vshrl.u32 %v3514, 7
        %v3516 = vsub.s32 %v3513, %v3515
        %v3517 = vrot.slane %v3489, %v3516
        %v3518 = vcombine.high %v3496, %v3496
        %v3519 = vcombine.high %v3503, %v3503
        %v3520 = vcombine.high %v3510, %v3510
        %v3521 = vcombine.high %v3517, %v3517
        %v3523 = vcombine.low %v3152, %v3154
        %v3524 = vcombine.high %v3152, %v3154
        %v3526 = vunpack.c.l.s4 1966171168
        %v3527 = vunpack.c.0.s8 %v3526
        %v3528 = vlaneseq
        %v3529 = vshrl.u32 %v3528, 7
        %v3530 = vsub.s32 %v3527, %v3529
        %v3531 = vrot.slane %v3523, %v3530
        %v3533 = vunpack.c.l.s4 1966171168
        %v3534 = vunpack.c.0.s8 %v3533
        %v3535 = vlaneseq
        %v3536 = vshrl.u32 %v3535, 7
        %v3537 = vsub.s32 %v3534, %v3536
        %v3538 = vrot.slane %v3524, %v3537
        %v3539 = vcombine.high %v3531, %v3531
        %v3540 = vcombine.high %v3538, %v3538
        %v3542 = vunpack.c.l.s4 1966171168
        %v3543 = vunpack.c.0.s8 %v3542
        %v3544 = vlaneseq
        %v3545 = vshrl.u32 %v3544, 7
        %v3546 = vsub.s32 %v3543, %v3545
        %v3547 = vrot.slane %v3531, %v3546
        %v3549 = vunpack.c.l.s4 1966171168
        %v3550 = vunpack.c.0.s8 %v3549
        %v3551 = vlaneseq
        %v3552 = vshrl.u32 %v3551, 7
        %v3553 = vsub.s32 %v3550, %v3552
        %v3554 = vrot.slane %v3538, %v3553
        %v3556 = vunpack.c.l.s4 1966171168
        %v3557 = vunpack.c.0.s8 %v3556
        %v3558 = vlaneseq
        %v3559 = vshrl.u32 %v3558, 7
        %v3560 = vsub.s32 %v3557, %v3559
        %v3561 = vrot.slane %v3539, %v3560
        %v3563 = vunpack.c.l.s4 1966171168
        %v3564 = vunpack.c.0.s8 %v3563
        %v3565 = vlaneseq
        %v3566 = vshrl.u32 %v3565, 7
        %v3567 = vsub.s32 %v3564, %v3566
        %v3568 = vrot.slane %v3540, %v3567
        %v3569 = vcombine.high %v3547, %v3547
        %v3570 = vcombine.high %v3554, %v3554
        %v3571 = vcombine.high %v3561, %v3561
        %v3572 = vcombine.high %v3568, %v3568
        %v3573 = vlaneseq
        %v3574 = vshrl.u32 %v3573, 7
        %v3575 = vsub.s32 0, %v3574
        %v3576 = vrot.slane %v3241, %v3575
        %v3577 = vlaneseq
        %v3578 = vshrl.u32 %v3577, 7
        %v3579 = vsub.s32 1, %v3578
        %v3580 = vrot.slane %v3241, %v3579
        %v3581 = vlaneseq
        %v3582 = vshrl.u32 %v3581, 7
        %v3583 = vsub.s32 0, %v3582
        %v3584 = vrot.slane %v3255, %v3583
        %v3585 = vlaneseq
        %v3586 = vshrl.u32 %v3585, 7
        %v3587 = vsub.s32 1, %v3586
        %v3588 = vrot.slane %v3255, %v3587
        %v3589 = vlaneseq
        %v3590 = vshrl.u32 %v3589, 7
        %v3591 = vsub.s32 0, %v3590
        %v3592 = vrot.slane %v3263, %v3591
        %v3593 = vlaneseq
        %v3594 = vshrl.u32 %v3593, 7
        %v3595 = vsub.s32 1, %v3594
        %v3596 = vrot.slane %v3263, %v3595
        %v3597 = vlaneseq
        %v3598 = vshrl.u32 %v3597, 7
        %v3599 = vsub.s32 0, %v3598
        %v3600 = vrot.slane %v3265, %v3599
        %v3601 = vlaneseq
        %v3602 = vshrl.u32 %v3601, 7
        %v3603 = vsub.s32 1, %v3602
        %v3604 = vrot.slane %v3265, %v3603
        %v3605 = vlaneseq
        %v3606 = vshrl.u32 %v3605, 7
        %v3607 = vsub.s32 0, %v3606
        %v3608 = vrot.slane %v3248, %v3607
        %v3609 = vlaneseq
        %v3610 = vshrl.u32 %v3609, 7
        %v3611 = vsub.s32 1, %v3610
        %v3612 = vrot.slane %v3248, %v3611
        %v3613 = vlaneseq
        %v3614 = vshrl.u32 %v3613, 7
        %v3615 = vsub.s32 0, %v3614
        %v3616 = vrot.slane %v3262, %v3615
        %v3617 = vlaneseq
        %v3618 = vshrl.u32 %v3617, 7
        %v3619 = vsub.s32 1, %v3618
        %v3620 = vrot.slane %v3262, %v3619
        %v3621 = vlaneseq
        %v3622 = vshrl.u32 %v3621, 7
        %v3623 = vsub.s32 0, %v3622
        %v3624 = vrot.slane %v3264, %v3623
        %v3625 = vlaneseq
        %v3626 = vshrl.u32 %v3625, 7
        %v3627 = vsub.s32 1, %v3626
        %v3628 = vrot.slane %v3264, %v3627
        %v3629 = vlaneseq
        %v3630 = vshrl.u32 %v3629, 7
        %v3631 = vsub.s32 0, %v3630
        %v3632 = vrot.slane %v3266, %v3631
        %v3633 = vlaneseq
        %v3634 = vshrl.u32 %v3633, 7
        %v3635 = vsub.s32 1, %v3634
        %v3636 = vrot.slane %v3266, %v3635
        %3637 = vrot.lane.b32.xlu0 %v3576, 8
        %v3638 = vpop.permute.xlu0 %3637
        %3639 = vrot.lane.b32.xlu0 %v3580, 8
        %v3640 = vpop.permute.xlu0 %3639
        %3641 = vrot.lane.b32.xlu0 %v3584, 8
        %v3642 = vpop.permute.xlu0 %3641
        %3643 = vrot.lane.b32.xlu0 %v3588, 8
        %v3644 = vpop.permute.xlu0 %3643
        %3645 = vrot.lane.b32.xlu0 %v3592, 8
        %v3646 = vpop.permute.xlu0 %3645
        %3647 = vrot.lane.b32.xlu0 %v3596, 8
        %v3648 = vpop.permute.xlu0 %3647
        %3649 = vrot.lane.b32.xlu0 %v3600, 8
        %v3650 = vpop.permute.xlu0 %3649
        %3651 = vrot.lane.b32.xlu0 %v3604, 8
        %v3652 = vpop.permute.xlu0 %3651
        %3653 = vrot.lane.b32.xlu0 %v3608, 8
        %v3654 = vpop.permute.xlu0 %3653
        %3655 = vrot.lane.b32.xlu0 %v3612, 8
        %v3656 = vpop.permute.xlu0 %3655
        %3657 = vrot.lane.b32.xlu0 %v3616, 8
        %v3658 = vpop.permute.xlu0 %3657
        %3659 = vrot.lane.b32.xlu0 %v3620, 8
        %v3660 = vpop.permute.xlu0 %3659
        %3661 = vrot.lane.b32.xlu0 %v3624, 8
        %v3662 = vpop.permute.xlu0 %3661
        %3663 = vrot.lane.b32.xlu0 %v3628, 8
        %v3664 = vpop.permute.xlu0 %3663
        %3665 = vrot.lane.b32.xlu0 %v3632, 8
        %v3666 = vpop.permute.xlu0 %3665
        %3667 = vrot.lane.b32.xlu0 %v3636, 8
        %v3668 = vpop.permute.xlu0 %3667
        %vm3669 = vcmask 64512
        %v3670 = vsel %vm3669, %v3638, %v3640
        %v3671 = vsel %vm3669, %v3642, %v3644
        %v3672 = vsel %vm3669, %v3646, %v3648
        %v3673 = vsel %vm3669, %v3650, %v3652
        %v3674 = vsel %vm3669, %v3654, %v3656
        %v3675 = vsel %vm3669, %v3658, %v3660
        %v3676 = vsel %vm3669, %v3662, %v3664
        %v3677 = vsel %vm3669, %v3666, %v3668
        %v3686 = vlaneseq
        %v3687 = vshrl.u32 %v3686, 7
        %v3688 = vsub.s32 0, %v3687
        %v3689 = vrot.slane %v3292, %v3688
        %v3690 = vlaneseq
        %v3691 = vshrl.u32 %v3690, 7
        %v3692 = vsub.s32 1, %v3691
        %v3693 = vrot.slane %v3292, %v3692
        %v3694 = vlaneseq
        %v3695 = vshrl.u32 %v3694, 7
        %v3696 = vsub.s32 0, %v3695
        %v3697 = vrot.slane %v3306, %v3696
        %v3698 = vlaneseq
        %v3699 = vshrl.u32 %v3698, 7
        %v3700 = vsub.s32 1, %v3699
        %v3701 = vrot.slane %v3306, %v3700
        %v3702 = vlaneseq
        %v3703 = vshrl.u32 %v3702, 7
        %v3704 = vsub.s32 0, %v3703
        %v3705 = vrot.slane %v3314, %v3704
        %v3706 = vlaneseq
        %v3707 = vshrl.u32 %v3706, 7
        %v3708 = vsub.s32 1, %v3707
        %v3709 = vrot.slane %v3314, %v3708
        %v3710 = vlaneseq
        %v3711 = vshrl.u32 %v3710, 7
        %v3712 = vsub.s32 0, %v3711
        %v3713 = vrot.slane %v3316, %v3712
        %v3714 = vlaneseq
        %v3715 = vshrl.u32 %v3714, 7
        %v3716 = vsub.s32 1, %v3715
        %v3717 = vrot.slane %v3316, %v3716
        %v3718 = vlaneseq
        %v3719 = vshrl.u32 %v3718, 7
        %v3720 = vsub.s32 0, %v3719
        %v3721 = vrot.slane %v3299, %v3720
        %v3722 = vlaneseq
        %v3723 = vshrl.u32 %v3722, 7
        %v3724 = vsub.s32 1, %v3723
        %v3725 = vrot.slane %v3299, %v3724
        %v3726 = vlaneseq
        %v3727 = vshrl.u32 %v3726, 7
        %v3728 = vsub.s32 0, %v3727
        %v3729 = vrot.slane %v3313, %v3728
        %v3730 = vlaneseq
        %v3731 = vshrl.u32 %v3730, 7
        %v3732 = vsub.s32 1, %v3731
        %v3733 = vrot.slane %v3313, %v3732
        %v3734 = vlaneseq
        %v3735 = vshrl.u32 %v3734, 7
        %v3736 = vsub.s32 0, %v3735
        %v3737 = vrot.slane %v3315, %v3736
        %v3738 = vlaneseq
        %v3739 = vshrl.u32 %v3738, 7
        %v3740 = vsub.s32 1, %v3739
        %v3741 = vrot.slane %v3315, %v3740
        %v3742 = vlaneseq
        %v3743 = vshrl.u32 %v3742, 7
        %v3744 = vsub.s32 0, %v3743
        %v3745 = vrot.slane %v3317, %v3744
        %v3746 = vlaneseq
        %v3747 = vshrl.u32 %v3746, 7
        %v3748 = vsub.s32 1, %v3747
        %v3749 = vrot.slane %v3317, %v3748
        %3750 = vrot.lane.b32.xlu0 %v3689, 16
        %v3751 = vpop.permute.xlu0 %3750
        %3752 = vrot.lane.b32.xlu0 %v3693, 16
        %v3753 = vpop.permute.xlu0 %3752
        %3754 = vrot.lane.b32.xlu0 %v3697, 16
        %v3755 = vpop.permute.xlu0 %3754
        %3756 = vrot.lane.b32.xlu0 %v3701, 16
        %v3757 = vpop.permute.xlu0 %3756
        %3758 = vrot.lane.b32.xlu0 %v3705, 16
        %v3759 = vpop.permute.xlu0 %3758
        %3760 = vrot.lane.b32.xlu0 %v3709, 16
        %v3761 = vpop.permute.xlu0 %3760
        %3762 = vrot.lane.b32.xlu0 %v3713, 16
        %v3763 = vpop.permute.xlu0 %3762
        %3764 = vrot.lane.b32.xlu0 %v3717, 16
        %v3765 = vpop.permute.xlu0 %3764
        %3766 = vrot.lane.b32.xlu0 %v3721, 16
        %v3767 = vpop.permute.xlu0 %3766
        %3768 = vrot.lane.b32.xlu0 %v3725, 16
        %v3769 = vpop.permute.xlu0 %3768
        %3770 = vrot.lane.b32.xlu0 %v3729, 16
        %v3771 = vpop.permute.xlu0 %3770
        %3772 = vrot.lane.b32.xlu0 %v3733, 16
        %v3773 = vpop.permute.xlu0 %3772
        %3774 = vrot.lane.b32.xlu0 %v3737, 16
        %v3775 = vpop.permute.xlu0 %3774
        %3776 = vrot.lane.b32.xlu0 %v3741, 16
        %v3777 = vpop.permute.xlu0 %3776
        %3778 = vrot.lane.b32.xlu0 %v3745, 16
        %v3779 = vpop.permute.xlu0 %3778
        %3780 = vrot.lane.b32.xlu0 %v3749, 16
        %v3781 = vpop.permute.xlu0 %3780
        %vm3782 = vcmask 130048
        %v3783 = vsel %vm3782, %v3751, %v3753
        %v3784 = vsel %vm3782, %v3755, %v3757
        %v3785 = vsel %vm3782, %v3759, %v3761
        %v3786 = vsel %vm3782, %v3763, %v3765
        %v3787 = vsel %vm3782, %v3767, %v3769
        %v3788 = vsel %vm3782, %v3771, %v3773
        %v3789 = vsel %vm3782, %v3775, %v3777
        %v3790 = vsel %vm3782, %v3779, %v3781
        %v3799 = vlaneseq
        %v3800 = vshrl.u32 %v3799, 7
        %v3801 = vsub.s32 0, %v3800
        %v3802 = vrot.slane %v3343, %v3801
        %v3803 = vlaneseq
        %v3804 = vshrl.u32 %v3803, 7
        %v3805 = vsub.s32 1, %v3804
        %v3806 = vrot.slane %v3343, %v3805
        %v3807 = vlaneseq
        %v3808 = vshrl.u32 %v3807, 7
        %v3809 = vsub.s32 0, %v3808
        %v3810 = vrot.slane %v3357, %v3809
        %v3811 = vlaneseq
        %v3812 = vshrl.u32 %v3811, 7
        %v3813 = vsub.s32 1, %v3812
        %v3814 = vrot.slane %v3357, %v3813
        %v3815 = vlaneseq
        %v3816 = vshrl.u32 %v3815, 7
        %v3817 = vsub.s32 0, %v3816
        %v3818 = vrot.slane %v3365, %v3817
        %v3819 = vlaneseq
        %v3820 = vshrl.u32 %v3819, 7
        %v3821 = vsub.s32 1, %v3820
        %v3822 = vrot.slane %v3365, %v3821
        %v3823 = vlaneseq
        %v3824 = vshrl.u32 %v3823, 7
        %v3825 = vsub.s32 0, %v3824
        %v3826 = vrot.slane %v3367, %v3825
        %v3827 = vlaneseq
        %v3828 = vshrl.u32 %v3827, 7
        %v3829 = vsub.s32 1, %v3828
        %v3830 = vrot.slane %v3367, %v3829
        %v3831 = vlaneseq
        %v3832 = vshrl.u32 %v3831, 7
        %v3833 = vsub.s32 0, %v3832
        %v3834 = vrot.slane %v3350, %v3833
        %v3835 = vlaneseq
        %v3836 = vshrl.u32 %v3835, 7
        %v3837 = vsub.s32 1, %v3836
        %v3838 = vrot.slane %v3350, %v3837
        %v3839 = vlaneseq
        %v3840 = vshrl.u32 %v3839, 7
        %v3841 = vsub.s32 0, %v3840
        %v3842 = vrot.slane %v3364, %v3841
        %v3843 = vlaneseq
        %v3844 = vshrl.u32 %v3843, 7
        %v3845 = vsub.s32 1, %v3844
        %v3846 = vrot.slane %v3364, %v3845
        %v3847 = vlaneseq
        %v3848 = vshrl.u32 %v3847, 7
        %v3849 = vsub.s32 0, %v3848
        %v3850 = vrot.slane %v3366, %v3849
        %v3851 = vlaneseq
        %v3852 = vshrl.u32 %v3851, 7
        %v3853 = vsub.s32 1, %v3852
        %v3854 = vrot.slane %v3366, %v3853
        %v3855 = vlaneseq
        %v3856 = vshrl.u32 %v3855, 7
        %v3857 = vsub.s32 0, %v3856
        %v3858 = vrot.slane %v3368, %v3857
        %v3859 = vlaneseq
        %v3860 = vshrl.u32 %v3859, 7
        %v3861 = vsub.s32 1, %v3860
        %v3862 = vrot.slane %v3368, %v3861
        %3863 = vrot.lane.b32.xlu0 %v3802, 24
        %v3864 = vpop.permute.xlu0 %3863
        %3865 = vrot.lane.b32.xlu0 %v3806, 24
        %v3866 = vpop.permute.xlu0 %3865
        %3867 = vrot.lane.b32.xlu0 %v3810, 24
        %v3868 = vpop.permute.xlu0 %3867
        %3869 = vrot.lane.b32.xlu0 %v3814, 24
        %v3870 = vpop.permute.xlu0 %3869
        %3871 = vrot.lane.b32.xlu0 %v3818, 24
        %v3872 = vpop.permute.xlu0 %3871
        %3873 = vrot.lane.b32.xlu0 %v3822, 24
        %v3874 = vpop.permute.xlu0 %3873
        %3875 = vrot.lane.b32.xlu0 %v3826, 24
        %v3876 = vpop.permute.xlu0 %3875
        %3877 = vrot.lane.b32.xlu0 %v3830, 24
        %v3878 = vpop.permute.xlu0 %3877
        %3879 = vrot.lane.b32.xlu0 %v3834, 24
        %v3880 = vpop.permute.xlu0 %3879
        %3881 = vrot.lane.b32.xlu0 %v3838, 24
        %v3882 = vpop.permute.xlu0 %3881
        %3883 = vrot.lane.b32.xlu0 %v3842, 24
        %v3884 = vpop.permute.xlu0 %3883
        %3885 = vrot.lane.b32.xlu0 %v3846, 24
        %v3886 = vpop.permute.xlu0 %3885
        %3887 = vrot.lane.b32.xlu0 %v3850, 24
        %v3888 = vpop.permute.xlu0 %3887
        %3889 = vrot.lane.b32.xlu0 %v3854, 24
        %v3890 = vpop.permute.xlu0 %3889
        %3891 = vrot.lane.b32.xlu0 %v3858, 24
        %v3892 = vpop.permute.xlu0 %3891
        %3893 = vrot.lane.b32.xlu0 %v3862, 24
        %v3894 = vpop.permute.xlu0 %3893
        %vm3895 = vcmask 195584
        %v3896 = vsel %vm3895, %v3864, %v3866
        %v3897 = vsel %vm3895, %v3868, %v3870
        %v3898 = vsel %vm3895, %v3872, %v3874
        %v3899 = vsel %vm3895, %v3876, %v3878
        %v3900 = vsel %vm3895, %v3880, %v3882
        %v3901 = vsel %vm3895, %v3884, %v3886
        %v3902 = vsel %vm3895, %v3888, %v3890
        %v3903 = vsel %vm3895, %v3892, %v3894
        %v3912 = vlaneseq
        %v3913 = vshrl.u32 %v3912, 7
        %v3914 = vsub.s32 0, %v3913
        %v3915 = vrot.slane %v3394, %v3914
        %v3916 = vlaneseq
        %v3917 = vshrl.u32 %v3916, 7
        %v3918 = vsub.s32 1, %v3917
        %v3919 = vrot.slane %v3394, %v3918
        %v3920 = vlaneseq
        %v3921 = vshrl.u32 %v3920, 7
        %v3922 = vsub.s32 0, %v3921
        %v3923 = vrot.slane %v3408, %v3922
        %v3924 = vlaneseq
        %v3925 = vshrl.u32 %v3924, 7
        %v3926 = vsub.s32 1, %v3925
        %v3927 = vrot.slane %v3408, %v3926
        %v3928 = vlaneseq
        %v3929 = vshrl.u32 %v3928, 7
        %v3930 = vsub.s32 0, %v3929
        %v3931 = vrot.slane %v3416, %v3930
        %v3932 = vlaneseq
        %v3933 = vshrl.u32 %v3932, 7
        %v3934 = vsub.s32 1, %v3933
        %v3935 = vrot.slane %v3416, %v3934
        %v3936 = vlaneseq
        %v3937 = vshrl.u32 %v3936, 7
        %v3938 = vsub.s32 0, %v3937
        %v3939 = vrot.slane %v3418, %v3938
        %v3940 = vlaneseq
        %v3941 = vshrl.u32 %v3940, 7
        %v3942 = vsub.s32 1, %v3941
        %v3943 = vrot.slane %v3418, %v3942
        %v3944 = vlaneseq
        %v3945 = vshrl.u32 %v3944, 7
        %v3946 = vsub.s32 0, %v3945
        %v3947 = vrot.slane %v3401, %v3946
        %v3948 = vlaneseq
        %v3949 = vshrl.u32 %v3948, 7
        %v3950 = vsub.s32 1, %v3949
        %v3951 = vrot.slane %v3401, %v3950
        %v3952 = vlaneseq
        %v3953 = vshrl.u32 %v3952, 7
        %v3954 = vsub.s32 0, %v3953
        %v3955 = vrot.slane %v3415, %v3954
        %v3956 = vlaneseq
        %v3957 = vshrl.u32 %v3956, 7
        %v3958 = vsub.s32 1, %v3957
        %v3959 = vrot.slane %v3415, %v3958
        %v3960 = vlaneseq
        %v3961 = vshrl.u32 %v3960, 7
        %v3962 = vsub.s32 0, %v3961
        %v3963 = vrot.slane %v3417, %v3962
        %v3964 = vlaneseq
        %v3965 = vshrl.u32 %v3964, 7
        %v3966 = vsub.s32 1, %v3965
        %v3967 = vrot.slane %v3417, %v3966
        %v3968 = vlaneseq
        %v3969 = vshrl.u32 %v3968, 7
        %v3970 = vsub.s32 0, %v3969
        %v3971 = vrot.slane %v3419, %v3970
        %v3972 = vlaneseq
        %v3973 = vshrl.u32 %v3972, 7
        %v3974 = vsub.s32 1, %v3973
        %v3975 = vrot.slane %v3419, %v3974
        %3976 = vrot.lane.b32.xlu0 %v3915, 32
        %v3977 = vpop.permute.xlu0 %3976
        %3978 = vrot.lane.b32.xlu0 %v3919, 32
        %v3979 = vpop.permute.xlu0 %3978
        %3980 = vrot.lane.b32.xlu0 %v3923, 32
        %v3981 = vpop.permute.xlu0 %3980
        %3982 = vrot.lane.b32.xlu0 %v3927, 32
        %v3983 = vpop.permute.xlu0 %3982
        %3984 = vrot.lane.b32.xlu0 %v3931, 32
        %v3985 = vpop.permute.xlu0 %3984
        %3986 = vrot.lane.b32.xlu0 %v3935, 32
        %v3987 = vpop.permute.xlu0 %3986
        %3988 = vrot.lane.b32.xlu0 %v3939, 32
        %v3989 = vpop.permute.xlu0 %3988
        %3990 = vrot.lane.b32.xlu0 %v3943, 32
        %v3991 = vpop.permute.xlu0 %3990
        %3992 = vrot.lane.b32.xlu0 %v3947, 32
        %v3993 = vpop.permute.xlu0 %3992
        %3994 = vrot.lane.b32.xlu0 %v3951, 32
        %v3995 = vpop.permute.xlu0 %3994
        %3996 = vrot.lane.b32.xlu0 %v3955, 32
        %v3997 = vpop.permute.xlu0 %3996
        %3998 = vrot.lane.b32.xlu0 %v3959, 32
        %v3999 = vpop.permute.xlu0 %3998
        %4000 = vrot.lane.b32.xlu0 %v3963, 32
        %v4001 = vpop.permute.xlu0 %4000
        %4002 = vrot.lane.b32.xlu0 %v3967, 32
        %v4003 = vpop.permute.xlu0 %4002
        %4004 = vrot.lane.b32.xlu0 %v3971, 32
        %v4005 = vpop.permute.xlu0 %4004
        %4006 = vrot.lane.b32.xlu0 %v3975, 32
        %v4007 = vpop.permute.xlu0 %4006
        %v4008 = vsel %vm786, %v3977, %v3979
        %v4009 = vsel %vm786, %v3981, %v3983
        %v4010 = vsel %vm786, %v3985, %v3987
        %v4011 = vsel %vm786, %v3989, %v3991
        %v4012 = vsel %vm786, %v3993, %v3995
        %v4013 = vsel %vm786, %v3997, %v3999
        %v4014 = vsel %vm786, %v4001, %v4003
        %v4015 = vsel %vm786, %v4005, %v4007
        %v4024 = vlaneseq
        %v4025 = vshrl.u32 %v4024, 7
        %v4026 = vsub.s32 0, %v4025
        %v4027 = vrot.slane %v3445, %v4026
        %v4028 = vlaneseq
        %v4029 = vshrl.u32 %v4028, 7
        %v4030 = vsub.s32 1, %v4029
        %v4031 = vrot.slane %v3445, %v4030
        %v4032 = vlaneseq
        %v4033 = vshrl.u32 %v4032, 7
        %v4034 = vsub.s32 0, %v4033
        %v4035 = vrot.slane %v3459, %v4034
        %v4036 = vlaneseq
        %v4037 = vshrl.u32 %v4036, 7
        %v4038 = vsub.s32 1, %v4037
        %v4039 = vrot.slane %v3459, %v4038
        %v4040 = vlaneseq
        %v4041 = vshrl.u32 %v4040, 7
        %v4042 = vsub.s32 0, %v4041
        %v4043 = vrot.slane %v3467, %v4042
        %v4044 = vlaneseq
        %v4045 = vshrl.u32 %v4044, 7
        %v4046 = vsub.s32 1, %v4045
        %v4047 = vrot.slane %v3467, %v4046
        %v4048 = vlaneseq
        %v4049 = vshrl.u32 %v4048, 7
        %v4050 = vsub.s32 0, %v4049
        %v4051 = vrot.slane %v3469, %v4050
        %v4052 = vlaneseq
        %v4053 = vshrl.u32 %v4052, 7
        %v4054 = vsub.s32 1, %v4053
        %v4055 = vrot.slane %v3469, %v4054
        %v4056 = vlaneseq
        %v4057 = vshrl.u32 %v4056, 7
        %v4058 = vsub.s32 0, %v4057
        %v4059 = vrot.slane %v3452, %v4058
        %v4060 = vlaneseq
        %v4061 = vshrl.u32 %v4060, 7
        %v4062 = vsub.s32 1, %v4061
        %v4063 = vrot.slane %v3452, %v4062
        %v4064 = vlaneseq
        %v4065 = vshrl.u32 %v4064, 7
        %v4066 = vsub.s32 0, %v4065
        %v4067 = vrot.slane %v3466, %v4066
        %v4068 = vlaneseq
        %v4069 = vshrl.u32 %v4068, 7
        %v4070 = vsub.s32 1, %v4069
        %v4071 = vrot.slane %v3466, %v4070
        %v4072 = vlaneseq
        %v4073 = vshrl.u32 %v4072, 7
        %v4074 = vsub.s32 0, %v4073
        %v4075 = vrot.slane %v3468, %v4074
        %v4076 = vlaneseq
        %v4077 = vshrl.u32 %v4076, 7
        %v4078 = vsub.s32 1, %v4077
        %v4079 = vrot.slane %v3468, %v4078
        %v4080 = vlaneseq
        %v4081 = vshrl.u32 %v4080, 7
        %v4082 = vsub.s32 0, %v4081
        %v4083 = vrot.slane %v3470, %v4082
        %v4084 = vlaneseq
        %v4085 = vshrl.u32 %v4084, 7
        %v4086 = vsub.s32 1, %v4085
        %v4087 = vrot.slane %v3470, %v4086
        %4088 = vrot.lane.b32.xlu0 %v4027, 40
        %v4089 = vpop.permute.xlu0 %4088
        %4090 = vrot.lane.b32.xlu0 %v4031, 40
        %v4091 = vpop.permute.xlu0 %4090
        %4092 = vrot.lane.b32.xlu0 %v4035, 40
        %v4093 = vpop.permute.xlu0 %4092
        %4094 = vrot.lane.b32.xlu0 %v4039, 40
        %v4095 = vpop.permute.xlu0 %4094
        %4096 = vrot.lane.b32.xlu0 %v4043, 40
        %v4097 = vpop.permute.xlu0 %4096
        %4098 = vrot.lane.b32.xlu0 %v4047, 40
        %v4099 = vpop.permute.xlu0 %4098
        %4100 = vrot.lane.b32.xlu0 %v4051, 40
        %v4101 = vpop.permute.xlu0 %4100
        %4102 = vrot.lane.b32.xlu0 %v4055, 40
        %v4103 = vpop.permute.xlu0 %4102
        %4104 = vrot.lane.b32.xlu0 %v4059, 40
        %v4105 = vpop.permute.xlu0 %4104
        %4106 = vrot.lane.b32.xlu0 %v4063, 40
        %v4107 = vpop.permute.xlu0 %4106
        %4108 = vrot.lane.b32.xlu0 %v4067, 40
        %v4109 = vpop.permute.xlu0 %4108
        %4110 = vrot.lane.b32.xlu0 %v4071, 40
        %v4111 = vpop.permute.xlu0 %4110
        %4112 = vrot.lane.b32.xlu0 %v4075, 40
        %v4113 = vpop.permute.xlu0 %4112
        %4114 = vrot.lane.b32.xlu0 %v4079, 40
        %v4115 = vpop.permute.xlu0 %4114
        %4116 = vrot.lane.b32.xlu0 %v4083, 40
        %v4117 = vpop.permute.xlu0 %4116
        %4118 = vrot.lane.b32.xlu0 %v4087, 40
        %v4119 = vpop.permute.xlu0 %4118
        %vm4120 = vcmask 326656
        %v4121 = vsel %vm4120, %v4089, %v4091
        %v4122 = vsel %vm4120, %v4093, %v4095
        %v4123 = vsel %vm4120, %v4097, %v4099
        %v4124 = vsel %vm4120, %v4101, %v4103
        %v4125 = vsel %vm4120, %v4105, %v4107
        %v4126 = vsel %vm4120, %v4109, %v4111
        %v4127 = vsel %vm4120, %v4113, %v4115
        %v4128 = vsel %vm4120, %v4117, %v4119
        %v4137 = vlaneseq
        %v4138 = vshrl.u32 %v4137, 7
        %v4139 = vsub.s32 0, %v4138
        %v4140 = vrot.slane %v3496, %v4139
        %v4141 = vlaneseq
        %v4142 = vshrl.u32 %v4141, 7
        %v4143 = vsub.s32 1, %v4142
        %v4144 = vrot.slane %v3496, %v4143
        %v4145 = vlaneseq
        %v4146 = vshrl.u32 %v4145, 7
        %v4147 = vsub.s32 0, %v4146
        %v4148 = vrot.slane %v3510, %v4147
        %v4149 = vlaneseq
        %v4150 = vshrl.u32 %v4149, 7
        %v4151 = vsub.s32 1, %v4150
        %v4152 = vrot.slane %v3510, %v4151
        %v4153 = vlaneseq
        %v4154 = vshrl.u32 %v4153, 7
        %v4155 = vsub.s32 0, %v4154
        %v4156 = vrot.slane %v3518, %v4155
        %v4157 = vlaneseq
        %v4158 = vshrl.u32 %v4157, 7
        %v4159 = vsub.s32 1, %v4158
        %v4160 = vrot.slane %v3518, %v4159
        %v4161 = vlaneseq
        %v4162 = vshrl.u32 %v4161, 7
        %v4163 = vsub.s32 0, %v4162
        %v4164 = vrot.slane %v3520, %v4163
        %v4165 = vlaneseq
        %v4166 = vshrl.u32 %v4165, 7
        %v4167 = vsub.s32 1, %v4166
        %v4168 = vrot.slane %v3520, %v4167
        %v4169 = vlaneseq
        %v4170 = vshrl.u32 %v4169, 7
        %v4171 = vsub.s32 0, %v4170
        %v4172 = vrot.slane %v3503, %v4171
        %v4173 = vlaneseq
        %v4174 = vshrl.u32 %v4173, 7
        %v4175 = vsub.s32 1, %v4174
        %v4176 = vrot.slane %v3503, %v4175
        %v4177 = vlaneseq
        %v4178 = vshrl.u32 %v4177, 7
        %v4179 = vsub.s32 0, %v4178
        %v4180 = vrot.slane %v3517, %v4179
        %v4181 = vlaneseq
        %v4182 = vshrl.u32 %v4181, 7
        %v4183 = vsub.s32 1, %v4182
        %v4184 = vrot.slane %v3517, %v4183
        %v4185 = vlaneseq
        %v4186 = vshrl.u32 %v4185, 7
        %v4187 = vsub.s32 0, %v4186
        %v4188 = vrot.slane %v3519, %v4187
        %v4189 = vlaneseq
        %v4190 = vshrl.u32 %v4189, 7
        %v4191 = vsub.s32 1, %v4190
        %v4192 = vrot.slane %v3519, %v4191
        %v4193 = vlaneseq
        %v4194 = vshrl.u32 %v4193, 7
        %v4195 = vsub.s32 0, %v4194
        %v4196 = vrot.slane %v3521, %v4195
        %v4197 = vlaneseq
        %v4198 = vshrl.u32 %v4197, 7
        %v4199 = vsub.s32 1, %v4198
        %v4200 = vrot.slane %v3521, %v4199
        %4201 = vrot.lane.b32.xlu0 %v4140, 48
        %v4202 = vpop.permute.xlu0 %4201
        %4203 = vrot.lane.b32.xlu0 %v4144, 48
        %v4204 = vpop.permute.xlu0 %4203
        %4205 = vrot.lane.b32.xlu0 %v4148, 48
        %v4206 = vpop.permute.xlu0 %4205
        %4207 = vrot.lane.b32.xlu0 %v4152, 48
        %v4208 = vpop.permute.xlu0 %4207
        %4209 = vrot.lane.b32.xlu0 %v4156, 48
        %v4210 = vpop.permute.xlu0 %4209
        %4211 = vrot.lane.b32.xlu0 %v4160, 48
        %v4212 = vpop.permute.xlu0 %4211
        %4213 = vrot.lane.b32.xlu0 %v4164, 48
        %v4214 = vpop.permute.xlu0 %4213
        %4215 = vrot.lane.b32.xlu0 %v4168, 48
        %v4216 = vpop.permute.xlu0 %4215
        %4217 = vrot.lane.b32.xlu0 %v4172, 48
        %v4218 = vpop.permute.xlu0 %4217
        %4219 = vrot.lane.b32.xlu0 %v4176, 48
        %v4220 = vpop.permute.xlu0 %4219
        %4221 = vrot.lane.b32.xlu0 %v4180, 48
        %v4222 = vpop.permute.xlu0 %4221
        %4223 = vrot.lane.b32.xlu0 %v4184, 48
        %v4224 = vpop.permute.xlu0 %4223
        %4225 = vrot.lane.b32.xlu0 %v4188, 48
        %v4226 = vpop.permute.xlu0 %4225
        %4227 = vrot.lane.b32.xlu0 %v4192, 48
        %v4228 = vpop.permute.xlu0 %4227
        %4229 = vrot.lane.b32.xlu0 %v4196, 48
        %v4230 = vpop.permute.xlu0 %4229
        %4231 = vrot.lane.b32.xlu0 %v4200, 48
        %v4232 = vpop.permute.xlu0 %4231
        %vm4233 = vcmask 392192
        %v4234 = vsel %vm4233, %v4202, %v4204
        %v4235 = vsel %vm4233, %v4206, %v4208
        %v4236 = vsel %vm4233, %v4210, %v4212
        %v4237 = vsel %vm4233, %v4214, %v4216
        %v4238 = vsel %vm4233, %v4218, %v4220
        %v4239 = vsel %vm4233, %v4222, %v4224
        %v4240 = vsel %vm4233, %v4226, %v4228
        %v4241 = vsel %vm4233, %v4230, %v4232
        %v4250 = vlaneseq
        %v4251 = vshrl.u32 %v4250, 7
        %v4252 = vsub.s32 0, %v4251
        %v4253 = vrot.slane %v3547, %v4252
        %v4254 = vlaneseq
        %v4255 = vshrl.u32 %v4254, 7
        %v4256 = vsub.s32 1, %v4255
        %v4257 = vrot.slane %v3547, %v4256
        %v4258 = vlaneseq
        %v4259 = vshrl.u32 %v4258, 7
        %v4260 = vsub.s32 0, %v4259
        %v4261 = vrot.slane %v3561, %v4260
        %v4262 = vlaneseq
        %v4263 = vshrl.u32 %v4262, 7
        %v4264 = vsub.s32 1, %v4263
        %v4265 = vrot.slane %v3561, %v4264
        %v4266 = vlaneseq
        %v4267 = vshrl.u32 %v4266, 7
        %v4268 = vsub.s32 0, %v4267
        %v4269 = vrot.slane %v3569, %v4268
        %v4270 = vlaneseq
        %v4271 = vshrl.u32 %v4270, 7
        %v4272 = vsub.s32 1, %v4271
        %v4273 = vrot.slane %v3569, %v4272
        %v4274 = vlaneseq
        %v4275 = vshrl.u32 %v4274, 7
        %v4276 = vsub.s32 0, %v4275
        %v4277 = vrot.slane %v3571, %v4276
        %v4278 = vlaneseq
        %v4279 = vshrl.u32 %v4278, 7
        %v4280 = vsub.s32 1, %v4279
        %v4281 = vrot.slane %v3571, %v4280
        %v4282 = vlaneseq
        %v4283 = vshrl.u32 %v4282, 7
        %v4284 = vsub.s32 0, %v4283
        %v4285 = vrot.slane %v3554, %v4284
        %v4286 = vlaneseq
        %v4287 = vshrl.u32 %v4286, 7
        %v4288 = vsub.s32 1, %v4287
        %v4289 = vrot.slane %v3554, %v4288
        %v4290 = vlaneseq
        %v4291 = vshrl.u32 %v4290, 7
        %v4292 = vsub.s32 0, %v4291
        %v4293 = vrot.slane %v3568, %v4292
        %v4294 = vlaneseq
        %v4295 = vshrl.u32 %v4294, 7
        %v4296 = vsub.s32 1, %v4295
        %v4297 = vrot.slane %v3568, %v4296
        %v4298 = vlaneseq
        %v4299 = vshrl.u32 %v4298, 7
        %v4300 = vsub.s32 0, %v4299
        %v4301 = vrot.slane %v3570, %v4300
        %v4302 = vlaneseq
        %v4303 = vshrl.u32 %v4302, 7
        %v4304 = vsub.s32 1, %v4303
        %v4305 = vrot.slane %v3570, %v4304
        %v4306 = vlaneseq
        %v4307 = vshrl.u32 %v4306, 7
        %v4308 = vsub.s32 0, %v4307
        %v4309 = vrot.slane %v3572, %v4308
        %v4310 = vlaneseq
        %v4311 = vshrl.u32 %v4310, 7
        %v4312 = vsub.s32 1, %v4311
        %v4313 = vrot.slane %v3572, %v4312
        %4314 = vrot.lane.b32.xlu0 %v4253, 56
        %v4315 = vpop.permute.xlu0 %4314
        %4316 = vrot.lane.b32.xlu0 %v4257, 56
        %v4317 = vpop.permute.xlu0 %4316
        %4318 = vrot.lane.b32.xlu0 %v4261, 56
        %v4319 = vpop.permute.xlu0 %4318
        %4320 = vrot.lane.b32.xlu0 %v4265, 56
        %v4321 = vpop.permute.xlu0 %4320
        %4322 = vrot.lane.b32.xlu0 %v4269, 56
        %v4323 = vpop.permute.xlu0 %4322
        %4324 = vrot.lane.b32.xlu0 %v4273, 56
        %v4325 = vpop.permute.xlu0 %4324
        %4326 = vrot.lane.b32.xlu0 %v4277, 56
        %v4327 = vpop.permute.xlu0 %4326
        %4328 = vrot.lane.b32.xlu0 %v4281, 56
        %v4329 = vpop.permute.xlu0 %4328
        %4330 = vrot.lane.b32.xlu0 %v4285, 56
        %v4331 = vpop.permute.xlu0 %4330
        %4332 = vrot.lane.b32.xlu0 %v4289, 56
        %v4333 = vpop.permute.xlu0 %4332
        %4334 = vrot.lane.b32.xlu0 %v4293, 56
        %v4335 = vpop.permute.xlu0 %4334
        %4336 = vrot.lane.b32.xlu0 %v4297, 56
        %v4337 = vpop.permute.xlu0 %4336
        %4338 = vrot.lane.b32.xlu0 %v4301, 56
        %v4339 = vpop.permute.xlu0 %4338
        %4340 = vrot.lane.b32.xlu0 %v4305, 56
        %v4341 = vpop.permute.xlu0 %4340
        %4342 = vrot.lane.b32.xlu0 %v4309, 56
        %v4343 = vpop.permute.xlu0 %4342
        %4344 = vrot.lane.b32.xlu0 %v4313, 56
        %v4345 = vpop.permute.xlu0 %4344
        %vm4346 = vcmask 457728
        %v4347 = vsel %vm4346, %v4315, %v4317
        %v4348 = vsel %vm4346, %v4319, %v4321
        %v4349 = vsel %vm4346, %v4323, %v4325
        %v4350 = vsel %vm4346, %v4327, %v4329
        %v4351 = vsel %vm4346, %v4331, %v4333
        %v4352 = vsel %vm4346, %v4335, %v4337
        %v4353 = vsel %vm4346, %v4339, %v4341
        %v4354 = vsel %vm4346, %v4343, %v4345
        %v4363 = vsel %vm1408, %v3182, %v3670
        %v4364 = vsel %vm1408, %v3196, %v3671
        %v4365 = vsel %vm1408, %v3204, %v3672
        %v4366 = vsel %vm1408, %v3206, %v3673
        %v4367 = vsel %vm1408, %v3189, %v3674
        %v4368 = vsel %vm1408, %v3203, %v3675
        %v4369 = vsel %vm1408, %v3205, %v3676
        %v4370 = vsel %vm1408, %v3207, %v3677
        %v4371 = vsel %vm1417, %v4363, %v3783
        %v4372 = vsel %vm1417, %v4364, %v3784
        %v4373 = vsel %vm1417, %v4365, %v3785
        %v4374 = vsel %vm1417, %v4366, %v3786
        %v4375 = vsel %vm1417, %v4367, %v3787
        %v4376 = vsel %vm1417, %v4368, %v3788
        %v4377 = vsel %vm1417, %v4369, %v3789
        %v4378 = vsel %vm1417, %v4370, %v3790
        %v4379 = vsel %vm1426, %v4371, %v3896
        %v4380 = vsel %vm1426, %v4372, %v3897
        %v4381 = vsel %vm1426, %v4373, %v3898
        %v4382 = vsel %vm1426, %v4374, %v3899
        %v4383 = vsel %vm1426, %v4375, %v3900
        %v4384 = vsel %vm1426, %v4376, %v3901
        %v4385 = vsel %vm1426, %v4377, %v3902
        %v4386 = vsel %vm1426, %v4378, %v3903
        %v4387 = vsel %vm1435, %v4379, %v4008
        %v4388 = vsel %vm1435, %v4380, %v4009
        %v4389 = vsel %vm1435, %v4381, %v4010
        %v4390 = vsel %vm1435, %v4382, %v4011
        %v4391 = vsel %vm1435, %v4383, %v4012
        %v4392 = vsel %vm1435, %v4384, %v4013
        %v4393 = vsel %vm1435, %v4385, %v4014
        %v4394 = vsel %vm1435, %v4386, %v4015
        %v4395 = vsel %vm1444, %v4387, %v4121
        %v4396 = vsel %vm1444, %v4388, %v4122
        %v4397 = vsel %vm1444, %v4389, %v4123
        %v4398 = vsel %vm1444, %v4390, %v4124
        %v4399 = vsel %vm1444, %v4391, %v4125
        %v4400 = vsel %vm1444, %v4392, %v4126
        %v4401 = vsel %vm1444, %v4393, %v4127
        %v4402 = vsel %vm1444, %v4394, %v4128
        %v4403 = vsel %vm1453, %v4395, %v4234
        %v4404 = vsel %vm1453, %v4396, %v4235
        %v4405 = vsel %vm1453, %v4397, %v4236
        %v4406 = vsel %vm1453, %v4398, %v4237
        %v4407 = vsel %vm1453, %v4399, %v4238
        %v4408 = vsel %vm1453, %v4400, %v4239
        %v4409 = vsel %vm1453, %v4401, %v4240
        %v4410 = vsel %vm1453, %v4402, %v4241
        %v4411 = vsel %vm1462, %v4403, %v4347
        %v4412 = vsel %vm1462, %v4404, %v4348
        %v4413 = vsel %vm1462, %v4405, %v4349
        %v4414 = vsel %vm1462, %v4406, %v4350
        %v4415 = vsel %vm1462, %v4407, %v4351
        %v4416 = vsel %vm1462, %v4408, %v4352
        %v4417 = vsel %vm1462, %v4409, %v4353
        %v4418 = vsel %vm1462, %v4410, %v4354
        %4427 = vrot.lane.b32.xlu0 %v2485, 120
        %v4428 = vpop.permute.xlu0 %4427
        %4429 = vrot.lane.b32.xlu0 %v2486, 120
        %v4430 = vpop.permute.xlu0 %4429
        %4431 = vrot.lane.b32.xlu0 %v2487, 120
        %v4432 = vpop.permute.xlu0 %4431
        %4433 = vrot.lane.b32.xlu0 %v2488, 120
        %v4434 = vpop.permute.xlu0 %4433
        %4435 = vrot.lane.b32.xlu0 %v2489, 120
        %v4436 = vpop.permute.xlu0 %4435
        %4437 = vrot.lane.b32.xlu0 %v2490, 120
        %v4438 = vpop.permute.xlu0 %4437
        %4439 = vrot.lane.b32.xlu0 %v2491, 120
        %v4440 = vpop.permute.xlu0 %4439
        %4441 = vrot.lane.b32.xlu0 %v2492, 120
        %v4442 = vpop.permute.xlu0 %4441
        %4451 = vrot.lane.b32.xlu0 %v2485, 7
        %v4452 = vpop.permute.xlu0 %4451
        %4453 = vrot.lane.b32.xlu0 %v2486, 7
        %v4454 = vpop.permute.xlu0 %4453
        %4455 = vrot.lane.b32.xlu0 %v2487, 7
        %v4456 = vpop.permute.xlu0 %4455
        %4457 = vrot.lane.b32.xlu0 %v2488, 7
        %v4458 = vpop.permute.xlu0 %4457
        %4459 = vrot.lane.b32.xlu0 %v2489, 7
        %v4460 = vpop.permute.xlu0 %4459
        %4461 = vrot.lane.b32.xlu0 %v2490, 7
        %v4462 = vpop.permute.xlu0 %4461
        %4463 = vrot.lane.b32.xlu0 %v2491, 7
        %v4464 = vpop.permute.xlu0 %4463
        %4465 = vrot.lane.b32.xlu0 %v2492, 7
        %v4466 = vpop.permute.xlu0 %4465
        %4475 = vrot.lane.b32.xlu0 %v2485, 22
        %v4476 = vpop.permute.xlu0 %4475
        %4477 = vrot.lane.b32.xlu0 %v2486, 22
        %v4478 = vpop.permute.xlu0 %4477
        %4479 = vrot.lane.b32.xlu0 %v2487, 22
        %v4480 = vpop.permute.xlu0 %4479
        %4481 = vrot.lane.b32.xlu0 %v2488, 22
        %v4482 = vpop.permute.xlu0 %4481
        %4483 = vrot.lane.b32.xlu0 %v2489, 22
        %v4484 = vpop.permute.xlu0 %4483
        %4485 = vrot.lane.b32.xlu0 %v2490, 22
        %v4486 = vpop.permute.xlu0 %4485
        %4487 = vrot.lane.b32.xlu0 %v2491, 22
        %v4488 = vpop.permute.xlu0 %4487
        %4489 = vrot.lane.b32.xlu0 %v2492, 22
        %v4490 = vpop.permute.xlu0 %4489
        %v4499 = vsel %vm1575, %v4428, %v4452
        %v4500 = vsel %vm1575, %v4430, %v4454
        %v4501 = vsel %vm1575, %v4432, %v4456
        %v4502 = vsel %vm1575, %v4434, %v4458
        %v4503 = vsel %vm1575, %v4436, %v4460
        %v4504 = vsel %vm1575, %v4438, %v4462
        %v4505 = vsel %vm1575, %v4440, %v4464
        %v4506 = vsel %vm1575, %v4442, %v4466
        %v4507 = vsel %vm1584, %v4499, %v4476
        %v4508 = vsel %vm1584, %v4500, %v4478
        %v4509 = vsel %vm1584, %v4501, %v4480
        %v4510 = vsel %vm1584, %v4502, %v4482
        %v4511 = vsel %vm1584, %v4503, %v4484
        %v4512 = vsel %vm1584, %v4504, %v4486
        %v4513 = vsel %vm1584, %v4505, %v4488
        %v4514 = vsel %vm1584, %v4506, %v4490
        %4523 = vrot.lane.b32.xlu0 %v4507, 127
        %v4524 = vpop.permute.xlu0 %4523
        %4525 = vrot.lane.b32.xlu0 %v4508, 127
        %v4526 = vpop.permute.xlu0 %4525
        %4527 = vrot.lane.b32.xlu0 %v4509, 127
        %v4528 = vpop.permute.xlu0 %4527
        %4529 = vrot.lane.b32.xlu0 %v4510, 127
        %v4530 = vpop.permute.xlu0 %4529
        %4531 = vrot.lane.b32.xlu0 %v4511, 127
        %v4532 = vpop.permute.xlu0 %4531
        %4533 = vrot.lane.b32.xlu0 %v4512, 127
        %v4534 = vpop.permute.xlu0 %4533
        %4535 = vrot.lane.b32.xlu0 %v4513, 127
        %v4536 = vpop.permute.xlu0 %4535
        %4537 = vrot.lane.b32.xlu0 %v4514, 127
        %v4538 = vpop.permute.xlu0 %4537
        %4547 = vrot.lane.b32.xlu0 %v4507, 126
        %v4548 = vpop.permute.xlu0 %4547
        %4549 = vrot.lane.b32.xlu0 %v4508, 126
        %v4550 = vpop.permute.xlu0 %4549
        %4551 = vrot.lane.b32.xlu0 %v4509, 126
        %v4552 = vpop.permute.xlu0 %4551
        %4553 = vrot.lane.b32.xlu0 %v4510, 126
        %v4554 = vpop.permute.xlu0 %4553
        %4555 = vrot.lane.b32.xlu0 %v4511, 126
        %v4556 = vpop.permute.xlu0 %4555
        %4557 = vrot.lane.b32.xlu0 %v4512, 126
        %v4558 = vpop.permute.xlu0 %4557
        %4559 = vrot.lane.b32.xlu0 %v4513, 126
        %v4560 = vpop.permute.xlu0 %4559
        %4561 = vrot.lane.b32.xlu0 %v4514, 126
        %v4562 = vpop.permute.xlu0 %4561
        %4571 = vrot.lane.b32.xlu0 %v4507, 125
        %v4572 = vpop.permute.xlu0 %4571
        %4573 = vrot.lane.b32.xlu0 %v4508, 125
        %v4574 = vpop.permute.xlu0 %4573
        %4575 = vrot.lane.b32.xlu0 %v4509, 125
        %v4576 = vpop.permute.xlu0 %4575
        %4577 = vrot.lane.b32.xlu0 %v4510, 125
        %v4578 = vpop.permute.xlu0 %4577
        %4579 = vrot.lane.b32.xlu0 %v4511, 125
        %v4580 = vpop.permute.xlu0 %4579
        %4581 = vrot.lane.b32.xlu0 %v4512, 125
        %v4582 = vpop.permute.xlu0 %4581
        %4583 = vrot.lane.b32.xlu0 %v4513, 125
        %v4584 = vpop.permute.xlu0 %4583
        %4585 = vrot.lane.b32.xlu0 %v4514, 125
        %v4586 = vpop.permute.xlu0 %4585
        %4595 = vrot.lane.b32.xlu0 %v4507, 124
        %v4596 = vpop.permute.xlu0 %4595
        %4597 = vrot.lane.b32.xlu0 %v4508, 124
        %v4598 = vpop.permute.xlu0 %4597
        %4599 = vrot.lane.b32.xlu0 %v4509, 124
        %v4600 = vpop.permute.xlu0 %4599
        %4601 = vrot.lane.b32.xlu0 %v4510, 124
        %v4602 = vpop.permute.xlu0 %4601
        %4603 = vrot.lane.b32.xlu0 %v4511, 124
        %v4604 = vpop.permute.xlu0 %4603
        %4605 = vrot.lane.b32.xlu0 %v4512, 124
        %v4606 = vpop.permute.xlu0 %4605
        %4607 = vrot.lane.b32.xlu0 %v4513, 124
        %v4608 = vpop.permute.xlu0 %4607
        %4609 = vrot.lane.b32.xlu0 %v4514, 124
        %v4610 = vpop.permute.xlu0 %4609
        %4619 = vrot.lane.b32.xlu0 %v4507, 123
        %v4620 = vpop.permute.xlu0 %4619
        %4621 = vrot.lane.b32.xlu0 %v4508, 123
        %v4622 = vpop.permute.xlu0 %4621
        %4623 = vrot.lane.b32.xlu0 %v4509, 123
        %v4624 = vpop.permute.xlu0 %4623
        %4625 = vrot.lane.b32.xlu0 %v4510, 123
        %v4626 = vpop.permute.xlu0 %4625
        %4627 = vrot.lane.b32.xlu0 %v4511, 123
        %v4628 = vpop.permute.xlu0 %4627
        %4629 = vrot.lane.b32.xlu0 %v4512, 123
        %v4630 = vpop.permute.xlu0 %4629
        %4631 = vrot.lane.b32.xlu0 %v4513, 123
        %v4632 = vpop.permute.xlu0 %4631
        %4633 = vrot.lane.b32.xlu0 %v4514, 123
        %v4634 = vpop.permute.xlu0 %4633
        %4643 = vrot.lane.b32.xlu0 %v4507, 122
        %v4644 = vpop.permute.xlu0 %4643
        %4645 = vrot.lane.b32.xlu0 %v4508, 122
        %v4646 = vpop.permute.xlu0 %4645
        %4647 = vrot.lane.b32.xlu0 %v4509, 122
        %v4648 = vpop.permute.xlu0 %4647
        %4649 = vrot.lane.b32.xlu0 %v4510, 122
        %v4650 = vpop.permute.xlu0 %4649
        %4651 = vrot.lane.b32.xlu0 %v4511, 122
        %v4652 = vpop.permute.xlu0 %4651
        %4653 = vrot.lane.b32.xlu0 %v4512, 122
        %v4654 = vpop.permute.xlu0 %4653
        %4655 = vrot.lane.b32.xlu0 %v4513, 122
        %v4656 = vpop.permute.xlu0 %4655
        %4657 = vrot.lane.b32.xlu0 %v4514, 122
        %v4658 = vpop.permute.xlu0 %4657
        %4667 = vrot.lane.b32.xlu0 %v4507, 121
        %v4668 = vpop.permute.xlu0 %4667
        %4669 = vrot.lane.b32.xlu0 %v4508, 121
        %v4670 = vpop.permute.xlu0 %4669
        %4671 = vrot.lane.b32.xlu0 %v4509, 121
        %v4672 = vpop.permute.xlu0 %4671
        %4673 = vrot.lane.b32.xlu0 %v4510, 121
        %v4674 = vpop.permute.xlu0 %4673
        %4675 = vrot.lane.b32.xlu0 %v4511, 121
        %v4676 = vpop.permute.xlu0 %4675
        %4677 = vrot.lane.b32.xlu0 %v4512, 121
        %v4678 = vpop.permute.xlu0 %4677
        %4679 = vrot.lane.b32.xlu0 %v4513, 121
        %v4680 = vpop.permute.xlu0 %4679
        %4681 = vrot.lane.b32.xlu0 %v4514, 121
        %v4682 = vpop.permute.xlu0 %4681
        %4691 = vrot.lane.b32.xlu0 %v4507, 120
        %v4692 = vpop.permute.xlu0 %4691
        %4693 = vrot.lane.b32.xlu0 %v4508, 120
        %v4694 = vpop.permute.xlu0 %4693
        %4695 = vrot.lane.b32.xlu0 %v4509, 120
        %v4696 = vpop.permute.xlu0 %4695
        %4697 = vrot.lane.b32.xlu0 %v4510, 120
        %v4698 = vpop.permute.xlu0 %4697
        %4699 = vrot.lane.b32.xlu0 %v4511, 120
        %v4700 = vpop.permute.xlu0 %4699
        %4701 = vrot.lane.b32.xlu0 %v4512, 120
        %v4702 = vpop.permute.xlu0 %4701
        %4703 = vrot.lane.b32.xlu0 %v4513, 120
        %v4704 = vpop.permute.xlu0 %4703
        %4705 = vrot.lane.b32.xlu0 %v4514, 120
        %v4706 = vpop.permute.xlu0 %4705
        %4715 = vrot.lane.b32.xlu0 %v4507, 119
        %v4716 = vpop.permute.xlu0 %4715
        %4717 = vrot.lane.b32.xlu0 %v4508, 119
        %v4718 = vpop.permute.xlu0 %4717
        %4719 = vrot.lane.b32.xlu0 %v4509, 119
        %v4720 = vpop.permute.xlu0 %4719
        %4721 = vrot.lane.b32.xlu0 %v4510, 119
        %v4722 = vpop.permute.xlu0 %4721
        %4723 = vrot.lane.b32.xlu0 %v4511, 119
        %v4724 = vpop.permute.xlu0 %4723
        %4725 = vrot.lane.b32.xlu0 %v4512, 119
        %v4726 = vpop.permute.xlu0 %4725
        %4727 = vrot.lane.b32.xlu0 %v4513, 119
        %v4728 = vpop.permute.xlu0 %4727
        %4729 = vrot.lane.b32.xlu0 %v4514, 119
        %v4730 = vpop.permute.xlu0 %4729
        %4739 = vrot.lane.b32.xlu0 %v4507, 118
        %v4740 = vpop.permute.xlu0 %4739
        %4741 = vrot.lane.b32.xlu0 %v4508, 118
        %v4742 = vpop.permute.xlu0 %4741
        %4743 = vrot.lane.b32.xlu0 %v4509, 118
        %v4744 = vpop.permute.xlu0 %4743
        %4745 = vrot.lane.b32.xlu0 %v4510, 118
        %v4746 = vpop.permute.xlu0 %4745
        %4747 = vrot.lane.b32.xlu0 %v4511, 118
        %v4748 = vpop.permute.xlu0 %4747
        %4749 = vrot.lane.b32.xlu0 %v4512, 118
        %v4750 = vpop.permute.xlu0 %4749
        %4751 = vrot.lane.b32.xlu0 %v4513, 118
        %v4752 = vpop.permute.xlu0 %4751
        %4753 = vrot.lane.b32.xlu0 %v4514, 118
        %v4754 = vpop.permute.xlu0 %4753
        %4763 = vrot.lane.b32.xlu0 %v4507, 117
        %v4764 = vpop.permute.xlu0 %4763
        %4765 = vrot.lane.b32.xlu0 %v4508, 117
        %v4766 = vpop.permute.xlu0 %4765
        %4767 = vrot.lane.b32.xlu0 %v4509, 117
        %v4768 = vpop.permute.xlu0 %4767
        %4769 = vrot.lane.b32.xlu0 %v4510, 117
        %v4770 = vpop.permute.xlu0 %4769
        %4771 = vrot.lane.b32.xlu0 %v4511, 117
        %v4772 = vpop.permute.xlu0 %4771
        %4773 = vrot.lane.b32.xlu0 %v4512, 117
        %v4774 = vpop.permute.xlu0 %4773
        %4775 = vrot.lane.b32.xlu0 %v4513, 117
        %v4776 = vpop.permute.xlu0 %4775
        %4777 = vrot.lane.b32.xlu0 %v4514, 117
        %v4778 = vpop.permute.xlu0 %4777
        %4787 = vrot.lane.b32.xlu0 %v4507, 116
        %v4788 = vpop.permute.xlu0 %4787
        %4789 = vrot.lane.b32.xlu0 %v4508, 116
        %v4790 = vpop.permute.xlu0 %4789
        %4791 = vrot.lane.b32.xlu0 %v4509, 116
        %v4792 = vpop.permute.xlu0 %4791
        %4793 = vrot.lane.b32.xlu0 %v4510, 116
        %v4794 = vpop.permute.xlu0 %4793
        %4795 = vrot.lane.b32.xlu0 %v4511, 116
        %v4796 = vpop.permute.xlu0 %4795
        %4797 = vrot.lane.b32.xlu0 %v4512, 116
        %v4798 = vpop.permute.xlu0 %4797
        %4799 = vrot.lane.b32.xlu0 %v4513, 116
        %v4800 = vpop.permute.xlu0 %4799
        %4801 = vrot.lane.b32.xlu0 %v4514, 116
        %v4802 = vpop.permute.xlu0 %4801
        %4811 = vrot.lane.b32.xlu0 %v4507, 115
        %v4812 = vpop.permute.xlu0 %4811
        %4813 = vrot.lane.b32.xlu0 %v4508, 115
        %v4814 = vpop.permute.xlu0 %4813
        %4815 = vrot.lane.b32.xlu0 %v4509, 115
        %v4816 = vpop.permute.xlu0 %4815
        %4817 = vrot.lane.b32.xlu0 %v4510, 115
        %v4818 = vpop.permute.xlu0 %4817
        %4819 = vrot.lane.b32.xlu0 %v4511, 115
        %v4820 = vpop.permute.xlu0 %4819
        %4821 = vrot.lane.b32.xlu0 %v4512, 115
        %v4822 = vpop.permute.xlu0 %4821
        %4823 = vrot.lane.b32.xlu0 %v4513, 115
        %v4824 = vpop.permute.xlu0 %4823
        %4825 = vrot.lane.b32.xlu0 %v4514, 115
        %v4826 = vpop.permute.xlu0 %4825
        %4835 = vrot.lane.b32.xlu0 %v4507, 114
        %v4836 = vpop.permute.xlu0 %4835
        %4837 = vrot.lane.b32.xlu0 %v4508, 114
        %v4838 = vpop.permute.xlu0 %4837
        %4839 = vrot.lane.b32.xlu0 %v4509, 114
        %v4840 = vpop.permute.xlu0 %4839
        %4841 = vrot.lane.b32.xlu0 %v4510, 114
        %v4842 = vpop.permute.xlu0 %4841
        %4843 = vrot.lane.b32.xlu0 %v4511, 114
        %v4844 = vpop.permute.xlu0 %4843
        %4845 = vrot.lane.b32.xlu0 %v4512, 114
        %v4846 = vpop.permute.xlu0 %4845
        %4847 = vrot.lane.b32.xlu0 %v4513, 114
        %v4848 = vpop.permute.xlu0 %4847
        %4849 = vrot.lane.b32.xlu0 %v4514, 114
        %v4850 = vpop.permute.xlu0 %4849
        %v4859 = vpack.c.bf16 %v4411, %v4411
        %v4860 = vpack.c.bf16 %v4412, %v4412
        %v4861 = vpack.c.bf16 %v4413, %v4413
        %v4862 = vpack.c.bf16 %v4414, %v4414
        %v4863 = vpack.c.bf16 %v4415, %v4415
        %v4864 = vpack.c.bf16 %v4416, %v4416
        %v4865 = vpack.c.bf16 %v4417, %v4417
        %v4866 = vpack.c.bf16 %v4418, %v4418
        %v4867 = vpack.c.bf16 %v4524, %v4507
        %v4868 = vpack.c.bf16 %v4572, %v4548
        %v4869 = vpack.c.bf16 %v4620, %v4596
        %v4870 = vpack.c.bf16 %v4668, %v4644
        %v4871 = vpack.c.bf16 %v4716, %v4692
        %v4872 = vpack.c.bf16 %v4764, %v4740
        %v4873 = vpack.c.bf16 %v4812, %v4788
        %v4874 = vpack.c.bf16 %v4836, %v4836
        %v4875 = vpack.c.bf16 %v4526, %v4508
        %v4876 = vpack.c.bf16 %v4574, %v4550
        %v4877 = vpack.c.bf16 %v4622, %v4598
        %v4878 = vpack.c.bf16 %v4670, %v4646
        %v4879 = vpack.c.bf16 %v4718, %v4694
        %v4880 = vpack.c.bf16 %v4766, %v4742
        %v4881 = vpack.c.bf16 %v4814, %v4790
        %v4882 = vpack.c.bf16 %v4838, %v4838
        %v4883 = vpack.c.bf16 %v4528, %v4509
        %v4884 = vpack.c.bf16 %v4576, %v4552
        %v4885 = vpack.c.bf16 %v4624, %v4600
        %v4886 = vpack.c.bf16 %v4672, %v4648
        %v4887 = vpack.c.bf16 %v4720, %v4696
        %v4888 = vpack.c.bf16 %v4768, %v4744
        %v4889 = vpack.c.bf16 %v4816, %v4792
        %v4890 = vpack.c.bf16 %v4840, %v4840
        %v4891 = vpack.c.bf16 %v4530, %v4510
        %v4892 = vpack.c.bf16 %v4578, %v4554
        %v4893 = vpack.c.bf16 %v4626, %v4602
        %v4894 = vpack.c.bf16 %v4674, %v4650
        %v4895 = vpack.c.bf16 %v4722, %v4698
        %v4896 = vpack.c.bf16 %v4770, %v4746
        %v4897 = vpack.c.bf16 %v4818, %v4794
        %v4898 = vpack.c.bf16 %v4842, %v4842
        %v4899 = vpack.c.bf16 %v4532, %v4511
        %v4900 = vpack.c.bf16 %v4580, %v4556
        %v4901 = vpack.c.bf16 %v4628, %v4604
        %v4902 = vpack.c.bf16 %v4676, %v4652
        %v4903 = vpack.c.bf16 %v4724, %v4700
        %v4904 = vpack.c.bf16 %v4772, %v4748
        %v4905 = vpack.c.bf16 %v4820, %v4796
        %v4906 = vpack.c.bf16 %v4844, %v4844
        %v4907 = vpack.c.bf16 %v4534, %v4512
        %v4908 = vpack.c.bf16 %v4582, %v4558
        %v4909 = vpack.c.bf16 %v4630, %v4606
        %v4910 = vpack.c.bf16 %v4678, %v4654
        %v4911 = vpack.c.bf16 %v4726, %v4702
        %v4912 = vpack.c.bf16 %v4774, %v4750
        %v4913 = vpack.c.bf16 %v4822, %v4798
        %v4914 = vpack.c.bf16 %v4846, %v4846
        %v4915 = vpack.c.bf16 %v4536, %v4513
        %v4916 = vpack.c.bf16 %v4584, %v4560
        %v4917 = vpack.c.bf16 %v4632, %v4608
        %v4918 = vpack.c.bf16 %v4680, %v4656
        %v4919 = vpack.c.bf16 %v4728, %v4704
        %v4920 = vpack.c.bf16 %v4776, %v4752
        %v4921 = vpack.c.bf16 %v4824, %v4800
        %v4922 = vpack.c.bf16 %v4848, %v4848
        %v4923 = vpack.c.bf16 %v4538, %v4514
        %v4924 = vpack.c.bf16 %v4586, %v4562
        %v4925 = vpack.c.bf16 %v4634, %v4610
        %v4926 = vpack.c.bf16 %v4682, %v4658
        %v4927 = vpack.c.bf16 %v4730, %v4706
        %v4928 = vpack.c.bf16 %v4778, %v4754
        %v4929 = vpack.c.bf16 %v4826, %v4802
        %v4930 = vpack.c.bf16 %v4850, %v4850
        %v4932 = vsel %vm1082, %v4859, 0
        %v4935 = vsel %vm1435, %v4874, 0
        %4937 = vmatprep.subr.bf16.mxu0 0
        %4938 = vmatpush1.bf16.msra.mxu0 %v4867
        %4939 = vmatprep.subr.bf16.mxu0 0
        %4940 = vmatpush1.bf16.msra.mxu0 %v4868
        %4941 = vmatprep.subr.bf16.mxu0 0
        %4942 = vmatpush1.bf16.msra.mxu0 %v4869
        %4943 = vmatprep.subr.bf16.mxu0 0
        %4944 = vmatpush1.bf16.msra.mxu0 %v4870
        %4945 = vmatprep.subr.bf16.mxu0 0
        %4946 = vmatpush1.bf16.msra.mxu0 %v4871
        %4947 = vmatprep.subr.bf16.mxu0 0
        %4948 = vmatpush1.bf16.msra.mxu0 %v4872
        %4949 = vmatprep.subr.bf16.mxu0 0
        %4950 = vmatpush1.bf16.msra.mxu0 %v4873
        %4951 = vmatprep.subr.bf16.mxu0 0
        %4952 = vmatpush1.bf16.msra.mxu0 %v4935
        %4953 = vmatprep.subr.bf16.mxu0 0
        %4954 = vmatpush1.bf16.msra.mxu0 0
        %4955 = vmatprep.subr.bf16.mxu0 0
        %4956 = vmatpush1.bf16.msra.mxu0 0
        %4957 = vmatprep.subr.bf16.mxu0 0
        %4958 = vmatpush1.bf16.msra.mxu0 0
        %4959 = vmatprep.subr.bf16.mxu0 0
        %4960 = vmatpush1.bf16.msra.mxu0 0
        %4961 = vmatprep.subr.bf16.mxu0 0
        %4962 = vmatpush1.bf16.msra.mxu0 0
        %4963 = vmatprep.subr.bf16.mxu0 0
        %4964 = vmatpush1.bf16.msra.mxu0 0
        %4965 = vmatprep.subr.bf16.mxu0 0
        %4966 = vmatpush1.bf16.msra.mxu0 0
        %4967 = vmatprep.subr.bf16.mxu0 0
        %4968 = vmatpush1.bf16.msra.mxu0 0
        %4969 = vmatprep.mubr.bf16.mxu0 0
        %4970 = vmatmul.mubr.bf16.gmra.mrb[0].mxu0 %v4932
        %v4971 = vpop.f32.mrb[0].mxu0
        %v4972 = vadd.f32 0.0, %v4971
        %v4973 = vpop.f32.mrb[0].mxu0
        %v4974 = vpop.f32.mrb[0].mxu0
        %v4975 = vpop.f32.mrb[0].mxu0
        %4976 = vdwg.mxu0
        %v4978 = vsel %vm1082, %v4860, 0
        %v4981 = vsel %vm1435, %v4882, 0
        %4983 = vmatprep.subr.bf16.mxu0 0
        %4984 = vmatpush1.bf16.msra.mxu0 %v4875
        %4985 = vmatprep.subr.bf16.mxu0 0
        %4986 = vmatpush1.bf16.msra.mxu0 %v4876
        %4987 = vmatprep.subr.bf16.mxu0 0
        %4988 = vmatpush1.bf16.msra.mxu0 %v4877
        %4989 = vmatprep.subr.bf16.mxu0 0
        %4990 = vmatpush1.bf16.msra.mxu0 %v4878
        %4991 = vmatprep.subr.bf16.mxu0 0
        %4992 = vmatpush1.bf16.msra.mxu0 %v4879
        %4993 = vmatprep.subr.bf16.mxu0 0
        %4994 = vmatpush1.bf16.msra.mxu0 %v4880
        %4995 = vmatprep.subr.bf16.mxu0 0
        %4996 = vmatpush1.bf16.msra.mxu0 %v4881
        %4997 = vmatprep.subr.bf16.mxu0 0
        %4998 = vmatpush1.bf16.msra.mxu0 %v4981
        %4999 = vmatprep.subr.bf16.mxu0 0
        %5000 = vmatpush1.bf16.msra.mxu0 0
        %5001 = vmatprep.subr.bf16.mxu0 0
        %5002 = vmatpush1.bf16.msra.mxu0 0
        %5003 = vmatprep.subr.bf16.mxu0 0
        %5004 = vmatpush1.bf16.msra.mxu0 0
        %5005 = vmatprep.subr.bf16.mxu0 0
        %5006 = vmatpush1.bf16.msra.mxu0 0
        %5007 = vmatprep.subr.bf16.mxu0 0
        %5008 = vmatpush1.bf16.msra.mxu0 0
        %5009 = vmatprep.subr.bf16.mxu0 0
        %5010 = vmatpush1.bf16.msra.mxu0 0
        %5011 = vmatprep.subr.bf16.mxu0 0
        %5012 = vmatpush1.bf16.msra.mxu0 0
        %5013 = vmatprep.subr.bf16.mxu0 0
        %5014 = vmatpush1.bf16.msra.mxu0 0
        %5015 = vmatprep.mubr.bf16.mxu0 0
        %5016 = vmatmul.mubr.bf16.gmra.mrb[0].mxu0 %v4978
        %v5017 = vpop.f32.mrb[0].mxu0
        %v5018 = vadd.f32 0.0, %v5017
        %v5019 = vpop.f32.mrb[0].mxu0
        %v5020 = vpop.f32.mrb[0].mxu0
        %v5021 = vpop.f32.mrb[0].mxu0
        %5022 = vdwg.mxu0
        %v5024 = vsel %vm1082, %v4861, 0
        %v5027 = vsel %vm1435, %v4890, 0
        %5029 = vmatprep.subr.bf16.mxu0 0
        %5030 = vmatpush1.bf16.msra.mxu0 %v4883
        %5031 = vmatprep.subr.bf16.mxu0 0
        %5032 = vmatpush1.bf16.msra.mxu0 %v4884
        %5033 = vmatprep.subr.bf16.mxu0 0
        %5034 = vmatpush1.bf16.msra.mxu0 %v4885
        %5035 = vmatprep.subr.bf16.mxu0 0
        %5036 = vmatpush1.bf16.msra.mxu0 %v4886
        %5037 = vmatprep.subr.bf16.mxu0 0
        %5038 = vmatpush1.bf16.msra.mxu0 %v4887
        %5039 = vmatprep.subr.bf16.mxu0 0
        %5040 = vmatpush1.bf16.msra.mxu0 %v4888
        %5041 = vmatprep.subr.bf16.mxu0 0
        %5042 = vmatpush1.bf16.msra.mxu0 %v4889
        %5043 = vmatprep.subr.bf16.mxu0 0
        %5044 = vmatpush1.bf16.msra.mxu0 %v5027
        %5045 = vmatprep.subr.bf16.mxu0 0
        %5046 = vmatpush1.bf16.msra.mxu0 0
        %5047 = vmatprep.subr.bf16.mxu0 0
        %5048 = vmatpush1.bf16.msra.mxu0 0
        %5049 = vmatprep.subr.bf16.mxu0 0
        %5050 = vmatpush1.bf16.msra.mxu0 0
        %5051 = vmatprep.subr.bf16.mxu0 0
        %5052 = vmatpush1.bf16.msra.mxu0 0
        %5053 = vmatprep.subr.bf16.mxu0 0
        %5054 = vmatpush1.bf16.msra.mxu0 0
        %5055 = vmatprep.subr.bf16.mxu0 0
        %5056 = vmatpush1.bf16.msra.mxu0 0
        %5057 = vmatprep.subr.bf16.mxu0 0
        %5058 = vmatpush1.bf16.msra.mxu0 0
        %5059 = vmatprep.subr.bf16.mxu0 0
        %5060 = vmatpush1.bf16.msra.mxu0 0
        %5061 = vmatprep.mubr.bf16.mxu0 0
        %5062 = vmatmul.mubr.bf16.gmra.mrb[0].mxu0 %v5024
        %v5063 = vpop.f32.mrb[0].mxu0
        %v5064 = vadd.f32 0.0, %v5063
        %v5065 = vpop.f32.mrb[0].mxu0
        %v5066 = vpop.f32.mrb[0].mxu0
        %v5067 = vpop.f32.mrb[0].mxu0
        %5068 = vdwg.mxu0
        %v5070 = vsel %vm1082, %v4862, 0
        %v5073 = vsel %vm1435, %v4898, 0
        %5075 = vmatprep.subr.bf16.mxu0 0
        %5076 = vmatpush1.bf16.msra.mxu0 %v4891
        %5077 = vmatprep.subr.bf16.mxu0 0
        %5078 = vmatpush1.bf16.msra.mxu0 %v4892
        %5079 = vmatprep.subr.bf16.mxu0 0
        %5080 = vmatpush1.bf16.msra.mxu0 %v4893
        %5081 = vmatprep.subr.bf16.mxu0 0
        %5082 = vmatpush1.bf16.msra.mxu0 %v4894
        %5083 = vmatprep.subr.bf16.mxu0 0
        %5084 = vmatpush1.bf16.msra.mxu0 %v4895
        %5085 = vmatprep.subr.bf16.mxu0 0
        %5086 = vmatpush1.bf16.msra.mxu0 %v4896
        %5087 = vmatprep.subr.bf16.mxu0 0
        %5088 = vmatpush1.bf16.msra.mxu0 %v4897
        %5089 = vmatprep.subr.bf16.mxu0 0
        %5090 = vmatpush1.bf16.msra.mxu0 %v5073
        %5091 = vmatprep.subr.bf16.mxu0 0
        %5092 = vmatpush1.bf16.msra.mxu0 0
        %5093 = vmatprep.subr.bf16.mxu0 0
        %5094 = vmatpush1.bf16.msra.mxu0 0
        %5095 = vmatprep.subr.bf16.mxu0 0
        %5096 = vmatpush1.bf16.msra.mxu0 0
        %5097 = vmatprep.subr.bf16.mxu0 0
        %5098 = vmatpush1.bf16.msra.mxu0 0
        %5099 = vmatprep.subr.bf16.mxu0 0
        %5100 = vmatpush1.bf16.msra.mxu0 0
        %5101 = vmatprep.subr.bf16.mxu0 0
        %5102 = vmatpush1.bf16.msra.mxu0 0
        %5103 = vmatprep.subr.bf16.mxu0 0
        %5104 = vmatpush1.bf16.msra.mxu0 0
        %5105 = vmatprep.subr.bf16.mxu0 0
        %5106 = vmatpush1.bf16.msra.mxu0 0
        %5107 = vmatprep.mubr.bf16.mxu0 0
        %5108 = vmatmul.mubr.bf16.gmra.mrb[0].mxu0 %v5070
        %v5109 = vpop.f32.mrb[0].mxu0
        %v5110 = vadd.f32 0.0, %v5109
        %v5111 = vpop.f32.mrb[0].mxu0
        %v5112 = vpop.f32.mrb[0].mxu0
        %v5113 = vpop.f32.mrb[0].mxu0
        %5114 = vdwg.mxu0
        %v5116 = vsel %vm1082, %v4863, 0
        %v5119 = vsel %vm1435, %v4906, 0
        %5121 = vmatprep.subr.bf16.mxu0 0
        %5122 = vmatpush1.bf16.msra.mxu0 %v4899
        %5123 = vmatprep.subr.bf16.mxu0 0
        %5124 = vmatpush1.bf16.msra.mxu0 %v4900
        %5125 = vmatprep.subr.bf16.mxu0 0
        %5126 = vmatpush1.bf16.msra.mxu0 %v4901
        %5127 = vmatprep.subr.bf16.mxu0 0
        %5128 = vmatpush1.bf16.msra.mxu0 %v4902
        %5129 = vmatprep.subr.bf16.mxu0 0
        %5130 = vmatpush1.bf16.msra.mxu0 %v4903
        %5131 = vmatprep.subr.bf16.mxu0 0
        %5132 = vmatpush1.bf16.msra.mxu0 %v4904
        %5133 = vmatprep.subr.bf16.mxu0 0
        %5134 = vmatpush1.bf16.msra.mxu0 %v4905
        %5135 = vmatprep.subr.bf16.mxu0 0
        %5136 = vmatpush1.bf16.msra.mxu0 %v5119
        %5137 = vmatprep.subr.bf16.mxu0 0
        %5138 = vmatpush1.bf16.msra.mxu0 0
        %5139 = vmatprep.subr.bf16.mxu0 0
        %5140 = vmatpush1.bf16.msra.mxu0 0
        %5141 = vmatprep.subr.bf16.mxu0 0
        %5142 = vmatpush1.bf16.msra.mxu0 0
        %5143 = vmatprep.subr.bf16.mxu0 0
        %5144 = vmatpush1.bf16.msra.mxu0 0
        %5145 = vmatprep.subr.bf16.mxu0 0
        %5146 = vmatpush1.bf16.msra.mxu0 0
        %5147 = vmatprep.subr.bf16.mxu0 0
        %5148 = vmatpush1.bf16.msra.mxu0 0
        %5149 = vmatprep.subr.bf16.mxu0 0
        %5150 = vmatpush1.bf16.msra.mxu0 0
        %5151 = vmatprep.subr.bf16.mxu0 0
        %5152 = vmatpush1.bf16.msra.mxu0 0
        %5153 = vmatprep.mubr.bf16.mxu0 0
        %5154 = vmatmul.mubr.bf16.gmra.mrb[0].mxu0 %v5116
        %v5155 = vpop.f32.mrb[0].mxu0
        %v5156 = vadd.f32 0.0, %v5155
        %v5157 = vpop.f32.mrb[0].mxu0
        %v5158 = vpop.f32.mrb[0].mxu0
        %v5159 = vpop.f32.mrb[0].mxu0
        %5160 = vdwg.mxu0
        %v5162 = vsel %vm1082, %v4864, 0
        %v5165 = vsel %vm1435, %v4914, 0
        %5167 = vmatprep.subr.bf16.mxu0 0
        %5168 = vmatpush1.bf16.msra.mxu0 %v4907
        %5169 = vmatprep.subr.bf16.mxu0 0
        %5170 = vmatpush1.bf16.msra.mxu0 %v4908
        %5171 = vmatprep.subr.bf16.mxu0 0
        %5172 = vmatpush1.bf16.msra.mxu0 %v4909
        %5173 = vmatprep.subr.bf16.mxu0 0
        %5174 = vmatpush1.bf16.msra.mxu0 %v4910
        %5175 = vmatprep.subr.bf16.mxu0 0
        %5176 = vmatpush1.bf16.msra.mxu0 %v4911
        %5177 = vmatprep.subr.bf16.mxu0 0
        %5178 = vmatpush1.bf16.msra.mxu0 %v4912
        %5179 = vmatprep.subr.bf16.mxu0 0
        %5180 = vmatpush1.bf16.msra.mxu0 %v4913
        %5181 = vmatprep.subr.bf16.mxu0 0
        %5182 = vmatpush1.bf16.msra.mxu0 %v5165
        %5183 = vmatprep.subr.bf16.mxu0 0
        %5184 = vmatpush1.bf16.msra.mxu0 0
        %5185 = vmatprep.subr.bf16.mxu0 0
        %5186 = vmatpush1.bf16.msra.mxu0 0
        %5187 = vmatprep.subr.bf16.mxu0 0
        %5188 = vmatpush1.bf16.msra.mxu0 0
        %5189 = vmatprep.subr.bf16.mxu0 0
        %5190 = vmatpush1.bf16.msra.mxu0 0
        %5191 = vmatprep.subr.bf16.mxu0 0
        %5192 = vmatpush1.bf16.msra.mxu0 0
        %5193 = vmatprep.subr.bf16.mxu0 0
        %5194 = vmatpush1.bf16.msra.mxu0 0
        %5195 = vmatprep.subr.bf16.mxu0 0
        %5196 = vmatpush1.bf16.msra.mxu0 0
        %5197 = vmatprep.subr.bf16.mxu0 0
        %5198 = vmatpush1.bf16.msra.mxu0 0
        %5199 = vmatprep.mubr.bf16.mxu0 0
        %5200 = vmatmul.mubr.bf16.gmra.mrb[0].mxu0 %v5162
        %v5201 = vpop.f32.mrb[0].mxu0
        %v5202 = vadd.f32 0.0, %v5201
        %v5203 = vpop.f32.mrb[0].mxu0
        %v5204 = vpop.f32.mrb[0].mxu0
        %v5205 = vpop.f32.mrb[0].mxu0
        %5206 = vdwg.mxu0
        %v5208 = vsel %vm1082, %v4865, 0
        %v5211 = vsel %vm1435, %v4922, 0
        %5213 = vmatprep.subr.bf16.mxu0 0
        %5214 = vmatpush1.bf16.msra.mxu0 %v4915
        %5215 = vmatprep.subr.bf16.mxu0 0
        %5216 = vmatpush1.bf16.msra.mxu0 %v4916
        %5217 = vmatprep.subr.bf16.mxu0 0
        %5218 = vmatpush1.bf16.msra.mxu0 %v4917
        %5219 = vmatprep.subr.bf16.mxu0 0
        %5220 = vmatpush1.bf16.msra.mxu0 %v4918
        %5221 = vmatprep.subr.bf16.mxu0 0
        %5222 = vmatpush1.bf16.msra.mxu0 %v4919
        %5223 = vmatprep.subr.bf16.mxu0 0
        %5224 = vmatpush1.bf16.msra.mxu0 %v4920
        %5225 = vmatprep.subr.bf16.mxu0 0
        %5226 = vmatpush1.bf16.msra.mxu0 %v4921
        %5227 = vmatprep.subr.bf16.mxu0 0
        %5228 = vmatpush1.bf16.msra.mxu0 %v5211
        %5229 = vmatprep.subr.bf16.mxu0 0
        %5230 = vmatpush1.bf16.msra.mxu0 0
        %5231 = vmatprep.subr.bf16.mxu0 0
        %5232 = vmatpush1.bf16.msra.mxu0 0
        %5233 = vmatprep.subr.bf16.mxu0 0
        %5234 = vmatpush1.bf16.msra.mxu0 0
        %5235 = vmatprep.subr.bf16.mxu0 0
        %5236 = vmatpush1.bf16.msra.mxu0 0
        %5237 = vmatprep.subr.bf16.mxu0 0
        %5238 = vmatpush1.bf16.msra.mxu0 0
        %5239 = vmatprep.subr.bf16.mxu0 0
        %5240 = vmatpush1.bf16.msra.mxu0 0
        %5241 = vmatprep.subr.bf16.mxu0 0
        %5242 = vmatpush1.bf16.msra.mxu0 0
        %5243 = vmatprep.subr.bf16.mxu0 0
        %5244 = vmatpush1.bf16.msra.mxu0 0
        %5245 = vmatprep.mubr.bf16.mxu0 0
        %5246 = vmatmul.mubr.bf16.gmra.mrb[0].mxu0 %v5208
        %v5247 = vpop.f32.mrb[0].mxu0
        %v5248 = vadd.f32 0.0, %v5247
        %v5249 = vpop.f32.mrb[0].mxu0
        %v5250 = vpop.f32.mrb[0].mxu0
        %v5251 = vpop.f32.mrb[0].mxu0
        %5252 = vdwg.mxu0
        %v5254 = vsel %vm1082, %v4866, 0
        %v5257 = vsel %vm1435, %v4930, 0
        %5259 = vmatprep.subr.bf16.mxu0 0
        %5260 = vmatpush1.bf16.msra.mxu0 %v4923
        %5261 = vmatprep.subr.bf16.mxu0 0
        %5262 = vmatpush1.bf16.msra.mxu0 %v4924
        %5263 = vmatprep.subr.bf16.mxu0 0
        %5264 = vmatpush1.bf16.msra.mxu0 %v4925
        %5265 = vmatprep.subr.bf16.mxu0 0
        %5266 = vmatpush1.bf16.msra.mxu0 %v4926
        %5267 = vmatprep.subr.bf16.mxu0 0
        %5268 = vmatpush1.bf16.msra.mxu0 %v4927
        %5269 = vmatprep.subr.bf16.mxu0 0
        %5270 = vmatpush1.bf16.msra.mxu0 %v4928
        %5271 = vmatprep.subr.bf16.mxu0 0
        %5272 = vmatpush1.bf16.msra.mxu0 %v4929
        %5273 = vmatprep.subr.bf16.mxu0 0
        %5274 = vmatpush1.bf16.msra.mxu0 %v5257
        %5275 = vmatprep.subr.bf16.mxu0 0
        %5276 = vmatpush1.bf16.msra.mxu0 0
        %5277 = vmatprep.subr.bf16.mxu0 0
        %5278 = vmatpush1.bf16.msra.mxu0 0
        %5279 = vmatprep.subr.bf16.mxu0 0
        %5280 = vmatpush1.bf16.msra.mxu0 0
        %5281 = vmatprep.subr.bf16.mxu0 0
        %5282 = vmatpush1.bf16.msra.mxu0 0
        %5283 = vmatprep.subr.bf16.mxu0 0
        %5284 = vmatpush1.bf16.msra.mxu0 0
        %5285 = vmatprep.subr.bf16.mxu0 0
        %5286 = vmatpush1.bf16.msra.mxu0 0
        %5287 = vmatprep.subr.bf16.mxu0 0
        %5288 = vmatpush1.bf16.msra.mxu0 0
        %5289 = vmatprep.subr.bf16.mxu0 0
        %5290 = vmatpush1.bf16.msra.mxu0 0
        %5291 = vmatprep.mubr.bf16.mxu0 0
        %5292 = vmatmul.mubr.bf16.gmra.mrb[0].mxu0 %v5254
        %v5293 = vpop.f32.mrb[0].mxu0
        %v5294 = vadd.f32 0.0, %v5293
        %v5295 = vpop.f32.mrb[0].mxu0
        %v5296 = vpop.f32.mrb[0].mxu0
        %v5297 = vpop.f32.mrb[0].mxu0
        %5298 = vdwg.mxu0
        %v5299 = vmax.f32 %v4972, 0.0
        %v5300 = vmax.f32 %v5018, 0.0
        %v5301 = vmax.f32 %v5064, 0.0
        %v5302 = vmax.f32 %v5110, 0.0
        %v5303 = vmax.f32 %v5156, 0.0
        %v5304 = vmax.f32 %v5202, 0.0
        %v5305 = vmax.f32 %v5248, 0.0
        %v5306 = vmax.f32 %v5294, 0.0
        %v5307 = vld [vmem:[%s15] sm:$0xff]
        %v5308 = vld [vmem:[%s15 + $0x8] sm:$0xff]
        %v5309 = vld [vmem:[%s15 + $0x10] sm:$0xff]
        %v5310 = vld [vmem:[%s15 + $0x18] sm:$0xff]
        %v5311 = vld [vmem:[%s15 + $0x20] sm:$0xff]
        %v5312 = vld [vmem:[%s15 + $0x28] sm:$0xff]
        %v5313 = vld [vmem:[%s15 + $0x30] sm:$0xff]
        %v5314 = vld [vmem:[%s15 + $0x38] sm:$0xff]
        %v5315 = vld [vmem:[%s15 + $0x40] sm:$0xff]
        %v5316 = vld [vmem:[%s15 + $0x48] sm:$0xff]
        %v5317 = vld [vmem:[%s15 + $0x50] sm:$0xff]
        %v5318 = vld [vmem:[%s15 + $0x58] sm:$0xff]
        %v5319 = vld [vmem:[%s15 + $0x60] sm:$0xff]
        %v5320 = vld [vmem:[%s15 + $0x68] sm:$0xff]
        %v5321 = vld [vmem:[%s15 + $0x70] sm:$0xff]
        %v5322 = vpack.c.bf16 %v5308, %v5307
        %v5323 = vpack.c.bf16 %v5310, %v5309
        %v5324 = vpack.c.bf16 %v5312, %v5311
        %v5325 = vpack.c.bf16 %v5314, %v5313
        %v5326 = vpack.c.bf16 %v5316, %v5315
        %v5327 = vpack.c.bf16 %v5318, %v5317
        %v5328 = vpack.c.bf16 %v5320, %v5319
        %v5329 = vpack.c.bf16 %v5321, %v5321
        %v5330 = vld [vmem:[%s16] sm:$0x1]
        %v5332 = vlaneseq
        %v5333 = vshrl.u32 %v5332, 7
        %v5334 = vsub.s32 0, %v5333
        %v5335 = vrot.slane %v5330, %v5334
        %v5338 = vsel %vm786, %v5322, 0
        %v5341 = vsel %vm786, %v5323, 0
        %v5344 = vsel %vm786, %v5324, 0
        %v5347 = vsel %vm786, %v5325, 0
        %v5350 = vsel %vm786, %v5326, 0
        %v5353 = vsel %vm786, %v5327, 0
        %v5356 = vsel %vm786, %v5328, 0
        %v5359 = vsel %vm786, %v5329, 0
        %5361 = vmatprep.subr.bf16.mxu0 0
        %5362 = vmatpush1.bf16.xpose.msra.mxu0 %v5338
        %5363 = vmatprep.subr.bf16.mxu0 0
        %5364 = vmatpush1.bf16.xpose.msra.mxu0 %v5341
        %5365 = vmatprep.subr.bf16.mxu0 0
        %5366 = vmatpush1.bf16.xpose.msra.mxu0 %v5344
        %5367 = vmatprep.subr.bf16.mxu0 0
        %5368 = vmatpush1.bf16.xpose.msra.mxu0 %v5347
        %5369 = vmatprep.subr.bf16.mxu0 0
        %5370 = vmatpush1.bf16.xpose.msra.mxu0 %v5350
        %5371 = vmatprep.subr.bf16.mxu0 0
        %5372 = vmatpush1.bf16.xpose.msra.mxu0 %v5353
        %5373 = vmatprep.subr.bf16.mxu0 0
        %5374 = vmatpush1.bf16.xpose.msra.mxu0 %v5356
        %5375 = vmatprep.subr.bf16.mxu0 0
        %5376 = vmatpush1.bf16.xpose.msra.mxu0 %v5359
        %5377 = vmatprep.subr.bf16.mxu0 0
        %5378 = vmatpush1.bf16.xpose.msra.mxu0 0
        %5379 = vmatprep.subr.bf16.mxu0 0
        %5380 = vmatpush1.bf16.xpose.msra.mxu0 0
        %5381 = vmatprep.subr.bf16.mxu0 0
        %5382 = vmatpush1.bf16.xpose.msra.mxu0 0
        %5383 = vmatprep.subr.bf16.mxu0 0
        %5384 = vmatpush1.bf16.xpose.msra.mxu0 0
        %5385 = vmatprep.subr.bf16.mxu0 0
        %5386 = vmatpush1.bf16.xpose.msra.mxu0 0
        %5387 = vmatprep.subr.bf16.mxu0 0
        %5388 = vmatpush1.bf16.xpose.msra.mxu0 0
        %5389 = vmatprep.subr.bf16.mxu0 0
        %5390 = vmatpush1.bf16.xpose.msra.mxu0 0
        %5391 = vmatprep.subr.bf16.mxu0 0
        %5392 = vmatpush1.bf16.xpose.msra.mxu0 0
        %5393 = vmatprep.mubr.bf16.mxu0 0
        %5394 = vmatmul.mubr.bf16.gmra.mrb[0].mxu0 %v984
        %v5395 = vpop.f32.mrb[0].mxu0
        %v5396 = vadd.f32 %v5335, %v5395
        %v5397 = vpop.f32.mrb[0].mxu0
        %v5398 = vpop.f32.mrb[0].mxu0
        %v5399 = vpop.f32.mrb[0].mxu0
        %5400 = vdwg.mxu0
        %v5401 = vmax.f32 %v5396, 0.0
        %v5402 = vpack.c.bf16 %v5401, %v5401
        %v5403 = vld [vmem:[#allocation5] sm:$0xff]
        %v5404 = vld [vmem:[#allocation5 + $0x8] sm:$0xff]
        %v5405 = vld [vmem:[#allocation5 + $0x10] sm:$0xff]
        %v5406 = vld [vmem:[#allocation5 + $0x18] sm:$0xff]
        %v5407 = vld [vmem:[#allocation5 + $0x20] sm:$0xff]
        %v5408 = vld [vmem:[#allocation5 + $0x28] sm:$0xff]
        %v5409 = vld [vmem:[#allocation5 + $0x30] sm:$0xff]
        %v5410 = vld [vmem:[#allocation5 + $0x38] sm:$0xff]
        %v5411 = vld [vmem:[#allocation5 + $0x40] sm:$0xff]
        %v5412 = vld [vmem:[#allocation5 + $0x48] sm:$0xff]
        %v5413 = vld [vmem:[#allocation5 + $0x50] sm:$0xff]
        %v5414 = vld [vmem:[#allocation5 + $0x58] sm:$0xff]
        %v5415 = vld [vmem:[#allocation5 + $0x60] sm:$0xff]
        %v5416 = vld [vmem:[#allocation5 + $0x68] sm:$0xff]
        %v5417 = vld [vmem:[#allocation5 + $0x70] sm:$0xff]
        %v5418 = vld [vmem:[#allocation5 + $0x78] sm:$0xff]
        %v5419 = vld [vmem:[#allocation5 + $0x80] sm:$0xff]
        %v5420 = vld [vmem:[#allocation5 + $0x88] sm:$0xff]
        %v5421 = vld [vmem:[#allocation5 + $0x90] sm:$0xff]
        %v5422 = vld [vmem:[#allocation5 + $0x98] sm:$0xff]
        %v5423 = vld [vmem:[#allocation5 + $0xa0] sm:$0xff]
        %v5424 = vld [vmem:[#allocation5 + $0xa8] sm:$0xff]
        %v5425 = vld [vmem:[#allocation5 + $0xb0] sm:$0xff]
        %v5426 = vld [vmem:[#allocation5 + $0xb8] sm:$0xff]
        %v5427 = vld [vmem:[#allocation5 + $0xc0] sm:$0xff]
        %v5428 = vld [vmem:[#allocation5 + $0xc8] sm:$0xff]
        %v5429 = vld [vmem:[#allocation5 + $0xd0] sm:$0xff]
        %v5430 = vld [vmem:[#allocation5 + $0xd8] sm:$0xff]
        %v5431 = vld [vmem:[#allocation5 + $0xe0] sm:$0xff]
        %v5432 = vld [vmem:[#allocation5 + $0xe8] sm:$0xff]
        %v5433 = vld [vmem:[#allocation5 + $0xf0] sm:$0xff]
        %v5434 = vld [vmem:[#allocation5 + $0xf8] sm:$0xff]
        %v5435 = vld [vmem:[#allocation5 + $0x100] sm:$0xff]
        %v5436 = vld [vmem:[#allocation5 + $0x108] sm:$0xff]
        %v5437 = vld [vmem:[#allocation5 + $0x110] sm:$0xff]
        %v5438 = vld [vmem:[#allocation5 + $0x118] sm:$0xff]
        %v5439 = vld [vmem:[#allocation5 + $0x120] sm:$0xff]
        %v5440 = vld [vmem:[#allocation5 + $0x128] sm:$0xff]
        %v5441 = vld [vmem:[#allocation5 + $0x130] sm:$0xff]
        %v5442 = vld [vmem:[#allocation5 + $0x138] sm:$0xff]
        %v5443 = vld [vmem:[#allocation5 + $0x140] sm:$0xff]
        %v5444 = vld [vmem:[#allocation5 + $0x148] sm:$0xff]
        %v5445 = vld [vmem:[#allocation5 + $0x150] sm:$0xff]
        %v5446 = vld [vmem:[#allocation5 + $0x158] sm:$0xff]
        %v5447 = vld [vmem:[#allocation5 + $0x160] sm:$0xff]
        %v5448 = vld [vmem:[#allocation5 + $0x168] sm:$0xff]
        %v5449 = vld [vmem:[#allocation5 + $0x170] sm:$0xff]
        %v5450 = vld [vmem:[#allocation5 + $0x178] sm:$0xff]
        %v5451 = vld [vmem:[#allocation5 + $0x180] sm:$0xff]
        %v5452 = vld [vmem:[#allocation5 + $0x188] sm:$0xff]
        %v5453 = vld [vmem:[#allocation5 + $0x190] sm:$0xff]
        %v5454 = vld [vmem:[#allocation5 + $0x198] sm:$0xff]
        %v5455 = vld [vmem:[#allocation5 + $0x1a0] sm:$0xff]
        %v5456 = vld [vmem:[#allocation5 + $0x1a8] sm:$0xff]
        %v5457 = vld [vmem:[#allocation5 + $0x1b0] sm:$0xff]
        %v5458 = vld [vmem:[#allocation5 + $0x1b8] sm:$0xff]
        %v5459 = vld [vmem:[#allocation5 + $0x1c0] sm:$0xff]
        %v5460 = vld [vmem:[#allocation5 + $0x1c8] sm:$0xff]
        %v5461 = vld [vmem:[#allocation5 + $0x1d0] sm:$0xff]
        %v5462 = vld [vmem:[#allocation5 + $0x1d8] sm:$0xff]
        %v5463 = vld [vmem:[#allocation5 + $0x1e0] sm:$0xff]
        %v5464 = vld [vmem:[#allocation5 + $0x1e8] sm:$0xff]
        %v5465 = vld [vmem:[#allocation5 + $0x1f0] sm:$0xff]
        %v5466 = vld [vmem:[#allocation5 + $0x1f8] sm:$0xff]
        %v5467 = vld [vmem:[#allocation5 + $0x200] sm:$0xff]
        %v5468 = vld [vmem:[#allocation5 + $0x208] sm:$0xff]
        %v5469 = vld [vmem:[#allocation5 + $0x210] sm:$0xff]
        %v5470 = vld [vmem:[#allocation5 + $0x218] sm:$0xff]
        %v5471 = vld [vmem:[#allocation5 + $0x220] sm:$0xff]
        %v5472 = vld [vmem:[#allocation5 + $0x228] sm:$0xff]
        %v5473 = vld [vmem:[#allocation5 + $0x230] sm:$0xff]
        %v5474 = vld [vmem:[#allocation5 + $0x238] sm:$0xff]
        %v5475 = vld [vmem:[#allocation5 + $0x240] sm:$0xff]
        %v5476 = vld [vmem:[#allocation5 + $0x248] sm:$0xff]
        %v5477 = vld [vmem:[#allocation5 + $0x250] sm:$0xff]
        %v5478 = vld [vmem:[#allocation5 + $0x258] sm:$0xff]
        %v5479 = vld [vmem:[#allocation5 + $0x260] sm:$0xff]
        %v5480 = vld [vmem:[#allocation5 + $0x268] sm:$0xff]
        %v5481 = vld [vmem:[#allocation5 + $0x270] sm:$0xff]
        %v5482 = vld [vmem:[#allocation5 + $0x278] sm:$0xff]
        %v5483 = vld [vmem:[#allocation5 + $0x280] sm:$0xff]
        %v5484 = vld [vmem:[#allocation5 + $0x288] sm:$0xff]
        %v5485 = vld [vmem:[#allocation5 + $0x290] sm:$0xff]
        %v5486 = vld [vmem:[#allocation5 + $0x298] sm:$0xff]
        %v5487 = vld [vmem:[#allocation5 + $0x2a0] sm:$0xff]
        %v5488 = vld [vmem:[#allocation5 + $0x2a8] sm:$0xff]
        %v5489 = vld [vmem:[#allocation5 + $0x2b0] sm:$0xff]
        %v5490 = vld [vmem:[#allocation5 + $0x2b8] sm:$0xff]
        %v5491 = vld [vmem:[#allocation5 + $0x2c0] sm:$0xff]
        %v5492 = vld [vmem:[#allocation5 + $0x2c8] sm:$0xff]
        %v5493 = vld [vmem:[#allocation5 + $0x2d0] sm:$0xff]
        %v5494 = vld [vmem:[#allocation5 + $0x2d8] sm:$0xff]
        %v5495 = vld [vmem:[#allocation5 + $0x2e0] sm:$0xff]
        %v5496 = vld [vmem:[#allocation5 + $0x2e8] sm:$0xff]
        %v5497 = vld [vmem:[#allocation5 + $0x2f0] sm:$0xff]
        %v5498 = vld [vmem:[#allocation5 + $0x2f8] sm:$0xff]
        %v5499 = vld [vmem:[#allocation5 + $0x300] sm:$0xff]
        %v5500 = vld [vmem:[#allocation5 + $0x308] sm:$0xff]
        %v5501 = vld [vmem:[#allocation5 + $0x310] sm:$0xff]
        %v5502 = vld [vmem:[#allocation5 + $0x318] sm:$0xff]
        %v5503 = vld [vmem:[#allocation5 + $0x320] sm:$0xff]
        %v5504 = vld [vmem:[#allocation5 + $0x328] sm:$0xff]
        %v5505 = vld [vmem:[#allocation5 + $0x330] sm:$0xff]
        %v5506 = vld [vmem:[#allocation5 + $0x338] sm:$0xff]
        %v5507 = vld [vmem:[#allocation5 + $0x340] sm:$0xff]
        %v5508 = vld [vmem:[#allocation5 + $0x348] sm:$0xff]
        %v5509 = vld [vmem:[#allocation5 + $0x350] sm:$0xff]
        %v5510 = vld [vmem:[#allocation5 + $0x358] sm:$0xff]
        %v5511 = vld [vmem:[#allocation5 + $0x360] sm:$0xff]
        %v5512 = vld [vmem:[#allocation5 + $0x368] sm:$0xff]
        %v5513 = vld [vmem:[#allocation5 + $0x370] sm:$0xff]
        %v5514 = vld [vmem:[#allocation5 + $0x378] sm:$0xff]
        %v5515 = vld [vmem:[#allocation5 + $0x380] sm:$0xff]
        %v5516 = vld [vmem:[#allocation5 + $0x388] sm:$0xff]
        %v5517 = vld [vmem:[#allocation5 + $0x390] sm:$0xff]
        %v5518 = vld [vmem:[#allocation5 + $0x398] sm:$0xff]
        %v5519 = vld [vmem:[#allocation5 + $0x3a0] sm:$0xff]
        %v5520 = vld [vmem:[#allocation5 + $0x3a8] sm:$0xff]
        %v5521 = vld [vmem:[#allocation5 + $0x3b0] sm:$0xff]
        %v5522 = vld [vmem:[#allocation5 + $0x3b8] sm:$0xff]
        %v5523 = vpack.c.bf16 %v5404, %v5403
        %v5524 = vpack.c.bf16 %v5406, %v5405
        %v5525 = vpack.c.bf16 %v5408, %v5407
        %v5526 = vpack.c.bf16 %v5410, %v5409
        %v5527 = vpack.c.bf16 %v5412, %v5411
        %v5528 = vpack.c.bf16 %v5414, %v5413
        %v5529 = vpack.c.bf16 %v5416, %v5415
        %v5530 = vpack.c.bf16 %v5418, %v5417
        %v5531 = vpack.c.bf16 %v5420, %v5419
        %v5532 = vpack.c.bf16 %v5422, %v5421
        %v5533 = vpack.c.bf16 %v5424, %v5423
        %v5534 = vpack.c.bf16 %v5426, %v5425
        %v5535 = vpack.c.bf16 %v5428, %v5427
        %v5536 = vpack.c.bf16 %v5430, %v5429
        %v5537 = vpack.c.bf16 %v5432, %v5431
        %v5538 = vpack.c.bf16 %v5434, %v5433
        %v5539 = vpack.c.bf16 %v5436, %v5435
        %v5540 = vpack.c.bf16 %v5438, %v5437
        %v5541 = vpack.c.bf16 %v5440, %v5439
        %v5542 = vpack.c.bf16 %v5442, %v5441
        %v5543 = vpack.c.bf16 %v5444, %v5443
        %v5544 = vpack.c.bf16 %v5446, %v5445
        %v5545 = vpack.c.bf16 %v5448, %v5447
        %v5546 = vpack.c.bf16 %v5450, %v5449
        %v5547 = vpack.c.bf16 %v5452, %v5451
        %v5548 = vpack.c.bf16 %v5454, %v5453
        %v5549 = vpack.c.bf16 %v5456, %v5455
        %v5550 = vpack.c.bf16 %v5458, %v5457
        %v5551 = vpack.c.bf16 %v5460, %v5459
        %v5552 = vpack.c.bf16 %v5462, %v5461
        %v5553 = vpack.c.bf16 %v5464, %v5463
        %v5554 = vpack.c.bf16 %v5466, %v5465
        %v5555 = vpack.c.bf16 %v5468, %v5467
        %v5556 = vpack.c.bf16 %v5470, %v5469
        %v5557 = vpack.c.bf16 %v5472, %v5471
        %v5558 = vpack.c.bf16 %v5474, %v5473
        %v5559 = vpack.c.bf16 %v5476, %v5475
        %v5560 = vpack.c.bf16 %v5478, %v5477
        %v5561 = vpack.c.bf16 %v5480, %v5479
        %v5562 = vpack.c.bf16 %v5482, %v5481
        %v5563 = vpack.c.bf16 %v5484, %v5483
        %v5564 = vpack.c.bf16 %v5486, %v5485
        %v5565 = vpack.c.bf16 %v5488, %v5487
        %v5566 = vpack.c.bf16 %v5490, %v5489
        %v5567 = vpack.c.bf16 %v5492, %v5491
        %v5568 = vpack.c.bf16 %v5494, %v5493
        %v5569 = vpack.c.bf16 %v5496, %v5495
        %v5570 = vpack.c.bf16 %v5498, %v5497
        %v5571 = vpack.c.bf16 %v5500, %v5499
        %v5572 = vpack.c.bf16 %v5502, %v5501
        %v5573 = vpack.c.bf16 %v5504, %v5503
        %v5574 = vpack.c.bf16 %v5506, %v5505
        %v5575 = vpack.c.bf16 %v5508, %v5507
        %v5576 = vpack.c.bf16 %v5510, %v5509
        %v5577 = vpack.c.bf16 %v5512, %v5511
        %v5578 = vpack.c.bf16 %v5514, %v5513
        %v5579 = vpack.c.bf16 %v5516, %v5515
        %v5580 = vpack.c.bf16 %v5518, %v5517
        %v5581 = vpack.c.bf16 %v5520, %v5519
        %v5582 = vpack.c.bf16 %v5522, %v5521
        %v5583 = vld [vmem:[%s18] sm:$0xff]
        %v5585 = vlaneseq
        %v5586 = vshrl.u32 %v5585, 7
        %v5587 = vsub.s32 0, %v5586
        %v5588 = vrot.slane %v5583, %v5587
        %v5589 = vlaneseq
        %v5590 = vshrl.u32 %v5589, 7
        %v5591 = vsub.s32 1, %v5590
        %v5592 = vrot.slane %v5583, %v5591
        %v5593 = vlaneseq
        %v5594 = vshrl.u32 %v5593, 7
        %v5595 = vsub.s32 2, %v5594
        %v5596 = vrot.slane %v5583, %v5595
        %v5597 = vlaneseq
        %v5598 = vshrl.u32 %v5597, 7
        %v5599 = vsub.s32 3, %v5598
        %v5600 = vrot.slane %v5583, %v5599
        %v5601 = vlaneseq
        %v5602 = vshrl.u32 %v5601, 7
        %v5603 = vsub.s32 4, %v5602
        %v5604 = vrot.slane %v5583, %v5603
        %v5605 = vlaneseq
        %v5606 = vshrl.u32 %v5605, 7
        %v5607 = vsub.s32 5, %v5606
        %v5608 = vrot.slane %v5583, %v5607
        %v5609 = vlaneseq
        %v5610 = vshrl.u32 %v5609, 7
        %v5611 = vsub.s32 6, %v5610
        %v5612 = vrot.slane %v5583, %v5611
        %v5613 = vlaneseq
        %v5614 = vshrl.u32 %v5613, 7
        %v5615 = vsub.s32 7, %v5614
        %v5616 = vrot.slane %v5583, %v5615
        %v5626 = vsel %vm1082, %v5402, 0
        %v5629 = vsel %vm1082, %v5523, 0
        %v5632 = vsel %vm1082, %v5524, 0
        %v5635 = vsel %vm1082, %v5525, 0
        %v5638 = vsel %vm1082, %v5526, 0
        %v5641 = vsel %vm1082, %v5527, 0
        %v5644 = vsel %vm1082, %v5528, 0
        %v5647 = vsel %vm1082, %v5529, 0
        %v5650 = vsel %vm1082, %v5530, 0
        %v5653 = vsel %vm1082, %v5531, 0
        %v5656 = vsel %vm1082, %v5532, 0
        %v5659 = vsel %vm1082, %v5533, 0
        %v5662 = vsel %vm1082, %v5534, 0
        %v5665 = vsel %vm1082, %v5535, 0
        %v5668 = vsel %vm1082, %v5536, 0
        %v5671 = vsel %vm1082, %v5537, 0
        %v5674 = vsel %vm1082, %v5538, 0
        %v5677 = vsel %vm1082, %v5539, 0
        %v5680 = vsel %vm1082, %v5540, 0
        %v5683 = vsel %vm1082, %v5541, 0
        %v5686 = vsel %vm1082, %v5542, 0
        %v5689 = vsel %vm1082, %v5543, 0
        %v5692 = vsel %vm1082, %v5544, 0
        %v5695 = vsel %vm1082, %v5545, 0
        %v5698 = vsel %vm1082, %v5546, 0
        %v5701 = vsel %vm1082, %v5547, 0
        %v5704 = vsel %vm1082, %v5548, 0
        %v5707 = vsel %vm1082, %v5549, 0
        %v5710 = vsel %vm1082, %v5550, 0
        %v5713 = vsel %vm1082, %v5551, 0
        %v5716 = vsel %vm1082, %v5552, 0
        %v5719 = vsel %vm1082, %v5553, 0
        %v5722 = vsel %vm1082, %v5554, 0
        %v5725 = vsel %vm1082, %v5555, 0
        %v5728 = vsel %vm1082, %v5556, 0
        %v5731 = vsel %vm1082, %v5557, 0
        %v5734 = vsel %vm1082, %v5558, 0
        %v5737 = vsel %vm1082, %v5559, 0
        %v5740 = vsel %vm1082, %v5560, 0
        %v5743 = vsel %vm1082, %v5561, 0
        %v5746 = vsel %vm1082, %v5562, 0
        %v5749 = vsel %vm1082, %v5563, 0
        %v5752 = vsel %vm1082, %v5564, 0
        %v5755 = vsel %vm1082, %v5565, 0
        %v5758 = vsel %vm1082, %v5566, 0
        %v5761 = vsel %vm1082, %v5567, 0
        %v5764 = vsel %vm1082, %v5568, 0
        %v5767 = vsel %vm1082, %v5569, 0
        %v5770 = vsel %vm1082, %v5570, 0
        %v5773 = vsel %vm1082, %v5571, 0
        %v5776 = vsel %vm1082, %v5572, 0
        %v5779 = vsel %vm1082, %v5573, 0
        %v5782 = vsel %vm1082, %v5574, 0
        %v5785 = vsel %vm1082, %v5575, 0
        %v5788 = vsel %vm1082, %v5576, 0
        %v5791 = vsel %vm1082, %v5577, 0
        %v5794 = vsel %vm1082, %v5578, 0
        %v5797 = vsel %vm1082, %v5579, 0
        %v5800 = vsel %vm1082, %v5580, 0
        %v5803 = vsel %vm1082, %v5581, 0
        %v5806 = vsel %vm1082, %v5582, 0
        %5808 = vmatprep.subr.bf16.mxu0 0
        %5809 = vmatpush1.bf16.xpose.msra.mxu0 %v5629
        %5810 = vmatprep.subr.bf16.mxu0 0
        %5811 = vmatpush1.bf16.xpose.msra.mxu0 %v5632
        %5812 = vmatprep.subr.bf16.mxu0 0
        %5813 = vmatpush1.bf16.xpose.msra.mxu0 %v5635
        %5814 = vmatprep.subr.bf16.mxu0 0
        %5815 = vmatpush1.bf16.xpose.msra.mxu0 %v5638
        %5816 = vmatprep.subr.bf16.mxu0 0
        %5817 = vmatpush1.bf16.xpose.msra.mxu0 %v5641
        %5818 = vmatprep.subr.bf16.mxu0 0
        %5819 = vmatpush1.bf16.xpose.msra.mxu0 %v5644
        %5820 = vmatprep.subr.bf16.mxu0 0
        %5821 = vmatpush1.bf16.xpose.msra.mxu0 %v5647
        %5822 = vmatprep.subr.bf16.mxu0 0
        %5823 = vmatpush1.bf16.xpose.msra.mxu0 %v5650
        %5824 = vmatprep.subr.bf16.mxu0 0
        %5825 = vmatpush1.bf16.xpose.msra.mxu0 %v5653
        %5826 = vmatprep.subr.bf16.mxu0 0
        %5827 = vmatpush1.bf16.xpose.msra.mxu0 %v5656
        %5828 = vmatprep.subr.bf16.mxu0 0
        %5829 = vmatpush1.bf16.xpose.msra.mxu0 %v5659
        %5830 = vmatprep.subr.bf16.mxu0 0
        %5831 = vmatpush1.bf16.xpose.msra.mxu0 %v5662
        %5832 = vmatprep.subr.bf16.mxu0 0
        %5833 = vmatpush1.bf16.xpose.msra.mxu0 %v5665
        %5834 = vmatprep.subr.bf16.mxu0 0
        %5835 = vmatpush1.bf16.xpose.msra.mxu0 %v5668
        %5836 = vmatprep.subr.bf16.mxu0 0
        %5837 = vmatpush1.bf16.xpose.msra.mxu0 %v5671
        %5838 = vmatprep.subr.bf16.mxu0 0
        %5839 = vmatpush1.bf16.xpose.msra.mxu0 %v5674
        %5840 = vmatprep.mubr.bf16.mxu0 0
        %5841 = vmatmul.mubr.bf16.gmra.mrb[0].mxu0 %v5626
        %v5842 = vpop.f32.mrb[0].mxu0
        %v5843 = vadd.f32 %v5588, %v5842
        %v5844 = vpop.f32.mrb[0].mxu0
        %v5845 = vadd.f32 %v5592, %v5844
        %v5846 = vpop.f32.mrb[0].mxu0
        %v5847 = vpop.f32.mrb[0].mxu0
        %5848 = vdwg.mxu0
        %5849 = vmatprep.subr.bf16.mxu0 0
        %5850 = vmatpush1.bf16.xpose.msra.mxu0 %v5677
        %5851 = vmatprep.subr.bf16.mxu0 0
        %5852 = vmatpush1.bf16.xpose.msra.mxu0 %v5680
        %5853 = vmatprep.subr.bf16.mxu0 0
        %5854 = vmatpush1.bf16.xpose.msra.mxu0 %v5683
        %5855 = vmatprep.subr.bf16.mxu0 0
        %5856 = vmatpush1.bf16.xpose.msra.mxu0 %v5686
        %5857 = vmatprep.subr.bf16.mxu0 0
        %5858 = vmatpush1.bf16.xpose.msra.mxu0 %v5689
        %5859 = vmatprep.subr.bf16.mxu0 0
        %5860 = vmatpush1.bf16.xpose.msra.mxu0 %v5692
        %5861 = vmatprep.subr.bf16.mxu0 0
        %5862 = vmatpush1.bf16.xpose.msra.mxu0 %v5695
        %5863 = vmatprep.subr.bf16.mxu0 0
        %5864 = vmatpush1.bf16.xpose.msra.mxu0 %v5698
        %5865 = vmatprep.subr.bf16.mxu0 0
        %5866 = vmatpush1.bf16.xpose.msra.mxu0 %v5701
        %5867 = vmatprep.subr.bf16.mxu0 0
        %5868 = vmatpush1.bf16.xpose.msra.mxu0 %v5704
        %5869 = vmatprep.subr.bf16.mxu0 0
        %5870 = vmatpush1.bf16.xpose.msra.mxu0 %v5707
        %5871 = vmatprep.subr.bf16.mxu0 0
        %5872 = vmatpush1.bf16.xpose.msra.mxu0 %v5710
        %5873 = vmatprep.subr.bf16.mxu0 0
        %5874 = vmatpush1.bf16.xpose.msra.mxu0 %v5713
        %5875 = vmatprep.subr.bf16.mxu0 0
        %5876 = vmatpush1.bf16.xpose.msra.mxu0 %v5716
        %5877 = vmatprep.subr.bf16.mxu0 0
        %5878 = vmatpush1.bf16.xpose.msra.mxu0 %v5719
        %5879 = vmatprep.subr.bf16.mxu0 0
        %5880 = vmatpush1.bf16.xpose.msra.mxu0 %v5722
        %5881 = vmatprep.mubr.bf16.mxu0 0
        %5882 = vmatmul.mubr.bf16.gmra.mrb[0].mxu0 %v5626
        %v5883 = vpop.f32.mrb[0].mxu0
        %v5884 = vadd.f32 %v5596, %v5883
        %v5885 = vpop.f32.mrb[0].mxu0
        %v5886 = vadd.f32 %v5600, %v5885
        %v5887 = vpop.f32.mrb[0].mxu0
        %v5888 = vpop.f32.mrb[0].mxu0
        %5889 = vdwg.mxu0
        %5890 = vmatprep.subr.bf16.mxu0 0
        %5891 = vmatpush1.bf16.xpose.msra.mxu0 %v5725
        %5892 = vmatprep.subr.bf16.mxu0 0
        %5893 = vmatpush1.bf16.xpose.msra.mxu0 %v5728
        %5894 = vmatprep.subr.bf16.mxu0 0
        %5895 = vmatpush1.bf16.xpose.msra.mxu0 %v5731
        %5896 = vmatprep.subr.bf16.mxu0 0
        %5897 = vmatpush1.bf16.xpose.msra.mxu0 %v5734
        %5898 = vmatprep.subr.bf16.mxu0 0
        %5899 = vmatpush1.bf16.xpose.msra.mxu0 %v5737
        %5900 = vmatprep.subr.bf16.mxu0 0
        %5901 = vmatpush1.bf16.xpose.msra.mxu0 %v5740
        %5902 = vmatprep.subr.bf16.mxu0 0
        %5903 = vmatpush1.bf16.xpose.msra.mxu0 %v5743
        %5904 = vmatprep.subr.bf16.mxu0 0
        %5905 = vmatpush1.bf16.xpose.msra.mxu0 %v5746
        %5906 = vmatprep.subr.bf16.mxu0 0
        %5907 = vmatpush1.bf16.xpose.msra.mxu0 %v5749
        %5908 = vmatprep.subr.bf16.mxu0 0
        %5909 = vmatpush1.bf16.xpose.msra.mxu0 %v5752
        %5910 = vmatprep.subr.bf16.mxu0 0
        %5911 = vmatpush1.bf16.xpose.msra.mxu0 %v5755
        %5912 = vmatprep.subr.bf16.mxu0 0
        %5913 = vmatpush1.bf16.xpose.msra.mxu0 %v5758
        %5914 = vmatprep.subr.bf16.mxu0 0
        %5915 = vmatpush1.bf16.xpose.msra.mxu0 %v5761
        %5916 = vmatprep.subr.bf16.mxu0 0
        %5917 = vmatpush1.bf16.xpose.msra.mxu0 %v5764
        %5918 = vmatprep.subr.bf16.mxu0 0
        %5919 = vmatpush1.bf16.xpose.msra.mxu0 %v5767
        %5920 = vmatprep.subr.bf16.mxu0 0
        %5921 = vmatpush1.bf16.xpose.msra.mxu0 %v5770
        %5922 = vmatprep.mubr.bf16.mxu0 0
        %5923 = vmatmul.mubr.bf16.gmra.mrb[0].mxu0 %v5626
        %v5924 = vpop.f32.mrb[0].mxu0
        %v5925 = vadd.f32 %v5604, %v5924
        %v5926 = vpop.f32.mrb[0].mxu0
        %v5927 = vadd.f32 %v5608, %v5926
        %v5928 = vpop.f32.mrb[0].mxu0
        %v5929 = vpop.f32.mrb[0].mxu0
        %5930 = vdwg.mxu0
        %5931 = vmatprep.subr.bf16.mxu0 0
        %5932 = vmatpush1.bf16.xpose.msra.mxu0 %v5773
        %5933 = vmatprep.subr.bf16.mxu0 0
        %5934 = vmatpush1.bf16.xpose.msra.mxu0 %v5776
        %5935 = vmatprep.subr.bf16.mxu0 0
        %5936 = vmatpush1.bf16.xpose.msra.mxu0 %v5779
        %5937 = vmatprep.subr.bf16.mxu0 0
        %5938 = vmatpush1.bf16.xpose.msra.mxu0 %v5782
        %5939 = vmatprep.subr.bf16.mxu0 0
        %5940 = vmatpush1.bf16.xpose.msra.mxu0 %v5785
        %5941 = vmatprep.subr.bf16.mxu0 0
        %5942 = vmatpush1.bf16.xpose.msra.mxu0 %v5788
        %5943 = vmatprep.subr.bf16.mxu0 0
        %5944 = vmatpush1.bf16.xpose.msra.mxu0 %v5791
        %5945 = vmatprep.subr.bf16.mxu0 0
        %5946 = vmatpush1.bf16.xpose.msra.mxu0 %v5794
        %5947 = vmatprep.subr.bf16.mxu0 0
        %5948 = vmatpush1.bf16.xpose.msra.mxu0 %v5797
        %5949 = vmatprep.subr.bf16.mxu0 0
        %5950 = vmatpush1.bf16.xpose.msra.mxu0 %v5800
        %5951 = vmatprep.subr.bf16.mxu0 0
        %5952 = vmatpush1.bf16.xpose.msra.mxu0 %v5803
        %5953 = vmatprep.subr.bf16.mxu0 0
        %5954 = vmatpush1.bf16.xpose.msra.mxu0 %v5806
        %5955 = vmatprep.subr.bf16.mxu0 0
        %5956 = vmatpush1.bf16.xpose.msra.mxu0 0
        %5957 = vmatprep.subr.bf16.mxu0 0
        %5958 = vmatpush1.bf16.xpose.msra.mxu0 0
        %5959 = vmatprep.subr.bf16.mxu0 0
        %5960 = vmatpush1.bf16.xpose.msra.mxu0 0
        %5961 = vmatprep.subr.bf16.mxu0 0
        %5962 = vmatpush1.bf16.xpose.msra.mxu0 0
        %5963 = vmatprep.mubr.bf16.mxu0 0
        %5964 = vmatmul.mubr.bf16.gmra.mrb[0].mxu0 %v5626
        %v5965 = vpop.f32.mrb[0].mxu0
        %v5966 = vadd.f32 %v5612, %v5965
        %v5967 = vpop.f32.mrb[0].mxu0
        %v5968 = vadd.f32 %v5616, %v5967
        %v5969 = vpop.f32.mrb[0].mxu0
        %v5970 = vpop.f32.mrb[0].mxu0
        %5971 = vdwg.mxu0
        %v5973 = vcombine.high %v5843, %v5843
        %v5975 = vunpack.c.l.s4 1966171168
        %v5976 = vunpack.c.0.s8 %v5975
        %v5977 = vlaneseq
        %v5978 = vshrl.u32 %v5977, 7
        %v5979 = vsub.s32 %v5976, %v5978
        %v5980 = vrot.slane %v5843, %v5979
        %v5982 = vunpack.c.l.s4 1966171168
        %v5983 = vunpack.c.0.s8 %v5982
        %v5984 = vlaneseq
        %v5985 = vshrl.u32 %v5984, 7
        %v5986 = vsub.s32 %v5983, %v5985
        %v5987 = vrot.slane %v5973, %v5986
        %v5988 = vcombine.high %v5980, %v5980
        %v5989 = vcombine.high %v5987, %v5987
        %v5991 = vunpack.c.l.s4 1966171168
        %v5992 = vunpack.c.0.s8 %v5991
        %v5993 = vlaneseq
        %v5994 = vshrl.u32 %v5993, 7
        %v5995 = vsub.s32 %v5992, %v5994
        %v5996 = vrot.slane %v5980, %v5995
        %v5998 = vunpack.c.l.s4 1966171168
        %v5999 = vunpack.c.0.s8 %v5998
        %v6000 = vlaneseq
        %v6001 = vshrl.u32 %v6000, 7
        %v6002 = vsub.s32 %v5999, %v6001
        %v6003 = vrot.slane %v5987, %v6002
        %v6005 = vunpack.c.l.s4 1966171168
        %v6006 = vunpack.c.0.s8 %v6005
        %v6007 = vlaneseq
        %v6008 = vshrl.u32 %v6007, 7
        %v6009 = vsub.s32 %v6006, %v6008
        %v6010 = vrot.slane %v5988, %v6009
        %v6012 = vunpack.c.l.s4 1966171168
        %v6013 = vunpack.c.0.s8 %v6012
        %v6014 = vlaneseq
        %v6015 = vshrl.u32 %v6014, 7
        %v6016 = vsub.s32 %v6013, %v6015
        %v6017 = vrot.slane %v5989, %v6016
        %v6018 = vcombine.high %v5996, %v5996
        %v6019 = vcombine.high %v6003, %v6003
        %v6020 = vcombine.high %v6010, %v6010
        %v6021 = vcombine.high %v6017, %v6017
        %v6031 = vcombine.low %v5843, %v5845
        %v6032 = vcombine.high %v5843, %v5845
        %v6034 = vunpack.c.l.s4 1966171168
        %v6035 = vunpack.c.0.s8 %v6034
        %v6036 = vlaneseq
        %v6037 = vshrl.u32 %v6036, 7
        %v6038 = vsub.s32 %v6035, %v6037
        %v6039 = vrot.slane %v6031, %v6038
        %v6041 = vunpack.c.l.s4 1966171168
        %v6042 = vunpack.c.0.s8 %v6041
        %v6043 = vlaneseq
        %v6044 = vshrl.u32 %v6043, 7
        %v6045 = vsub.s32 %v6042, %v6044
        %v6046 = vrot.slane %v6032, %v6045
        %v6047 = vcombine.high %v6039, %v6039
        %v6048 = vcombine.high %v6046, %v6046
        %v6050 = vunpack.c.l.s4 1966171168
        %v6051 = vunpack.c.0.s8 %v6050
        %v6052 = vlaneseq
        %v6053 = vshrl.u32 %v6052, 7
        %v6054 = vsub.s32 %v6051, %v6053
        %v6055 = vrot.slane %v6039, %v6054
        %v6057 = vunpack.c.l.s4 1966171168
        %v6058 = vunpack.c.0.s8 %v6057
        %v6059 = vlaneseq
        %v6060 = vshrl.u32 %v6059, 7
        %v6061 = vsub.s32 %v6058, %v6060
        %v6062 = vrot.slane %v6046, %v6061
        %v6064 = vunpack.c.l.s4 1966171168
        %v6065 = vunpack.c.0.s8 %v6064
        %v6066 = vlaneseq
        %v6067 = vshrl.u32 %v6066, 7
        %v6068 = vsub.s32 %v6065, %v6067
        %v6069 = vrot.slane %v6047, %v6068
        %v6071 = vunpack.c.l.s4 1966171168
        %v6072 = vunpack.c.0.s8 %v6071
        %v6073 = vlaneseq
        %v6074 = vshrl.u32 %v6073, 7
        %v6075 = vsub.s32 %v6072, %v6074
        %v6076 = vrot.slane %v6048, %v6075
        %v6077 = vcombine.high %v6055, %v6055
        %v6078 = vcombine.high %v6062, %v6062
        %v6079 = vcombine.high %v6069, %v6069
        %v6080 = vcombine.high %v6076, %v6076
        %v6082 = vcombine.low %v5845, %v5884
        %v6083 = vcombine.high %v5845, %v5884
        %v6085 = vunpack.c.l.s4 1966171168
        %v6086 = vunpack.c.0.s8 %v6085
        %v6087 = vlaneseq
        %v6088 = vshrl.u32 %v6087, 7
        %v6089 = vsub.s32 %v6086, %v6088
        %v6090 = vrot.slane %v6082, %v6089
        %v6092 = vunpack.c.l.s4 1966171168
        %v6093 = vunpack.c.0.s8 %v6092
        %v6094 = vlaneseq
        %v6095 = vshrl.u32 %v6094, 7
        %v6096 = vsub.s32 %v6093, %v6095
        %v6097 = vrot.slane %v6083, %v6096
        %v6098 = vcombine.high %v6090, %v6090
        %v6099 = vcombine.high %v6097, %v6097
        %v6101 = vunpack.c.l.s4 1966171168
        %v6102 = vunpack.c.0.s8 %v6101
        %v6103 = vlaneseq
        %v6104 = vshrl.u32 %v6103, 7
        %v6105 = vsub.s32 %v6102, %v6104
        %v6106 = vrot.slane %v6090, %v6105
        %v6108 = vunpack.c.l.s4 1966171168
        %v6109 = vunpack.c.0.s8 %v6108
        %v6110 = vlaneseq
        %v6111 = vshrl.u32 %v6110, 7
        %v6112 = vsub.s32 %v6109, %v6111
        %v6113 = vrot.slane %v6097, %v6112
        %v6115 = vunpack.c.l.s4 1966171168
        %v6116 = vunpack.c.0.s8 %v6115
        %v6117 = vlaneseq
        %v6118 = vshrl.u32 %v6117, 7
        %v6119 = vsub.s32 %v6116, %v6118
        %v6120 = vrot.slane %v6098, %v6119
        %v6122 = vunpack.c.l.s4 1966171168
        %v6123 = vunpack.c.0.s8 %v6122
        %v6124 = vlaneseq
        %v6125 = vshrl.u32 %v6124, 7
        %v6126 = vsub.s32 %v6123, %v6125
        %v6127 = vrot.slane %v6099, %v6126
        %v6128 = vcombine.high %v6106, %v6106
        %v6129 = vcombine.high %v6113, %v6113
        %v6130 = vcombine.high %v6120, %v6120
        %v6131 = vcombine.high %v6127, %v6127
        %v6133 = vcombine.low %v5884, %v5886
        %v6134 = vcombine.high %v5884, %v5886
        %v6136 = vunpack.c.l.s4 1966171168
        %v6137 = vunpack.c.0.s8 %v6136
        %v6138 = vlaneseq
        %v6139 = vshrl.u32 %v6138, 7
        %v6140 = vsub.s32 %v6137, %v6139
        %v6141 = vrot.slane %v6133, %v6140
        %v6143 = vunpack.c.l.s4 1966171168
        %v6144 = vunpack.c.0.s8 %v6143
        %v6145 = vlaneseq
        %v6146 = vshrl.u32 %v6145, 7
        %v6147 = vsub.s32 %v6144, %v6146
        %v6148 = vrot.slane %v6134, %v6147
        %v6149 = vcombine.high %v6141, %v6141
        %v6150 = vcombine.high %v6148, %v6148
        %v6152 = vunpack.c.l.s4 1966171168
        %v6153 = vunpack.c.0.s8 %v6152
        %v6154 = vlaneseq
        %v6155 = vshrl.u32 %v6154, 7
        %v6156 = vsub.s32 %v6153, %v6155
        %v6157 = vrot.slane %v6141, %v6156
        %v6159 = vunpack.c.l.s4 1966171168
        %v6160 = vunpack.c.0.s8 %v6159
        %v6161 = vlaneseq
        %v6162 = vshrl.u32 %v6161, 7
        %v6163 = vsub.s32 %v6160, %v6162
        %v6164 = vrot.slane %v6148, %v6163
        %v6166 = vunpack.c.l.s4 1966171168
        %v6167 = vunpack.c.0.s8 %v6166
        %v6168 = vlaneseq
        %v6169 = vshrl.u32 %v6168, 7
        %v6170 = vsub.s32 %v6167, %v6169
        %v6171 = vrot.slane %v6149, %v6170
        %v6173 = vunpack.c.l.s4 1966171168
        %v6174 = vunpack.c.0.s8 %v6173
        %v6175 = vlaneseq
        %v6176 = vshrl.u32 %v6175, 7
        %v6177 = vsub.s32 %v6174, %v6176
        %v6178 = vrot.slane %v6150, %v6177
        %v6179 = vcombine.high %v6157, %v6157
        %v6180 = vcombine.high %v6164, %v6164
        %v6181 = vcombine.high %v6171, %v6171
        %v6182 = vcombine.high %v6178, %v6178
        %v6184 = vcombine.low %v5886, %v5925
        %v6185 = vcombine.high %v5886, %v5925
        %v6187 = vunpack.c.l.s4 1966171168
        %v6188 = vunpack.c.0.s8 %v6187
        %v6189 = vlaneseq
        %v6190 = vshrl.u32 %v6189, 7
        %v6191 = vsub.s32 %v6188, %v6190
        %v6192 = vrot.slane %v6184, %v6191
        %v6194 = vunpack.c.l.s4 1966171168
        %v6195 = vunpack.c.0.s8 %v6194
        %v6196 = vlaneseq
        %v6197 = vshrl.u32 %v6196, 7
        %v6198 = vsub.s32 %v6195, %v6197
        %v6199 = vrot.slane %v6185, %v6198
        %v6200 = vcombine.high %v6192, %v6192
        %v6201 = vcombine.high %v6199, %v6199
        %v6203 = vunpack.c.l.s4 1966171168
        %v6204 = vunpack.c.0.s8 %v6203
        %v6205 = vlaneseq
        %v6206 = vshrl.u32 %v6205, 7
        %v6207 = vsub.s32 %v6204, %v6206
        %v6208 = vrot.slane %v6192, %v6207
        %v6210 = vunpack.c.l.s4 1966171168
        %v6211 = vunpack.c.0.s8 %v6210
        %v6212 = vlaneseq
        %v6213 = vshrl.u32 %v6212, 7
        %v6214 = vsub.s32 %v6211, %v6213
        %v6215 = vrot.slane %v6199, %v6214
        %v6217 = vunpack.c.l.s4 1966171168
        %v6218 = vunpack.c.0.s8 %v6217
        %v6219 = vlaneseq
        %v6220 = vshrl.u32 %v6219, 7
        %v6221 = vsub.s32 %v6218, %v6220
        %v6222 = vrot.slane %v6200, %v6221
        %v6224 = vunpack.c.l.s4 1966171168
        %v6225 = vunpack.c.0.s8 %v6224
        %v6226 = vlaneseq
        %v6227 = vshrl.u32 %v6226, 7
        %v6228 = vsub.s32 %v6225, %v6227
        %v6229 = vrot.slane %v6201, %v6228
        %v6230 = vcombine.high %v6208, %v6208
        %v6231 = vcombine.high %v6215, %v6215
        %v6232 = vcombine.high %v6222, %v6222
        %v6233 = vcombine.high %v6229, %v6229
        %v6235 = vcombine.low %v5925, %v5927
        %v6236 = vcombine.high %v5925, %v5927
        %v6238 = vunpack.c.l.s4 1966171168
        %v6239 = vunpack.c.0.s8 %v6238
        %v6240 = vlaneseq
        %v6241 = vshrl.u32 %v6240, 7
        %v6242 = vsub.s32 %v6239, %v6241
        %v6243 = vrot.slane %v6235, %v6242
        %v6245 = vunpack.c.l.s4 1966171168
        %v6246 = vunpack.c.0.s8 %v6245
        %v6247 = vlaneseq
        %v6248 = vshrl.u32 %v6247, 7
        %v6249 = vsub.s32 %v6246, %v6248
        %v6250 = vrot.slane %v6236, %v6249
        %v6251 = vcombine.high %v6243, %v6243
        %v6252 = vcombine.high %v6250, %v6250
        %v6254 = vunpack.c.l.s4 1966171168
        %v6255 = vunpack.c.0.s8 %v6254
        %v6256 = vlaneseq
        %v6257 = vshrl.u32 %v6256, 7
        %v6258 = vsub.s32 %v6255, %v6257
        %v6259 = vrot.slane %v6243, %v6258
        %v6261 = vunpack.c.l.s4 1966171168
        %v6262 = vunpack.c.0.s8 %v6261
        %v6263 = vlaneseq
        %v6264 = vshrl.u32 %v6263, 7
        %v6265 = vsub.s32 %v6262, %v6264
        %v6266 = vrot.slane %v6250, %v6265
        %v6268 = vunpack.c.l.s4 1966171168
        %v6269 = vunpack.c.0.s8 %v6268
        %v6270 = vlaneseq
        %v6271 = vshrl.u32 %v6270, 7
        %v6272 = vsub.s32 %v6269, %v6271
        %v6273 = vrot.slane %v6251, %v6272
        %v6275 = vunpack.c.l.s4 1966171168
        %v6276 = vunpack.c.0.s8 %v6275
        %v6277 = vlaneseq
        %v6278 = vshrl.u32 %v6277, 7
        %v6279 = vsub.s32 %v6276, %v6278
        %v6280 = vrot.slane %v6252, %v6279
        %v6281 = vcombine.high %v6259, %v6259
        %v6282 = vcombine.high %v6266, %v6266
        %v6283 = vcombine.high %v6273, %v6273
        %v6284 = vcombine.high %v6280, %v6280
        %v6286 = vcombine.low %v5927, %v5966
        %v6287 = vcombine.high %v5927, %v5966
        %v6289 = vunpack.c.l.s4 1966171168
        %v6290 = vunpack.c.0.s8 %v6289
        %v6291 = vlaneseq
        %v6292 = vshrl.u32 %v6291, 7
        %v6293 = vsub.s32 %v6290, %v6292
        %v6294 = vrot.slane %v6286, %v6293
        %v6296 = vunpack.c.l.s4 1966171168
        %v6297 = vunpack.c.0.s8 %v6296
        %v6298 = vlaneseq
        %v6299 = vshrl.u32 %v6298, 7
        %v6300 = vsub.s32 %v6297, %v6299
        %v6301 = vrot.slane %v6287, %v6300
        %v6302 = vcombine.high %v6294, %v6294
        %v6303 = vcombine.high %v6301, %v6301
        %v6305 = vunpack.c.l.s4 1966171168
        %v6306 = vunpack.c.0.s8 %v6305
        %v6307 = vlaneseq
        %v6308 = vshrl.u32 %v6307, 7
        %v6309 = vsub.s32 %v6306, %v6308
        %v6310 = vrot.slane %v6294, %v6309
        %v6312 = vunpack.c.l.s4 1966171168
        %v6313 = vunpack.c.0.s8 %v6312
        %v6314 = vlaneseq
        %v6315 = vshrl.u32 %v6314, 7
        %v6316 = vsub.s32 %v6313, %v6315
        %v6317 = vrot.slane %v6301, %v6316
        %v6319 = vunpack.c.l.s4 1966171168
        %v6320 = vunpack.c.0.s8 %v6319
        %v6321 = vlaneseq
        %v6322 = vshrl.u32 %v6321, 7
        %v6323 = vsub.s32 %v6320, %v6322
        %v6324 = vrot.slane %v6302, %v6323
        %v6326 = vunpack.c.l.s4 1966171168
        %v6327 = vunpack.c.0.s8 %v6326
        %v6328 = vlaneseq
        %v6329 = vshrl.u32 %v6328, 7
        %v6330 = vsub.s32 %v6327, %v6329
        %v6331 = vrot.slane %v6303, %v6330
        %v6332 = vcombine.high %v6310, %v6310
        %v6333 = vcombine.high %v6317, %v6317
        %v6334 = vcombine.high %v6324, %v6324
        %v6335 = vcombine.high %v6331, %v6331
        %v6337 = vcombine.low %v5966, %v5968
        %v6338 = vcombine.high %v5966, %v5968
        %v6340 = vunpack.c.l.s4 1966171168
        %v6341 = vunpack.c.0.s8 %v6340
        %v6342 = vlaneseq
        %v6343 = vshrl.u32 %v6342, 7
        %v6344 = vsub.s32 %v6341, %v6343
        %v6345 = vrot.slane %v6337, %v6344
        %v6347 = vunpack.c.l.s4 1966171168
        %v6348 = vunpack.c.0.s8 %v6347
        %v6349 = vlaneseq
        %v6350 = vshrl.u32 %v6349, 7
        %v6351 = vsub.s32 %v6348, %v6350
        %v6352 = vrot.slane %v6338, %v6351
        %v6353 = vcombine.high %v6345, %v6345
        %v6354 = vcombine.high %v6352, %v6352
        %v6356 = vunpack.c.l.s4 1966171168
        %v6357 = vunpack.c.0.s8 %v6356
        %v6358 = vlaneseq
        %v6359 = vshrl.u32 %v6358, 7
        %v6360 = vsub.s32 %v6357, %v6359
        %v6361 = vrot.slane %v6345, %v6360
        %v6363 = vunpack.c.l.s4 1966171168
        %v6364 = vunpack.c.0.s8 %v6363
        %v6365 = vlaneseq
        %v6366 = vshrl.u32 %v6365, 7
        %v6367 = vsub.s32 %v6364, %v6366
        %v6368 = vrot.slane %v6352, %v6367
        %v6370 = vunpack.c.l.s4 1966171168
        %v6371 = vunpack.c.0.s8 %v6370
        %v6372 = vlaneseq
        %v6373 = vshrl.u32 %v6372, 7
        %v6374 = vsub.s32 %v6371, %v6373
        %v6375 = vrot.slane %v6353, %v6374
        %v6377 = vunpack.c.l.s4 1966171168
        %v6378 = vunpack.c.0.s8 %v6377
        %v6379 = vlaneseq
        %v6380 = vshrl.u32 %v6379, 7
        %v6381 = vsub.s32 %v6378, %v6380
        %v6382 = vrot.slane %v6354, %v6381
        %v6383 = vcombine.high %v6361, %v6361
        %v6384 = vcombine.high %v6368, %v6368
        %v6385 = vcombine.high %v6375, %v6375
        %v6386 = vcombine.high %v6382, %v6382
        %v6387 = vlaneseq
        %v6388 = vshrl.u32 %v6387, 7
        %v6389 = vsub.s32 0, %v6388
        %v6390 = vrot.slane %v6055, %v6389
        %v6391 = vlaneseq
        %v6392 = vshrl.u32 %v6391, 7
        %v6393 = vsub.s32 1, %v6392
        %v6394 = vrot.slane %v6055, %v6393
        %v6395 = vlaneseq
        %v6396 = vshrl.u32 %v6395, 7
        %v6397 = vsub.s32 0, %v6396
        %v6398 = vrot.slane %v6069, %v6397
        %v6399 = vlaneseq
        %v6400 = vshrl.u32 %v6399, 7
        %v6401 = vsub.s32 1, %v6400
        %v6402 = vrot.slane %v6069, %v6401
        %v6403 = vlaneseq
        %v6404 = vshrl.u32 %v6403, 7
        %v6405 = vsub.s32 0, %v6404
        %v6406 = vrot.slane %v6077, %v6405
        %v6407 = vlaneseq
        %v6408 = vshrl.u32 %v6407, 7
        %v6409 = vsub.s32 1, %v6408
        %v6410 = vrot.slane %v6077, %v6409
        %v6411 = vlaneseq
        %v6412 = vshrl.u32 %v6411, 7
        %v6413 = vsub.s32 0, %v6412
        %v6414 = vrot.slane %v6079, %v6413
        %v6415 = vlaneseq
        %v6416 = vshrl.u32 %v6415, 7
        %v6417 = vsub.s32 1, %v6416
        %v6418 = vrot.slane %v6079, %v6417
        %v6419 = vlaneseq
        %v6420 = vshrl.u32 %v6419, 7
        %v6421 = vsub.s32 0, %v6420
        %v6422 = vrot.slane %v6062, %v6421
        %v6423 = vlaneseq
        %v6424 = vshrl.u32 %v6423, 7
        %v6425 = vsub.s32 1, %v6424
        %v6426 = vrot.slane %v6062, %v6425
        %v6427 = vlaneseq
        %v6428 = vshrl.u32 %v6427, 7
        %v6429 = vsub.s32 0, %v6428
        %v6430 = vrot.slane %v6076, %v6429
        %v6431 = vlaneseq
        %v6432 = vshrl.u32 %v6431, 7
        %v6433 = vsub.s32 1, %v6432
        %v6434 = vrot.slane %v6076, %v6433
        %v6435 = vlaneseq
        %v6436 = vshrl.u32 %v6435, 7
        %v6437 = vsub.s32 0, %v6436
        %v6438 = vrot.slane %v6078, %v6437
        %v6439 = vlaneseq
        %v6440 = vshrl.u32 %v6439, 7
        %v6441 = vsub.s32 1, %v6440
        %v6442 = vrot.slane %v6078, %v6441
        %v6443 = vlaneseq
        %v6444 = vshrl.u32 %v6443, 7
        %v6445 = vsub.s32 0, %v6444
        %v6446 = vrot.slane %v6080, %v6445
        %v6447 = vlaneseq
        %v6448 = vshrl.u32 %v6447, 7
        %v6449 = vsub.s32 1, %v6448
        %v6450 = vrot.slane %v6080, %v6449
        %6451 = vrot.lane.b32.xlu0 %v6390, 8
        %v6452 = vpop.permute.xlu0 %6451
        %6453 = vrot.lane.b32.xlu0 %v6394, 8
        %v6454 = vpop.permute.xlu0 %6453
        %6455 = vrot.lane.b32.xlu0 %v6398, 8
        %v6456 = vpop.permute.xlu0 %6455
        %6457 = vrot.lane.b32.xlu0 %v6402, 8
        %v6458 = vpop.permute.xlu0 %6457
        %6459 = vrot.lane.b32.xlu0 %v6406, 8
        %v6460 = vpop.permute.xlu0 %6459
        %6461 = vrot.lane.b32.xlu0 %v6410, 8
        %v6462 = vpop.permute.xlu0 %6461
        %6463 = vrot.lane.b32.xlu0 %v6414, 8
        %v6464 = vpop.permute.xlu0 %6463
        %6465 = vrot.lane.b32.xlu0 %v6418, 8
        %v6466 = vpop.permute.xlu0 %6465
        %6467 = vrot.lane.b32.xlu0 %v6422, 8
        %v6468 = vpop.permute.xlu0 %6467
        %6469 = vrot.lane.b32.xlu0 %v6426, 8
        %v6470 = vpop.permute.xlu0 %6469
        %6471 = vrot.lane.b32.xlu0 %v6430, 8
        %v6472 = vpop.permute.xlu0 %6471
        %6473 = vrot.lane.b32.xlu0 %v6434, 8
        %v6474 = vpop.permute.xlu0 %6473
        %6475 = vrot.lane.b32.xlu0 %v6438, 8
        %v6476 = vpop.permute.xlu0 %6475
        %6477 = vrot.lane.b32.xlu0 %v6442, 8
        %v6478 = vpop.permute.xlu0 %6477
        %6479 = vrot.lane.b32.xlu0 %v6446, 8
        %v6480 = vpop.permute.xlu0 %6479
        %6481 = vrot.lane.b32.xlu0 %v6450, 8
        %v6482 = vpop.permute.xlu0 %6481
        %v6483 = vsel %vm3669, %v6452, %v6454
        %v6484 = vsel %vm3669, %v6456, %v6458
        %v6485 = vsel %vm3669, %v6460, %v6462
        %v6486 = vsel %vm3669, %v6464, %v6466
        %v6487 = vsel %vm3669, %v6468, %v6470
        %v6488 = vsel %vm3669, %v6472, %v6474
        %v6489 = vsel %vm3669, %v6476, %v6478
        %v6490 = vsel %vm3669, %v6480, %v6482
        %v6499 = vlaneseq
        %v6500 = vshrl.u32 %v6499, 7
        %v6501 = vsub.s32 0, %v6500
        %v6502 = vrot.slane %v6106, %v6501
        %v6503 = vlaneseq
        %v6504 = vshrl.u32 %v6503, 7
        %v6505 = vsub.s32 1, %v6504
        %v6506 = vrot.slane %v6106, %v6505
        %v6507 = vlaneseq
        %v6508 = vshrl.u32 %v6507, 7
        %v6509 = vsub.s32 0, %v6508
        %v6510 = vrot.slane %v6120, %v6509
        %v6511 = vlaneseq
        %v6512 = vshrl.u32 %v6511, 7
        %v6513 = vsub.s32 1, %v6512
        %v6514 = vrot.slane %v6120, %v6513
        %v6515 = vlaneseq
        %v6516 = vshrl.u32 %v6515, 7
        %v6517 = vsub.s32 0, %v6516
        %v6518 = vrot.slane %v6128, %v6517
        %v6519 = vlaneseq
        %v6520 = vshrl.u32 %v6519, 7
        %v6521 = vsub.s32 1, %v6520
        %v6522 = vrot.slane %v6128, %v6521
        %v6523 = vlaneseq
        %v6524 = vshrl.u32 %v6523, 7
        %v6525 = vsub.s32 0, %v6524
        %v6526 = vrot.slane %v6130, %v6525
        %v6527 = vlaneseq
        %v6528 = vshrl.u32 %v6527, 7
        %v6529 = vsub.s32 1, %v6528
        %v6530 = vrot.slane %v6130, %v6529
        %v6531 = vlaneseq
        %v6532 = vshrl.u32 %v6531, 7
        %v6533 = vsub.s32 0, %v6532
        %v6534 = vrot.slane %v6113, %v6533
        %v6535 = vlaneseq
        %v6536 = vshrl.u32 %v6535, 7
        %v6537 = vsub.s32 1, %v6536
        %v6538 = vrot.slane %v6113, %v6537
        %v6539 = vlaneseq
        %v6540 = vshrl.u32 %v6539, 7
        %v6541 = vsub.s32 0, %v6540
        %v6542 = vrot.slane %v6127, %v6541
        %v6543 = vlaneseq
        %v6544 = vshrl.u32 %v6543, 7
        %v6545 = vsub.s32 1, %v6544
        %v6546 = vrot.slane %v6127, %v6545
        %v6547 = vlaneseq
        %v6548 = vshrl.u32 %v6547, 7
        %v6549 = vsub.s32 0, %v6548
        %v6550 = vrot.slane %v6129, %v6549
        %v6551 = vlaneseq
        %v6552 = vshrl.u32 %v6551, 7
        %v6553 = vsub.s32 1, %v6552
        %v6554 = vrot.slane %v6129, %v6553
        %v6555 = vlaneseq
        %v6556 = vshrl.u32 %v6555, 7
        %v6557 = vsub.s32 0, %v6556
        %v6558 = vrot.slane %v6131, %v6557
        %v6559 = vlaneseq
        %v6560 = vshrl.u32 %v6559, 7
        %v6561 = vsub.s32 1, %v6560
        %v6562 = vrot.slane %v6131, %v6561
        %6563 = vrot.lane.b32.xlu0 %v6502, 16
        %v6564 = vpop.permute.xlu0 %6563
        %6565 = vrot.lane.b32.xlu0 %v6506, 16
        %v6566 = vpop.permute.xlu0 %6565
        %6567 = vrot.lane.b32.xlu0 %v6510, 16
        %v6568 = vpop.permute.xlu0 %6567
        %6569 = vrot.lane.b32.xlu0 %v6514, 16
        %v6570 = vpop.permute.xlu0 %6569
        %6571 = vrot.lane.b32.xlu0 %v6518, 16
        %v6572 = vpop.permute.xlu0 %6571
        %6573 = vrot.lane.b32.xlu0 %v6522, 16
        %v6574 = vpop.permute.xlu0 %6573
        %6575 = vrot.lane.b32.xlu0 %v6526, 16
        %v6576 = vpop.permute.xlu0 %6575
        %6577 = vrot.lane.b32.xlu0 %v6530, 16
        %v6578 = vpop.permute.xlu0 %6577
        %6579 = vrot.lane.b32.xlu0 %v6534, 16
        %v6580 = vpop.permute.xlu0 %6579
        %6581 = vrot.lane.b32.xlu0 %v6538, 16
        %v6582 = vpop.permute.xlu0 %6581
        %6583 = vrot.lane.b32.xlu0 %v6542, 16
        %v6584 = vpop.permute.xlu0 %6583
        %6585 = vrot.lane.b32.xlu0 %v6546, 16
        %v6586 = vpop.permute.xlu0 %6585
        %6587 = vrot.lane.b32.xlu0 %v6550, 16
        %v6588 = vpop.permute.xlu0 %6587
        %6589 = vrot.lane.b32.xlu0 %v6554, 16
        %v6590 = vpop.permute.xlu0 %6589
        %6591 = vrot.lane.b32.xlu0 %v6558, 16
        %v6592 = vpop.permute.xlu0 %6591
        %6593 = vrot.lane.b32.xlu0 %v6562, 16
        %v6594 = vpop.permute.xlu0 %6593
        %v6595 = vsel %vm3782, %v6564, %v6566
        %v6596 = vsel %vm3782, %v6568, %v6570
        %v6597 = vsel %vm3782, %v6572, %v6574
        %v6598 = vsel %vm3782, %v6576, %v6578
        %v6599 = vsel %vm3782, %v6580, %v6582
        %v6600 = vsel %vm3782, %v6584, %v6586
        %v6601 = vsel %vm3782, %v6588, %v6590
        %v6602 = vsel %vm3782, %v6592, %v6594
        %v6611 = vlaneseq
        %v6612 = vshrl.u32 %v6611, 7
        %v6613 = vsub.s32 0, %v6612
        %v6614 = vrot.slane %v6157, %v6613
        %v6615 = vlaneseq
        %v6616 = vshrl.u32 %v6615, 7
        %v6617 = vsub.s32 1, %v6616
        %v6618 = vrot.slane %v6157, %v6617
        %v6619 = vlaneseq
        %v6620 = vshrl.u32 %v6619, 7
        %v6621 = vsub.s32 0, %v6620
        %v6622 = vrot.slane %v6171, %v6621
        %v6623 = vlaneseq
        %v6624 = vshrl.u32 %v6623, 7
        %v6625 = vsub.s32 1, %v6624
        %v6626 = vrot.slane %v6171, %v6625
        %v6627 = vlaneseq
        %v6628 = vshrl.u32 %v6627, 7
        %v6629 = vsub.s32 0, %v6628
        %v6630 = vrot.slane %v6179, %v6629
        %v6631 = vlaneseq
        %v6632 = vshrl.u32 %v6631, 7
        %v6633 = vsub.s32 1, %v6632
        %v6634 = vrot.slane %v6179, %v6633
        %v6635 = vlaneseq
        %v6636 = vshrl.u32 %v6635, 7
        %v6637 = vsub.s32 0, %v6636
        %v6638 = vrot.slane %v6181, %v6637
        %v6639 = vlaneseq
        %v6640 = vshrl.u32 %v6639, 7
        %v6641 = vsub.s32 1, %v6640
        %v6642 = vrot.slane %v6181, %v6641
        %v6643 = vlaneseq
        %v6644 = vshrl.u32 %v6643, 7
        %v6645 = vsub.s32 0, %v6644
        %v6646 = vrot.slane %v6164, %v6645
        %v6647 = vlaneseq
        %v6648 = vshrl.u32 %v6647, 7
        %v6649 = vsub.s32 1, %v6648
        %v6650 = vrot.slane %v6164, %v6649
        %v6651 = vlaneseq
        %v6652 = vshrl.u32 %v6651, 7
        %v6653 = vsub.s32 0, %v6652
        %v6654 = vrot.slane %v6178, %v6653
        %v6655 = vlaneseq
        %v6656 = vshrl.u32 %v6655, 7
        %v6657 = vsub.s32 1, %v6656
        %v6658 = vrot.slane %v6178, %v6657
        %v6659 = vlaneseq
        %v6660 = vshrl.u32 %v6659, 7
        %v6661 = vsub.s32 0, %v6660
        %v6662 = vrot.slane %v6180, %v6661
        %v6663 = vlaneseq
        %v6664 = vshrl.u32 %v6663, 7
        %v6665 = vsub.s32 1, %v6664
        %v6666 = vrot.slane %v6180, %v6665
        %v6667 = vlaneseq
        %v6668 = vshrl.u32 %v6667, 7
        %v6669 = vsub.s32 0, %v6668
        %v6670 = vrot.slane %v6182, %v6669
        %v6671 = vlaneseq
        %v6672 = vshrl.u32 %v6671, 7
        %v6673 = vsub.s32 1, %v6672
        %v6674 = vrot.slane %v6182, %v6673
        %6675 = vrot.lane.b32.xlu0 %v6614, 24
        %v6676 = vpop.permute.xlu0 %6675
        %6677 = vrot.lane.b32.xlu0 %v6618, 24
        %v6678 = vpop.permute.xlu0 %6677
        %6679 = vrot.lane.b32.xlu0 %v6622, 24
        %v6680 = vpop.permute.xlu0 %6679
        %6681 = vrot.lane.b32.xlu0 %v6626, 24
        %v6682 = vpop.permute.xlu0 %6681
        %6683 = vrot.lane.b32.xlu0 %v6630, 24
        %v6684 = vpop.permute.xlu0 %6683
        %6685 = vrot.lane.b32.xlu0 %v6634, 24
        %v6686 = vpop.permute.xlu0 %6685
        %6687 = vrot.lane.b32.xlu0 %v6638, 24
        %v6688 = vpop.permute.xlu0 %6687
        %6689 = vrot.lane.b32.xlu0 %v6642, 24
        %v6690 = vpop.permute.xlu0 %6689
        %6691 = vrot.lane.b32.xlu0 %v6646, 24
        %v6692 = vpop.permute.xlu0 %6691
        %6693 = vrot.lane.b32.xlu0 %v6650, 24
        %v6694 = vpop.permute.xlu0 %6693
        %6695 = vrot.lane.b32.xlu0 %v6654, 24
        %v6696 = vpop.permute.xlu0 %6695
        %6697 = vrot.lane.b32.xlu0 %v6658, 24
        %v6698 = vpop.permute.xlu0 %6697
        %6699 = vrot.lane.b32.xlu0 %v6662, 24
        %v6700 = vpop.permute.xlu0 %6699
        %6701 = vrot.lane.b32.xlu0 %v6666, 24
        %v6702 = vpop.permute.xlu0 %6701
        %6703 = vrot.lane.b32.xlu0 %v6670, 24
        %v6704 = vpop.permute.xlu0 %6703
        %6705 = vrot.lane.b32.xlu0 %v6674, 24
        %v6706 = vpop.permute.xlu0 %6705
        %v6707 = vsel %vm3895, %v6676, %v6678
        %v6708 = vsel %vm3895, %v6680, %v6682
        %v6709 = vsel %vm3895, %v6684, %v6686
        %v6710 = vsel %vm3895, %v6688, %v6690
        %v6711 = vsel %vm3895, %v6692, %v6694
        %v6712 = vsel %vm3895, %v6696, %v6698
        %v6713 = vsel %vm3895, %v6700, %v6702
        %v6714 = vsel %vm3895, %v6704, %v6706
        %v6723 = vlaneseq
        %v6724 = vshrl.u32 %v6723, 7
        %v6725 = vsub.s32 0, %v6724
        %v6726 = vrot.slane %v6208, %v6725
        %v6727 = vlaneseq
        %v6728 = vshrl.u32 %v6727, 7
        %v6729 = vsub.s32 1, %v6728
        %v6730 = vrot.slane %v6208, %v6729
        %v6731 = vlaneseq
        %v6732 = vshrl.u32 %v6731, 7
        %v6733 = vsub.s32 0, %v6732
        %v6734 = vrot.slane %v6222, %v6733
        %v6735 = vlaneseq
        %v6736 = vshrl.u32 %v6735, 7
        %v6737 = vsub.s32 1, %v6736
        %v6738 = vrot.slane %v6222, %v6737
        %v6739 = vlaneseq
        %v6740 = vshrl.u32 %v6739, 7
        %v6741 = vsub.s32 0, %v6740
        %v6742 = vrot.slane %v6230, %v6741
        %v6743 = vlaneseq
        %v6744 = vshrl.u32 %v6743, 7
        %v6745 = vsub.s32 1, %v6744
        %v6746 = vrot.slane %v6230, %v6745
        %v6747 = vlaneseq
        %v6748 = vshrl.u32 %v6747, 7
        %v6749 = vsub.s32 0, %v6748
        %v6750 = vrot.slane %v6232, %v6749
        %v6751 = vlaneseq
        %v6752 = vshrl.u32 %v6751, 7
        %v6753 = vsub.s32 1, %v6752
        %v6754 = vrot.slane %v6232, %v6753
        %v6755 = vlaneseq
        %v6756 = vshrl.u32 %v6755, 7
        %v6757 = vsub.s32 0, %v6756
        %v6758 = vrot.slane %v6215, %v6757
        %v6759 = vlaneseq
        %v6760 = vshrl.u32 %v6759, 7
        %v6761 = vsub.s32 1, %v6760
        %v6762 = vrot.slane %v6215, %v6761
        %v6763 = vlaneseq
        %v6764 = vshrl.u32 %v6763, 7
        %v6765 = vsub.s32 0, %v6764
        %v6766 = vrot.slane %v6229, %v6765
        %v6767 = vlaneseq
        %v6768 = vshrl.u32 %v6767, 7
        %v6769 = vsub.s32 1, %v6768
        %v6770 = vrot.slane %v6229, %v6769
        %v6771 = vlaneseq
        %v6772 = vshrl.u32 %v6771, 7
        %v6773 = vsub.s32 0, %v6772
        %v6774 = vrot.slane %v6231, %v6773
        %v6775 = vlaneseq
        %v6776 = vshrl.u32 %v6775, 7
        %v6777 = vsub.s32 1, %v6776
        %v6778 = vrot.slane %v6231, %v6777
        %v6779 = vlaneseq
        %v6780 = vshrl.u32 %v6779, 7
        %v6781 = vsub.s32 0, %v6780
        %v6782 = vrot.slane %v6233, %v6781
        %v6783 = vlaneseq
        %v6784 = vshrl.u32 %v6783, 7
        %v6785 = vsub.s32 1, %v6784
        %v6786 = vrot.slane %v6233, %v6785
        %6787 = vrot.lane.b32.xlu0 %v6726, 32
        %v6788 = vpop.permute.xlu0 %6787
        %6789 = vrot.lane.b32.xlu0 %v6730, 32
        %v6790 = vpop.permute.xlu0 %6789
        %6791 = vrot.lane.b32.xlu0 %v6734, 32
        %v6792 = vpop.permute.xlu0 %6791
        %6793 = vrot.lane.b32.xlu0 %v6738, 32
        %v6794 = vpop.permute.xlu0 %6793
        %6795 = vrot.lane.b32.xlu0 %v6742, 32
        %v6796 = vpop.permute.xlu0 %6795
        %6797 = vrot.lane.b32.xlu0 %v6746, 32
        %v6798 = vpop.permute.xlu0 %6797
        %6799 = vrot.lane.b32.xlu0 %v6750, 32
        %v6800 = vpop.permute.xlu0 %6799
        %6801 = vrot.lane.b32.xlu0 %v6754, 32
        %v6802 = vpop.permute.xlu0 %6801
        %6803 = vrot.lane.b32.xlu0 %v6758, 32
        %v6804 = vpop.permute.xlu0 %6803
        %6805 = vrot.lane.b32.xlu0 %v6762, 32
        %v6806 = vpop.permute.xlu0 %6805
        %6807 = vrot.lane.b32.xlu0 %v6766, 32
        %v6808 = vpop.permute.xlu0 %6807
        %6809 = vrot.lane.b32.xlu0 %v6770, 32
        %v6810 = vpop.permute.xlu0 %6809
        %6811 = vrot.lane.b32.xlu0 %v6774, 32
        %v6812 = vpop.permute.xlu0 %6811
        %6813 = vrot.lane.b32.xlu0 %v6778, 32
        %v6814 = vpop.permute.xlu0 %6813
        %6815 = vrot.lane.b32.xlu0 %v6782, 32
        %v6816 = vpop.permute.xlu0 %6815
        %6817 = vrot.lane.b32.xlu0 %v6786, 32
        %v6818 = vpop.permute.xlu0 %6817
        %v6819 = vsel %vm786, %v6788, %v6790
        %v6820 = vsel %vm786, %v6792, %v6794
        %v6821 = vsel %vm786, %v6796, %v6798
        %v6822 = vsel %vm786, %v6800, %v6802
        %v6823 = vsel %vm786, %v6804, %v6806
        %v6824 = vsel %vm786, %v6808, %v6810
        %v6825 = vsel %vm786, %v6812, %v6814
        %v6826 = vsel %vm786, %v6816, %v6818
        %v6835 = vlaneseq
        %v6836 = vshrl.u32 %v6835, 7
        %v6837 = vsub.s32 0, %v6836
        %v6838 = vrot.slane %v6259, %v6837
        %v6839 = vlaneseq
        %v6840 = vshrl.u32 %v6839, 7
        %v6841 = vsub.s32 1, %v6840
        %v6842 = vrot.slane %v6259, %v6841
        %v6843 = vlaneseq
        %v6844 = vshrl.u32 %v6843, 7
        %v6845 = vsub.s32 0, %v6844
        %v6846 = vrot.slane %v6273, %v6845
        %v6847 = vlaneseq
        %v6848 = vshrl.u32 %v6847, 7
        %v6849 = vsub.s32 1, %v6848
        %v6850 = vrot.slane %v6273, %v6849
        %v6851 = vlaneseq
        %v6852 = vshrl.u32 %v6851, 7
        %v6853 = vsub.s32 0, %v6852
        %v6854 = vrot.slane %v6281, %v6853
        %v6855 = vlaneseq
        %v6856 = vshrl.u32 %v6855, 7
        %v6857 = vsub.s32 1, %v6856
        %v6858 = vrot.slane %v6281, %v6857
        %v6859 = vlaneseq
        %v6860 = vshrl.u32 %v6859, 7
        %v6861 = vsub.s32 0, %v6860
        %v6862 = vrot.slane %v6283, %v6861
        %v6863 = vlaneseq
        %v6864 = vshrl.u32 %v6863, 7
        %v6865 = vsub.s32 1, %v6864
        %v6866 = vrot.slane %v6283, %v6865
        %v6867 = vlaneseq
        %v6868 = vshrl.u32 %v6867, 7
        %v6869 = vsub.s32 0, %v6868
        %v6870 = vrot.slane %v6266, %v6869
        %v6871 = vlaneseq
        %v6872 = vshrl.u32 %v6871, 7
        %v6873 = vsub.s32 1, %v6872
        %v6874 = vrot.slane %v6266, %v6873
        %v6875 = vlaneseq
        %v6876 = vshrl.u32 %v6875, 7
        %v6877 = vsub.s32 0, %v6876
        %v6878 = vrot.slane %v6280, %v6877
        %v6879 = vlaneseq
        %v6880 = vshrl.u32 %v6879, 7
        %v6881 = vsub.s32 1, %v6880
        %v6882 = vrot.slane %v6280, %v6881
        %v6883 = vlaneseq
        %v6884 = vshrl.u32 %v6883, 7
        %v6885 = vsub.s32 0, %v6884
        %v6886 = vrot.slane %v6282, %v6885
        %v6887 = vlaneseq
        %v6888 = vshrl.u32 %v6887, 7
        %v6889 = vsub.s32 1, %v6888
        %v6890 = vrot.slane %v6282, %v6889
        %v6891 = vlaneseq
        %v6892 = vshrl.u32 %v6891, 7
        %v6893 = vsub.s32 0, %v6892
        %v6894 = vrot.slane %v6284, %v6893
        %v6895 = vlaneseq
        %v6896 = vshrl.u32 %v6895, 7
        %v6897 = vsub.s32 1, %v6896
        %v6898 = vrot.slane %v6284, %v6897
        %6899 = vrot.lane.b32.xlu0 %v6838, 40
        %v6900 = vpop.permute.xlu0 %6899
        %6901 = vrot.lane.b32.xlu0 %v6842, 40
        %v6902 = vpop.permute.xlu0 %6901
        %6903 = vrot.lane.b32.xlu0 %v6846, 40
        %v6904 = vpop.permute.xlu0 %6903
        %6905 = vrot.lane.b32.xlu0 %v6850, 40
        %v6906 = vpop.permute.xlu0 %6905
        %6907 = vrot.lane.b32.xlu0 %v6854, 40
        %v6908 = vpop.permute.xlu0 %6907
        %6909 = vrot.lane.b32.xlu0 %v6858, 40
        %v6910 = vpop.permute.xlu0 %6909
        %6911 = vrot.lane.b32.xlu0 %v6862, 40
        %v6912 = vpop.permute.xlu0 %6911
        %6913 = vrot.lane.b32.xlu0 %v6866, 40
        %v6914 = vpop.permute.xlu0 %6913
        %6915 = vrot.lane.b32.xlu0 %v6870, 40
        %v6916 = vpop.permute.xlu0 %6915
        %6917 = vrot.lane.b32.xlu0 %v6874, 40
        %v6918 = vpop.permute.xlu0 %6917
        %6919 = vrot.lane.b32.xlu0 %v6878, 40
        %v6920 = vpop.permute.xlu0 %6919
        %6921 = vrot.lane.b32.xlu0 %v6882, 40
        %v6922 = vpop.permute.xlu0 %6921
        %6923 = vrot.lane.b32.xlu0 %v6886, 40
        %v6924 = vpop.permute.xlu0 %6923
        %6925 = vrot.lane.b32.xlu0 %v6890, 40
        %v6926 = vpop.permute.xlu0 %6925
        %6927 = vrot.lane.b32.xlu0 %v6894, 40
        %v6928 = vpop.permute.xlu0 %6927
        %6929 = vrot.lane.b32.xlu0 %v6898, 40
        %v6930 = vpop.permute.xlu0 %6929
        %v6931 = vsel %vm4120, %v6900, %v6902
        %v6932 = vsel %vm4120, %v6904, %v6906
        %v6933 = vsel %vm4120, %v6908, %v6910
        %v6934 = vsel %vm4120, %v6912, %v6914
        %v6935 = vsel %vm4120, %v6916, %v6918
        %v6936 = vsel %vm4120, %v6920, %v6922
        %v6937 = vsel %vm4120, %v6924, %v6926
        %v6938 = vsel %vm4120, %v6928, %v6930
        %v6947 = vlaneseq
        %v6948 = vshrl.u32 %v6947, 7
        %v6949 = vsub.s32 0, %v6948
        %v6950 = vrot.slane %v6310, %v6949
        %v6951 = vlaneseq
        %v6952 = vshrl.u32 %v6951, 7
        %v6953 = vsub.s32 1, %v6952
        %v6954 = vrot.slane %v6310, %v6953
        %v6955 = vlaneseq
        %v6956 = vshrl.u32 %v6955, 7
        %v6957 = vsub.s32 0, %v6956
        %v6958 = vrot.slane %v6324, %v6957
        %v6959 = vlaneseq
        %v6960 = vshrl.u32 %v6959, 7
        %v6961 = vsub.s32 1, %v6960
        %v6962 = vrot.slane %v6324, %v6961
        %v6963 = vlaneseq
        %v6964 = vshrl.u32 %v6963, 7
        %v6965 = vsub.s32 0, %v6964
        %v6966 = vrot.slane %v6332, %v6965
        %v6967 = vlaneseq
        %v6968 = vshrl.u32 %v6967, 7
        %v6969 = vsub.s32 1, %v6968
        %v6970 = vrot.slane %v6332, %v6969
        %v6971 = vlaneseq
        %v6972 = vshrl.u32 %v6971, 7
        %v6973 = vsub.s32 0, %v6972
        %v6974 = vrot.slane %v6334, %v6973
        %v6975 = vlaneseq
        %v6976 = vshrl.u32 %v6975, 7
        %v6977 = vsub.s32 1, %v6976
        %v6978 = vrot.slane %v6334, %v6977
        %v6979 = vlaneseq
        %v6980 = vshrl.u32 %v6979, 7
        %v6981 = vsub.s32 0, %v6980
        %v6982 = vrot.slane %v6317, %v6981
        %v6983 = vlaneseq
        %v6984 = vshrl.u32 %v6983, 7
        %v6985 = vsub.s32 1, %v6984
        %v6986 = vrot.slane %v6317, %v6985
        %v6987 = vlaneseq
        %v6988 = vshrl.u32 %v6987, 7
        %v6989 = vsub.s32 0, %v6988
        %v6990 = vrot.slane %v6331, %v6989
        %v6991 = vlaneseq
        %v6992 = vshrl.u32 %v6991, 7
        %v6993 = vsub.s32 1, %v6992
        %v6994 = vrot.slane %v6331, %v6993
        %v6995 = vlaneseq
        %v6996 = vshrl.u32 %v6995, 7
        %v6997 = vsub.s32 0, %v6996
        %v6998 = vrot.slane %v6333, %v6997
        %v6999 = vlaneseq
        %v7000 = vshrl.u32 %v6999, 7
        %v7001 = vsub.s32 1, %v7000
        %v7002 = vrot.slane %v6333, %v7001
        %v7003 = vlaneseq
        %v7004 = vshrl.u32 %v7003, 7
        %v7005 = vsub.s32 0, %v7004
        %v7006 = vrot.slane %v6335, %v7005
        %v7007 = vlaneseq
        %v7008 = vshrl.u32 %v7007, 7
        %v7009 = vsub.s32 1, %v7008
        %v7010 = vrot.slane %v6335, %v7009
        %7011 = vrot.lane.b32.xlu0 %v6950, 48
        %v7012 = vpop.permute.xlu0 %7011
        %7013 = vrot.lane.b32.xlu0 %v6954, 48
        %v7014 = vpop.permute.xlu0 %7013
        %7015 = vrot.lane.b32.xlu0 %v6958, 48
        %v7016 = vpop.permute.xlu0 %7015
        %7017 = vrot.lane.b32.xlu0 %v6962, 48
        %v7018 = vpop.permute.xlu0 %7017
        %7019 = vrot.lane.b32.xlu0 %v6966, 48
        %v7020 = vpop.permute.xlu0 %7019
        %7021 = vrot.lane.b32.xlu0 %v6970, 48
        %v7022 = vpop.permute.xlu0 %7021
        %7023 = vrot.lane.b32.xlu0 %v6974, 48
        %v7024 = vpop.permute.xlu0 %7023
        %7025 = vrot.lane.b32.xlu0 %v6978, 48
        %v7026 = vpop.permute.xlu0 %7025
        %7027 = vrot.lane.b32.xlu0 %v6982, 48
        %v7028 = vpop.permute.xlu0 %7027
        %7029 = vrot.lane.b32.xlu0 %v6986, 48
        %v7030 = vpop.permute.xlu0 %7029
        %7031 = vrot.lane.b32.xlu0 %v6990, 48
        %v7032 = vpop.permute.xlu0 %7031
        %7033 = vrot.lane.b32.xlu0 %v6994, 48
        %v7034 = vpop.permute.xlu0 %7033
        %7035 = vrot.lane.b32.xlu0 %v6998, 48
        %v7036 = vpop.permute.xlu0 %7035
        %7037 = vrot.lane.b32.xlu0 %v7002, 48
        %v7038 = vpop.permute.xlu0 %7037
        %7039 = vrot.lane.b32.xlu0 %v7006, 48
        %v7040 = vpop.permute.xlu0 %7039
        %7041 = vrot.lane.b32.xlu0 %v7010, 48
        %v7042 = vpop.permute.xlu0 %7041
        %v7043 = vsel %vm4233, %v7012, %v7014
        %v7044 = vsel %vm4233, %v7016, %v7018
        %v7045 = vsel %vm4233, %v7020, %v7022
        %v7046 = vsel %vm4233, %v7024, %v7026
        %v7047 = vsel %vm4233, %v7028, %v7030
        %v7048 = vsel %vm4233, %v7032, %v7034
        %v7049 = vsel %vm4233, %v7036, %v7038
        %v7050 = vsel %vm4233, %v7040, %v7042
        %v7059 = vlaneseq
        %v7060 = vshrl.u32 %v7059, 7
        %v7061 = vsub.s32 0, %v7060
        %v7062 = vrot.slane %v6361, %v7061
        %v7063 = vlaneseq
        %v7064 = vshrl.u32 %v7063, 7
        %v7065 = vsub.s32 1, %v7064
        %v7066 = vrot.slane %v6361, %v7065
        %v7067 = vlaneseq
        %v7068 = vshrl.u32 %v7067, 7
        %v7069 = vsub.s32 0, %v7068
        %v7070 = vrot.slane %v6375, %v7069
        %v7071 = vlaneseq
        %v7072 = vshrl.u32 %v7071, 7
        %v7073 = vsub.s32 1, %v7072
        %v7074 = vrot.slane %v6375, %v7073
        %v7075 = vlaneseq
        %v7076 = vshrl.u32 %v7075, 7
        %v7077 = vsub.s32 0, %v7076
        %v7078 = vrot.slane %v6383, %v7077
        %v7079 = vlaneseq
        %v7080 = vshrl.u32 %v7079, 7
        %v7081 = vsub.s32 1, %v7080
        %v7082 = vrot.slane %v6383, %v7081
        %v7083 = vlaneseq
        %v7084 = vshrl.u32 %v7083, 7
        %v7085 = vsub.s32 0, %v7084
        %v7086 = vrot.slane %v6385, %v7085
        %v7087 = vlaneseq
        %v7088 = vshrl.u32 %v7087, 7
        %v7089 = vsub.s32 1, %v7088
        %v7090 = vrot.slane %v6385, %v7089
        %v7091 = vlaneseq
        %v7092 = vshrl.u32 %v7091, 7
        %v7093 = vsub.s32 0, %v7092
        %v7094 = vrot.slane %v6368, %v7093
        %v7095 = vlaneseq
        %v7096 = vshrl.u32 %v7095, 7
        %v7097 = vsub.s32 1, %v7096
        %v7098 = vrot.slane %v6368, %v7097
        %v7099 = vlaneseq
        %v7100 = vshrl.u32 %v7099, 7
        %v7101 = vsub.s32 0, %v7100
        %v7102 = vrot.slane %v6382, %v7101
        %v7103 = vlaneseq
        %v7104 = vshrl.u32 %v7103, 7
        %v7105 = vsub.s32 1, %v7104
        %v7106 = vrot.slane %v6382, %v7105
        %v7107 = vlaneseq
        %v7108 = vshrl.u32 %v7107, 7
        %v7109 = vsub.s32 0, %v7108
        %v7110 = vrot.slane %v6384, %v7109
        %v7111 = vlaneseq
        %v7112 = vshrl.u32 %v7111, 7
        %v7113 = vsub.s32 1, %v7112
        %v7114 = vrot.slane %v6384, %v7113
        %v7115 = vlaneseq
        %v7116 = vshrl.u32 %v7115, 7
        %v7117 = vsub.s32 0, %v7116
        %v7118 = vrot.slane %v6386, %v7117
        %v7119 = vlaneseq
        %v7120 = vshrl.u32 %v7119, 7
        %v7121 = vsub.s32 1, %v7120
        %v7122 = vrot.slane %v6386, %v7121
        %7123 = vrot.lane.b32.xlu0 %v7062, 56
        %v7124 = vpop.permute.xlu0 %7123
        %7125 = vrot.lane.b32.xlu0 %v7066, 56
        %v7126 = vpop.permute.xlu0 %7125
        %7127 = vrot.lane.b32.xlu0 %v7070, 56
        %v7128 = vpop.permute.xlu0 %7127
        %7129 = vrot.lane.b32.xlu0 %v7074, 56
        %v7130 = vpop.permute.xlu0 %7129
        %7131 = vrot.lane.b32.xlu0 %v7078, 56
        %v7132 = vpop.permute.xlu0 %7131
        %7133 = vrot.lane.b32.xlu0 %v7082, 56
        %v7134 = vpop.permute.xlu0 %7133
        %7135 = vrot.lane.b32.xlu0 %v7086, 56
        %v7136 = vpop.permute.xlu0 %7135
        %7137 = vrot.lane.b32.xlu0 %v7090, 56
        %v7138 = vpop.permute.xlu0 %7137
        %7139 = vrot.lane.b32.xlu0 %v7094, 56
        %v7140 = vpop.permute.xlu0 %7139
        %7141 = vrot.lane.b32.xlu0 %v7098, 56
        %v7142 = vpop.permute.xlu0 %7141
        %7143 = vrot.lane.b32.xlu0 %v7102, 56
        %v7144 = vpop.permute.xlu0 %7143
        %7145 = vrot.lane.b32.xlu0 %v7106, 56
        %v7146 = vpop.permute.xlu0 %7145
        %7147 = vrot.lane.b32.xlu0 %v7110, 56
        %v7148 = vpop.permute.xlu0 %7147
        %7149 = vrot.lane.b32.xlu0 %v7114, 56
        %v7150 = vpop.permute.xlu0 %7149
        %7151 = vrot.lane.b32.xlu0 %v7118, 56
        %v7152 = vpop.permute.xlu0 %7151
        %7153 = vrot.lane.b32.xlu0 %v7122, 56
        %v7154 = vpop.permute.xlu0 %7153
        %v7155 = vsel %vm4346, %v7124, %v7126
        %v7156 = vsel %vm4346, %v7128, %v7130
        %v7157 = vsel %vm4346, %v7132, %v7134
        %v7158 = vsel %vm4346, %v7136, %v7138
        %v7159 = vsel %vm4346, %v7140, %v7142
        %v7160 = vsel %vm4346, %v7144, %v7146
        %v7161 = vsel %vm4346, %v7148, %v7150
        %v7162 = vsel %vm4346, %v7152, %v7154
        %v7171 = vsel %vm1408, %v5996, %v6483
        %v7172 = vsel %vm1408, %v6010, %v6484
        %v7173 = vsel %vm1408, %v6018, %v6485
        %v7174 = vsel %vm1408, %v6020, %v6486
        %v7175 = vsel %vm1408, %v6003, %v6487
        %v7176 = vsel %vm1408, %v6017, %v6488
        %v7177 = vsel %vm1408, %v6019, %v6489
        %v7178 = vsel %vm1408, %v6021, %v6490
        %v7179 = vsel %vm1417, %v7171, %v6595
        %v7180 = vsel %vm1417, %v7172, %v6596
        %v7181 = vsel %vm1417, %v7173, %v6597
        %v7182 = vsel %vm1417, %v7174, %v6598
        %v7183 = vsel %vm1417, %v7175, %v6599
        %v7184 = vsel %vm1417, %v7176, %v6600
        %v7185 = vsel %vm1417, %v7177, %v6601
        %v7186 = vsel %vm1417, %v7178, %v6602
        %v7187 = vsel %vm1426, %v7179, %v6707
        %v7188 = vsel %vm1426, %v7180, %v6708
        %v7189 = vsel %vm1426, %v7181, %v6709
        %v7190 = vsel %vm1426, %v7182, %v6710
        %v7191 = vsel %vm1426, %v7183, %v6711
        %v7192 = vsel %vm1426, %v7184, %v6712
        %v7193 = vsel %vm1426, %v7185, %v6713
        %v7194 = vsel %vm1426, %v7186, %v6714
        %v7195 = vsel %vm1435, %v7187, %v6819
        %v7196 = vsel %vm1435, %v7188, %v6820
        %v7197 = vsel %vm1435, %v7189, %v6821
        %v7198 = vsel %vm1435, %v7190, %v6822
        %v7199 = vsel %vm1435, %v7191, %v6823
        %v7200 = vsel %vm1435, %v7192, %v6824
        %v7201 = vsel %vm1435, %v7193, %v6825
        %v7202 = vsel %vm1435, %v7194, %v6826
        %v7203 = vsel %vm1444, %v7195, %v6931
        %v7204 = vsel %vm1444, %v7196, %v6932
        %v7205 = vsel %vm1444, %v7197, %v6933
        %v7206 = vsel %vm1444, %v7198, %v6934
        %v7207 = vsel %vm1444, %v7199, %v6935
        %v7208 = vsel %vm1444, %v7200, %v6936
        %v7209 = vsel %vm1444, %v7201, %v6937
        %v7210 = vsel %vm1444, %v7202, %v6938
        %v7211 = vsel %vm1453, %v7203, %v7043
        %v7212 = vsel %vm1453, %v7204, %v7044
        %v7213 = vsel %vm1453, %v7205, %v7045
        %v7214 = vsel %vm1453, %v7206, %v7046
        %v7215 = vsel %vm1453, %v7207, %v7047
        %v7216 = vsel %vm1453, %v7208, %v7048
        %v7217 = vsel %vm1453, %v7209, %v7049
        %v7218 = vsel %vm1453, %v7210, %v7050
        %v7219 = vsel %vm1462, %v7211, %v7155
        %v7220 = vsel %vm1462, %v7212, %v7156
        %v7221 = vsel %vm1462, %v7213, %v7157
        %v7222 = vsel %vm1462, %v7214, %v7158
        %v7223 = vsel %vm1462, %v7215, %v7159
        %v7224 = vsel %vm1462, %v7216, %v7160
        %v7225 = vsel %vm1462, %v7217, %v7161
        %v7226 = vsel %vm1462, %v7218, %v7162
        %7235 = vrot.lane.b32.xlu0 %v5299, 120
        %v7236 = vpop.permute.xlu0 %7235
        %7237 = vrot.lane.b32.xlu0 %v5300, 120
        %v7238 = vpop.permute.xlu0 %7237
        %7239 = vrot.lane.b32.xlu0 %v5301, 120
        %v7240 = vpop.permute.xlu0 %7239
        %7241 = vrot.lane.b32.xlu0 %v5302, 120
        %v7242 = vpop.permute.xlu0 %7241
        %7243 = vrot.lane.b32.xlu0 %v5303, 120
        %v7244 = vpop.permute.xlu0 %7243
        %7245 = vrot.lane.b32.xlu0 %v5304, 120
        %v7246 = vpop.permute.xlu0 %7245
        %7247 = vrot.lane.b32.xlu0 %v5305, 120
        %v7248 = vpop.permute.xlu0 %7247
        %7249 = vrot.lane.b32.xlu0 %v5306, 120
        %v7250 = vpop.permute.xlu0 %7249
        %7259 = vrot.lane.b32.xlu0 %v5299, 7
        %v7260 = vpop.permute.xlu0 %7259
        %7261 = vrot.lane.b32.xlu0 %v5300, 7
        %v7262 = vpop.permute.xlu0 %7261
        %7263 = vrot.lane.b32.xlu0 %v5301, 7
        %v7264 = vpop.permute.xlu0 %7263
        %7265 = vrot.lane.b32.xlu0 %v5302, 7
        %v7266 = vpop.permute.xlu0 %7265
        %7267 = vrot.lane.b32.xlu0 %v5303, 7
        %v7268 = vpop.permute.xlu0 %7267
        %7269 = vrot.lane.b32.xlu0 %v5304, 7
        %v7270 = vpop.permute.xlu0 %7269
        %7271 = vrot.lane.b32.xlu0 %v5305, 7
        %v7272 = vpop.permute.xlu0 %7271
        %7273 = vrot.lane.b32.xlu0 %v5306, 7
        %v7274 = vpop.permute.xlu0 %7273
        %7283 = vrot.lane.b32.xlu0 %v5299, 22
        %v7284 = vpop.permute.xlu0 %7283
        %7285 = vrot.lane.b32.xlu0 %v5300, 22
        %v7286 = vpop.permute.xlu0 %7285
        %7287 = vrot.lane.b32.xlu0 %v5301, 22
        %v7288 = vpop.permute.xlu0 %7287
        %7289 = vrot.lane.b32.xlu0 %v5302, 22
        %v7290 = vpop.permute.xlu0 %7289
        %7291 = vrot.lane.b32.xlu0 %v5303, 22
        %v7292 = vpop.permute.xlu0 %7291
        %7293 = vrot.lane.b32.xlu0 %v5304, 22
        %v7294 = vpop.permute.xlu0 %7293
        %7295 = vrot.lane.b32.xlu0 %v5305, 22
        %v7296 = vpop.permute.xlu0 %7295
        %7297 = vrot.lane.b32.xlu0 %v5306, 22
        %v7298 = vpop.permute.xlu0 %7297
        %v7307 = vsel %vm1575, %v7236, %v7260
        %v7308 = vsel %vm1575, %v7238, %v7262
        %v7309 = vsel %vm1575, %v7240, %v7264
        %v7310 = vsel %vm1575, %v7242, %v7266
        %v7311 = vsel %vm1575, %v7244, %v7268
        %v7312 = vsel %vm1575, %v7246, %v7270
        %v7313 = vsel %vm1575, %v7248, %v7272
        %v7314 = vsel %vm1575, %v7250, %v7274
        %v7315 = vsel %vm1584, %v7307, %v7284
        %v7316 = vsel %vm1584, %v7308, %v7286
        %v7317 = vsel %vm1584, %v7309, %v7288
        %v7318 = vsel %vm1584, %v7310, %v7290
        %v7319 = vsel %vm1584, %v7311, %v7292
        %v7320 = vsel %vm1584, %v7312, %v7294
        %v7321 = vsel %vm1584, %v7313, %v7296
        %v7322 = vsel %vm1584, %v7314, %v7298
        %7331 = vrot.lane.b32.xlu0 %v7315, 127
        %v7332 = vpop.permute.xlu0 %7331
        %7333 = vrot.lane.b32.xlu0 %v7316, 127
        %v7334 = vpop.permute.xlu0 %7333
        %7335 = vrot.lane.b32.xlu0 %v7317, 127
        %v7336 = vpop.permute.xlu0 %7335
        %7337 = vrot.lane.b32.xlu0 %v7318, 127
        %v7338 = vpop.permute.xlu0 %7337
        %7339 = vrot.lane.b32.xlu0 %v7319, 127
        %v7340 = vpop.permute.xlu0 %7339
        %7341 = vrot.lane.b32.xlu0 %v7320, 127
        %v7342 = vpop.permute.xlu0 %7341
        %7343 = vrot.lane.b32.xlu0 %v7321, 127
        %v7344 = vpop.permute.xlu0 %7343
        %7345 = vrot.lane.b32.xlu0 %v7322, 127
        %v7346 = vpop.permute.xlu0 %7345
        %7355 = vrot.lane.b32.xlu0 %v7315, 126
        %v7356 = vpop.permute.xlu0 %7355
        %7357 = vrot.lane.b32.xlu0 %v7316, 126
        %v7358 = vpop.permute.xlu0 %7357
        %7359 = vrot.lane.b32.xlu0 %v7317, 126
        %v7360 = vpop.permute.xlu0 %7359
        %7361 = vrot.lane.b32.xlu0 %v7318, 126
        %v7362 = vpop.permute.xlu0 %7361
        %7363 = vrot.lane.b32.xlu0 %v7319, 126
        %v7364 = vpop.permute.xlu0 %7363
        %7365 = vrot.lane.b32.xlu0 %v7320, 126
        %v7366 = vpop.permute.xlu0 %7365
        %7367 = vrot.lane.b32.xlu0 %v7321, 126
        %v7368 = vpop.permute.xlu0 %7367
        %7369 = vrot.lane.b32.xlu0 %v7322, 126
        %v7370 = vpop.permute.xlu0 %7369
        %7379 = vrot.lane.b32.xlu0 %v7315, 125
        %v7380 = vpop.permute.xlu0 %7379
        %7381 = vrot.lane.b32.xlu0 %v7316, 125
        %v7382 = vpop.permute.xlu0 %7381
        %7383 = vrot.lane.b32.xlu0 %v7317, 125
        %v7384 = vpop.permute.xlu0 %7383
        %7385 = vrot.lane.b32.xlu0 %v7318, 125
        %v7386 = vpop.permute.xlu0 %7385
        %7387 = vrot.lane.b32.xlu0 %v7319, 125
        %v7388 = vpop.permute.xlu0 %7387
        %7389 = vrot.lane.b32.xlu0 %v7320, 125
        %v7390 = vpop.permute.xlu0 %7389
        %7391 = vrot.lane.b32.xlu0 %v7321, 125
        %v7392 = vpop.permute.xlu0 %7391
        %7393 = vrot.lane.b32.xlu0 %v7322, 125
        %v7394 = vpop.permute.xlu0 %7393
        %7403 = vrot.lane.b32.xlu0 %v7315, 124
        %v7404 = vpop.permute.xlu0 %7403
        %7405 = vrot.lane.b32.xlu0 %v7316, 124
        %v7406 = vpop.permute.xlu0 %7405
        %7407 = vrot.lane.b32.xlu0 %v7317, 124
        %v7408 = vpop.permute.xlu0 %7407
        %7409 = vrot.lane.b32.xlu0 %v7318, 124
        %v7410 = vpop.permute.xlu0 %7409
        %7411 = vrot.lane.b32.xlu0 %v7319, 124
        %v7412 = vpop.permute.xlu0 %7411
        %7413 = vrot.lane.b32.xlu0 %v7320, 124
        %v7414 = vpop.permute.xlu0 %7413
        %7415 = vrot.lane.b32.xlu0 %v7321, 124
        %v7416 = vpop.permute.xlu0 %7415
        %7417 = vrot.lane.b32.xlu0 %v7322, 124
        %v7418 = vpop.permute.xlu0 %7417
        %7427 = vrot.lane.b32.xlu0 %v7315, 123
        %v7428 = vpop.permute.xlu0 %7427
        %7429 = vrot.lane.b32.xlu0 %v7316, 123
        %v7430 = vpop.permute.xlu0 %7429
        %7431 = vrot.lane.b32.xlu0 %v7317, 123
        %v7432 = vpop.permute.xlu0 %7431
        %7433 = vrot.lane.b32.xlu0 %v7318, 123
        %v7434 = vpop.permute.xlu0 %7433
        %7435 = vrot.lane.b32.xlu0 %v7319, 123
        %v7436 = vpop.permute.xlu0 %7435
        %7437 = vrot.lane.b32.xlu0 %v7320, 123
        %v7438 = vpop.permute.xlu0 %7437
        %7439 = vrot.lane.b32.xlu0 %v7321, 123
        %v7440 = vpop.permute.xlu0 %7439
        %7441 = vrot.lane.b32.xlu0 %v7322, 123
        %v7442 = vpop.permute.xlu0 %7441
        %7451 = vrot.lane.b32.xlu0 %v7315, 122
        %v7452 = vpop.permute.xlu0 %7451
        %7453 = vrot.lane.b32.xlu0 %v7316, 122
        %v7454 = vpop.permute.xlu0 %7453
        %7455 = vrot.lane.b32.xlu0 %v7317, 122
        %v7456 = vpop.permute.xlu0 %7455
        %7457 = vrot.lane.b32.xlu0 %v7318, 122
        %v7458 = vpop.permute.xlu0 %7457
        %7459 = vrot.lane.b32.xlu0 %v7319, 122
        %v7460 = vpop.permute.xlu0 %7459
        %7461 = vrot.lane.b32.xlu0 %v7320, 122
        %v7462 = vpop.permute.xlu0 %7461
        %7463 = vrot.lane.b32.xlu0 %v7321, 122
        %v7464 = vpop.permute.xlu0 %7463
        %7465 = vrot.lane.b32.xlu0 %v7322, 122
        %v7466 = vpop.permute.xlu0 %7465
        %7475 = vrot.lane.b32.xlu0 %v7315, 121
        %v7476 = vpop.permute.xlu0 %7475
        %7477 = vrot.lane.b32.xlu0 %v7316, 121
        %v7478 = vpop.permute.xlu0 %7477
        %7479 = vrot.lane.b32.xlu0 %v7317, 121
        %v7480 = vpop.permute.xlu0 %7479
        %7481 = vrot.lane.b32.xlu0 %v7318, 121
        %v7482 = vpop.permute.xlu0 %7481
        %7483 = vrot.lane.b32.xlu0 %v7319, 121
        %v7484 = vpop.permute.xlu0 %7483
        %7485 = vrot.lane.b32.xlu0 %v7320, 121
        %v7486 = vpop.permute.xlu0 %7485
        %7487 = vrot.lane.b32.xlu0 %v7321, 121
        %v7488 = vpop.permute.xlu0 %7487
        %7489 = vrot.lane.b32.xlu0 %v7322, 121
        %v7490 = vpop.permute.xlu0 %7489
        %7499 = vrot.lane.b32.xlu0 %v7315, 120
        %v7500 = vpop.permute.xlu0 %7499
        %7501 = vrot.lane.b32.xlu0 %v7316, 120
        %v7502 = vpop.permute.xlu0 %7501
        %7503 = vrot.lane.b32.xlu0 %v7317, 120
        %v7504 = vpop.permute.xlu0 %7503
        %7505 = vrot.lane.b32.xlu0 %v7318, 120
        %v7506 = vpop.permute.xlu0 %7505
        %7507 = vrot.lane.b32.xlu0 %v7319, 120
        %v7508 = vpop.permute.xlu0 %7507
        %7509 = vrot.lane.b32.xlu0 %v7320, 120
        %v7510 = vpop.permute.xlu0 %7509
        %7511 = vrot.lane.b32.xlu0 %v7321, 120
        %v7512 = vpop.permute.xlu0 %7511
        %7513 = vrot.lane.b32.xlu0 %v7322, 120
        %v7514 = vpop.permute.xlu0 %7513
        %7523 = vrot.lane.b32.xlu0 %v7315, 119
        %v7524 = vpop.permute.xlu0 %7523
        %7525 = vrot.lane.b32.xlu0 %v7316, 119
        %v7526 = vpop.permute.xlu0 %7525
        %7527 = vrot.lane.b32.xlu0 %v7317, 119
        %v7528 = vpop.permute.xlu0 %7527
        %7529 = vrot.lane.b32.xlu0 %v7318, 119
        %v7530 = vpop.permute.xlu0 %7529
        %7531 = vrot.lane.b32.xlu0 %v7319, 119
        %v7532 = vpop.permute.xlu0 %7531
        %7533 = vrot.lane.b32.xlu0 %v7320, 119
        %v7534 = vpop.permute.xlu0 %7533
        %7535 = vrot.lane.b32.xlu0 %v7321, 119
        %v7536 = vpop.permute.xlu0 %7535
        %7537 = vrot.lane.b32.xlu0 %v7322, 119
        %v7538 = vpop.permute.xlu0 %7537
        %7547 = vrot.lane.b32.xlu0 %v7315, 118
        %v7548 = vpop.permute.xlu0 %7547
        %7549 = vrot.lane.b32.xlu0 %v7316, 118
        %v7550 = vpop.permute.xlu0 %7549
        %7551 = vrot.lane.b32.xlu0 %v7317, 118
        %v7552 = vpop.permute.xlu0 %7551
        %7553 = vrot.lane.b32.xlu0 %v7318, 118
        %v7554 = vpop.permute.xlu0 %7553
        %7555 = vrot.lane.b32.xlu0 %v7319, 118
        %v7556 = vpop.permute.xlu0 %7555
        %7557 = vrot.lane.b32.xlu0 %v7320, 118
        %v7558 = vpop.permute.xlu0 %7557
        %7559 = vrot.lane.b32.xlu0 %v7321, 118
        %v7560 = vpop.permute.xlu0 %7559
        %7561 = vrot.lane.b32.xlu0 %v7322, 118
        %v7562 = vpop.permute.xlu0 %7561
        %7571 = vrot.lane.b32.xlu0 %v7315, 117
        %v7572 = vpop.permute.xlu0 %7571
        %7573 = vrot.lane.b32.xlu0 %v7316, 117
        %v7574 = vpop.permute.xlu0 %7573
        %7575 = vrot.lane.b32.xlu0 %v7317, 117
        %v7576 = vpop.permute.xlu0 %7575
        %7577 = vrot.lane.b32.xlu0 %v7318, 117
        %v7578 = vpop.permute.xlu0 %7577
        %7579 = vrot.lane.b32.xlu0 %v7319, 117
        %v7580 = vpop.permute.xlu0 %7579
        %7581 = vrot.lane.b32.xlu0 %v7320, 117
        %v7582 = vpop.permute.xlu0 %7581
        %7583 = vrot.lane.b32.xlu0 %v7321, 117
        %v7584 = vpop.permute.xlu0 %7583
        %7585 = vrot.lane.b32.xlu0 %v7322, 117
        %v7586 = vpop.permute.xlu0 %7585
        %7595 = vrot.lane.b32.xlu0 %v7315, 116
        %v7596 = vpop.permute.xlu0 %7595
        %7597 = vrot.lane.b32.xlu0 %v7316, 116
        %v7598 = vpop.permute.xlu0 %7597
        %7599 = vrot.lane.b32.xlu0 %v7317, 116
        %v7600 = vpop.permute.xlu0 %7599
        %7601 = vrot.lane.b32.xlu0 %v7318, 116
        %v7602 = vpop.permute.xlu0 %7601
        %7603 = vrot.lane.b32.xlu0 %v7319, 116
        %v7604 = vpop.permute.xlu0 %7603
        %7605 = vrot.lane.b32.xlu0 %v7320, 116
        %v7606 = vpop.permute.xlu0 %7605
        %7607 = vrot.lane.b32.xlu0 %v7321, 116
        %v7608 = vpop.permute.xlu0 %7607
        %7609 = vrot.lane.b32.xlu0 %v7322, 116
        %v7610 = vpop.permute.xlu0 %7609
        %7619 = vrot.lane.b32.xlu0 %v7315, 115
        %v7620 = vpop.permute.xlu0 %7619
        %7621 = vrot.lane.b32.xlu0 %v7316, 115
        %v7622 = vpop.permute.xlu0 %7621
        %7623 = vrot.lane.b32.xlu0 %v7317, 115
        %v7624 = vpop.permute.xlu0 %7623
        %7625 = vrot.lane.b32.xlu0 %v7318, 115
        %v7626 = vpop.permute.xlu0 %7625
        %7627 = vrot.lane.b32.xlu0 %v7319, 115
        %v7628 = vpop.permute.xlu0 %7627
        %7629 = vrot.lane.b32.xlu0 %v7320, 115
        %v7630 = vpop.permute.xlu0 %7629
        %7631 = vrot.lane.b32.xlu0 %v7321, 115
        %v7632 = vpop.permute.xlu0 %7631
        %7633 = vrot.lane.b32.xlu0 %v7322, 115
        %v7634 = vpop.permute.xlu0 %7633
        %7643 = vrot.lane.b32.xlu0 %v7315, 114
        %v7644 = vpop.permute.xlu0 %7643
        %7645 = vrot.lane.b32.xlu0 %v7316, 114
        %v7646 = vpop.permute.xlu0 %7645
        %7647 = vrot.lane.b32.xlu0 %v7317, 114
        %v7648 = vpop.permute.xlu0 %7647
        %7649 = vrot.lane.b32.xlu0 %v7318, 114
        %v7650 = vpop.permute.xlu0 %7649
        %7651 = vrot.lane.b32.xlu0 %v7319, 114
        %v7652 = vpop.permute.xlu0 %7651
        %7653 = vrot.lane.b32.xlu0 %v7320, 114
        %v7654 = vpop.permute.xlu0 %7653
        %7655 = vrot.lane.b32.xlu0 %v7321, 114
        %v7656 = vpop.permute.xlu0 %7655
        %7657 = vrot.lane.b32.xlu0 %v7322, 114
        %v7658 = vpop.permute.xlu0 %7657
        %v7667 = vpack.c.bf16 %v7219, %v7219
        %v7668 = vpack.c.bf16 %v7220, %v7220
        %v7669 = vpack.c.bf16 %v7221, %v7221
        %v7670 = vpack.c.bf16 %v7222, %v7222
        %v7671 = vpack.c.bf16 %v7223, %v7223
        %v7672 = vpack.c.bf16 %v7224, %v7224
        %v7673 = vpack.c.bf16 %v7225, %v7225
        %v7674 = vpack.c.bf16 %v7226, %v7226
        %v7675 = vpack.c.bf16 %v7332, %v7315
        %v7676 = vpack.c.bf16 %v7380, %v7356
        %v7677 = vpack.c.bf16 %v7428, %v7404
        %v7678 = vpack.c.bf16 %v7476, %v7452
        %v7679 = vpack.c.bf16 %v7524, %v7500
        %v7680 = vpack.c.bf16 %v7572, %v7548
        %v7681 = vpack.c.bf16 %v7620, %v7596
        %v7682 = vpack.c.bf16 %v7644, %v7644
        %v7683 = vpack.c.bf16 %v7334, %v7316
        %v7684 = vpack.c.bf16 %v7382, %v7358
        %v7685 = vpack.c.bf16 %v7430, %v7406
        %v7686 = vpack.c.bf16 %v7478, %v7454
        %v7687 = vpack.c.bf16 %v7526, %v7502
        %v7688 = vpack.c.bf16 %v7574, %v7550
        %v7689 = vpack.c.bf16 %v7622, %v7598
        %v7690 = vpack.c.bf16 %v7646, %v7646
        %v7691 = vpack.c.bf16 %v7336, %v7317
        %v7692 = vpack.c.bf16 %v7384, %v7360
        %v7693 = vpack.c.bf16 %v7432, %v7408
        %v7694 = vpack.c.bf16 %v7480, %v7456
        %v7695 = vpack.c.bf16 %v7528, %v7504
        %v7696 = vpack.c.bf16 %v7576, %v7552
        %v7697 = vpack.c.bf16 %v7624, %v7600
        %v7698 = vpack.c.bf16 %v7648, %v7648
        %v7699 = vpack.c.bf16 %v7338, %v7318
        %v7700 = vpack.c.bf16 %v7386, %v7362
        %v7701 = vpack.c.bf16 %v7434, %v7410
        %v7702 = vpack.c.bf16 %v7482, %v7458
        %v7703 = vpack.c.bf16 %v7530, %v7506
        %v7704 = vpack.c.bf16 %v7578, %v7554
        %v7705 = vpack.c.bf16 %v7626, %v7602
        %v7706 = vpack.c.bf16 %v7650, %v7650
        %v7707 = vpack.c.bf16 %v7340, %v7319
        %v7708 = vpack.c.bf16 %v7388, %v7364
        %v7709 = vpack.c.bf16 %v7436, %v7412
        %v7710 = vpack.c.bf16 %v7484, %v7460
        %v7711 = vpack.c.bf16 %v7532, %v7508
        %v7712 = vpack.c.bf16 %v7580, %v7556
        %v7713 = vpack.c.bf16 %v7628, %v7604
        %v7714 = vpack.c.bf16 %v7652, %v7652
        %v7715 = vpack.c.bf16 %v7342, %v7320
        %v7716 = vpack.c.bf16 %v7390, %v7366
        %v7717 = vpack.c.bf16 %v7438, %v7414
        %v7718 = vpack.c.bf16 %v7486, %v7462
        %v7719 = vpack.c.bf16 %v7534, %v7510
        %v7720 = vpack.c.bf16 %v7582, %v7558
        %v7721 = vpack.c.bf16 %v7630, %v7606
        %v7722 = vpack.c.bf16 %v7654, %v7654
        %v7723 = vpack.c.bf16 %v7344, %v7321
        %v7724 = vpack.c.bf16 %v7392, %v7368
        %v7725 = vpack.c.bf16 %v7440, %v7416
        %v7726 = vpack.c.bf16 %v7488, %v7464
        %v7727 = vpack.c.bf16 %v7536, %v7512
        %v7728 = vpack.c.bf16 %v7584, %v7560
        %v7729 = vpack.c.bf16 %v7632, %v7608
        %v7730 = vpack.c.bf16 %v7656, %v7656
        %v7731 = vpack.c.bf16 %v7346, %v7322
        %v7732 = vpack.c.bf16 %v7394, %v7370
        %v7733 = vpack.c.bf16 %v7442, %v7418
        %v7734 = vpack.c.bf16 %v7490, %v7466
        %v7735 = vpack.c.bf16 %v7538, %v7514
        %v7736 = vpack.c.bf16 %v7586, %v7562
        %v7737 = vpack.c.bf16 %v7634, %v7610
        %v7738 = vpack.c.bf16 %v7658, %v7658
        %v7740 = vsel %vm1082, %v7667, 0
        %v7743 = vsel %vm1435, %v7682, 0
        %7745 = vmatprep.subr.bf16.mxu0 0
        %7746 = vmatpush1.bf16.msra.mxu0 %v7675
        %7747 = vmatprep.subr.bf16.mxu0 0
        %7748 = vmatpush1.bf16.msra.mxu0 %v7676
        %7749 = vmatprep.subr.bf16.mxu0 0
        %7750 = vmatpush1.bf16.msra.mxu0 %v7677
        %7751 = vmatprep.subr.bf16.mxu0 0
        %7752 = vmatpush1.bf16.msra.mxu0 %v7678
        %7753 = vmatprep.subr.bf16.mxu0 0
        %7754 = vmatpush1.bf16.msra.mxu0 %v7679
        %7755 = vmatprep.subr.bf16.mxu0 0
        %7756 = vmatpush1.bf16.msra.mxu0 %v7680
        %7757 = vmatprep.subr.bf16.mxu0 0
        %7758 = vmatpush1.bf16.msra.mxu0 %v7681
        %7759 = vmatprep.subr.bf16.mxu0 0
        %7760 = vmatpush1.bf16.msra.mxu0 %v7743
        %7761 = vmatprep.subr.bf16.mxu0 0
        %7762 = vmatpush1.bf16.msra.mxu0 0
        %7763 = vmatprep.subr.bf16.mxu0 0
        %7764 = vmatpush1.bf16.msra.mxu0 0
        %7765 = vmatprep.subr.bf16.mxu0 0
        %7766 = vmatpush1.bf16.msra.mxu0 0
        %7767 = vmatprep.subr.bf16.mxu0 0
        %7768 = vmatpush1.bf16.msra.mxu0 0
        %7769 = vmatprep.subr.bf16.mxu0 0
        %7770 = vmatpush1.bf16.msra.mxu0 0
        %7771 = vmatprep.subr.bf16.mxu0 0
        %7772 = vmatpush1.bf16.msra.mxu0 0
        %7773 = vmatprep.subr.bf16.mxu0 0
        %7774 = vmatpush1.bf16.msra.mxu0 0
        %7775 = vmatprep.subr.bf16.mxu0 0
        %7776 = vmatpush1.bf16.msra.mxu0 0
        %7777 = vmatprep.mubr.bf16.mxu0 0
        %7778 = vmatmul.mubr.bf16.gmra.mrb[0].mxu0 %v7740
        %v7779 = vpop.f32.mrb[0].mxu0
        %v7780 = vadd.f32 0.0, %v7779
        %v7781 = vpop.f32.mrb[0].mxu0
        %v7782 = vpop.f32.mrb[0].mxu0
        %v7783 = vpop.f32.mrb[0].mxu0
        %7784 = vdwg.mxu0
        %v7786 = vsel %vm1082, %v7668, 0
        %v7789 = vsel %vm1435, %v7690, 0
        %7791 = vmatprep.subr.bf16.mxu0 0
        %7792 = vmatpush1.bf16.msra.mxu0 %v7683
        %7793 = vmatprep.subr.bf16.mxu0 0
        %7794 = vmatpush1.bf16.msra.mxu0 %v7684
        %7795 = vmatprep.subr.bf16.mxu0 0
        %7796 = vmatpush1.bf16.msra.mxu0 %v7685
        %7797 = vmatprep.subr.bf16.mxu0 0
        %7798 = vmatpush1.bf16.msra.mxu0 %v7686
        %7799 = vmatprep.subr.bf16.mxu0 0
        %7800 = vmatpush1.bf16.msra.mxu0 %v7687
        %7801 = vmatprep.subr.bf16.mxu0 0
        %7802 = vmatpush1.bf16.msra.mxu0 %v7688
        %7803 = vmatprep.subr.bf16.mxu0 0
        %7804 = vmatpush1.bf16.msra.mxu0 %v7689
        %7805 = vmatprep.subr.bf16.mxu0 0
        %7806 = vmatpush1.bf16.msra.mxu0 %v7789
        %7807 = vmatprep.subr.bf16.mxu0 0
        %7808 = vmatpush1.bf16.msra.mxu0 0
        %7809 = vmatprep.subr.bf16.mxu0 0
        %7810 = vmatpush1.bf16.msra.mxu0 0
        %7811 = vmatprep.subr.bf16.mxu0 0
        %7812 = vmatpush1.bf16.msra.mxu0 0
        %7813 = vmatprep.subr.bf16.mxu0 0
        %7814 = vmatpush1.bf16.msra.mxu0 0
        %7815 = vmatprep.subr.bf16.mxu0 0
        %7816 = vmatpush1.bf16.msra.mxu0 0
        %7817 = vmatprep.subr.bf16.mxu0 0
        %7818 = vmatpush1.bf16.msra.mxu0 0
        %7819 = vmatprep.subr.bf16.mxu0 0
        %7820 = vmatpush1.bf16.msra.mxu0 0
        %7821 = vmatprep.subr.bf16.mxu0 0
        %7822 = vmatpush1.bf16.msra.mxu0 0
        %7823 = vmatprep.mubr.bf16.mxu0 0
        %7824 = vmatmul.mubr.bf16.gmra.mrb[0].mxu0 %v7786
        %v7825 = vpop.f32.mrb[0].mxu0
        %v7826 = vadd.f32 0.0, %v7825
        %v7827 = vpop.f32.mrb[0].mxu0
        %v7828 = vpop.f32.mrb[0].mxu0
        %v7829 = vpop.f32.mrb[0].mxu0
        %7830 = vdwg.mxu0
        %v7832 = vsel %vm1082, %v7669, 0
        %v7835 = vsel %vm1435, %v7698, 0
        %7837 = vmatprep.subr.bf16.mxu0 0
        %7838 = vmatpush1.bf16.msra.mxu0 %v7691
        %7839 = vmatprep.subr.bf16.mxu0 0
        %7840 = vmatpush1.bf16.msra.mxu0 %v7692
        %7841 = vmatprep.subr.bf16.mxu0 0
        %7842 = vmatpush1.bf16.msra.mxu0 %v7693
        %7843 = vmatprep.subr.bf16.mxu0 0
        %7844 = vmatpush1.bf16.msra.mxu0 %v7694
        %7845 = vmatprep.subr.bf16.mxu0 0
        %7846 = vmatpush1.bf16.msra.mxu0 %v7695
        %7847 = vmatprep.subr.bf16.mxu0 0
        %7848 = vmatpush1.bf16.msra.mxu0 %v7696
        %7849 = vmatprep.subr.bf16.mxu0 0
        %7850 = vmatpush1.bf16.msra.mxu0 %v7697
        %7851 = vmatprep.subr.bf16.mxu0 0
        %7852 = vmatpush1.bf16.msra.mxu0 %v7835
        %7853 = vmatprep.subr.bf16.mxu0 0
        %7854 = vmatpush1.bf16.msra.mxu0 0
        %7855 = vmatprep.subr.bf16.mxu0 0
        %7856 = vmatpush1.bf16.msra.mxu0 0
        %7857 = vmatprep.subr.bf16.mxu0 0
        %7858 = vmatpush1.bf16.msra.mxu0 0
        %7859 = vmatprep.subr.bf16.mxu0 0
        %7860 = vmatpush1.bf16.msra.mxu0 0
        %7861 = vmatprep.subr.bf16.mxu0 0
        %7862 = vmatpush1.bf16.msra.mxu0 0
        %7863 = vmatprep.subr.bf16.mxu0 0
        %7864 = vmatpush1.bf16.msra.mxu0 0
        %7865 = vmatprep.subr.bf16.mxu0 0
        %7866 = vmatpush1.bf16.msra.mxu0 0
        %7867 = vmatprep.subr.bf16.mxu0 0
        %7868 = vmatpush1.bf16.msra.mxu0 0
        %7869 = vmatprep.mubr.bf16.mxu0 0
        %7870 = vmatmul.mubr.bf16.gmra.mrb[0].mxu0 %v7832
        %v7871 = vpop.f32.mrb[0].mxu0
        %v7872 = vadd.f32 0.0, %v7871
        %v7873 = vpop.f32.mrb[0].mxu0
        %v7874 = vpop.f32.mrb[0].mxu0
        %v7875 = vpop.f32.mrb[0].mxu0
        %7876 = vdwg.mxu0
        %v7878 = vsel %vm1082, %v7670, 0
        %v7881 = vsel %vm1435, %v7706, 0
        %7883 = vmatprep.subr.bf16.mxu0 0
        %7884 = vmatpush1.bf16.msra.mxu0 %v7699
        %7885 = vmatprep.subr.bf16.mxu0 0
        %7886 = vmatpush1.bf16.msra.mxu0 %v7700
        %7887 = vmatprep.subr.bf16.mxu0 0
        %7888 = vmatpush1.bf16.msra.mxu0 %v7701
        %7889 = vmatprep.subr.bf16.mxu0 0
        %7890 = vmatpush1.bf16.msra.mxu0 %v7702
        %7891 = vmatprep.subr.bf16.mxu0 0
        %7892 = vmatpush1.bf16.msra.mxu0 %v7703
        %7893 = vmatprep.subr.bf16.mxu0 0
        %7894 = vmatpush1.bf16.msra.mxu0 %v7704
        %7895 = vmatprep.subr.bf16.mxu0 0
        %7896 = vmatpush1.bf16.msra.mxu0 %v7705
        %7897 = vmatprep.subr.bf16.mxu0 0
        %7898 = vmatpush1.bf16.msra.mxu0 %v7881
        %7899 = vmatprep.subr.bf16.mxu0 0
        %7900 = vmatpush1.bf16.msra.mxu0 0
        %7901 = vmatprep.subr.bf16.mxu0 0
        %7902 = vmatpush1.bf16.msra.mxu0 0
        %7903 = vmatprep.subr.bf16.mxu0 0
        %7904 = vmatpush1.bf16.msra.mxu0 0
        %7905 = vmatprep.subr.bf16.mxu0 0
        %7906 = vmatpush1.bf16.msra.mxu0 0
        %7907 = vmatprep.subr.bf16.mxu0 0
        %7908 = vmatpush1.bf16.msra.mxu0 0
        %7909 = vmatprep.subr.bf16.mxu0 0
        %7910 = vmatpush1.bf16.msra.mxu0 0
        %7911 = vmatprep.subr.bf16.mxu0 0
        %7912 = vmatpush1.bf16.msra.mxu0 0
        %7913 = vmatprep.subr.bf16.mxu0 0
        %7914 = vmatpush1.bf16.msra.mxu0 0
        %7915 = vmatprep.mubr.bf16.mxu0 0
        %7916 = vmatmul.mubr.bf16.gmra.mrb[0].mxu0 %v7878
        %v7917 = vpop.f32.mrb[0].mxu0
        %v7918 = vadd.f32 0.0, %v7917
        %v7919 = vpop.f32.mrb[0].mxu0
        %v7920 = vpop.f32.mrb[0].mxu0
        %v7921 = vpop.f32.mrb[0].mxu0
        %7922 = vdwg.mxu0
        %v7924 = vsel %vm1082, %v7671, 0
        %v7927 = vsel %vm1435, %v7714, 0
        %7929 = vmatprep.subr.bf16.mxu0 0
        %7930 = vmatpush1.bf16.msra.mxu0 %v7707
        %7931 = vmatprep.subr.bf16.mxu0 0
        %7932 = vmatpush1.bf16.msra.mxu0 %v7708
        %7933 = vmatprep.subr.bf16.mxu0 0
        %7934 = vmatpush1.bf16.msra.mxu0 %v7709
        %7935 = vmatprep.subr.bf16.mxu0 0
        %7936 = vmatpush1.bf16.msra.mxu0 %v7710
        %7937 = vmatprep.subr.bf16.mxu0 0
        %7938 = vmatpush1.bf16.msra.mxu0 %v7711
        %7939 = vmatprep.subr.bf16.mxu0 0
        %7940 = vmatpush1.bf16.msra.mxu0 %v7712
        %7941 = vmatprep.subr.bf16.mxu0 0
        %7942 = vmatpush1.bf16.msra.mxu0 %v7713
        %7943 = vmatprep.subr.bf16.mxu0 0
        %7944 = vmatpush1.bf16.msra.mxu0 %v7927
        %7945 = vmatprep.subr.bf16.mxu0 0
        %7946 = vmatpush1.bf16.msra.mxu0 0
        %7947 = vmatprep.subr.bf16.mxu0 0
        %7948 = vmatpush1.bf16.msra.mxu0 0
        %7949 = vmatprep.subr.bf16.mxu0 0
        %7950 = vmatpush1.bf16.msra.mxu0 0
        %7951 = vmatprep.subr.bf16.mxu0 0
        %7952 = vmatpush1.bf16.msra.mxu0 0
        %7953 = vmatprep.subr.bf16.mxu0 0
        %7954 = vmatpush1.bf16.msra.mxu0 0
        %7955 = vmatprep.subr.bf16.mxu0 0
        %7956 = vmatpush1.bf16.msra.mxu0 0
        %7957 = vmatprep.subr.bf16.mxu0 0
        %7958 = vmatpush1.bf16.msra.mxu0 0
        %7959 = vmatprep.subr.bf16.mxu0 0
        %7960 = vmatpush1.bf16.msra.mxu0 0
        %7961 = vmatprep.mubr.bf16.mxu0 0
        %7962 = vmatmul.mubr.bf16.gmra.mrb[0].mxu0 %v7924
        %v7963 = vpop.f32.mrb[0].mxu0
        %v7964 = vadd.f32 0.0, %v7963
        %v7965 = vpop.f32.mrb[0].mxu0
        %v7966 = vpop.f32.mrb[0].mxu0
        %v7967 = vpop.f32.mrb[0].mxu0
        %7968 = vdwg.mxu0
        %v7970 = vsel %vm1082, %v7672, 0
        %v7973 = vsel %vm1435, %v7722, 0
        %7975 = vmatprep.subr.bf16.mxu0 0
        %7976 = vmatpush1.bf16.msra.mxu0 %v7715
        %7977 = vmatprep.subr.bf16.mxu0 0
        %7978 = vmatpush1.bf16.msra.mxu0 %v7716
        %7979 = vmatprep.subr.bf16.mxu0 0
        %7980 = vmatpush1.bf16.msra.mxu0 %v7717
        %7981 = vmatprep.subr.bf16.mxu0 0
        %7982 = vmatpush1.bf16.msra.mxu0 %v7718
        %7983 = vmatprep.subr.bf16.mxu0 0
        %7984 = vmatpush1.bf16.msra.mxu0 %v7719
        %7985 = vmatprep.subr.bf16.mxu0 0
        %7986 = vmatpush1.bf16.msra.mxu0 %v7720
        %7987 = vmatprep.subr.bf16.mxu0 0
        %7988 = vmatpush1.bf16.msra.mxu0 %v7721
        %7989 = vmatprep.subr.bf16.mxu0 0
        %7990 = vmatpush1.bf16.msra.mxu0 %v7973
        %7991 = vmatprep.subr.bf16.mxu0 0
        %7992 = vmatpush1.bf16.msra.mxu0 0
        %7993 = vmatprep.subr.bf16.mxu0 0
        %7994 = vmatpush1.bf16.msra.mxu0 0
        %7995 = vmatprep.subr.bf16.mxu0 0
        %7996 = vmatpush1.bf16.msra.mxu0 0
        %7997 = vmatprep.subr.bf16.mxu0 0
        %7998 = vmatpush1.bf16.msra.mxu0 0
        %7999 = vmatprep.subr.bf16.mxu0 0
        %8000 = vmatpush1.bf16.msra.mxu0 0
        %8001 = vmatprep.subr.bf16.mxu0 0
        %8002 = vmatpush1.bf16.msra.mxu0 0
        %8003 = vmatprep.subr.bf16.mxu0 0
        %8004 = vmatpush1.bf16.msra.mxu0 0
        %8005 = vmatprep.subr.bf16.mxu0 0
        %8006 = vmatpush1.bf16.msra.mxu0 0
        %8007 = vmatprep.mubr.bf16.mxu0 0
        %8008 = vmatmul.mubr.bf16.gmra.mrb[0].mxu0 %v7970
        %v8009 = vpop.f32.mrb[0].mxu0
        %v8010 = vadd.f32 0.0, %v8009
        %v8011 = vpop.f32.mrb[0].mxu0
        %v8012 = vpop.f32.mrb[0].mxu0
        %v8013 = vpop.f32.mrb[0].mxu0
        %8014 = vdwg.mxu0
        %v8016 = vsel %vm1082, %v7673, 0
        %v8019 = vsel %vm1435, %v7730, 0
        %8021 = vmatprep.subr.bf16.mxu0 0
        %8022 = vmatpush1.bf16.msra.mxu0 %v7723
        %8023 = vmatprep.subr.bf16.mxu0 0
        %8024 = vmatpush1.bf16.msra.mxu0 %v7724
        %8025 = vmatprep.subr.bf16.mxu0 0
        %8026 = vmatpush1.bf16.msra.mxu0 %v7725
        %8027 = vmatprep.subr.bf16.mxu0 0
        %8028 = vmatpush1.bf16.msra.mxu0 %v7726
        %8029 = vmatprep.subr.bf16.mxu0 0
        %8030 = vmatpush1.bf16.msra.mxu0 %v7727
        %8031 = vmatprep.subr.bf16.mxu0 0
        %8032 = vmatpush1.bf16.msra.mxu0 %v7728
        %8033 = vmatprep.subr.bf16.mxu0 0
        %8034 = vmatpush1.bf16.msra.mxu0 %v7729
        %8035 = vmatprep.subr.bf16.mxu0 0
        %8036 = vmatpush1.bf16.msra.mxu0 %v8019
        %8037 = vmatprep.subr.bf16.mxu0 0
        %8038 = vmatpush1.bf16.msra.mxu0 0
        %8039 = vmatprep.subr.bf16.mxu0 0
        %8040 = vmatpush1.bf16.msra.mxu0 0
        %8041 = vmatprep.subr.bf16.mxu0 0
        %8042 = vmatpush1.bf16.msra.mxu0 0
        %8043 = vmatprep.subr.bf16.mxu0 0
        %8044 = vmatpush1.bf16.msra.mxu0 0
        %8045 = vmatprep.subr.bf16.mxu0 0
        %8046 = vmatpush1.bf16.msra.mxu0 0
        %8047 = vmatprep.subr.bf16.mxu0 0
        %8048 = vmatpush1.bf16.msra.mxu0 0
        %8049 = vmatprep.subr.bf16.mxu0 0
        %8050 = vmatpush1.bf16.msra.mxu0 0
        %8051 = vmatprep.subr.bf16.mxu0 0
        %8052 = vmatpush1.bf16.msra.mxu0 0
        %8053 = vmatprep.mubr.bf16.mxu0 0
        %8054 = vmatmul.mubr.bf16.gmra.mrb[0].mxu0 %v8016
        %v8055 = vpop.f32.mrb[0].mxu0
        %v8056 = vadd.f32 0.0, %v8055
        %v8057 = vpop.f32.mrb[0].mxu0
        %v8058 = vpop.f32.mrb[0].mxu0
        %v8059 = vpop.f32.mrb[0].mxu0
        %8060 = vdwg.mxu0
        %v8062 = vsel %vm1082, %v7674, 0
        %v8065 = vsel %vm1435, %v7738, 0
        %8067 = vmatprep.subr.bf16.mxu0 0
        %8068 = vmatpush1.bf16.msra.mxu0 %v7731
        %8069 = vmatprep.subr.bf16.mxu0 0
        %8070 = vmatpush1.bf16.msra.mxu0 %v7732
        %8071 = vmatprep.subr.bf16.mxu0 0
        %8072 = vmatpush1.bf16.msra.mxu0 %v7733
        %8073 = vmatprep.subr.bf16.mxu0 0
        %8074 = vmatpush1.bf16.msra.mxu0 %v7734
        %8075 = vmatprep.subr.bf16.mxu0 0
        %8076 = vmatpush1.bf16.msra.mxu0 %v7735
        %8077 = vmatprep.subr.bf16.mxu0 0
        %8078 = vmatpush1.bf16.msra.mxu0 %v7736
        %8079 = vmatprep.subr.bf16.mxu0 0
        %8080 = vmatpush1.bf16.msra.mxu0 %v7737
        %8081 = vmatprep.subr.bf16.mxu0 0
        %8082 = vmatpush1.bf16.msra.mxu0 %v8065
        %8083 = vmatprep.subr.bf16.mxu0 0
        %8084 = vmatpush1.bf16.msra.mxu0 0
        %8085 = vmatprep.subr.bf16.mxu0 0
        %8086 = vmatpush1.bf16.msra.mxu0 0
        %8087 = vmatprep.subr.bf16.mxu0 0
        %8088 = vmatpush1.bf16.msra.mxu0 0
        %8089 = vmatprep.subr.bf16.mxu0 0
        %8090 = vmatpush1.bf16.msra.mxu0 0
        %8091 = vmatprep.subr.bf16.mxu0 0
        %8092 = vmatpush1.bf16.msra.mxu0 0
        %8093 = vmatprep.subr.bf16.mxu0 0
        %8094 = vmatpush1.bf16.msra.mxu0 0
        %8095 = vmatprep.subr.bf16.mxu0 0
        %8096 = vmatpush1.bf16.msra.mxu0 0
        %8097 = vmatprep.subr.bf16.mxu0 0
        %8098 = vmatpush1.bf16.msra.mxu0 0
        %8099 = vmatprep.mubr.bf16.mxu0 0
        %8100 = vmatmul.mubr.bf16.gmra.mrb[0].mxu0 %v8062
        %v8101 = vpop.f32.mrb[0].mxu0
        %v8102 = vadd.f32 0.0, %v8101
        %v8103 = vpop.f32.mrb[0].mxu0
        %v8104 = vpop.f32.mrb[0].mxu0
        %v8105 = vpop.f32.mrb[0].mxu0
        %8106 = vdwg.mxu0
        %v8107 = vmax.f32 %v7780, 0.0
        %v8108 = vmax.f32 %v7826, 0.0
        %v8109 = vmax.f32 %v7872, 0.0
        %v8110 = vmax.f32 %v7918, 0.0
        %v8111 = vmax.f32 %v7964, 0.0
        %v8112 = vmax.f32 %v8010, 0.0
        %v8113 = vmax.f32 %v8056, 0.0
        %v8114 = vmax.f32 %v8102, 0.0
        %v8115 = vld [vmem:[%s19] sm:$0xff]
        %v8116 = vld [vmem:[%s19 + $0x8] sm:$0xff]
        %v8117 = vld [vmem:[%s19 + $0x10] sm:$0xff]
        %v8118 = vld [vmem:[%s19 + $0x18] sm:$0xff]
        %v8119 = vld [vmem:[%s19 + $0x20] sm:$0xff]
        %v8120 = vld [vmem:[%s19 + $0x28] sm:$0xff]
        %v8121 = vld [vmem:[%s19 + $0x30] sm:$0xff]
        %v8122 = vld [vmem:[%s19 + $0x38] sm:$0xff]
        %v8123 = vld [vmem:[%s19 + $0x40] sm:$0xff]
        %v8124 = vld [vmem:[%s19 + $0x48] sm:$0xff]
        %v8125 = vld [vmem:[%s19 + $0x50] sm:$0xff]
        %v8126 = vld [vmem:[%s19 + $0x58] sm:$0xff]
        %v8127 = vld [vmem:[%s19 + $0x60] sm:$0xff]
        %v8128 = vld [vmem:[%s19 + $0x68] sm:$0xff]
        %v8129 = vld [vmem:[%s19 + $0x70] sm:$0xff]
        %v8130 = vpack.c.bf16 %v8116, %v8115
        %v8131 = vpack.c.bf16 %v8118, %v8117
        %v8132 = vpack.c.bf16 %v8120, %v8119
        %v8133 = vpack.c.bf16 %v8122, %v8121
        %v8134 = vpack.c.bf16 %v8124, %v8123
        %v8135 = vpack.c.bf16 %v8126, %v8125
        %v8136 = vpack.c.bf16 %v8128, %v8127
        %v8137 = vpack.c.bf16 %v8129, %v8129
        %v8138 = vld [vmem:[%s20] sm:$0x1]
        %v8140 = vlaneseq
        %v8141 = vshrl.u32 %v8140, 7
        %v8142 = vsub.s32 0, %v8141
        %v8143 = vrot.slane %v8138, %v8142
        %v8146 = vsel %vm786, %v8130, 0
        %v8149 = vsel %vm786, %v8131, 0
        %v8152 = vsel %vm786, %v8132, 0
        %v8155 = vsel %vm786, %v8133, 0
        %v8158 = vsel %vm786, %v8134, 0
        %v8161 = vsel %vm786, %v8135, 0
        %v8164 = vsel %vm786, %v8136, 0
        %v8167 = vsel %vm786, %v8137, 0
        %8169 = vmatprep.subr.bf16.mxu0 0
        %8170 = vmatpush1.bf16.xpose.msra.mxu0 %v8146
        %8171 = vmatprep.subr.bf16.mxu0 0
        %8172 = vmatpush1.bf16.xpose.msra.mxu0 %v8149
        %8173 = vmatprep.subr.bf16.mxu0 0
        %8174 = vmatpush1.bf16.xpose.msra.mxu0 %v8152
        %8175 = vmatprep.subr.bf16.mxu0 0
        %8176 = vmatpush1.bf16.xpose.msra.mxu0 %v8155
        %8177 = vmatprep.subr.bf16.mxu0 0
        %8178 = vmatpush1.bf16.xpose.msra.mxu0 %v8158
        %8179 = vmatprep.subr.bf16.mxu0 0
        %8180 = vmatpush1.bf16.xpose.msra.mxu0 %v8161
        %8181 = vmatprep.subr.bf16.mxu0 0
        %8182 = vmatpush1.bf16.xpose.msra.mxu0 %v8164
        %8183 = vmatprep.subr.bf16.mxu0 0
        %8184 = vmatpush1.bf16.xpose.msra.mxu0 %v8167
        %8185 = vmatprep.subr.bf16.mxu0 0
        %8186 = vmatpush1.bf16.xpose.msra.mxu0 0
        %8187 = vmatprep.subr.bf16.mxu0 0
        %8188 = vmatpush1.bf16.xpose.msra.mxu0 0
        %8189 = vmatprep.subr.bf16.mxu0 0
        %8190 = vmatpush1.bf16.xpose.msra.mxu0 0
        %8191 = vmatprep.subr.bf16.mxu0 0
        %8192 = vmatpush1.bf16.xpose.msra.mxu0 0
        %8193 = vmatprep.subr.bf16.mxu0 0
        %8194 = vmatpush1.bf16.xpose.msra.mxu0 0
        %8195 = vmatprep.subr.bf16.mxu0 0
        %8196 = vmatpush1.bf16.xpose.msra.mxu0 0
        %8197 = vmatprep.subr.bf16.mxu0 0
        %8198 = vmatpush1.bf16.xpose.msra.mxu0 0
        %8199 = vmatprep.subr.bf16.mxu0 0
        %8200 = vmatpush1.bf16.xpose.msra.mxu0 0
        %8201 = vmatprep.mubr.bf16.mxu0 0
        %8202 = vmatmul.mubr.bf16.gmra.mrb[0].mxu0 %v984
        %v8203 = vpop.f32.mrb[0].mxu0
        %v8204 = vadd.f32 %v8143, %v8203
        %v8205 = vpop.f32.mrb[0].mxu0
        %v8206 = vpop.f32.mrb[0].mxu0
        %v8207 = vpop.f32.mrb[0].mxu0
        %8208 = vdwg.mxu0
        %v8209 = vmax.f32 %v8204, 0.0
        %v8210 = vpack.c.bf16 %v8209, %v8209
        %v8211 = vld [vmem:[%s21] sm:$0xff]
        %v8212 = vld [vmem:[%s21 + $0x8] sm:$0xff]
        %v8213 = vld [vmem:[%s21 + $0x10] sm:$0xff]
        %v8214 = vld [vmem:[%s21 + $0x18] sm:$0xff]
        %v8215 = vld [vmem:[%s21 + $0x20] sm:$0xff]
        %v8216 = vld [vmem:[%s21 + $0x28] sm:$0xff]
        %v8217 = vld [vmem:[%s21 + $0x30] sm:$0xff]
        %v8218 = vld [vmem:[%s21 + $0x38] sm:$0xff]
        %v8219 = vld [vmem:[%s21 + $0x40] sm:$0xff]
        %v8220 = vld [vmem:[%s21 + $0x48] sm:$0xff]
        %v8221 = vld [vmem:[%s21 + $0x50] sm:$0xff]
        %v8222 = vld [vmem:[%s21 + $0x58] sm:$0xff]
        %v8223 = vld [vmem:[%s21 + $0x60] sm:$0xff]
        %v8224 = vld [vmem:[%s21 + $0x68] sm:$0xff]
        %v8225 = vld [vmem:[%s21 + $0x70] sm:$0xff]
        %v8226 = vpack.c.bf16 %v8212, %v8211
        %v8227 = vpack.c.bf16 %v8214, %v8213
        %v8228 = vpack.c.bf16 %v8216, %v8215
        %v8229 = vpack.c.bf16 %v8218, %v8217
        %v8230 = vpack.c.bf16 %v8220, %v8219
        %v8231 = vpack.c.bf16 %v8222, %v8221
        %v8232 = vpack.c.bf16 %v8224, %v8223
        %v8233 = vpack.c.bf16 %v8225, %v8225
        %v8234 = vld [vmem:[%s22] sm:$0x1]
        %v8236 = vlaneseq
        %v8237 = vshrl.u32 %v8236, 7
        %v8238 = vsub.s32 0, %v8237
        %v8239 = vrot.slane %v8234, %v8238
        %v8242 = vsel %vm1082, %v8210, 0
        %v8245 = vsel %vm1082, %v8226, 0
        %v8248 = vsel %vm1082, %v8227, 0
        %v8251 = vsel %vm1082, %v8228, 0
        %v8254 = vsel %vm1082, %v8229, 0
        %v8257 = vsel %vm1082, %v8230, 0
        %v8260 = vsel %vm1082, %v8231, 0
        %v8263 = vsel %vm1082, %v8232, 0
        %v8266 = vsel %vm1082, %v8233, 0
        %8268 = vmatprep.subr.bf16.mxu0 0
        %8269 = vmatpush1.bf16.xpose.msra.mxu0 %v8245
        %8270 = vmatprep.subr.bf16.mxu0 0
        %8271 = vmatpush1.bf16.xpose.msra.mxu0 %v8248
        %8272 = vmatprep.subr.bf16.mxu0 0
        %8273 = vmatpush1.bf16.xpose.msra.mxu0 %v8251
        %8274 = vmatprep.subr.bf16.mxu0 0
        %8275 = vmatpush1.bf16.xpose.msra.mxu0 %v8254
        %8276 = vmatprep.subr.bf16.mxu0 0
        %8277 = vmatpush1.bf16.xpose.msra.mxu0 %v8257
        %8278 = vmatprep.subr.bf16.mxu0 0
        %8279 = vmatpush1.bf16.xpose.msra.mxu0 %v8260
        %8280 = vmatprep.subr.bf16.mxu0 0
        %8281 = vmatpush1.bf16.xpose.msra.mxu0 %v8263
        %8282 = vmatprep.subr.bf16.mxu0 0
        %8283 = vmatpush1.bf16.xpose.msra.mxu0 %v8266
        %8284 = vmatprep.subr.bf16.mxu0 0
        %8285 = vmatpush1.bf16.xpose.msra.mxu0 0
        %8286 = vmatprep.subr.bf16.mxu0 0
        %8287 = vmatpush1.bf16.xpose.msra.mxu0 0
        %8288 = vmatprep.subr.bf16.mxu0 0
        %8289 = vmatpush1.bf16.xpose.msra.mxu0 0
        %8290 = vmatprep.subr.bf16.mxu0 0
        %8291 = vmatpush1.bf16.xpose.msra.mxu0 0
        %8292 = vmatprep.subr.bf16.mxu0 0
        %8293 = vmatpush1.bf16.xpose.msra.mxu0 0
        %8294 = vmatprep.subr.bf16.mxu0 0
        %8295 = vmatpush1.bf16.xpose.msra.mxu0 0
        %8296 = vmatprep.subr.bf16.mxu0 0
        %8297 = vmatpush1.bf16.xpose.msra.mxu0 0
        %8298 = vmatprep.subr.bf16.mxu0 0
        %8299 = vmatpush1.bf16.xpose.msra.mxu0 0
        %8300 = vmatprep.mubr.bf16.mxu0 0
        %8301 = vmatmul.mubr.bf16.gmra.mrb[0].mxu0 %v8242
        %v8302 = vpop.f32.mrb[0].mxu0
        %v8303 = vadd.f32 %v8239, %v8302
        %v8304 = vpop.f32.mrb[0].mxu0
        %v8305 = vpop.f32.mrb[0].mxu0
        %v8306 = vpop.f32.mrb[0].mxu0
        %8307 = vdwg.mxu0
        %v8309 = vcombine.high %v8303, %v8303
        %v8311 = vunpack.c.l.s4 1966171168
        %v8312 = vunpack.c.0.s8 %v8311
        %v8313 = vlaneseq
        %v8314 = vshrl.u32 %v8313, 7
        %v8315 = vsub.s32 %v8312, %v8314
        %v8316 = vrot.slane %v8303, %v8315
        %v8318 = vunpack.c.l.s4 1966171168
        %v8319 = vunpack.c.0.s8 %v8318
        %v8320 = vlaneseq
        %v8321 = vshrl.u32 %v8320, 7
        %v8322 = vsub.s32 %v8319, %v8321
        %v8323 = vrot.slane %v8309, %v8322
        %v8324 = vcombine.high %v8316, %v8316
        %v8325 = vcombine.high %v8323, %v8323
        %v8327 = vunpack.c.l.s4 1966171168
        %v8328 = vunpack.c.0.s8 %v8327
        %v8329 = vlaneseq
        %v8330 = vshrl.u32 %v8329, 7
        %v8331 = vsub.s32 %v8328, %v8330
        %v8332 = vrot.slane %v8316, %v8331
        %v8334 = vunpack.c.l.s4 1966171168
        %v8335 = vunpack.c.0.s8 %v8334
        %v8336 = vlaneseq
        %v8337 = vshrl.u32 %v8336, 7
        %v8338 = vsub.s32 %v8335, %v8337
        %v8339 = vrot.slane %v8323, %v8338
        %v8341 = vunpack.c.l.s4 1966171168
        %v8342 = vunpack.c.0.s8 %v8341
        %v8343 = vlaneseq
        %v8344 = vshrl.u32 %v8343, 7
        %v8345 = vsub.s32 %v8342, %v8344
        %v8346 = vrot.slane %v8324, %v8345
        %v8348 = vunpack.c.l.s4 1966171168
        %v8349 = vunpack.c.0.s8 %v8348
        %v8350 = vlaneseq
        %v8351 = vshrl.u32 %v8350, 7
        %v8352 = vsub.s32 %v8349, %v8351
        %v8353 = vrot.slane %v8325, %v8352
        %v8354 = vcombine.high %v8332, %v8332
        %v8355 = vcombine.high %v8339, %v8339
        %v8356 = vcombine.high %v8346, %v8346
        %v8357 = vcombine.high %v8353, %v8353
        %8374 = vrot.lane.b32.xlu0 %v8107, 120
        %v8375 = vpop.permute.xlu0 %8374
        %8376 = vrot.lane.b32.xlu0 %v8108, 120
        %v8377 = vpop.permute.xlu0 %8376
        %8378 = vrot.lane.b32.xlu0 %v8109, 120
        %v8379 = vpop.permute.xlu0 %8378
        %8380 = vrot.lane.b32.xlu0 %v8110, 120
        %v8381 = vpop.permute.xlu0 %8380
        %8382 = vrot.lane.b32.xlu0 %v8111, 120
        %v8383 = vpop.permute.xlu0 %8382
        %8384 = vrot.lane.b32.xlu0 %v8112, 120
        %v8385 = vpop.permute.xlu0 %8384
        %8386 = vrot.lane.b32.xlu0 %v8113, 120
        %v8387 = vpop.permute.xlu0 %8386
        %8388 = vrot.lane.b32.xlu0 %v8114, 120
        %v8389 = vpop.permute.xlu0 %8388
        %8398 = vrot.lane.b32.xlu0 %v8107, 7
        %v8399 = vpop.permute.xlu0 %8398
        %8400 = vrot.lane.b32.xlu0 %v8108, 7
        %v8401 = vpop.permute.xlu0 %8400
        %8402 = vrot.lane.b32.xlu0 %v8109, 7
        %v8403 = vpop.permute.xlu0 %8402
        %8404 = vrot.lane.b32.xlu0 %v8110, 7
        %v8405 = vpop.permute.xlu0 %8404
        %8406 = vrot.lane.b32.xlu0 %v8111, 7
        %v8407 = vpop.permute.xlu0 %8406
        %8408 = vrot.lane.b32.xlu0 %v8112, 7
        %v8409 = vpop.permute.xlu0 %8408
        %8410 = vrot.lane.b32.xlu0 %v8113, 7
        %v8411 = vpop.permute.xlu0 %8410
        %8412 = vrot.lane.b32.xlu0 %v8114, 7
        %v8413 = vpop.permute.xlu0 %8412
        %8422 = vrot.lane.b32.xlu0 %v8107, 22
        %v8423 = vpop.permute.xlu0 %8422
        %8424 = vrot.lane.b32.xlu0 %v8108, 22
        %v8425 = vpop.permute.xlu0 %8424
        %8426 = vrot.lane.b32.xlu0 %v8109, 22
        %v8427 = vpop.permute.xlu0 %8426
        %8428 = vrot.lane.b32.xlu0 %v8110, 22
        %v8429 = vpop.permute.xlu0 %8428
        %8430 = vrot.lane.b32.xlu0 %v8111, 22
        %v8431 = vpop.permute.xlu0 %8430
        %8432 = vrot.lane.b32.xlu0 %v8112, 22
        %v8433 = vpop.permute.xlu0 %8432
        %8434 = vrot.lane.b32.xlu0 %v8113, 22
        %v8435 = vpop.permute.xlu0 %8434
        %8436 = vrot.lane.b32.xlu0 %v8114, 22
        %v8437 = vpop.permute.xlu0 %8436
        %v8446 = vsel %vm1575, %v8375, %v8399
        %v8447 = vsel %vm1575, %v8377, %v8401
        %v8448 = vsel %vm1575, %v8379, %v8403
        %v8449 = vsel %vm1575, %v8381, %v8405
        %v8450 = vsel %vm1575, %v8383, %v8407
        %v8451 = vsel %vm1575, %v8385, %v8409
        %v8452 = vsel %vm1575, %v8387, %v8411
        %v8453 = vsel %vm1575, %v8389, %v8413
        %v8454 = vsel %vm1584, %v8446, %v8423
        %v8455 = vsel %vm1584, %v8447, %v8425
        %v8456 = vsel %vm1584, %v8448, %v8427
        %v8457 = vsel %vm1584, %v8449, %v8429
        %v8458 = vsel %vm1584, %v8450, %v8431
        %v8459 = vsel %vm1584, %v8451, %v8433
        %v8460 = vsel %vm1584, %v8452, %v8435
        %v8461 = vsel %vm1584, %v8453, %v8437
        %8470 = vrot.lane.b32.xlu0 %v8454, 127
        %v8471 = vpop.permute.xlu0 %8470
        %8472 = vrot.lane.b32.xlu0 %v8455, 127
        %v8473 = vpop.permute.xlu0 %8472
        %8474 = vrot.lane.b32.xlu0 %v8456, 127
        %v8475 = vpop.permute.xlu0 %8474
        %8476 = vrot.lane.b32.xlu0 %v8457, 127
        %v8477 = vpop.permute.xlu0 %8476
        %8478 = vrot.lane.b32.xlu0 %v8458, 127
        %v8479 = vpop.permute.xlu0 %8478
        %8480 = vrot.lane.b32.xlu0 %v8459, 127
        %v8481 = vpop.permute.xlu0 %8480
        %8482 = vrot.lane.b32.xlu0 %v8460, 127
        %v8483 = vpop.permute.xlu0 %8482
        %8484 = vrot.lane.b32.xlu0 %v8461, 127
        %v8485 = vpop.permute.xlu0 %8484
        %8494 = vrot.lane.b32.xlu0 %v8454, 126
        %v8495 = vpop.permute.xlu0 %8494
        %8496 = vrot.lane.b32.xlu0 %v8455, 126
        %v8497 = vpop.permute.xlu0 %8496
        %8498 = vrot.lane.b32.xlu0 %v8456, 126
        %v8499 = vpop.permute.xlu0 %8498
        %8500 = vrot.lane.b32.xlu0 %v8457, 126
        %v8501 = vpop.permute.xlu0 %8500
        %8502 = vrot.lane.b32.xlu0 %v8458, 126
        %v8503 = vpop.permute.xlu0 %8502
        %8504 = vrot.lane.b32.xlu0 %v8459, 126
        %v8505 = vpop.permute.xlu0 %8504
        %8506 = vrot.lane.b32.xlu0 %v8460, 126
        %v8507 = vpop.permute.xlu0 %8506
        %8508 = vrot.lane.b32.xlu0 %v8461, 126
        %v8509 = vpop.permute.xlu0 %8508
        %8518 = vrot.lane.b32.xlu0 %v8454, 125
        %v8519 = vpop.permute.xlu0 %8518
        %8520 = vrot.lane.b32.xlu0 %v8455, 125
        %v8521 = vpop.permute.xlu0 %8520
        %8522 = vrot.lane.b32.xlu0 %v8456, 125
        %v8523 = vpop.permute.xlu0 %8522
        %8524 = vrot.lane.b32.xlu0 %v8457, 125
        %v8525 = vpop.permute.xlu0 %8524
        %8526 = vrot.lane.b32.xlu0 %v8458, 125
        %v8527 = vpop.permute.xlu0 %8526
        %8528 = vrot.lane.b32.xlu0 %v8459, 125
        %v8529 = vpop.permute.xlu0 %8528
        %8530 = vrot.lane.b32.xlu0 %v8460, 125
        %v8531 = vpop.permute.xlu0 %8530
        %8532 = vrot.lane.b32.xlu0 %v8461, 125
        %v8533 = vpop.permute.xlu0 %8532
        %8542 = vrot.lane.b32.xlu0 %v8454, 124
        %v8543 = vpop.permute.xlu0 %8542
        %8544 = vrot.lane.b32.xlu0 %v8455, 124
        %v8545 = vpop.permute.xlu0 %8544
        %8546 = vrot.lane.b32.xlu0 %v8456, 124
        %v8547 = vpop.permute.xlu0 %8546
        %8548 = vrot.lane.b32.xlu0 %v8457, 124
        %v8549 = vpop.permute.xlu0 %8548
        %8550 = vrot.lane.b32.xlu0 %v8458, 124
        %v8551 = vpop.permute.xlu0 %8550
        %8552 = vrot.lane.b32.xlu0 %v8459, 124
        %v8553 = vpop.permute.xlu0 %8552
        %8554 = vrot.lane.b32.xlu0 %v8460, 124
        %v8555 = vpop.permute.xlu0 %8554
        %8556 = vrot.lane.b32.xlu0 %v8461, 124
        %v8557 = vpop.permute.xlu0 %8556
        %8566 = vrot.lane.b32.xlu0 %v8454, 123
        %v8567 = vpop.permute.xlu0 %8566
        %8568 = vrot.lane.b32.xlu0 %v8455, 123
        %v8569 = vpop.permute.xlu0 %8568
        %8570 = vrot.lane.b32.xlu0 %v8456, 123
        %v8571 = vpop.permute.xlu0 %8570
        %8572 = vrot.lane.b32.xlu0 %v8457, 123
        %v8573 = vpop.permute.xlu0 %8572
        %8574 = vrot.lane.b32.xlu0 %v8458, 123
        %v8575 = vpop.permute.xlu0 %8574
        %8576 = vrot.lane.b32.xlu0 %v8459, 123
        %v8577 = vpop.permute.xlu0 %8576
        %8578 = vrot.lane.b32.xlu0 %v8460, 123
        %v8579 = vpop.permute.xlu0 %8578
        %8580 = vrot.lane.b32.xlu0 %v8461, 123
        %v8581 = vpop.permute.xlu0 %8580
        %8590 = vrot.lane.b32.xlu0 %v8454, 122
        %v8591 = vpop.permute.xlu0 %8590
        %8592 = vrot.lane.b32.xlu0 %v8455, 122
        %v8593 = vpop.permute.xlu0 %8592
        %8594 = vrot.lane.b32.xlu0 %v8456, 122
        %v8595 = vpop.permute.xlu0 %8594
        %8596 = vrot.lane.b32.xlu0 %v8457, 122
        %v8597 = vpop.permute.xlu0 %8596
        %8598 = vrot.lane.b32.xlu0 %v8458, 122
        %v8599 = vpop.permute.xlu0 %8598
        %8600 = vrot.lane.b32.xlu0 %v8459, 122
        %v8601 = vpop.permute.xlu0 %8600
        %8602 = vrot.lane.b32.xlu0 %v8460, 122
        %v8603 = vpop.permute.xlu0 %8602
        %8604 = vrot.lane.b32.xlu0 %v8461, 122
        %v8605 = vpop.permute.xlu0 %8604
        %8614 = vrot.lane.b32.xlu0 %v8454, 121
        %v8615 = vpop.permute.xlu0 %8614
        %8616 = vrot.lane.b32.xlu0 %v8455, 121
        %v8617 = vpop.permute.xlu0 %8616
        %8618 = vrot.lane.b32.xlu0 %v8456, 121
        %v8619 = vpop.permute.xlu0 %8618
        %8620 = vrot.lane.b32.xlu0 %v8457, 121
        %v8621 = vpop.permute.xlu0 %8620
        %8622 = vrot.lane.b32.xlu0 %v8458, 121
        %v8623 = vpop.permute.xlu0 %8622
        %8624 = vrot.lane.b32.xlu0 %v8459, 121
        %v8625 = vpop.permute.xlu0 %8624
        %8626 = vrot.lane.b32.xlu0 %v8460, 121
        %v8627 = vpop.permute.xlu0 %8626
        %8628 = vrot.lane.b32.xlu0 %v8461, 121
        %v8629 = vpop.permute.xlu0 %8628
        %8638 = vrot.lane.b32.xlu0 %v8454, 120
        %v8639 = vpop.permute.xlu0 %8638
        %8640 = vrot.lane.b32.xlu0 %v8455, 120
        %v8641 = vpop.permute.xlu0 %8640
        %8642 = vrot.lane.b32.xlu0 %v8456, 120
        %v8643 = vpop.permute.xlu0 %8642
        %8644 = vrot.lane.b32.xlu0 %v8457, 120
        %v8645 = vpop.permute.xlu0 %8644
        %8646 = vrot.lane.b32.xlu0 %v8458, 120
        %v8647 = vpop.permute.xlu0 %8646
        %8648 = vrot.lane.b32.xlu0 %v8459, 120
        %v8649 = vpop.permute.xlu0 %8648
        %8650 = vrot.lane.b32.xlu0 %v8460, 120
        %v8651 = vpop.permute.xlu0 %8650
        %8652 = vrot.lane.b32.xlu0 %v8461, 120
        %v8653 = vpop.permute.xlu0 %8652
        %8662 = vrot.lane.b32.xlu0 %v8454, 119
        %v8663 = vpop.permute.xlu0 %8662
        %8664 = vrot.lane.b32.xlu0 %v8455, 119
        %v8665 = vpop.permute.xlu0 %8664
        %8666 = vrot.lane.b32.xlu0 %v8456, 119
        %v8667 = vpop.permute.xlu0 %8666
        %8668 = vrot.lane.b32.xlu0 %v8457, 119
        %v8669 = vpop.permute.xlu0 %8668
        %8670 = vrot.lane.b32.xlu0 %v8458, 119
        %v8671 = vpop.permute.xlu0 %8670
        %8672 = vrot.lane.b32.xlu0 %v8459, 119
        %v8673 = vpop.permute.xlu0 %8672
        %8674 = vrot.lane.b32.xlu0 %v8460, 119
        %v8675 = vpop.permute.xlu0 %8674
        %8676 = vrot.lane.b32.xlu0 %v8461, 119
        %v8677 = vpop.permute.xlu0 %8676
        %8686 = vrot.lane.b32.xlu0 %v8454, 118
        %v8687 = vpop.permute.xlu0 %8686
        %8688 = vrot.lane.b32.xlu0 %v8455, 118
        %v8689 = vpop.permute.xlu0 %8688
        %8690 = vrot.lane.b32.xlu0 %v8456, 118
        %v8691 = vpop.permute.xlu0 %8690
        %8692 = vrot.lane.b32.xlu0 %v8457, 118
        %v8693 = vpop.permute.xlu0 %8692
        %8694 = vrot.lane.b32.xlu0 %v8458, 118
        %v8695 = vpop.permute.xlu0 %8694
        %8696 = vrot.lane.b32.xlu0 %v8459, 118
        %v8697 = vpop.permute.xlu0 %8696
        %8698 = vrot.lane.b32.xlu0 %v8460, 118
        %v8699 = vpop.permute.xlu0 %8698
        %8700 = vrot.lane.b32.xlu0 %v8461, 118
        %v8701 = vpop.permute.xlu0 %8700
        %8710 = vrot.lane.b32.xlu0 %v8454, 117
        %v8711 = vpop.permute.xlu0 %8710
        %8712 = vrot.lane.b32.xlu0 %v8455, 117
        %v8713 = vpop.permute.xlu0 %8712
        %8714 = vrot.lane.b32.xlu0 %v8456, 117
        %v8715 = vpop.permute.xlu0 %8714
        %8716 = vrot.lane.b32.xlu0 %v8457, 117
        %v8717 = vpop.permute.xlu0 %8716
        %8718 = vrot.lane.b32.xlu0 %v8458, 117
        %v8719 = vpop.permute.xlu0 %8718
        %8720 = vrot.lane.b32.xlu0 %v8459, 117
        %v8721 = vpop.permute.xlu0 %8720
        %8722 = vrot.lane.b32.xlu0 %v8460, 117
        %v8723 = vpop.permute.xlu0 %8722
        %8724 = vrot.lane.b32.xlu0 %v8461, 117
        %v8725 = vpop.permute.xlu0 %8724
        %8734 = vrot.lane.b32.xlu0 %v8454, 116
        %v8735 = vpop.permute.xlu0 %8734
        %8736 = vrot.lane.b32.xlu0 %v8455, 116
        %v8737 = vpop.permute.xlu0 %8736
        %8738 = vrot.lane.b32.xlu0 %v8456, 116
        %v8739 = vpop.permute.xlu0 %8738
        %8740 = vrot.lane.b32.xlu0 %v8457, 116
        %v8741 = vpop.permute.xlu0 %8740
        %8742 = vrot.lane.b32.xlu0 %v8458, 116
        %v8743 = vpop.permute.xlu0 %8742
        %8744 = vrot.lane.b32.xlu0 %v8459, 116
        %v8745 = vpop.permute.xlu0 %8744
        %8746 = vrot.lane.b32.xlu0 %v8460, 116
        %v8747 = vpop.permute.xlu0 %8746
        %8748 = vrot.lane.b32.xlu0 %v8461, 116
        %v8749 = vpop.permute.xlu0 %8748
        %8758 = vrot.lane.b32.xlu0 %v8454, 115
        %v8759 = vpop.permute.xlu0 %8758
        %8760 = vrot.lane.b32.xlu0 %v8455, 115
        %v8761 = vpop.permute.xlu0 %8760
        %8762 = vrot.lane.b32.xlu0 %v8456, 115
        %v8763 = vpop.permute.xlu0 %8762
        %8764 = vrot.lane.b32.xlu0 %v8457, 115
        %v8765 = vpop.permute.xlu0 %8764
        %8766 = vrot.lane.b32.xlu0 %v8458, 115
        %v8767 = vpop.permute.xlu0 %8766
        %8768 = vrot.lane.b32.xlu0 %v8459, 115
        %v8769 = vpop.permute.xlu0 %8768
        %8770 = vrot.lane.b32.xlu0 %v8460, 115
        %v8771 = vpop.permute.xlu0 %8770
        %8772 = vrot.lane.b32.xlu0 %v8461, 115
        %v8773 = vpop.permute.xlu0 %8772
        %8782 = vrot.lane.b32.xlu0 %v8454, 114
        %v8783 = vpop.permute.xlu0 %8782
        %8784 = vrot.lane.b32.xlu0 %v8455, 114
        %v8785 = vpop.permute.xlu0 %8784
        %8786 = vrot.lane.b32.xlu0 %v8456, 114
        %v8787 = vpop.permute.xlu0 %8786
        %8788 = vrot.lane.b32.xlu0 %v8457, 114
        %v8789 = vpop.permute.xlu0 %8788
        %8790 = vrot.lane.b32.xlu0 %v8458, 114
        %v8791 = vpop.permute.xlu0 %8790
        %8792 = vrot.lane.b32.xlu0 %v8459, 114
        %v8793 = vpop.permute.xlu0 %8792
        %8794 = vrot.lane.b32.xlu0 %v8460, 114
        %v8795 = vpop.permute.xlu0 %8794
        %8796 = vrot.lane.b32.xlu0 %v8461, 114
        %v8797 = vpop.permute.xlu0 %8796
        %v8806 = vpack.c.bf16 %v8332, %v8332
        %v8807 = vpack.c.bf16 %v8346, %v8346
        %v8808 = vpack.c.bf16 %v8354, %v8354
        %v8809 = vpack.c.bf16 %v8356, %v8356
        %v8810 = vpack.c.bf16 %v8339, %v8339
        %v8811 = vpack.c.bf16 %v8353, %v8353
        %v8812 = vpack.c.bf16 %v8355, %v8355
        %v8813 = vpack.c.bf16 %v8357, %v8357
        %v8814 = vpack.c.bf16 %v8471, %v8454
        %v8815 = vpack.c.bf16 %v8519, %v8495
        %v8816 = vpack.c.bf16 %v8567, %v8543
        %v8817 = vpack.c.bf16 %v8615, %v8591
        %v8818 = vpack.c.bf16 %v8663, %v8639
        %v8819 = vpack.c.bf16 %v8711, %v8687
        %v8820 = vpack.c.bf16 %v8759, %v8735
        %v8821 = vpack.c.bf16 %v8783, %v8783
        %v8822 = vpack.c.bf16 %v8473, %v8455
        %v8823 = vpack.c.bf16 %v8521, %v8497
        %v8824 = vpack.c.bf16 %v8569, %v8545
        %v8825 = vpack.c.bf16 %v8617, %v8593
        %v8826 = vpack.c.bf16 %v8665, %v8641
        %v8827 = vpack.c.bf16 %v8713, %v8689
        %v8828 = vpack.c.bf16 %v8761, %v8737
        %v8829 = vpack.c.bf16 %v8785, %v8785
        %v8830 = vpack.c.bf16 %v8475, %v8456
        %v8831 = vpack.c.bf16 %v8523, %v8499
        %v8832 = vpack.c.bf16 %v8571, %v8547
        %v8833 = vpack.c.bf16 %v8619, %v8595
        %v8834 = vpack.c.bf16 %v8667, %v8643
        %v8835 = vpack.c.bf16 %v8715, %v8691
        %v8836 = vpack.c.bf16 %v8763, %v8739
        %v8837 = vpack.c.bf16 %v8787, %v8787
        %v8838 = vpack.c.bf16 %v8477, %v8457
        %v8839 = vpack.c.bf16 %v8525, %v8501
        %v8840 = vpack.c.bf16 %v8573, %v8549
        %v8841 = vpack.c.bf16 %v8621, %v8597
        %v8842 = vpack.c.bf16 %v8669, %v8645
        %v8843 = vpack.c.bf16 %v8717, %v8693
        %v8844 = vpack.c.bf16 %v8765, %v8741
        %v8845 = vpack.c.bf16 %v8789, %v8789
        %v8846 = vpack.c.bf16 %v8479, %v8458
        %v8847 = vpack.c.bf16 %v8527, %v8503
        %v8848 = vpack.c.bf16 %v8575, %v8551
        %v8849 = vpack.c.bf16 %v8623, %v8599
        %v8850 = vpack.c.bf16 %v8671, %v8647
        %v8851 = vpack.c.bf16 %v8719, %v8695
        %v8852 = vpack.c.bf16 %v8767, %v8743
        %v8853 = vpack.c.bf16 %v8791, %v8791
        %v8854 = vpack.c.bf16 %v8481, %v8459
        %v8855 = vpack.c.bf16 %v8529, %v8505
        %v8856 = vpack.c.bf16 %v8577, %v8553
        %v8857 = vpack.c.bf16 %v8625, %v8601
        %v8858 = vpack.c.bf16 %v8673, %v8649
        %v8859 = vpack.c.bf16 %v8721, %v8697
        %v8860 = vpack.c.bf16 %v8769, %v8745
        %v8861 = vpack.c.bf16 %v8793, %v8793
        %v8862 = vpack.c.bf16 %v8483, %v8460
        %v8863 = vpack.c.bf16 %v8531, %v8507
        %v8864 = vpack.c.bf16 %v8579, %v8555
        %v8865 = vpack.c.bf16 %v8627, %v8603
        %v8866 = vpack.c.bf16 %v8675, %v8651
        %v8867 = vpack.c.bf16 %v8723, %v8699
        %v8868 = vpack.c.bf16 %v8771, %v8747
        %v8869 = vpack.c.bf16 %v8795, %v8795
        %v8870 = vpack.c.bf16 %v8485, %v8461
        %v8871 = vpack.c.bf16 %v8533, %v8509
        %v8872 = vpack.c.bf16 %v8581, %v8557
        %v8873 = vpack.c.bf16 %v8629, %v8605
        %v8874 = vpack.c.bf16 %v8677, %v8653
        %v8875 = vpack.c.bf16 %v8725, %v8701
        %v8876 = vpack.c.bf16 %v8773, %v8749
        %v8877 = vpack.c.bf16 %v8797, %v8797
        %v8879 = vsel %vm1082, %v8806, 0
        %v8882 = vsel %vm1435, %v8821, 0
        %8884 = vmatprep.subr.bf16.mxu0 0
        %8885 = vmatpush1.bf16.msra.mxu0 %v8814
        %8886 = vmatprep.subr.bf16.mxu0 0
        %8887 = vmatpush1.bf16.msra.mxu0 %v8815
        %8888 = vmatprep.subr.bf16.mxu0 0
        %8889 = vmatpush1.bf16.msra.mxu0 %v8816
        %8890 = vmatprep.subr.bf16.mxu0 0
        %8891 = vmatpush1.bf16.msra.mxu0 %v8817
        %8892 = vmatprep.subr.bf16.mxu0 0
        %8893 = vmatpush1.bf16.msra.mxu0 %v8818
        %8894 = vmatprep.subr.bf16.mxu0 0
        %8895 = vmatpush1.bf16.msra.mxu0 %v8819
        %8896 = vmatprep.subr.bf16.mxu0 0
        %8897 = vmatpush1.bf16.msra.mxu0 %v8820
        %8898 = vmatprep.subr.bf16.mxu0 0
        %8899 = vmatpush1.bf16.msra.mxu0 %v8882
        %8900 = vmatprep.subr.bf16.mxu0 0
        %8901 = vmatpush1.bf16.msra.mxu0 0
        %8902 = vmatprep.subr.bf16.mxu0 0
        %8903 = vmatpush1.bf16.msra.mxu0 0
        %8904 = vmatprep.subr.bf16.mxu0 0
        %8905 = vmatpush1.bf16.msra.mxu0 0
        %8906 = vmatprep.subr.bf16.mxu0 0
        %8907 = vmatpush1.bf16.msra.mxu0 0
        %8908 = vmatprep.subr.bf16.mxu0 0
        %8909 = vmatpush1.bf16.msra.mxu0 0
        %8910 = vmatprep.subr.bf16.mxu0 0
        %8911 = vmatpush1.bf16.msra.mxu0 0
        %8912 = vmatprep.subr.bf16.mxu0 0
        %8913 = vmatpush1.bf16.msra.mxu0 0
        %8914 = vmatprep.subr.bf16.mxu0 0
        %8915 = vmatpush1.bf16.msra.mxu0 0
        %8916 = vmatprep.mubr.bf16.mxu0 0
        %8917 = vmatmul.mubr.bf16.gmra.mrb[0].mxu0 %v8879
        %v8918 = vpop.f32.mrb[0].mxu0
        %v8919 = vadd.f32 0.0, %v8918
        %v8920 = vpop.f32.mrb[0].mxu0
        %v8921 = vpop.f32.mrb[0].mxu0
        %v8922 = vpop.f32.mrb[0].mxu0
        %8923 = vdwg.mxu0
        %v8925 = vsel %vm1082, %v8807, 0
        %v8928 = vsel %vm1435, %v8829, 0
        %8930 = vmatprep.subr.bf16.mxu0 0
        %8931 = vmatpush1.bf16.msra.mxu0 %v8822
        %8932 = vmatprep.subr.bf16.mxu0 0
        %8933 = vmatpush1.bf16.msra.mxu0 %v8823
        %8934 = vmatprep.subr.bf16.mxu0 0
        %8935 = vmatpush1.bf16.msra.mxu0 %v8824
        %8936 = vmatprep.subr.bf16.mxu0 0
        %8937 = vmatpush1.bf16.msra.mxu0 %v8825
        %8938 = vmatprep.subr.bf16.mxu0 0
        %8939 = vmatpush1.bf16.msra.mxu0 %v8826
        %8940 = vmatprep.subr.bf16.mxu0 0
        %8941 = vmatpush1.bf16.msra.mxu0 %v8827
        %8942 = vmatprep.subr.bf16.mxu0 0
        %8943 = vmatpush1.bf16.msra.mxu0 %v8828
        %8944 = vmatprep.subr.bf16.mxu0 0
        %8945 = vmatpush1.bf16.msra.mxu0 %v8928
        %8946 = vmatprep.subr.bf16.mxu0 0
        %8947 = vmatpush1.bf16.msra.mxu0 0
        %8948 = vmatprep.subr.bf16.mxu0 0
        %8949 = vmatpush1.bf16.msra.mxu0 0
        %8950 = vmatprep.subr.bf16.mxu0 0
        %8951 = vmatpush1.bf16.msra.mxu0 0
        %8952 = vmatprep.subr.bf16.mxu0 0
        %8953 = vmatpush1.bf16.msra.mxu0 0
        %8954 = vmatprep.subr.bf16.mxu0 0
        %8955 = vmatpush1.bf16.msra.mxu0 0
        %8956 = vmatprep.subr.bf16.mxu0 0
        %8957 = vmatpush1.bf16.msra.mxu0 0
        %8958 = vmatprep.subr.bf16.mxu0 0
        %8959 = vmatpush1.bf16.msra.mxu0 0
        %8960 = vmatprep.subr.bf16.mxu0 0
        %8961 = vmatpush1.bf16.msra.mxu0 0
        %8962 = vmatprep.mubr.bf16.mxu0 0
        %8963 = vmatmul.mubr.bf16.gmra.mrb[0].mxu0 %v8925
        %v8964 = vpop.f32.mrb[0].mxu0
        %v8965 = vadd.f32 0.0, %v8964
        %v8966 = vpop.f32.mrb[0].mxu0
        %v8967 = vpop.f32.mrb[0].mxu0
        %v8968 = vpop.f32.mrb[0].mxu0
        %8969 = vdwg.mxu0
        %v8971 = vsel %vm1082, %v8808, 0
        %v8974 = vsel %vm1435, %v8837, 0
        %8976 = vmatprep.subr.bf16.mxu0 0
        %8977 = vmatpush1.bf16.msra.mxu0 %v8830
        %8978 = vmatprep.subr.bf16.mxu0 0
        %8979 = vmatpush1.bf16.msra.mxu0 %v8831
        %8980 = vmatprep.subr.bf16.mxu0 0
        %8981 = vmatpush1.bf16.msra.mxu0 %v8832
        %8982 = vmatprep.subr.bf16.mxu0 0
        %8983 = vmatpush1.bf16.msra.mxu0 %v8833
        %8984 = vmatprep.subr.bf16.mxu0 0
        %8985 = vmatpush1.bf16.msra.mxu0 %v8834
        %8986 = vmatprep.subr.bf16.mxu0 0
        %8987 = vmatpush1.bf16.msra.mxu0 %v8835
        %8988 = vmatprep.subr.bf16.mxu0 0
        %8989 = vmatpush1.bf16.msra.mxu0 %v8836
        %8990 = vmatprep.subr.bf16.mxu0 0
        %8991 = vmatpush1.bf16.msra.mxu0 %v8974
        %8992 = vmatprep.subr.bf16.mxu0 0
        %8993 = vmatpush1.bf16.msra.mxu0 0
        %8994 = vmatprep.subr.bf16.mxu0 0
        %8995 = vmatpush1.bf16.msra.mxu0 0
        %8996 = vmatprep.subr.bf16.mxu0 0
        %8997 = vmatpush1.bf16.msra.mxu0 0
        %8998 = vmatprep.subr.bf16.mxu0 0
        %8999 = vmatpush1.bf16.msra.mxu0 0
        %9000 = vmatprep.subr.bf16.mxu0 0
        %9001 = vmatpush1.bf16.msra.mxu0 0
        %9002 = vmatprep.subr.bf16.mxu0 0
        %9003 = vmatpush1.bf16.msra.mxu0 0
        %9004 = vmatprep.subr.bf16.mxu0 0
        %9005 = vmatpush1.bf16.msra.mxu0 0
        %9006 = vmatprep.subr.bf16.mxu0 0
        %9007 = vmatpush1.bf16.msra.mxu0 0
        %9008 = vmatprep.mubr.bf16.mxu0 0
        %9009 = vmatmul.mubr.bf16.gmra.mrb[0].mxu0 %v8971
        %v9010 = vpop.f32.mrb[0].mxu0
        %v9011 = vadd.f32 0.0, %v9010
        %v9012 = vpop.f32.mrb[0].mxu0
        %v9013 = vpop.f32.mrb[0].mxu0
        %v9014 = vpop.f32.mrb[0].mxu0
        %9015 = vdwg.mxu0
        %v9017 = vsel %vm1082, %v8809, 0
        %v9020 = vsel %vm1435, %v8845, 0
        %9022 = vmatprep.subr.bf16.mxu0 0
        %9023 = vmatpush1.bf16.msra.mxu0 %v8838
        %9024 = vmatprep.subr.bf16.mxu0 0
        %9025 = vmatpush1.bf16.msra.mxu0 %v8839
        %9026 = vmatprep.subr.bf16.mxu0 0
        %9027 = vmatpush1.bf16.msra.mxu0 %v8840
        %9028 = vmatprep.subr.bf16.mxu0 0
        %9029 = vmatpush1.bf16.msra.mxu0 %v8841
        %9030 = vmatprep.subr.bf16.mxu0 0
        %9031 = vmatpush1.bf16.msra.mxu0 %v8842
        %9032 = vmatprep.subr.bf16.mxu0 0
        %9033 = vmatpush1.bf16.msra.mxu0 %v8843
        %9034 = vmatprep.subr.bf16.mxu0 0
        %9035 = vmatpush1.bf16.msra.mxu0 %v8844
        %9036 = vmatprep.subr.bf16.mxu0 0
        %9037 = vmatpush1.bf16.msra.mxu0 %v9020
        %9038 = vmatprep.subr.bf16.mxu0 0
        %9039 = vmatpush1.bf16.msra.mxu0 0
        %9040 = vmatprep.subr.bf16.mxu0 0
        %9041 = vmatpush1.bf16.msra.mxu0 0
        %9042 = vmatprep.subr.bf16.mxu0 0
        %9043 = vmatpush1.bf16.msra.mxu0 0
        %9044 = vmatprep.subr.bf16.mxu0 0
        %9045 = vmatpush1.bf16.msra.mxu0 0
        %9046 = vmatprep.subr.bf16.mxu0 0
        %9047 = vmatpush1.bf16.msra.mxu0 0
        %9048 = vmatprep.subr.bf16.mxu0 0
        %9049 = vmatpush1.bf16.msra.mxu0 0
        %9050 = vmatprep.subr.bf16.mxu0 0
        %9051 = vmatpush1.bf16.msra.mxu0 0
        %9052 = vmatprep.subr.bf16.mxu0 0
        %9053 = vmatpush1.bf16.msra.mxu0 0
        %9054 = vmatprep.mubr.bf16.mxu0 0
        %9055 = vmatmul.mubr.bf16.gmra.mrb[0].mxu0 %v9017
        %v9056 = vpop.f32.mrb[0].mxu0
        %v9057 = vadd.f32 0.0, %v9056
        %v9058 = vpop.f32.mrb[0].mxu0
        %v9059 = vpop.f32.mrb[0].mxu0
        %v9060 = vpop.f32.mrb[0].mxu0
        %9061 = vdwg.mxu0
        %v9063 = vsel %vm1082, %v8810, 0
        %v9066 = vsel %vm1435, %v8853, 0
        %9068 = vmatprep.subr.bf16.mxu0 0
        %9069 = vmatpush1.bf16.msra.mxu0 %v8846
        %9070 = vmatprep.subr.bf16.mxu0 0
        %9071 = vmatpush1.bf16.msra.mxu0 %v8847
        %9072 = vmatprep.subr.bf16.mxu0 0
        %9073 = vmatpush1.bf16.msra.mxu0 %v8848
        %9074 = vmatprep.subr.bf16.mxu0 0
        %9075 = vmatpush1.bf16.msra.mxu0 %v8849
        %9076 = vmatprep.subr.bf16.mxu0 0
        %9077 = vmatpush1.bf16.msra.mxu0 %v8850
        %9078 = vmatprep.subr.bf16.mxu0 0
        %9079 = vmatpush1.bf16.msra.mxu0 %v8851
        %9080 = vmatprep.subr.bf16.mxu0 0
        %9081 = vmatpush1.bf16.msra.mxu0 %v8852
        %9082 = vmatprep.subr.bf16.mxu0 0
        %9083 = vmatpush1.bf16.msra.mxu0 %v9066
        %9084 = vmatprep.subr.bf16.mxu0 0
        %9085 = vmatpush1.bf16.msra.mxu0 0
        %9086 = vmatprep.subr.bf16.mxu0 0
        %9087 = vmatpush1.bf16.msra.mxu0 0
        %9088 = vmatprep.subr.bf16.mxu0 0
        %9089 = vmatpush1.bf16.msra.mxu0 0
        %9090 = vmatprep.subr.bf16.mxu0 0
        %9091 = vmatpush1.bf16.msra.mxu0 0
        %9092 = vmatprep.subr.bf16.mxu0 0
        %9093 = vmatpush1.bf16.msra.mxu0 0
        %9094 = vmatprep.subr.bf16.mxu0 0
        %9095 = vmatpush1.bf16.msra.mxu0 0
        %9096 = vmatprep.subr.bf16.mxu0 0
        %9097 = vmatpush1.bf16.msra.mxu0 0
        %9098 = vmatprep.subr.bf16.mxu0 0
        %9099 = vmatpush1.bf16.msra.mxu0 0
        %9100 = vmatprep.mubr.bf16.mxu0 0
        %9101 = vmatmul.mubr.bf16.gmra.mrb[0].mxu0 %v9063
        %v9102 = vpop.f32.mrb[0].mxu0
        %v9103 = vadd.f32 0.0, %v9102
        %v9104 = vpop.f32.mrb[0].mxu0
        %v9105 = vpop.f32.mrb[0].mxu0
        %v9106 = vpop.f32.mrb[0].mxu0
        %9107 = vdwg.mxu0
        %v9109 = vsel %vm1082, %v8811, 0
        %v9112 = vsel %vm1435, %v8861, 0
        %9114 = vmatprep.subr.bf16.mxu0 0
        %9115 = vmatpush1.bf16.msra.mxu0 %v8854
        %9116 = vmatprep.subr.bf16.mxu0 0
        %9117 = vmatpush1.bf16.msra.mxu0 %v8855
        %9118 = vmatprep.subr.bf16.mxu0 0
        %9119 = vmatpush1.bf16.msra.mxu0 %v8856
        %9120 = vmatprep.subr.bf16.mxu0 0
        %9121 = vmatpush1.bf16.msra.mxu0 %v8857
        %9122 = vmatprep.subr.bf16.mxu0 0
        %9123 = vmatpush1.bf16.msra.mxu0 %v8858
        %9124 = vmatprep.subr.bf16.mxu0 0
        %9125 = vmatpush1.bf16.msra.mxu0 %v8859
        %9126 = vmatprep.subr.bf16.mxu0 0
        %9127 = vmatpush1.bf16.msra.mxu0 %v8860
        %9128 = vmatprep.subr.bf16.mxu0 0
        %9129 = vmatpush1.bf16.msra.mxu0 %v9112
        %9130 = vmatprep.subr.bf16.mxu0 0
        %9131 = vmatpush1.bf16.msra.mxu0 0
        %9132 = vmatprep.subr.bf16.mxu0 0
        %9133 = vmatpush1.bf16.msra.mxu0 0
        %9134 = vmatprep.subr.bf16.mxu0 0
        %9135 = vmatpush1.bf16.msra.mxu0 0
        %9136 = vmatprep.subr.bf16.mxu0 0
        %9137 = vmatpush1.bf16.msra.mxu0 0
        %9138 = vmatprep.subr.bf16.mxu0 0
        %9139 = vmatpush1.bf16.msra.mxu0 0
        %9140 = vmatprep.subr.bf16.mxu0 0
        %9141 = vmatpush1.bf16.msra.mxu0 0
        %9142 = vmatprep.subr.bf16.mxu0 0
        %9143 = vmatpush1.bf16.msra.mxu0 0
        %9144 = vmatprep.subr.bf16.mxu0 0
        %9145 = vmatpush1.bf16.msra.mxu0 0
        %9146 = vmatprep.mubr.bf16.mxu0 0
        %9147 = vmatmul.mubr.bf16.gmra.mrb[0].mxu0 %v9109
        %v9148 = vpop.f32.mrb[0].mxu0
        %v9149 = vadd.f32 0.0, %v9148
        %v9150 = vpop.f32.mrb[0].mxu0
        %v9151 = vpop.f32.mrb[0].mxu0
        %v9152 = vpop.f32.mrb[0].mxu0
        %9153 = vdwg.mxu0
        %v9155 = vsel %vm1082, %v8812, 0
        %v9158 = vsel %vm1435, %v8869, 0
        %9160 = vmatprep.subr.bf16.mxu0 0
        %9161 = vmatpush1.bf16.msra.mxu0 %v8862
        %9162 = vmatprep.subr.bf16.mxu0 0
        %9163 = vmatpush1.bf16.msra.mxu0 %v8863
        %9164 = vmatprep.subr.bf16.mxu0 0
        %9165 = vmatpush1.bf16.msra.mxu0 %v8864
        %9166 = vmatprep.subr.bf16.mxu0 0
        %9167 = vmatpush1.bf16.msra.mxu0 %v8865
        %9168 = vmatprep.subr.bf16.mxu0 0
        %9169 = vmatpush1.bf16.msra.mxu0 %v8866
        %9170 = vmatprep.subr.bf16.mxu0 0
        %9171 = vmatpush1.bf16.msra.mxu0 %v8867
        %9172 = vmatprep.subr.bf16.mxu0 0
        %9173 = vmatpush1.bf16.msra.mxu0 %v8868
        %9174 = vmatprep.subr.bf16.mxu0 0
        %9175 = vmatpush1.bf16.msra.mxu0 %v9158
        %9176 = vmatprep.subr.bf16.mxu0 0
        %9177 = vmatpush1.bf16.msra.mxu0 0
        %9178 = vmatprep.subr.bf16.mxu0 0
        %9179 = vmatpush1.bf16.msra.mxu0 0
        %9180 = vmatprep.subr.bf16.mxu0 0
        %9181 = vmatpush1.bf16.msra.mxu0 0
        %9182 = vmatprep.subr.bf16.mxu0 0
        %9183 = vmatpush1.bf16.msra.mxu0 0
        %9184 = vmatprep.subr.bf16.mxu0 0
        %9185 = vmatpush1.bf16.msra.mxu0 0
        %9186 = vmatprep.subr.bf16.mxu0 0
        %9187 = vmatpush1.bf16.msra.mxu0 0
        %9188 = vmatprep.subr.bf16.mxu0 0
        %9189 = vmatpush1.bf16.msra.mxu0 0
        %9190 = vmatprep.subr.bf16.mxu0 0
        %9191 = vmatpush1.bf16.msra.mxu0 0
        %9192 = vmatprep.mubr.bf16.mxu0 0
        %9193 = vmatmul.mubr.bf16.gmra.mrb[0].mxu0 %v9155
        %v9194 = vpop.f32.mrb[0].mxu0
        %v9195 = vadd.f32 0.0, %v9194
        %v9196 = vpop.f32.mrb[0].mxu0
        %v9197 = vpop.f32.mrb[0].mxu0
        %v9198 = vpop.f32.mrb[0].mxu0
        %9199 = vdwg.mxu0
        %v9201 = vsel %vm1082, %v8813, 0
        %v9204 = vsel %vm1435, %v8877, 0
        %9206 = vmatprep.subr.bf16.mxu0 0
        %9207 = vmatpush1.bf16.msra.mxu0 %v8870
        %9208 = vmatprep.subr.bf16.mxu0 0
        %9209 = vmatpush1.bf16.msra.mxu0 %v8871
        %9210 = vmatprep.subr.bf16.mxu0 0
        %9211 = vmatpush1.bf16.msra.mxu0 %v8872
        %9212 = vmatprep.subr.bf16.mxu0 0
        %9213 = vmatpush1.bf16.msra.mxu0 %v8873
        %9214 = vmatprep.subr.bf16.mxu0 0
        %9215 = vmatpush1.bf16.msra.mxu0 %v8874
        %9216 = vmatprep.subr.bf16.mxu0 0
        %9217 = vmatpush1.bf16.msra.mxu0 %v8875
        %9218 = vmatprep.subr.bf16.mxu0 0
        %9219 = vmatpush1.bf16.msra.mxu0 %v8876
        %9220 = vmatprep.subr.bf16.mxu0 0
        %9221 = vmatpush1.bf16.msra.mxu0 %v9204
        %9222 = vmatprep.subr.bf16.mxu0 0
        %9223 = vmatpush1.bf16.msra.mxu0 0
        %9224 = vmatprep.subr.bf16.mxu0 0
        %9225 = vmatpush1.bf16.msra.mxu0 0
        %9226 = vmatprep.subr.bf16.mxu0 0
        %9227 = vmatpush1.bf16.msra.mxu0 0
        %9228 = vmatprep.subr.bf16.mxu0 0
        %9229 = vmatpush1.bf16.msra.mxu0 0
        %9230 = vmatprep.subr.bf16.mxu0 0
        %9231 = vmatpush1.bf16.msra.mxu0 0
        %9232 = vmatprep.subr.bf16.mxu0 0
        %9233 = vmatpush1.bf16.msra.mxu0 0
        %9234 = vmatprep.subr.bf16.mxu0 0
        %9235 = vmatpush1.bf16.msra.mxu0 0
        %9236 = vmatprep.subr.bf16.mxu0 0
        %9237 = vmatpush1.bf16.msra.mxu0 0
        %9238 = vmatprep.mubr.bf16.mxu0 0
        %9239 = vmatmul.mubr.bf16.gmra.mrb[0].mxu0 %v9201
        %v9240 = vpop.f32.mrb[0].mxu0
        %v9241 = vadd.f32 0.0, %v9240
        %v9242 = vpop.f32.mrb[0].mxu0
        %v9243 = vpop.f32.mrb[0].mxu0
        %v9244 = vpop.f32.mrb[0].mxu0
        %9245 = vdwg.mxu0
        %v9246 = vld [vmem:[%s769] sm:$0xff]
        %9248 = vset.pattern.permute.xlu0 0
        %9249 = vperm.xlu0 %9248, %v9246
        %v9250 = vpop.permute.xlu0 %9249
        %v9251 = vrot.slane %v9250, 1
        %v9252 = vrot.slane %v9250, 2
        %v9253 = vrot.slane %v9250, 3
        %v9254 = vrot.slane %v9250, 4
        %v9255 = vrot.slane %v9250, 5
        %v9256 = vrot.slane %v9250, 6
        %v9257 = vrot.slane %v9250, 7
        %v9266 = vmul.f32 %v8919, %v9250
        %v9267 = vmul.f32 %v8965, %v9251
        %v9268 = vmul.f32 %v9011, %v9252
        %v9269 = vmul.f32 %v9057, %v9253
        %v9270 = vmul.f32 %v9103, %v9254
        %v9271 = vmul.f32 %v9149, %v9255
        %v9272 = vmul.f32 %v9195, %v9256
        %v9273 = vmul.f32 %v9241, %v9257
        %v9282 = vrot.slane %v9267, 7
        %vm9283 = vcmask 1041409
        %v9284 = vsel %vm9283, %v9282, %v9266
        %v9285 = vrot.slane %v9268, 6
        %vm9286 = vcmask 1042434
        %v9287 = vsel %vm9286, %v9285, %v9284
        %v9288 = vrot.slane %v9269, 5
        %vm9289 = vcmask 1043459
        %v9290 = vsel %vm9289, %v9288, %v9287
        %v9291 = vrot.slane %v9270, 4
        %vm9292 = vcmask 1044484
        %v9293 = vsel %vm9292, %v9291, %v9290
        %v9294 = vrot.slane %v9271, 3
        %vm9295 = vcmask 1045509
        %v9296 = vsel %vm9295, %v9294, %v9293
        %v9297 = vrot.slane %v9272, 2
        %vm9298 = vcmask 1046534
        %v9299 = vsel %vm9298, %v9297, %v9296
        %v9300 = vrot.slane %v9273, 1
        %vm9301 = vcmask 1047559
        %v9302 = vsel %vm9301, %v9300, %v9299
        %9304 = vst.msk [vmem:[%s757] sm:$0xff] %vm2113, %v9302
        %s9305 = sand.u32 %s545, 1
        %s9306 = scalar_lea.sflag [#allocation4], %s9305
        %s9307 = sand.u32 %s545, 1
        %s9308 = smul.addr %s9307, 8
        %s9309 = scalar_lea.vmem [#allocation7], %s9308
        // Predicated region
        $region121: #{convolutional_forward.1} parent=111 // pred_check
          %p9310 = pneg %p555
        $region122: #{convolutional_forward.1} parent=111 // pred_check_branch
          %9312 = sbr.rel (%p9310) target = $region124
        $region123: #{convolutional_forward.1} parent=111 // pred_region
          %s9314 = ssub.s32 128, 128
          %9315 = vsyncadd %s9306, %s9314
          %s9316 = smul.addr %s39, 128
          %s9317 = scalar_lea.hbm %s23, %s9316
          %s9319 = sshll.u32 %s9309, 4
          %s9320 = int_to_ptr.vmem [resolvable:$true] %s9319
          %9322 = dma.vmem_to_hbm [thread:$0]  %s9320, 128, %s9317, %s9306
        $region124: #{convolutional_forward.1} parent=111 // pred_fallthru
          _
      $region112: #{convolutional_forward.1} parent=5 // pred_fallthru
        _
      %p9323 = scmp.le.s32.totalorder 2, %s34
      // Predicated region
      $region125: #{convolutional_forward.1} parent=5 // pred_check
        %p9324 = pneg %p9323
      $region126: #{convolutional_forward.1} parent=5 // pred_check_branch
        %9326 = sbr.rel (%p9324) target = $region128
      $region127: #{convolutional_forward.1} parent=5 // pred_region
        %s9327 = ssub.s32 %s34, 2
        // Predicated region
        $region129: #{convolutional_forward.1} parent=127 // pred_check
          %p9328 = pneg %p561
        $region130: #{convolutional_forward.1} parent=127 // pred_check_branch
          %9330 = sbr.rel (%p9328) target = $region132
        $region131: #{convolutional_forward.1} parent=127 // pred_region
          %s9331 = sand.u32 %s546, 1
          %s9332 = scalar_lea.sflag [#allocation4], %s9331
          %s9333 = sand.u32 %s546, 1
          %s9334 = smul.addr %s9333, 8
          %s9335 = scalar_lea.vmem [#allocation7], %s9334
          %9336 = dma.done %s9332, 128
        $region132: #{convolutional_forward.1} parent=127 // pred_fallthru
          _
      $region128: #{convolutional_forward.1} parent=5 // pred_fallthru
        _
    $region6: #{convolutional_forward.1} parent=1 // loop_footer
      %s38 = sadd.s32 1, %s34
    $region7: #{convolutional_forward.1} parent=1 // loop_footer_branch
      %33 = sbr.rel target = $region3
    $region8: #{convolutional_forward.1} parent=1 // loop_exit
      _
    %9337 = vsyncpa [#allocation3], 1
    %s9338 = scalar_lea.sflag [#allocation3], 1
    %9339 = vsyncpa %s9338, 1
    %9340 = vsyncpa [#allocation6], 1
    %9341 = vsyncpa [#allocation4], 1
    %s9342 = scalar_lea.sflag [#allocation4], 1
    %9343 = vsyncpa %s9342, 1

</llo_original>
